<compile_context>
chip_gen: v5e
topology: v5e:2x2
jax: 0.10.0
libtpu: 0.0.40
codegen_flags: <defaults>
</compile_context>

<pallas_src>
import functools

import jax
import jax.numpy as jnp
from jax.experimental import pallas as pl
from jax.experimental.pallas import tpu as pltpu


# ----------------------------------------------------------------------------
# Fused FireNet kernel (one grid step = one image)
# ----------------------------------------------------------------------------
def _firenet_kernel(ev_ref, h1_ref, h2_ref,
                    w_head, b_head,
                    w_g1_zr, b_g1_zr, w_g1_q, b_g1_q,
                    w_r11, b_r11, w_r12, b_r12,
                    w_g2_zr, b_g2_zr, w_g2_q, b_g2_q,
                    w_r21, b_r21, w_r22, b_r22,
                    w_pred, b_pred,
                    img_ref, s1_ref, s2_ref,
                    pad_ref, col_ref,
                    *, H, W, C, nb_pad):
    """Whole FireNet forward for one image.

    Activation layout: (channels, H*W) - channels on sublanes, flattened
    spatial on lanes.  Each 3x3 'same' conv:
      1. stage the input (bf16) into the interior of `pad_ref` (flat, margin W+1),
      2. build the bf16 (9*Cin, H*W) im2col matrix in `col_ref` via 9 shifted
         slice-loads + hoisted column masks (row overflow lands in the zeroed
         margins),
      3. one MXU matmul (Cout, 9*Cin) @ (9*Cin, H*W), bf16 in / f32 out.
    """
    HW = H * W
    M = W + 1  # margin of the flat padded scratch (max |tap offset| = W + 1)

    # Zero only the two margins; the interior is always overwritten before it
    # is read.  Rows that fall off the top/bottom of the image read from these
    # margins, so no row-validity mask is needed.  Done every grid step so it
    # stays correct when the batch axis is sharded across TensorCores.
    zeros_m = jnp.zeros((pad_ref.shape[0], M), pad_ref.dtype)
    pad_ref[:, 0:M] = zeros_m
    pad_ref[:, M + HW:M + HW + M] = zeros_m

    # Column-validity masks, hoisted out of the 81 tap iterations: only the
    # kx = +/-1 lane wrap-around between image rows needs masking.
    coli = jax.lax.broadcasted_iota(jnp.int32, (1, HW), 1) % W
    mask_l = coli >= 1          # kx = -1 valid
    mask_r = coli <= W - 2      # kx = +1 valid

    def put(x, c0):
        # Stage a (cin, HW) activation into the interior of the padded scratch
        # (cast to bf16 once here; the matmuls consume bf16 anyway).
        pad_ref[c0:c0 + x.shape[0], M:M + HW] = x.astype(pad_ref.dtype)

    def build_taps(cin, src_c0, dst_r0):
        # Write 9 shifted copies of pad_ref[src_c0:src_c0+cin] (already staged)
        # into col_ref rows [dst_r0 : dst_r0 + 9*cin].
        for t in range(9):
            ky, kx = t // 3 - 1, t % 3 - 1
            off = ky * W + kx
            tap = pad_ref[src_c0:src_c0 + cin, M + off:M + off + HW]
            if kx == -1:
                tap = jnp.where(mask_l, tap, 0)
            elif kx == 1:
                tap = jnp.where(mask_r, tap, 0)
            col_ref[dst_r0 + t * cin:dst_r0 + (t + 1) * cin, :] = tap

    def gemm(krows, w_ref, b_ref, act):
        out = jnp.dot(w_ref[...], col_ref[0:krows, :],
                      preferred_element_type=jnp.float32) + b_ref[...]
        if act == "relu":
            out = jnp.maximum(out, 0.0)
        elif act == "sigmoid":
            out = jax.nn.sigmoid(out)
        elif act == "tanh":
            out = jnp.tanh(out)
        return out  # (cout, HW) f32

    def conv3x3(x, w_ref, b_ref, act):
        cin = x.shape[0]
        put(x, 0)
        build_taps(cin, 0, 0)
        return gemm(9 * cin, w_ref, b_ref, act)

    def conv_gru(x, h, w_zr, b_zr, w_q, b_q):
        # Fused-gate K layout: [9 x-taps (9C) | 9 h-taps (9C)].  The x half of
        # the im2col is built once and reused by the candidate conv; only the
        # h half is rebuilt with r*h.
        put(x, 0)
        put(h, C)
        build_taps(C, 0, 0)        # x taps  -> col rows [0 : 9C]
        build_taps(C, C, 9 * C)    # h taps  -> col rows [9C : 18C]
        zr = gemm(18 * C, w_zr, b_zr, "sigmoid")   # rows [0:C]=update, [C:2C]=reset
        z = zr[:C]
        r = zr[C:]
        put(r * h, C)              # only the h half changes
        build_taps(C, C, 9 * C)
        q = gemm(18 * C, w_q, b_q, "tanh")
        return h * (1.0 - z) + q * z

    def res_block(x, w1, b1, w2, b2):
        out = conv3x3(x, w1, b1, "relu")
        out = conv3x3(out, w2, b2, None)
        return jnp.maximum(out + x, 0.0)

    ev = ev_ref[...]              # (nb_pad, HW) bf16, channel-padded
    h1 = h1_ref[...]              # (C, HW) f32
    h2 = h2_ref[...]              # (C, HW) f32

    x = conv3x3(ev, w_head, b_head, "relu")
    s1 = conv_gru(x, h1, w_g1_zr, b_g1_zr, w_g1_q, b_g1_q)
    x = res_block(s1, w_r11, b_r11, w_r12, b_r12)
    s2 = conv_gru(x, h2, w_g2_zr, b_g2_zr, w_g2_q, b_g2_q)
    x = res_block(s2, w_r21, b_r21, w_r22, b_r22)

    # 1x1 prediction conv (C -> 1): 16 MACs/pixel, VPU multiply + XLU reduce.
    img = jnp.sum(x * w_pred[...], axis=0, keepdims=True) + b_pred[...]

    img_ref[...] = img
    s1_ref[...] = s1
    s2_ref[...] = s2


# ----------------------------------------------------------------------------
# Weight preprocessing (done once, outside the kernel)
# ----------------------------------------------------------------------------
def _wmat(w):
    """(KH, KW, Cin, Cout) conv weight -> (Cout, KH*KW*Cin) bf16 im2col matrix."""
    KH, KW, Cin, Cout = w.shape
    return (jnp.transpose(w, (3, 0, 1, 2))
            .reshape(Cout, KH * KW * Cin).astype(jnp.bfloat16))


def _wmat_xh(w, C):
    """GRU conv weight on cat([x, h]) -> (Cout, 18C) bf16 with the K axis
    reordered as [9 x-taps | 9 h-taps], matching the kernel's im2col layout."""
    KH, KW, Cin, Cout = w.shape
    wt = jnp.transpose(w, (3, 0, 1, 2)).reshape(Cout, KH * KW, Cin)
    wx = wt[:, :, :C].reshape(Cout, KH * KW * C)
    wh = wt[:, :, C:].reshape(Cout, KH * KW * C)
    return jnp.concatenate([wx, wh], axis=1).astype(jnp.bfloat16)


def _bcol(b):
    return b.reshape(-1, 1).astype(jnp.float32)


# ----------------------------------------------------------------------------
# Parameter init (deterministic, PyTorch Conv2d-style uniform bounds)
# ----------------------------------------------------------------------------
def _conv_params(key, kh, kw, cin, cout):
    k1, k2 = jax.random.split(key)
    bound = 1.0 / float(kh * kw * cin) ** 0.5
    w = jax.random.uniform(k1, (kh, kw, cin, cout), jnp.float32, -bound, bound)
    b = jax.random.uniform(k2, (cout,), jnp.float32, -bound, bound)
    return w, b


def init_firenet_params(key, num_bins=4, base_channels=16):
    ks = jax.random.split(key, 12)
    C = base_channels
    return {
        "head": _conv_params(ks[0], 3, 3, num_bins, C),
        "g1_reset": _conv_params(ks[1], 3, 3, 2 * C, C),
        "g1_update": _conv_params(ks[2], 3, 3, 2 * C, C),
        "g1_out": _conv_params(ks[3], 3, 3, 2 * C, C),
        "r1_c1": _conv_params(ks[4], 3, 3, C, C),
        "r1_c2": _conv_params(ks[5], 3, 3, C, C),
        "g2_reset": _conv_params(ks[6], 3, 3, 2 * C, C),
        "g2_update": _conv_params(ks[7], 3, 3, 2 * C, C),
        "g2_out": _conv_params(ks[8], 3, 3, 2 * C, C),
        "r2_c1": _conv_params(ks[9], 3, 3, C, C),
        "r2_c2": _conv_params(ks[10], 3, 3, C, C),
        "pred": _conv_params(ks[11], 1, 1, C, 1),
    }


# ----------------------------------------------------------------------------
# FireNet forward: single fused pallas_call, grid over batch
# ----------------------------------------------------------------------------
@jax.jit
def firenet_forward(params, events, pre_states=None):
    """events: (N, num_bins, H, W) NCHW, like the PyTorch module.

    Returns (img, states): img (N, 1, H, W), states = [h1, h2] each (N, C, H, W).
    """
    # TODO(synk): exact tjevents FireUNet source not available; implements the
    # canonical FireNet forward (head/ConvGRU/Res x2/pred) it wraps.
    N, num_bins, H, W = events.shape
    C = params["head"][0].shape[-1]
    HW = H * W
    # Pad head input channels to a multiple of 16 so every bf16 im2col tap
    # block is sublane-aligned.
    nb_pad = max(16, -(-num_bins // 16) * 16)

    if pre_states is None:
        pre_states = [None, None]

    def as_flat_state(s):
        if s is None:
            return jnp.zeros((N, C, HW), jnp.float32)
        return s.astype(jnp.float32).reshape(N, C, HW)

    # Events are consumed only as bf16 matmul input -> ship them as bf16.
    ev = events.astype(jnp.bfloat16).reshape(N, num_bins, HW)
    if nb_pad > num_bins:
        ev = jnp.concatenate(
            [ev, jnp.zeros((N, nb_pad - num_bins, HW), jnp.bfloat16)], axis=1)
    h1 = as_flat_state(pre_states[0])
    h2 = as_flat_state(pre_states[1])

    w_head = jnp.pad(params["head"][0],
                     ((0, 0), (0, 0), (0, nb_pad - num_bins), (0, 0)))

    def gru_mats(p_reset, p_update, p_out):
        # Fuse update (z) + reset (r) gate convs into one matmul: rows [0:C]=z,
        # [C:2C]=r.  K axis is [x-taps | h-taps] for BOTH the gate and the
        # candidate matmuls (must stay consistent with the kernel).
        w_zr = jnp.concatenate([_wmat_xh(p_update[0], C),
                                _wmat_xh(p_reset[0], C)], axis=0)
        b_zr = jnp.concatenate([_bcol(p_update[1]), _bcol(p_reset[1])], axis=0)
        return (w_zr, b_zr, _wmat_xh(p_out[0], C), _bcol(p_out[1]))

    def res_mats(p1, p2):
        return (_wmat(p1[0]), _bcol(p1[1]), _wmat(p2[0]), _bcol(p2[1]))

    weights = (
        _wmat(w_head), _bcol(params["head"][1]),
        *gru_mats(params["g1_reset"], params["g1_update"], params["g1_out"]),
        *res_mats(params["r1_c1"], params["r1_c2"]),
        *gru_mats(params["g2_reset"], params["g2_update"], params["g2_out"]),
        *res_mats(params["r2_c1"], params["r2_c2"]),
        params["pred"][0].reshape(C, 1).astype(jnp.float32),   # 1x1 pred conv
        params["pred"][1].reshape(1, 1).astype(jnp.float32),
    )

    def batched_spec(shape):
        nd = len(shape)
        return pl.BlockSpec((None,) + tuple(shape[1:]),
                            lambda n, _nd=nd: (n,) + (0,) * (_nd - 1))

    def full_spec(arr):
        nd = arr.ndim
        return pl.BlockSpec(arr.shape, lambda n, _nd=nd: (0,) * _nd)

    in_specs = ([batched_spec(ev.shape), batched_spec(h1.shape),
                 batched_spec(h2.shape)]
                + [full_spec(w) for w in weights])
    out_specs = (batched_spec((N, 1, HW)),
                 batched_spec((N, C, HW)),
                 batched_spec((N, C, HW)))
    out_shape = (jax.ShapeDtypeStruct((N, 1, HW), jnp.float32),
                 jax.ShapeDtypeStruct((N, C, HW), jnp.float32),
                 jax.ShapeDtypeStruct((N, C, HW), jnp.float32))

    M = W + 1
    cmax = max(2 * C, nb_pad)
    kmax = max(18 * C, 9 * nb_pad)
    scratch_shapes = [
        pltpu.VMEM((cmax, HW + 2 * M), jnp.bfloat16),   # flat padded staging
        pltpu.VMEM((kmax, HW), jnp.bfloat16),           # bf16 im2col matrix
    ]

    # Explicit scoped-VMEM budget: scratch + double-buffered I/O blocks +
    # weight buffers + headroom (default 32 MiB is too small at sensor
    # resolutions on v6e/v7x).
    scratch_bytes = (cmax * (HW + 2 * M) + kmax * HW) * 2
    io_bytes = (nb_pad * HW * 2 + 2 * C * HW * 4        # ev, h1, h2 blocks
                + (1 + 2 * C) * HW * 4)                 # img, s1, s2 blocks
    weight_bytes = sum(int(w.size) * w.dtype.itemsize for w in weights)
    vmem_need = scratch_bytes + 2 * (io_bytes + weight_bytes)
    vmem_limit = int(min(120 << 20,
                         max(vmem_need + vmem_need // 4 + (8 << 20), 32 << 20)))

    kernel = functools.partial(_firenet_kernel, H=H, W=W, C=C, nb_pad=nb_pad)

    # TODO(synk): for sensor resolutions (e.g. 346x260, 480x640) on v7x (64 MiB
    # per-TC VMEM) add an H-strip grid axis with a 9-row recompute halo on
    # ev/h1/h2 and size pad_ref/col_ref per strip; that also keeps both v7x
    # TensorCores busy when N == 1.  Hidden states could additionally be
    # aliased to the s1/s2 outputs with input_output_aliases for streaming use.
    img, s1, s2 = pl.pallas_call(
        kernel,
        out_shape=out_shape,
        grid_spec=pltpu.PrefetchScalarGridSpec(
            num_scalar_prefetch=0,
            grid=(N,),
            in_specs=in_specs,
            out_specs=out_specs,
            scratch_shapes=scratch_shapes,
        ),
        compiler_params=pltpu.CompilerParams(
            dimension_semantics=("parallel",),
            vmem_limit_bytes=vmem_limit),
    )(ev, h1, h2, *weights)

    img = img.reshape(N, 1, H, W)
    states = [s1.reshape(N, C, H, W), s2.reshape(N, C, H, W)]
    return img, states


if __name__ == "__main__":
    key = jax.random.PRNGKey(0)
    k_events, k_params = jax.random.split(key)

    N, num_bins, H, W = 2, 4, 16, 16
    base_channels = 16

    events = jax.random.normal(k_events, (N, num_bins, H, W), jnp.float32)
    params = init_firenet_params(k_params, num_bins=num_bins,
                                 base_channels=base_channels)

    # First call: pre_states=None (zero-initialized hidden states).
    img, states = firenet_forward(params, events, pre_states=None)
    img = jax.block_until_ready(img)
    states = [jax.block_until_ready(s) for s in states]

    assert img.shape == (N, 1, H, W), img.shape
    assert states[0].shape == (N, base_channels, H, W)
    assert states[1].shape == (N, base_channels, H, W)
    assert bool(jnp.all(jnp.isfinite(img)))
    assert bool(jnp.all(jnp.isfinite(states[0])))
    assert bool(jnp.all(jnp.isfinite(states[1])))

    # Second call: feed states back (recurrent usage, as in the PyTorch module).
    img2, states2 = firenet_forward(params, events, pre_states=states)
    jax.block_until_ready(img2)
    assert bool(jnp.all(jnp.isfinite(img2)))

    print("KERNEL_OK")
</pallas_src>

<mosaic_0001>
module attributes {stable_mosaic.version = 11 : i64} {
  func.func @_firenet_kernel(%arg0: i32, %arg1: memref<1x16x256xbf16, #tpu.memory_space<vmem>>, %arg2: memref<1x16x256xf32, #tpu.memory_space<vmem>>, %arg3: memref<1x16x256xf32, #tpu.memory_space<vmem>>, %arg4: memref<16x144xbf16, #tpu.memory_space<vmem>>, %arg5: memref<16x1xf32, #tpu.memory_space<vmem>>, %arg6: memref<32x288xbf16, #tpu.memory_space<vmem>>, %arg7: memref<32x1xf32, #tpu.memory_space<vmem>>, %arg8: memref<16x288xbf16, #tpu.memory_space<vmem>>, %arg9: memref<16x1xf32, #tpu.memory_space<vmem>>, %arg10: memref<16x144xbf16, #tpu.memory_space<vmem>>, %arg11: memref<16x1xf32, #tpu.memory_space<vmem>>, %arg12: memref<16x144xbf16, #tpu.memory_space<vmem>>, %arg13: memref<16x1xf32, #tpu.memory_space<vmem>>, %arg14: memref<32x288xbf16, #tpu.memory_space<vmem>>, %arg15: memref<32x1xf32, #tpu.memory_space<vmem>>, %arg16: memref<16x288xbf16, #tpu.memory_space<vmem>>, %arg17: memref<16x1xf32, #tpu.memory_space<vmem>>, %arg18: memref<16x144xbf16, #tpu.memory_space<vmem>>, %arg19: memref<16x1xf32, #tpu.memory_space<vmem>>, %arg20: memref<16x144xbf16, #tpu.memory_space<vmem>>, %arg21: memref<16x1xf32, #tpu.memory_space<vmem>>, %arg22: memref<16x1xf32, #tpu.memory_space<vmem>>, %arg23: memref<1x1xf32, #tpu.memory_space<vmem>>, %arg24: memref<1x1x256xf32, #tpu.memory_space<vmem>>, %arg25: memref<1x16x256xf32, #tpu.memory_space<vmem>>, %arg26: memref<1x16x256xf32, #tpu.memory_space<vmem>>, %arg27: memref<32x290xbf16, #tpu.memory_space<vmem>>, %arg28: memref<288x256xbf16, #tpu.memory_space<vmem>>) attributes {dimension_semantics = [#tpu.dimension_semantics<parallel>], iteration_bounds = array<i64: 2>, scalar_prefetch = 0 : i64, scratch_operands = 2 : i64, tpu.core_type = #tpu.core_type<tc>, window_params = [{transform_indices = @transform_0, window_bounds = array<i64: 1, 16, 256>}, {transform_indices = @transform_1, window_bounds = array<i64: 1, 16, 256>}, {transform_indices = @transform_2, window_bounds = array<i64: 1, 16, 256>}, {pipeline_mode = #tpu.pipeline_mode<synchronous>, transform_indices = @transform_3, window_bounds = array<i64: 16, 144>}, {pipeline_mode = #tpu.pipeline_mode<synchronous>, transform_indices = @transform_4, window_bounds = array<i64: 16, 1>}, {pipeline_mode = #tpu.pipeline_mode<synchronous>, transform_indices = @transform_5, window_bounds = array<i64: 32, 288>}, {pipeline_mode = #tpu.pipeline_mode<synchronous>, transform_indices = @transform_6, window_bounds = array<i64: 32, 1>}, {pipeline_mode = #tpu.pipeline_mode<synchronous>, transform_indices = @transform_7, window_bounds = array<i64: 16, 288>}, {pipeline_mode = #tpu.pipeline_mode<synchronous>, transform_indices = @transform_8, window_bounds = array<i64: 16, 1>}, {pipeline_mode = #tpu.pipeline_mode<synchronous>, transform_indices = @transform_9, window_bounds = array<i64: 16, 144>}, {pipeline_mode = #tpu.pipeline_mode<synchronous>, transform_indices = @transform_10, window_bounds = array<i64: 16, 1>}, {pipeline_mode = #tpu.pipeline_mode<synchronous>, transform_indices = @transform_11, window_bounds = array<i64: 16, 144>}, {pipeline_mode = #tpu.pipeline_mode<synchronous>, transform_indices = @transform_12, window_bounds = array<i64: 16, 1>}, {pipeline_mode = #tpu.pipeline_mode<synchronous>, transform_indices = @transform_13, window_bounds = array<i64: 32, 288>}, {pipeline_mode = #tpu.pipeline_mode<synchronous>, transform_indices = @transform_14, window_bounds = array<i64: 32, 1>}, {pipeline_mode = #tpu.pipeline_mode<synchronous>, transform_indices = @transform_15, window_bounds = array<i64: 16, 288>}, {pipeline_mode = #tpu.pipeline_mode<synchronous>, transform_indices = @transform_16, window_bounds = array<i64: 16, 1>}, {pipeline_mode = #tpu.pipeline_mode<synchronous>, transform_indices = @transform_17, window_bounds = array<i64: 16, 144>}, {pipeline_mode = #tpu.pipeline_mode<synchronous>, transform_indices = @transform_18, window_bounds = array<i64: 16, 1>}, {pipeline_mode = #tpu.pipeline_mode<synchronous>, transform_indices = @transform_19, window_bounds = array<i64: 16, 144>}, {pipeline_mode = #tpu.pipeline_mode<synchronous>, transform_indices = @transform_20, window_bounds = array<i64: 16, 1>}, {pipeline_mode = #tpu.pipeline_mode<synchronous>, transform_indices = @transform_21, window_bounds = array<i64: 16, 1>}, {pipeline_mode = #tpu.pipeline_mode<synchronous>, transform_indices = @transform_22, window_bounds = array<i64: 1, 1>}, {transform_indices = @transform_23, window_bounds = array<i64: 1, 1, 256>}, {transform_indices = @transform_24, window_bounds = array<i64: 1, 16, 256>}, {transform_indices = @transform_25, window_bounds = array<i64: 1, 16, 256>}]} {
    %cst = arith.constant 0.000000e+00 : bf16
    %0 = vector.broadcast %cst : bf16 to vector<32x17xbf16>
    %c0 = arith.constant 0 : index
    %c0_0 = arith.constant 0 : index
    %1 = vector.load %arg27[%c0, %c0_0] : memref<32x290xbf16, #tpu.memory_space<vmem>>, vector<32x17xbf16>
    tpu.vector_store %arg27[%c0, %c0_0], %0 {strides = array<i32>} : memref<32x290xbf16, #tpu.memory_space<vmem>>, vector<32x17xbf16>,
    %c0_1 = arith.constant 0 : index
    %c273 = arith.constant 273 : index
    %2 = vector.load %arg27[%c0_1, %c273] : memref<32x290xbf16, #tpu.memory_space<vmem>>, vector<32x17xbf16>
    tpu.vector_store %arg27[%c0_1, %c273], %0 {strides = array<i32>} : memref<32x290xbf16, #tpu.memory_space<vmem>>, vector<32x17xbf16>,
    %3 = tpu.iota {dimensions = array<i32: 1>} : vector<1x256xi32>
    %c16_i32 = arith.constant 16 : i32
    %c0_i32 = arith.constant 0 : i32
    %4 = arith.cmpi eq, %c16_i32, %c0_i32 : i32
    %c1_i32 = arith.constant 1 : i32
    %5 = arith.select %4, %c1_i32, %c16_i32 : i32
    %6 = vector.broadcast %5 : i32 to vector<1x256xi32>
    %7 = arith.remsi %3, %6 : vector<1x256xi32>
    %c0_i32_2 = arith.constant 0 : i32
    %8 = vector.broadcast %c0_i32_2 : i32 to vector<1x256xi32>
    %9 = arith.cmpi ne, %7, %8 : vector<1x256xi32>
    %c0_i32_3 = arith.constant 0 : i32
    %10 = vector.broadcast %c0_i32_3 : i32 to vector<1x256xi32>
    %11 = arith.cmpi slt, %7, %10 : vector<1x256xi32>
    %c0_i32_4 = arith.constant 0 : i32
    %12 = arith.cmpi slt, %5, %c0_i32_4 : i32
    %13 = vector.broadcast %12 : i1 to vector<1x256xi1>
    %14 = vector.broadcast %13 : vector<1x256xi1> to vector<1x256xi1>
    %15 = arith.xori %11, %14 : vector<1x256xi1>
    %16 = arith.andi %15, %9 : vector<1x256xi1>
    %17 = vector.broadcast %5 : i32 to vector<1x256xi32>
    %18 = arith.addi %7, %17 : vector<1x256xi32>
    %19 = arith.select %16, %18, %7 : vector<1x256xi1>, vector<1x256xi32>
    %c1_i32_5 = arith.constant 1 : i32
    %20 = vector.broadcast %c1_i32_5 : i32 to vector<1x256xi32>
    %21 = arith.cmpi sge, %19, %20 : vector<1x256xi32>
    %c14_i32 = arith.constant 14 : i32
    %22 = vector.broadcast %c14_i32 : i32 to vector<1x256xi32>
    %23 = arith.cmpi sle, %19, %22 : vector<1x256xi32>
    %c0_6 = arith.constant 0 : index
    %c0_7 = arith.constant 0 : index
    %c0_8 = arith.constant 0 : index
    %24 = vector.load %arg1[%c0_6, %c0_7, %c0_8] : memref<1x16x256xbf16, #tpu.memory_space<vmem>>, vector<1x16x256xbf16>
    %25 = vector.shape_cast %24 : vector<1x16x256xbf16> to vector<16x256xbf16>
    %c0_9 = arith.constant 0 : index
    %c0_10 = arith.constant 0 : index
    %c0_11 = arith.constant 0 : index
    %26 = vector.load %arg2[%c0_9, %c0_10, %c0_11] : memref<1x16x256xf32, #tpu.memory_space<vmem>>, vector<1x16x256xf32>
    %27 = vector.shape_cast %26 : vector<1x16x256xf32> to vector<16x256xf32>
    %c0_12 = arith.constant 0 : index
    %c0_13 = arith.constant 0 : index
    %c0_14 = arith.constant 0 : index
    %28 = vector.load %arg3[%c0_12, %c0_13, %c0_14] : memref<1x16x256xf32, #tpu.memory_space<vmem>>, vector<1x16x256xf32>
    %29 = vector.shape_cast %28 : vector<1x16x256xf32> to vector<16x256xf32>
    %c0_15 = arith.constant 0 : index
    %c17 = arith.constant 17 : index
    %30 = vector.load %arg27[%c0_15, %c17] : memref<32x290xbf16, #tpu.memory_space<vmem>>, vector<16x256xbf16>
    tpu.vector_store %arg27[%c0_15, %c17], %25 {strides = array<i32>} : memref<32x290xbf16, #tpu.memory_space<vmem>>, vector<16x256xbf16>,
    %c0_16 = arith.constant 0 : index
    %c0_17 = arith.constant 0 : index
    %31 = vector.load %arg27[%c0_16, %c0_17] : memref<32x290xbf16, #tpu.memory_space<vmem>>, vector<16x256xbf16>
    %c0_i32_18 = arith.constant 0 : i32
    %32 = arith.sitofp %c0_i32_18 : i32 to bf16
    %33 = vector.shape_cast %21 : vector<1x256xi1> to vector<1x256xi1>
    %34 = vector.broadcast %33 : vector<1x256xi1> to vector<16x256xi1>
    %35 = vector.broadcast %32 : bf16 to vector<16x256xbf16>
    %36 = arith.select %34, %31, %35 : vector<16x256xi1>, vector<16x256xbf16>
    %c0_19 = arith.constant 0 : index
    %c0_20 = arith.constant 0 : index
    %37 = vector.load %arg28[%c0_19, %c0_20] : memref<288x256xbf16, #tpu.memory_space<vmem>>, vector<16x256xbf16>
    tpu.vector_store %arg28[%c0_19, %c0_20], %36 {strides = array<i32>} : memref<288x256xbf16, #tpu.memory_space<vmem>>, vector<16x256xbf16>,
    %c0_21 = arith.constant 0 : index
    %c1 = arith.constant 1 : index
    %38 = vector.load %arg27[%c0_21, %c1] : memref<32x290xbf16, #tpu.memory_space<vmem>>, vector<16x256xbf16>
    %c16 = arith.constant 16 : index
    %c0_22 = arith.constant 0 : index
    %39 = vector.load %arg28[%c16, %c0_22] : memref<288x256xbf16, #tpu.memory_space<vmem>>, vector<16x256xbf16>
    tpu.vector_store %arg28[%c16, %c0_22], %38 {strides = array<i32>} : memref<288x256xbf16, #tpu.memory_space<vmem>>, vector<16x256xbf16>,
    %c0_23 = arith.constant 0 : index
    %c2 = arith.constant 2 : index
    %40 = vector.load %arg27[%c0_23, %c2] : memref<32x290xbf16, #tpu.memory_space<vmem>>, vector<16x256xbf16>
    %c0_i32_24 = arith.constant 0 : i32
    %41 = arith.sitofp %c0_i32_24 : i32 to bf16
    %42 = vector.shape_cast %23 : vector<1x256xi1> to vector<1x256xi1>
    %43 = vector.broadcast %42 : vector<1x256xi1> to vector<16x256xi1>
    %44 = vector.broadcast %41 : bf16 to vector<16x256xbf16>
    %45 = arith.select %43, %40, %44 : vector<16x256xi1>, vector<16x256xbf16>
    %c32 = arith.constant 32 : index
    %c0_25 = arith.constant 0 : index
    %46 = vector.load %arg28[%c32, %c0_25] : memref<288x256xbf16, #tpu.memory_space<vmem>>, vector<16x256xbf16>
    tpu.vector_store %arg28[%c32, %c0_25], %45 {strides = array<i32>} : memref<288x256xbf16, #tpu.memory_space<vmem>>, vector<16x256xbf16>,
    %c0_26 = arith.constant 0 : index
    %c16_27 = arith.constant 16 : index
    %47 = vector.load %arg27[%c0_26, %c16_27] : memref<32x290xbf16, #tpu.memory_space<vmem>>, vector<16x256xbf16>
    %c0_i32_28 = arith.constant 0 : i32
    %48 = arith.sitofp %c0_i32_28 : i32 to bf16
    %49 = vector.shape_cast %21 : vector<1x256xi1> to vector<1x256xi1>
    %50 = vector.broadcast %49 : vector<1x256xi1> to vector<16x256xi1>
    %51 = vector.broadcast %48 : bf16 to vector<16x256xbf16>
    %52 = arith.select %50, %47, %51 : vector<16x256xi1>, vector<16x256xbf16>
    %c48 = arith.constant 48 : index
    %c0_29 = arith.constant 0 : index
    %53 = vector.load %arg28[%c48, %c0_29] : memref<288x256xbf16, #tpu.memory_space<vmem>>, vector<16x256xbf16>
    tpu.vector_store %arg28[%c48, %c0_29], %52 {strides = array<i32>} : memref<288x256xbf16, #tpu.memory_space<vmem>>, vector<16x256xbf16>,
    %c0_30 = arith.constant 0 : index
    %c17_31 = arith.constant 17 : index
    %54 = vector.load %arg27[%c0_30, %c17_31] : memref<32x290xbf16, #tpu.memory_space<vmem>>, vector<16x256xbf16>
    %c64 = arith.constant 64 : index
    %c0_32 = arith.constant 0 : index
    %55 = vector.load %arg28[%c64, %c0_32] : memref<288x256xbf16, #tpu.memory_space<vmem>>, vector<16x256xbf16>
    tpu.vector_store %arg28[%c64, %c0_32], %54 {strides = array<i32>} : memref<288x256xbf16, #tpu.memory_space<vmem>>, vector<16x256xbf16>,
    %c0_33 = arith.constant 0 : index
    %c18 = arith.constant 18 : index
    %56 = vector.load %arg27[%c0_33, %c18] : memref<32x290xbf16, #tpu.memory_space<vmem>>, vector<16x256xbf16>
    %c0_i32_34 = arith.constant 0 : i32
    %57 = arith.sitofp %c0_i32_34 : i32 to bf16
    %58 = vector.shape_cast %23 : vector<1x256xi1> to vector<1x256xi1>
    %59 = vector.broadcast %58 : vector<1x256xi1> to vector<16x256xi1>
    %60 = vector.broadcast %57 : bf16 to vector<16x256xbf16>
    %61 = arith.select %59, %56, %60 : vector<16x256xi1>, vector<16x256xbf16>
    %c80 = arith.constant 80 : index
    %c0_35 = arith.constant 0 : index
    %62 = vector.load %arg28[%c80, %c0_35] : memref<288x256xbf16, #tpu.memory_space<vmem>>, vector<16x256xbf16>
    tpu.vector_store %arg28[%c80, %c0_35], %61 {strides = array<i32>} : memref<288x256xbf16, #tpu.memory_space<vmem>>, vector<16x256xbf16>,
    %c0_36 = arith.constant 0 : index
    %c32_37 = arith.constant 32 : index
    %63 = vector.load %arg27[%c0_36, %c32_37] : memref<32x290xbf16, #tpu.memory_space<vmem>>, vector<16x256xbf16>
    %c0_i32_38 = arith.constant 0 : i32
    %64 = arith.sitofp %c0_i32_38 : i32 to bf16
    %65 = vector.shape_cast %21 : vector<1x256xi1> to vector<1x256xi1>
    %66 = vector.broadcast %65 : vector<1x256xi1> to vector<16x256xi1>
    %67 = vector.broadcast %64 : bf16 to vector<16x256xbf16>
    %68 = arith.select %66, %63, %67 : vector<16x256xi1>, vector<16x256xbf16>
    %c96 = arith.constant 96 : index
    %c0_39 = arith.constant 0 : index
    %69 = vector.load %arg28[%c96, %c0_39] : memref<288x256xbf16, #tpu.memory_space<vmem>>, vector<16x256xbf16>
    tpu.vector_store %arg28[%c96, %c0_39], %68 {strides = array<i32>} : memref<288x256xbf16, #tpu.memory_space<vmem>>, vector<16x256xbf16>,
    %c0_40 = arith.constant 0 : index
    %c33 = arith.constant 33 : index
    %70 = vector.load %arg27[%c0_40, %c33] : memref<32x290xbf16, #tpu.memory_space<vmem>>, vector<16x256xbf16>
    %c112 = arith.constant 112 : index
    %c0_41 = arith.constant 0 : index
    %71 = vector.load %arg28[%c112, %c0_41] : memref<288x256xbf16, #tpu.memory_space<vmem>>, vector<16x256xbf16>
    tpu.vector_store %arg28[%c112, %c0_41], %70 {strides = array<i32>} : memref<288x256xbf16, #tpu.memory_space<vmem>>, vector<16x256xbf16>,
    %c0_42 = arith.constant 0 : index
    %c34 = arith.constant 34 : index
    %72 = vector.load %arg27[%c0_42, %c34] : memref<32x290xbf16, #tpu.memory_space<vmem>>, vector<16x256xbf16>
    %c0_i32_43 = arith.constant 0 : i32
    %73 = arith.sitofp %c0_i32_43 : i32 to bf16
    %74 = vector.shape_cast %23 : vector<1x256xi1> to vector<1x256xi1>
    %75 = vector.broadcast %74 : vector<1x256xi1> to vector<16x256xi1>
    %76 = vector.broadcast %73 : bf16 to vector<16x256xbf16>
    %77 = arith.select %75, %72, %76 : vector<16x256xi1>, vector<16x256xbf16>
    %c128 = arith.constant 128 : index
    %c0_44 = arith.constant 0 : index
    %78 = vector.load %arg28[%c128, %c0_44] : memref<288x256xbf16, #tpu.memory_space<vmem>>, vector<16x256xbf16>
    tpu.vector_store %arg28[%c128, %c0_44], %77 {strides = array<i32>} : memref<288x256xbf16, #tpu.memory_space<vmem>>, vector<16x256xbf16>,
    %c0_45 = arith.constant 0 : index
    %c0_46 = arith.constant 0 : index
    %79 = vector.load %arg4[%c0_45, %c0_46] : memref<16x144xbf16, #tpu.memory_space<vmem>>, vector<16x144xbf16>
    %c0_47 = arith.constant 0 : index
    %c0_48 = arith.constant 0 : index
    %80 = vector.load %arg28[%c0_47, %c0_48] : memref<288x256xbf16, #tpu.memory_space<vmem>>, vector<144x256xbf16>
    %cst_49 = arith.constant dense<0.000000e+00> : vector<16x256xf32>
    %81 = tpu.matmul %79, %80, %cst_49 {dimension_numbers = #tpu.dot_dimension_numbers<[1], [0], [0], [1], [0, 0, 1, 1], [], []>} : vector<16x144xbf16>, vector<144x256xbf16>, vector<16x256xf32> -> vector<16x256xf32>
    %c0_50 = arith.constant 0 : index
    %c0_51 = arith.constant 0 : index
    %82 = vector.load %arg5[%c0_50, %c0_51] : memref<16x1xf32, #tpu.memory_space<vmem>>, vector<16x1xf32>
    %83 = vector.broadcast %82 : vector<16x1xf32> to vector<16x256xf32>
    %84 = arith.addf %81, %83 : vector<16x256xf32>
    %cst_52 = arith.constant 0.000000e+00 : f32
    %85 = vector.broadcast %cst_52 : f32 to vector<16x256xf32>
    %86 = arith.maximumf %84, %85 : vector<16x256xf32>
    %87 = arith.truncf %86 : vector<16x256xf32> to vector<16x256xbf16>
    %c0_53 = arith.constant 0 : index
    %c17_54 = arith.constant 17 : index
    %88 = vector.load %arg27[%c0_53, %c17_54] : memref<32x290xbf16, #tpu.memory_space<vmem>>, vector<16x256xbf16>
    tpu.vector_store %arg27[%c0_53, %c17_54], %87 {strides = array<i32>} : memref<32x290xbf16, #tpu.memory_space<vmem>>, vector<16x256xbf16>,
    %89 = arith.truncf %27 : vector<16x256xf32> to vector<16x256xbf16>
    %c16_55 = arith.constant 16 : index
    %c17_56 = arith.constant 17 : index
    %90 = vector.load %arg27[%c16_55, %c17_56] : memref<32x290xbf16, #tpu.memory_space<vmem>>, vector<16x256xbf16>
    tpu.vector_store %arg27[%c16_55, %c17_56], %89 {strides = array<i32>} : memref<32x290xbf16, #tpu.memory_space<vmem>>, vector<16x256xbf16>,
    %c0_57 = arith.constant 0 : index
    %c0_58 = arith.constant 0 : index
    %91 = vector.load %arg27[%c0_57, %c0_58] : memref<32x290xbf16, #tpu.memory_space<vmem>>, vector<16x256xbf16>
    %c0_i32_59 = arith.constant 0 : i32
    %92 = arith.sitofp %c0_i32_59 : i32 to bf16
    %93 = vector.shape_cast %21 : vector<1x256xi1> to vector<1x256xi1>
    %94 = vector.broadcast %93 : vector<1x256xi1> to vector<16x256xi1>
    %95 = vector.broadcast %92 : bf16 to vector<16x256xbf16>
    %96 = arith.select %94, %91, %95 : vector<16x256xi1>, vector<16x256xbf16>
    %c0_60 = arith.constant 0 : index
    %c0_61 = arith.constant 0 : index
    %97 = vector.load %arg28[%c0_60, %c0_61] : memref<288x256xbf16, #tpu.memory_space<vmem>>, vector<16x256xbf16>
    tpu.vector_store %arg28[%c0_60, %c0_61], %96 {strides = array<i32>} : memref<288x256xbf16, #tpu.memory_space<vmem>>, vector<16x256xbf16>,
    %c0_62 = arith.constant 0 : index
    %c1_63 = arith.constant 1 : index
    %98 = vector.load %arg27[%c0_62, %c1_63] : memref<32x290xbf16, #tpu.memory_space<vmem>>, vector<16x256xbf16>
    %c16_64 = arith.constant 16 : index
    %c0_65 = arith.constant 0 : index
    %99 = vector.load %arg28[%c16_64, %c0_65] : memref<288x256xbf16, #tpu.memory_space<vmem>>, vector<16x256xbf16>
    tpu.vector_store %arg28[%c16_64, %c0_65], %98 {strides = array<i32>} : memref<288x256xbf16, #tpu.memory_space<vmem>>, vector<16x256xbf16>,
    %c0_66 = arith.constant 0 : index
    %c2_67 = arith.constant 2 : index
    %100 = vector.load %arg27[%c0_66, %c2_67] : memref<32x290xbf16, #tpu.memory_space<vmem>>, vector<16x256xbf16>
    %c0_i32_68 = arith.constant 0 : i32
    %101 = arith.sitofp %c0_i32_68 : i32 to bf16
    %102 = vector.shape_cast %23 : vector<1x256xi1> to vector<1x256xi1>
    %103 = vector.broadcast %102 : vector<1x256xi1> to vector<16x256xi1>
    %104 = vector.broadcast %101 : bf16 to vector<16x256xbf16>
    %105 = arith.select %103, %100, %104 : vector<16x256xi1>, vector<16x256xbf16>
    %c32_69 = arith.constant 32 : index
    %c0_70 = arith.constant 0 : index
    %106 = vector.load %arg28[%c32_69, %c0_70] : memref<288x256xbf16, #tpu.memory_space<vmem>>, vector<16x256xbf16>
    tpu.vector_store %arg28[%c32_69, %c0_70], %105 {strides = array<i32>} : memref<288x256xbf16, #tpu.memory_space<vmem>>, vector<16x256xbf16>,
    %c0_71 = arith.constant 0 : index
    %c16_72 = arith.constant 16 : index
    %107 = vector.load %arg27[%c0_71, %c16_72] : memref<32x290xbf16, #tpu.memory_space<vmem>>, vector<16x256xbf16>
    %c0_i32_73 = arith.constant 0 : i32
    %108 = arith.sitofp %c0_i32_73 : i32 to bf16
    %109 = vector.shape_cast %21 : vector<1x256xi1> to vector<1x256xi1>
    %110 = vector.broadcast %109 : vector<1x256xi1> to vector<16x256xi1>
    %111 = vector.broadcast %108 : bf16 to vector<16x256xbf16>
    %112 = arith.select %110, %107, %111 : vector<16x256xi1>, vector<16x256xbf16>
    %c48_74 = arith.constant 48 : index
    %c0_75 = arith.constant 0 : index
    %113 = vector.load %arg28[%c48_74, %c0_75] : memref<288x256xbf16, #tpu.memory_space<vmem>>, vector<16x256xbf16>
    tpu.vector_store %arg28[%c48_74, %c0_75], %112 {strides = array<i32>} : memref<288x256xbf16, #tpu.memory_space<vmem>>, vector<16x256xbf16>,
    %c0_76 = arith.constant 0 : index
    %c17_77 = arith.constant 17 : index
    %114 = vector.load %arg27[%c0_76, %c17_77] : memref<32x290xbf16, #tpu.memory_space<vmem>>, vector<16x256xbf16>
    %c64_78 = arith.constant 64 : index
    %c0_79 = arith.constant 0 : index
    %115 = vector.load %arg28[%c64_78, %c0_79] : memref<288x256xbf16, #tpu.memory_space<vmem>>, vector<16x256xbf16>
    tpu.vector_store %arg28[%c64_78, %c0_79], %114 {strides = array<i32>} : memref<288x256xbf16, #tpu.memory_space<vmem>>, vector<16x256xbf16>,
    %c0_80 = arith.constant 0 : index
    %c18_81 = arith.constant 18 : index
    %116 = vector.load %arg27[%c0_80, %c18_81] : memref<32x290xbf16, #tpu.memory_space<vmem>>, vector<16x256xbf16>
    %c0_i32_82 = arith.constant 0 : i32
    %117 = arith.sitofp %c0_i32_82 : i32 to bf16
    %118 = vector.shape_cast %23 : vector<1x256xi1> to vector<1x256xi1>
    %119 = vector.broadcast %118 : vector<1x256xi1> to vector<16x256xi1>
    %120 = vector.broadcast %117 : bf16 to vector<16x256xbf16>
    %121 = arith.select %119, %116, %120 : vector<16x256xi1>, vector<16x256xbf16>
    %c80_83 = arith.constant 80 : index
    %c0_84 = arith.constant 0 : index
    %122 = vector.load %arg28[%c80_83, %c0_84] : memref<288x256xbf16, #tpu.memory_space<vmem>>, vector<16x256xbf16>
    tpu.vector_store %arg28[%c80_83, %c0_84], %121 {strides = array<i32>} : memref<288x256xbf16, #tpu.memory_space<vmem>>, vector<16x256xbf16>,
    %c0_85 = arith.constant 0 : index
    %c32_86 = arith.constant 32 : index
    %123 = vector.load %arg27[%c0_85, %c32_86] : memref<32x290xbf16, #tpu.memory_space<vmem>>, vector<16x256xbf16>
    %c0_i32_87 = arith.constant 0 : i32
    %124 = arith.sitofp %c0_i32_87 : i32 to bf16
    %125 = vector.shape_cast %21 : vector<1x256xi1> to vector<1x256xi1>
    %126 = vector.broadcast %125 : vector<1x256xi1> to vector<16x256xi1>
    %127 = vector.broadcast %124 : bf16 to vector<16x256xbf16>
    %128 = arith.select %126, %123, %127 : vector<16x256xi1>, vector<16x256xbf16>
    %c96_88 = arith.constant 96 : index
    %c0_89 = arith.constant 0 : index
    %129 = vector.load %arg28[%c96_88, %c0_89] : memref<288x256xbf16, #tpu.memory_space<vmem>>, vector<16x256xbf16>
    tpu.vector_store %arg28[%c96_88, %c0_89], %128 {strides = array<i32>} : memref<288x256xbf16, #tpu.memory_space<vmem>>, vector<16x256xbf16>,
    %c0_90 = arith.constant 0 : index
    %c33_91 = arith.constant 33 : index
    %130 = vector.load %arg27[%c0_90, %c33_91] : memref<32x290xbf16, #tpu.memory_space<vmem>>, vector<16x256xbf16>
    %c112_92 = arith.constant 112 : index
    %c0_93 = arith.constant 0 : index
    %131 = vector.load %arg28[%c112_92, %c0_93] : memref<288x256xbf16, #tpu.memory_space<vmem>>, vector<16x256xbf16>
    tpu.vector_store %arg28[%c112_92, %c0_93], %130 {strides = array<i32>} : memref<288x256xbf16, #tpu.memory_space<vmem>>, vector<16x256xbf16>,
    %c0_94 = arith.constant 0 : index
    %c34_95 = arith.constant 34 : index
    %132 = vector.load %arg27[%c0_94, %c34_95] : memref<32x290xbf16, #tpu.memory_space<vmem>>, vector<16x256xbf16>
    %c0_i32_96 = arith.constant 0 : i32
    %133 = arith.sitofp %c0_i32_96 : i32 to bf16
    %134 = vector.shape_cast %23 : vector<1x256xi1> to vector<1x256xi1>
    %135 = vector.broadcast %134 : vector<1x256xi1> to vector<16x256xi1>
    %136 = vector.broadcast %133 : bf16 to vector<16x256xbf16>
    %137 = arith.select %135, %132, %136 : vector<16x256xi1>, vector<16x256xbf16>
    %c128_97 = arith.constant 128 : index
    %c0_98 = arith.constant 0 : index
    %138 = vector.load %arg28[%c128_97, %c0_98] : memref<288x256xbf16, #tpu.memory_space<vmem>>, vector<16x256xbf16>
    tpu.vector_store %arg28[%c128_97, %c0_98], %137 {strides = array<i32>} : memref<288x256xbf16, #tpu.memory_space<vmem>>, vector<16x256xbf16>,
    %c16_99 = arith.constant 16 : index
    %c0_100 = arith.constant 0 : index
    %139 = vector.load %arg27[%c16_99, %c0_100] : memref<32x290xbf16, #tpu.memory_space<vmem>>, vector<16x256xbf16>
    %c0_i32_101 = arith.constant 0 : i32
    %140 = arith.sitofp %c0_i32_101 : i32 to bf16
    %141 = vector.shape_cast %21 : vector<1x256xi1> to vector<1x256xi1>
    %142 = vector.broadcast %141 : vector<1x256xi1> to vector<16x256xi1>
    %143 = vector.broadcast %140 : bf16 to vector<16x256xbf16>
    %144 = arith.select %142, %139, %143 : vector<16x256xi1>, vector<16x256xbf16>
    %c144 = arith.constant 144 : index
    %c0_102 = arith.constant 0 : index
    %145 = vector.load %arg28[%c144, %c0_102] : memref<288x256xbf16, #tpu.memory_space<vmem>>, vector<16x256xbf16>
    tpu.vector_store %arg28[%c144, %c0_102], %144 {strides = array<i32>} : memref<288x256xbf16, #tpu.memory_space<vmem>>, vector<16x256xbf16>,
    %c16_103 = arith.constant 16 : index
    %c1_104 = arith.constant 1 : index
    %146 = vector.load %arg27[%c16_103, %c1_104] : memref<32x290xbf16, #tpu.memory_space<vmem>>, vector<16x256xbf16>
    %c160 = arith.constant 160 : index
    %c0_105 = arith.constant 0 : index
    %147 = vector.load %arg28[%c160, %c0_105] : memref<288x256xbf16, #tpu.memory_space<vmem>>, vector<16x256xbf16>
    tpu.vector_store %arg28[%c160, %c0_105], %146 {strides = array<i32>} : memref<288x256xbf16, #tpu.memory_space<vmem>>, vector<16x256xbf16>,
    %c16_106 = arith.constant 16 : index
    %c2_107 = arith.constant 2 : index
    %148 = vector.load %arg27[%c16_106, %c2_107] : memref<32x290xbf16, #tpu.memory_space<vmem>>, vector<16x256xbf16>
    %c0_i32_108 = arith.constant 0 : i32
    %149 = arith.sitofp %c0_i32_108 : i32 to bf16
    %150 = vector.shape_cast %23 : vector<1x256xi1> to vector<1x256xi1>
    %151 = vector.broadcast %150 : vector<1x256xi1> to vector<16x256xi1>
    %152 = vector.broadcast %149 : bf16 to vector<16x256xbf16>
    %153 = arith.select %151, %148, %152 : vector<16x256xi1>, vector<16x256xbf16>
    %c176 = arith.constant 176 : index
    %c0_109 = arith.constant 0 : index
    %154 = vector.load %arg28[%c176, %c0_109] : memref<288x256xbf16, #tpu.memory_space<vmem>>, vector<16x256xbf16>
    tpu.vector_store %arg28[%c176, %c0_109], %153 {strides = array<i32>} : memref<288x256xbf16, #tpu.memory_space<vmem>>, vector<16x256xbf16>,
    %c16_110 = arith.constant 16 : index
    %c16_111 = arith.constant 16 : index
    %155 = vector.load %arg27[%c16_110, %c16_111] : memref<32x290xbf16, #tpu.memory_space<vmem>>, vector<16x256xbf16>
    %c0_i32_112 = arith.constant 0 : i32
    %156 = arith.sitofp %c0_i32_112 : i32 to bf16
    %157 = vector.shape_cast %21 : vector<1x256xi1> to vector<1x256xi1>
    %158 = vector.broadcast %157 : vector<1x256xi1> to vector<16x256xi1>
    %159 = vector.broadcast %156 : bf16 to vector<16x256xbf16>
    %160 = arith.select %158, %155, %159 : vector<16x256xi1>, vector<16x256xbf16>
    %c192 = arith.constant 192 : index
    %c0_113 = arith.constant 0 : index
    %161 = vector.load %arg28[%c192, %c0_113] : memref<288x256xbf16, #tpu.memory_space<vmem>>, vector<16x256xbf16>
    tpu.vector_store %arg28[%c192, %c0_113], %160 {strides = array<i32>} : memref<288x256xbf16, #tpu.memory_space<vmem>>, vector<16x256xbf16>,
    %c16_114 = arith.constant 16 : index
    %c17_115 = arith.constant 17 : index
    %162 = vector.load %arg27[%c16_114, %c17_115] : memref<32x290xbf16, #tpu.memory_space<vmem>>, vector<16x256xbf16>
    %c208 = arith.constant 208 : index
    %c0_116 = arith.constant 0 : index
    %163 = vector.load %arg28[%c208, %c0_116] : memref<288x256xbf16, #tpu.memory_space<vmem>>, vector<16x256xbf16>
    tpu.vector_store %arg28[%c208, %c0_116], %162 {strides = array<i32>} : memref<288x256xbf16, #tpu.memory_space<vmem>>, vector<16x256xbf16>,
    %c16_117 = arith.constant 16 : index
    %c18_118 = arith.constant 18 : index
    %164 = vector.load %arg27[%c16_117, %c18_118] : memref<32x290xbf16, #tpu.memory_space<vmem>>, vector<16x256xbf16>
    %c0_i32_119 = arith.constant 0 : i32
    %165 = arith.sitofp %c0_i32_119 : i32 to bf16
    %166 = vector.shape_cast %23 : vector<1x256xi1> to vector<1x256xi1>
    %167 = vector.broadcast %166 : vector<1x256xi1> to vector<16x256xi1>
    %168 = vector.broadcast %165 : bf16 to vector<16x256xbf16>
    %169 = arith.select %167, %164, %168 : vector<16x256xi1>, vector<16x256xbf16>
    %c224 = arith.constant 224 : index
    %c0_120 = arith.constant 0 : index
    %170 = vector.load %arg28[%c224, %c0_120] : memref<288x256xbf16, #tpu.memory_space<vmem>>, vector<16x256xbf16>
    tpu.vector_store %arg28[%c224, %c0_120], %169 {strides = array<i32>} : memref<288x256xbf16, #tpu.memory_space<vmem>>, vector<16x256xbf16>,
    %c16_121 = arith.constant 16 : index
    %c32_122 = arith.constant 32 : index
    %171 = vector.load %arg27[%c16_121, %c32_122] : memref<32x290xbf16, #tpu.memory_space<vmem>>, vector<16x256xbf16>
    %c0_i32_123 = arith.constant 0 : i32
    %172 = arith.sitofp %c0_i32_123 : i32 to bf16
    %173 = vector.shape_cast %21 : vector<1x256xi1> to vector<1x256xi1>
    %174 = vector.broadcast %173 : vector<1x256xi1> to vector<16x256xi1>
    %175 = vector.broadcast %172 : bf16 to vector<16x256xbf16>
    %176 = arith.select %174, %171, %175 : vector<16x256xi1>, vector<16x256xbf16>
    %c240 = arith.constant 240 : index
    %c0_124 = arith.constant 0 : index
    %177 = vector.load %arg28[%c240, %c0_124] : memref<288x256xbf16, #tpu.memory_space<vmem>>, vector<16x256xbf16>
    tpu.vector_store %arg28[%c240, %c0_124], %176 {strides = array<i32>} : memref<288x256xbf16, #tpu.memory_space<vmem>>, vector<16x256xbf16>,
    %c16_125 = arith.constant 16 : index
    %c33_126 = arith.constant 33 : index
    %178 = vector.load %arg27[%c16_125, %c33_126] : memref<32x290xbf16, #tpu.memory_space<vmem>>, vector<16x256xbf16>
    %c256 = arith.constant 256 : index
    %c0_127 = arith.constant 0 : index
    %179 = vector.load %arg28[%c256, %c0_127] : memref<288x256xbf16, #tpu.memory_space<vmem>>, vector<16x256xbf16>
    tpu.vector_store %arg28[%c256, %c0_127], %178 {strides = array<i32>} : memref<288x256xbf16, #tpu.memory_space<vmem>>, vector<16x256xbf16>,
    %c16_128 = arith.constant 16 : index
    %c34_129 = arith.constant 34 : index
    %180 = vector.load %arg27[%c16_128, %c34_129] : memref<32x290xbf16, #tpu.memory_space<vmem>>, vector<16x256xbf16>
    %c0_i32_130 = arith.constant 0 : i32
    %181 = arith.sitofp %c0_i32_130 : i32 to bf16
    %182 = vector.shape_cast %23 : vector<1x256xi1> to vector<1x256xi1>
    %183 = vector.broadcast %182 : vector<1x256xi1> to vector<16x256xi1>
    %184 = vector.broadcast %181 : bf16 to vector<16x256xbf16>
    %185 = arith.select %183, %180, %184 : vector<16x256xi1>, vector<16x256xbf16>
    %c272 = arith.constant 272 : index
    %c0_131 = arith.constant 0 : index
    %186 = vector.load %arg28[%c272, %c0_131] : memref<288x256xbf16, #tpu.memory_space<vmem>>, vector<16x256xbf16>
    tpu.vector_store %arg28[%c272, %c0_131], %185 {strides = array<i32>} : memref<288x256xbf16, #tpu.memory_space<vmem>>, vector<16x256xbf16>,
    %c0_132 = arith.constant 0 : index
    %c0_133 = arith.constant 0 : index
    %187 = vector.load %arg6[%c0_132, %c0_133] : memref<32x288xbf16, #tpu.memory_space<vmem>>, vector<32x288xbf16>
    %c0_134 = arith.constant 0 : index
    %c0_135 = arith.constant 0 : index
    %188 = vector.load %arg28[%c0_134, %c0_135] : memref<288x256xbf16, #tpu.memory_space<vmem>>, vector<288x256xbf16>
    %cst_136 = arith.constant dense<0.000000e+00> : vector<32x256xf32>
    %189 = tpu.matmul %187, %188, %cst_136 {dimension_numbers = #tpu.dot_dimension_numbers<[1], [0], [0], [1], [0, 0, 1, 1], [], []>} : vector<32x288xbf16>, vector<288x256xbf16>, vector<32x256xf32> -> vector<32x256xf32>
    %c0_137 = arith.constant 0 : index
    %c0_138 = arith.constant 0 : index
    %190 = vector.load %arg7[%c0_137, %c0_138] : memref<32x1xf32, #tpu.memory_space<vmem>>, vector<32x1xf32>
    %191 = vector.broadcast %190 : vector<32x1xf32> to vector<32x256xf32>
    %192 = arith.addf %189, %191 : vector<32x256xf32>
    %193 = arith.negf %192 : vector<32x256xf32>
    %194 = math.exp %193 : vector<32x256xf32>
    %cst_139 = arith.constant 1.000000e+00 : f32
    %195 = vector.broadcast %cst_139 : f32 to vector<32x256xf32>
    %196 = arith.addf %195, %194 : vector<32x256xf32>
    %197 = arith.divf %195, %196 : vector<32x256xf32>
    %198 = vector.extract_strided_slice %197 {offsets = [0, 0], sizes = [16, 256], strides = [1, 1]} : vector<32x256xf32> to vector<16x256xf32>
    %199 = vector.extract_strided_slice %197 {offsets = [16, 0], sizes = [16, 256], strides = [1, 1]} : vector<32x256xf32> to vector<16x256xf32>
    %200 = arith.mulf %199, %27 : vector<16x256xf32>
    %201 = arith.truncf %200 : vector<16x256xf32> to vector<16x256xbf16>
    %c16_140 = arith.constant 16 : index
    %c17_141 = arith.constant 17 : index
    %202 = vector.load %arg27[%c16_140, %c17_141] : memref<32x290xbf16, #tpu.memory_space<vmem>>, vector<16x256xbf16>
    tpu.vector_store %arg27[%c16_140, %c17_141], %201 {strides = array<i32>} : memref<32x290xbf16, #tpu.memory_space<vmem>>, vector<16x256xbf16>,
    %c16_142 = arith.constant 16 : index
    %c0_143 = arith.constant 0 : index
    %203 = vector.load %arg27[%c16_142, %c0_143] : memref<32x290xbf16, #tpu.memory_space<vmem>>, vector<16x256xbf16>
    %c0_i32_144 = arith.constant 0 : i32
    %204 = arith.sitofp %c0_i32_144 : i32 to bf16
    %205 = vector.shape_cast %21 : vector<1x256xi1> to vector<1x256xi1>
    %206 = vector.broadcast %205 : vector<1x256xi1> to vector<16x256xi1>
    %207 = vector.broadcast %204 : bf16 to vector<16x256xbf16>
    %208 = arith.select %206, %203, %207 : vector<16x256xi1>, vector<16x256xbf16>
    %c144_145 = arith.constant 144 : index
    %c0_146 = arith.constant 0 : index
    %209 = vector.load %arg28[%c144_145, %c0_146] : memref<288x256xbf16, #tpu.memory_space<vmem>>, vector<16x256xbf16>
    tpu.vector_store %arg28[%c144_145, %c0_146], %208 {strides = array<i32>} : memref<288x256xbf16, #tpu.memory_space<vmem>>, vector<16x256xbf16>,
    %c16_147 = arith.constant 16 : index
    %c1_148 = arith.constant 1 : index
    %210 = vector.load %arg27[%c16_147, %c1_148] : memref<32x290xbf16, #tpu.memory_space<vmem>>, vector<16x256xbf16>
    %c160_149 = arith.constant 160 : index
    %c0_150 = arith.constant 0 : index
    %211 = vector.load %arg28[%c160_149, %c0_150] : memref<288x256xbf16, #tpu.memory_space<vmem>>, vector<16x256xbf16>
    tpu.vector_store %arg28[%c160_149, %c0_150], %210 {strides = array<i32>} : memref<288x256xbf16, #tpu.memory_space<vmem>>, vector<16x256xbf16>,
    %c16_151 = arith.constant 16 : index
    %c2_152 = arith.constant 2 : index
    %212 = vector.load %arg27[%c16_151, %c2_152] : memref<32x290xbf16, #tpu.memory_space<vmem>>, vector<16x256xbf16>
    %c0_i32_153 = arith.constant 0 : i32
    %213 = arith.sitofp %c0_i32_153 : i32 to bf16
    %214 = vector.shape_cast %23 : vector<1x256xi1> to vector<1x256xi1>
    %215 = vector.broadcast %214 : vector<1x256xi1> to vector<16x256xi1>
    %216 = vector.broadcast %213 : bf16 to vector<16x256xbf16>
    %217 = arith.select %215, %212, %216 : vector<16x256xi1>, vector<16x256xbf16>
    %c176_154 = arith.constant 176 : index
    %c0_155 = arith.constant 0 : index
    %218 = vector.load %arg28[%c176_154, %c0_155] : memref<288x256xbf16, #tpu.memory_space<vmem>>, vector<16x256xbf16>
    tpu.vector_store %arg28[%c176_154, %c0_155], %217 {strides = array<i32>} : memref<288x256xbf16, #tpu.memory_space<vmem>>, vector<16x256xbf16>,
    %c16_156 = arith.constant 16 : index
    %c16_157 = arith.constant 16 : index
    %219 = vector.load %arg27[%c16_156, %c16_157] : memref<32x290xbf16, #tpu.memory_space<vmem>>, vector<16x256xbf16>
    %c0_i32_158 = arith.constant 0 : i32
    %220 = arith.sitofp %c0_i32_158 : i32 to bf16
    %221 = vector.shape_cast %21 : vector<1x256xi1> to vector<1x256xi1>
    %222 = vector.broadcast %221 : vector<1x256xi1> to vector<16x256xi1>
    %223 = vector.broadcast %220 : bf16 to vector<16x256xbf16>
    %224 = arith.select %222, %219, %223 : vector<16x256xi1>, vector<16x256xbf16>
    %c192_159 = arith.constant 192 : index
    %c0_160 = arith.constant 0 : index
    %225 = vector.load %arg28[%c192_159, %c0_160] : memref<288x256xbf16, #tpu.memory_space<vmem>>, vector<16x256xbf16>
    tpu.vector_store %arg28[%c192_159, %c0_160], %224 {strides = array<i32>} : memref<288x256xbf16, #tpu.memory_space<vmem>>, vector<16x256xbf16>,
    %c16_161 = arith.constant 16 : index
    %c17_162 = arith.constant 17 : index
    %226 = vector.load %arg27[%c16_161, %c17_162] : memref<32x290xbf16, #tpu.memory_space<vmem>>, vector<16x256xbf16>
    %c208_163 = arith.constant 208 : index
    %c0_164 = arith.constant 0 : index
    %227 = vector.load %arg28[%c208_163, %c0_164] : memref<288x256xbf16, #tpu.memory_space<vmem>>, vector<16x256xbf16>
    tpu.vector_store %arg28[%c208_163, %c0_164], %226 {strides = array<i32>} : memref<288x256xbf16, #tpu.memory_space<vmem>>, vector<16x256xbf16>,
    %c16_165 = arith.constant 16 : index
    %c18_166 = arith.constant 18 : index
    %228 = vector.load %arg27[%c16_165, %c18_166] : memref<32x290xbf16, #tpu.memory_space<vmem>>, vector<16x256xbf16>
    %c0_i32_167 = arith.constant 0 : i32
    %229 = arith.sitofp %c0_i32_167 : i32 to bf16
    %230 = vector.shape_cast %23 : vector<1x256xi1> to vector<1x256xi1>
    %231 = vector.broadcast %230 : vector<1x256xi1> to vector<16x256xi1>
    %232 = vector.broadcast %229 : bf16 to vector<16x256xbf16>
    %233 = arith.select %231, %228, %232 : vector<16x256xi1>, vector<16x256xbf16>
    %c224_168 = arith.constant 224 : index
    %c0_169 = arith.constant 0 : index
    %234 = vector.load %arg28[%c224_168, %c0_169] : memref<288x256xbf16, #tpu.memory_space<vmem>>, vector<16x256xbf16>
    tpu.vector_store %arg28[%c224_168, %c0_169], %233 {strides = array<i32>} : memref<288x256xbf16, #tpu.memory_space<vmem>>, vector<16x256xbf16>,
    %c16_170 = arith.constant 16 : index
    %c32_171 = arith.constant 32 : index
    %235 = vector.load %arg27[%c16_170, %c32_171] : memref<32x290xbf16, #tpu.memory_space<vmem>>, vector<16x256xbf16>
    %c0_i32_172 = arith.constant 0 : i32
    %236 = arith.sitofp %c0_i32_172 : i32 to bf16
    %237 = vector.shape_cast %21 : vector<1x256xi1> to vector<1x256xi1>
    %238 = vector.broadcast %237 : vector<1x256xi1> to vector<16x256xi1>
    %239 = vector.broadcast %236 : bf16 to vector<16x256xbf16>
    %240 = arith.select %238, %235, %239 : vector<16x256xi1>, vector<16x256xbf16>
    %c240_173 = arith.constant 240 : index
    %c0_174 = arith.constant 0 : index
    %241 = vector.load %arg28[%c240_173, %c0_174] : memref<288x256xbf16, #tpu.memory_space<vmem>>, vector<16x256xbf16>
    tpu.vector_store %arg28[%c240_173, %c0_174], %240 {strides = array<i32>} : memref<288x256xbf16, #tpu.memory_space<vmem>>, vector<16x256xbf16>,
    %c16_175 = arith.constant 16 : index
    %c33_176 = arith.constant 33 : index
    %242 = vector.load %arg27[%c16_175, %c33_176] : memref<32x290xbf16, #tpu.memory_space<vmem>>, vector<16x256xbf16>
    %c256_177 = arith.constant 256 : index
    %c0_178 = arith.constant 0 : index
    %243 = vector.load %arg28[%c256_177, %c0_178] : memref<288x256xbf16, #tpu.memory_space<vmem>>, vector<16x256xbf16>
    tpu.vector_store %arg28[%c256_177, %c0_178], %242 {strides = array<i32>} : memref<288x256xbf16, #tpu.memory_space<vmem>>, vector<16x256xbf16>,
    %c16_179 = arith.constant 16 : index
    %c34_180 = arith.constant 34 : index
    %244 = vector.load %arg27[%c16_179, %c34_180] : memref<32x290xbf16, #tpu.memory_space<vmem>>, vector<16x256xbf16>
    %c0_i32_181 = arith.constant 0 : i32
    %245 = arith.sitofp %c0_i32_181 : i32 to bf16
    %246 = vector.shape_cast %23 : vector<1x256xi1> to vector<1x256xi1>
    %247 = vector.broadcast %246 : vector<1x256xi1> to vector<16x256xi1>
    %248 = vector.broadcast %245 : bf16 to vector<16x256xbf16>
    %249 = arith.select %247, %244, %248 : vector<16x256xi1>, vector<16x256xbf16>
    %c272_182 = arith.constant 272 : index
    %c0_183 = arith.constant 0 : index
    %250 = vector.load %arg28[%c272_182, %c0_183] : memref<288x256xbf16, #tpu.memory_space<vmem>>, vector<16x256xbf16>
    tpu.vector_store %arg28[%c272_182, %c0_183], %249 {strides = array<i32>} : memref<288x256xbf16, #tpu.memory_space<vmem>>, vector<16x256xbf16>,
    %c0_184 = arith.constant 0 : index
    %c0_185 = arith.constant 0 : index
    %251 = vector.load %arg8[%c0_184, %c0_185] : memref<16x288xbf16, #tpu.memory_space<vmem>>, vector<16x288xbf16>
    %c0_186 = arith.constant 0 : index
    %c0_187 = arith.constant 0 : index
    %252 = vector.load %arg28[%c0_186, %c0_187] : memref<288x256xbf16, #tpu.memory_space<vmem>>, vector<288x256xbf16>
    %cst_188 = arith.constant dense<0.000000e+00> : vector<16x256xf32>
    %253 = tpu.matmul %251, %252, %cst_188 {dimension_numbers = #tpu.dot_dimension_numbers<[1], [0], [0], [1], [0, 0, 1, 1], [], []>} : vector<16x288xbf16>, vector<288x256xbf16>, vector<16x256xf32> -> vector<16x256xf32>
    %c0_189 = arith.constant 0 : index
    %c0_190 = arith.constant 0 : index
    %254 = vector.load %arg9[%c0_189, %c0_190] : memref<16x1xf32, #tpu.memory_space<vmem>>, vector<16x1xf32>
    %255 = vector.broadcast %254 : vector<16x1xf32> to vector<16x256xf32>
    %256 = arith.addf %253, %255 : vector<16x256xf32>
    %257 = math.tanh %256 : vector<16x256xf32>
    %cst_191 = arith.constant 1.000000e+00 : f32
    %258 = vector.broadcast %cst_191 : f32 to vector<16x256xf32>
    %259 = arith.subf %258, %198 : vector<16x256xf32>
    %260 = arith.mulf %27, %259 : vector<16x256xf32>
    %261 = arith.mulf %257, %198 : vector<16x256xf32>
    %262 = arith.addf %260, %261 : vector<16x256xf32>
    %263 = arith.truncf %262 : vector<16x256xf32> to vector<16x256xbf16>
    %c0_192 = arith.constant 0 : index
    %c17_193 = arith.constant 17 : index
    %264 = vector.load %arg27[%c0_192, %c17_193] : memref<32x290xbf16, #tpu.memory_space<vmem>>, vector<16x256xbf16>
    tpu.vector_store %arg27[%c0_192, %c17_193], %263 {strides = array<i32>} : memref<32x290xbf16, #tpu.memory_space<vmem>>, vector<16x256xbf16>,
    %c0_194 = arith.constant 0 : index
    %c0_195 = arith.constant 0 : index
    %265 = vector.load %arg27[%c0_194, %c0_195] : memref<32x290xbf16, #tpu.memory_space<vmem>>, vector<16x256xbf16>
    %c0_i32_196 = arith.constant 0 : i32
    %266 = arith.sitofp %c0_i32_196 : i32 to bf16
    %267 = vector.shape_cast %21 : vector<1x256xi1> to vector<1x256xi1>
    %268 = vector.broadcast %267 : vector<1x256xi1> to vector<16x256xi1>
    %269 = vector.broadcast %266 : bf16 to vector<16x256xbf16>
    %270 = arith.select %268, %265, %269 : vector<16x256xi1>, vector<16x256xbf16>
    %c0_197 = arith.constant 0 : index
    %c0_198 = arith.constant 0 : index
    %271 = vector.load %arg28[%c0_197, %c0_198] : memref<288x256xbf16, #tpu.memory_space<vmem>>, vector<16x256xbf16>
    tpu.vector_store %arg28[%c0_197, %c0_198], %270 {strides = array<i32>} : memref<288x256xbf16, #tpu.memory_space<vmem>>, vector<16x256xbf16>,
    %c0_199 = arith.constant 0 : index
    %c1_200 = arith.constant 1 : index
    %272 = vector.load %arg27[%c0_199, %c1_200] : memref<32x290xbf16, #tpu.memory_space<vmem>>, vector<16x256xbf16>
    %c16_201 = arith.constant 16 : index
    %c0_202 = arith.constant 0 : index
    %273 = vector.load %arg28[%c16_201, %c0_202] : memref<288x256xbf16, #tpu.memory_space<vmem>>, vector<16x256xbf16>
    tpu.vector_store %arg28[%c16_201, %c0_202], %272 {strides = array<i32>} : memref<288x256xbf16, #tpu.memory_space<vmem>>, vector<16x256xbf16>,
    %c0_203 = arith.constant 0 : index
    %c2_204 = arith.constant 2 : index
    %274 = vector.load %arg27[%c0_203, %c2_204] : memref<32x290xbf16, #tpu.memory_space<vmem>>, vector<16x256xbf16>
    %c0_i32_205 = arith.constant 0 : i32
    %275 = arith.sitofp %c0_i32_205 : i32 to bf16
    %276 = vector.shape_cast %23 : vector<1x256xi1> to vector<1x256xi1>
    %277 = vector.broadcast %276 : vector<1x256xi1> to vector<16x256xi1>
    %278 = vector.broadcast %275 : bf16 to vector<16x256xbf16>
    %279 = arith.select %277, %274, %278 : vector<16x256xi1>, vector<16x256xbf16>
    %c32_206 = arith.constant 32 : index
    %c0_207 = arith.constant 0 : index
    %280 = vector.load %arg28[%c32_206, %c0_207] : memref<288x256xbf16, #tpu.memory_space<vmem>>, vector<16x256xbf16>
    tpu.vector_store %arg28[%c32_206, %c0_207], %279 {strides = array<i32>} : memref<288x256xbf16, #tpu.memory_space<vmem>>, vector<16x256xbf16>,
    %c0_208 = arith.constant 0 : index
    %c16_209 = arith.constant 16 : index
    %281 = vector.load %arg27[%c0_208, %c16_209] : memref<32x290xbf16, #tpu.memory_space<vmem>>, vector<16x256xbf16>
    %c0_i32_210 = arith.constant 0 : i32
    %282 = arith.sitofp %c0_i32_210 : i32 to bf16
    %283 = vector.shape_cast %21 : vector<1x256xi1> to vector<1x256xi1>
    %284 = vector.broadcast %283 : vector<1x256xi1> to vector<16x256xi1>
    %285 = vector.broadcast %282 : bf16 to vector<16x256xbf16>
    %286 = arith.select %284, %281, %285 : vector<16x256xi1>, vector<16x256xbf16>
    %c48_211 = arith.constant 48 : index
    %c0_212 = arith.constant 0 : index
    %287 = vector.load %arg28[%c48_211, %c0_212] : memref<288x256xbf16, #tpu.memory_space<vmem>>, vector<16x256xbf16>
    tpu.vector_store %arg28[%c48_211, %c0_212], %286 {strides = array<i32>} : memref<288x256xbf16, #tpu.memory_space<vmem>>, vector<16x256xbf16>,
    %c0_213 = arith.constant 0 : index
    %c17_214 = arith.constant 17 : index
    %288 = vector.load %arg27[%c0_213, %c17_214] : memref<32x290xbf16, #tpu.memory_space<vmem>>, vector<16x256xbf16>
    %c64_215 = arith.constant 64 : index
    %c0_216 = arith.constant 0 : index
    %289 = vector.load %arg28[%c64_215, %c0_216] : memref<288x256xbf16, #tpu.memory_space<vmem>>, vector<16x256xbf16>
    tpu.vector_store %arg28[%c64_215, %c0_216], %288 {strides = array<i32>} : memref<288x256xbf16, #tpu.memory_space<vmem>>, vector<16x256xbf16>,
    %c0_217 = arith.constant 0 : index
    %c18_218 = arith.constant 18 : index
    %290 = vector.load %arg27[%c0_217, %c18_218] : memref<32x290xbf16, #tpu.memory_space<vmem>>, vector<16x256xbf16>
    %c0_i32_219 = arith.constant 0 : i32
    %291 = arith.sitofp %c0_i32_219 : i32 to bf16
    %292 = vector.shape_cast %23 : vector<1x256xi1> to vector<1x256xi1>
    %293 = vector.broadcast %292 : vector<1x256xi1> to vector<16x256xi1>
    %294 = vector.broadcast %291 : bf16 to vector<16x256xbf16>
    %295 = arith.select %293, %290, %294 : vector<16x256xi1>, vector<16x256xbf16>
    %c80_220 = arith.constant 80 : index
    %c0_221 = arith.constant 0 : index
    %296 = vector.load %arg28[%c80_220, %c0_221] : memref<288x256xbf16, #tpu.memory_space<vmem>>, vector<16x256xbf16>
    tpu.vector_store %arg28[%c80_220, %c0_221], %295 {strides = array<i32>} : memref<288x256xbf16, #tpu.memory_space<vmem>>, vector<16x256xbf16>,
    %c0_222 = arith.constant 0 : index
    %c32_223 = arith.constant 32 : index
    %297 = vector.load %arg27[%c0_222, %c32_223] : memref<32x290xbf16, #tpu.memory_space<vmem>>, vector<16x256xbf16>
    %c0_i32_224 = arith.constant 0 : i32
    %298 = arith.sitofp %c0_i32_224 : i32 to bf16
    %299 = vector.shape_cast %21 : vector<1x256xi1> to vector<1x256xi1>
    %300 = vector.broadcast %299 : vector<1x256xi1> to vector<16x256xi1>
    %301 = vector.broadcast %298 : bf16 to vector<16x256xbf16>
    %302 = arith.select %300, %297, %301 : vector<16x256xi1>, vector<16x256xbf16>
    %c96_225 = arith.constant 96 : index
    %c0_226 = arith.constant 0 : index
    %303 = vector.load %arg28[%c96_225, %c0_226] : memref<288x256xbf16, #tpu.memory_space<vmem>>, vector<16x256xbf16>
    tpu.vector_store %arg28[%c96_225, %c0_226], %302 {strides = array<i32>} : memref<288x256xbf16, #tpu.memory_space<vmem>>, vector<16x256xbf16>,
    %c0_227 = arith.constant 0 : index
    %c33_228 = arith.constant 33 : index
    %304 = vector.load %arg27[%c0_227, %c33_228] : memref<32x290xbf16, #tpu.memory_space<vmem>>, vector<16x256xbf16>
    %c112_229 = arith.constant 112 : index
    %c0_230 = arith.constant 0 : index
    %305 = vector.load %arg28[%c112_229, %c0_230] : memref<288x256xbf16, #tpu.memory_space<vmem>>, vector<16x256xbf16>
    tpu.vector_store %arg28[%c112_229, %c0_230], %304 {strides = array<i32>} : memref<288x256xbf16, #tpu.memory_space<vmem>>, vector<16x256xbf16>,
    %c0_231 = arith.constant 0 : index
    %c34_232 = arith.constant 34 : index
    %306 = vector.load %arg27[%c0_231, %c34_232] : memref<32x290xbf16, #tpu.memory_space<vmem>>, vector<16x256xbf16>
    %c0_i32_233 = arith.constant 0 : i32
    %307 = arith.sitofp %c0_i32_233 : i32 to bf16
    %308 = vector.shape_cast %23 : vector<1x256xi1> to vector<1x256xi1>
    %309 = vector.broadcast %308 : vector<1x256xi1> to vector<16x256xi1>
    %310 = vector.broadcast %307 : bf16 to vector<16x256xbf16>
    %311 = arith.select %309, %306, %310 : vector<16x256xi1>, vector<16x256xbf16>
    %c128_234 = arith.constant 128 : index
    %c0_235 = arith.constant 0 : index
    %312 = vector.load %arg28[%c128_234, %c0_235] : memref<288x256xbf16, #tpu.memory_space<vmem>>, vector<16x256xbf16>
    tpu.vector_store %arg28[%c128_234, %c0_235], %311 {strides = array<i32>} : memref<288x256xbf16, #tpu.memory_space<vmem>>, vector<16x256xbf16>,
    %c0_236 = arith.constant 0 : index
    %c0_237 = arith.constant 0 : index
    %313 = vector.load %arg10[%c0_236, %c0_237] : memref<16x144xbf16, #tpu.memory_space<vmem>>, vector<16x144xbf16>
    %c0_238 = arith.constant 0 : index
    %c0_239 = arith.constant 0 : index
    %314 = vector.load %arg28[%c0_238, %c0_239] : memref<288x256xbf16, #tpu.memory_space<vmem>>, vector<144x256xbf16>
    %cst_240 = arith.constant dense<0.000000e+00> : vector<16x256xf32>
    %315 = tpu.matmul %313, %314, %cst_240 {dimension_numbers = #tpu.dot_dimension_numbers<[1], [0], [0], [1], [0, 0, 1, 1], [], []>} : vector<16x144xbf16>, vector<144x256xbf16>, vector<16x256xf32> -> vector<16x256xf32>
    %c0_241 = arith.constant 0 : index
    %c0_242 = arith.constant 0 : index
    %316 = vector.load %arg11[%c0_241, %c0_242] : memref<16x1xf32, #tpu.memory_space<vmem>>, vector<16x1xf32>
    %317 = vector.broadcast %316 : vector<16x1xf32> to vector<16x256xf32>
    %318 = arith.addf %315, %317 : vector<16x256xf32>
    %cst_243 = arith.constant 0.000000e+00 : f32
    %319 = vector.broadcast %cst_243 : f32 to vector<16x256xf32>
    %320 = arith.maximumf %318, %319 : vector<16x256xf32>
    %321 = arith.truncf %320 : vector<16x256xf32> to vector<16x256xbf16>
    %c0_244 = arith.constant 0 : index
    %c17_245 = arith.constant 17 : index
    %322 = vector.load %arg27[%c0_244, %c17_245] : memref<32x290xbf16, #tpu.memory_space<vmem>>, vector<16x256xbf16>
    tpu.vector_store %arg27[%c0_244, %c17_245], %321 {strides = array<i32>} : memref<32x290xbf16, #tpu.memory_space<vmem>>, vector<16x256xbf16>,
    %c0_246 = arith.constant 0 : index
    %c0_247 = arith.constant 0 : index
    %323 = vector.load %arg27[%c0_246, %c0_247] : memref<32x290xbf16, #tpu.memory_space<vmem>>, vector<16x256xbf16>
    %c0_i32_248 = arith.constant 0 : i32
    %324 = arith.sitofp %c0_i32_248 : i32 to bf16
    %325 = vector.shape_cast %21 : vector<1x256xi1> to vector<1x256xi1>
    %326 = vector.broadcast %325 : vector<1x256xi1> to vector<16x256xi1>
    %327 = vector.broadcast %324 : bf16 to vector<16x256xbf16>
    %328 = arith.select %326, %323, %327 : vector<16x256xi1>, vector<16x256xbf16>
    %c0_249 = arith.constant 0 : index
    %c0_250 = arith.constant 0 : index
    %329 = vector.load %arg28[%c0_249, %c0_250] : memref<288x256xbf16, #tpu.memory_space<vmem>>, vector<16x256xbf16>
    tpu.vector_store %arg28[%c0_249, %c0_250], %328 {strides = array<i32>} : memref<288x256xbf16, #tpu.memory_space<vmem>>, vector<16x256xbf16>,
    %c0_251 = arith.constant 0 : index
    %c1_252 = arith.constant 1 : index
    %330 = vector.load %arg27[%c0_251, %c1_252] : memref<32x290xbf16, #tpu.memory_space<vmem>>, vector<16x256xbf16>
    %c16_253 = arith.constant 16 : index
    %c0_254 = arith.constant 0 : index
    %331 = vector.load %arg28[%c16_253, %c0_254] : memref<288x256xbf16, #tpu.memory_space<vmem>>, vector<16x256xbf16>
    tpu.vector_store %arg28[%c16_253, %c0_254], %330 {strides = array<i32>} : memref<288x256xbf16, #tpu.memory_space<vmem>>, vector<16x256xbf16>,
    %c0_255 = arith.constant 0 : index
    %c2_256 = arith.constant 2 : index
    %332 = vector.load %arg27[%c0_255, %c2_256] : memref<32x290xbf16, #tpu.memory_space<vmem>>, vector<16x256xbf16>
    %c0_i32_257 = arith.constant 0 : i32
    %333 = arith.sitofp %c0_i32_257 : i32 to bf16
    %334 = vector.shape_cast %23 : vector<1x256xi1> to vector<1x256xi1>
    %335 = vector.broadcast %334 : vector<1x256xi1> to vector<16x256xi1>
    %336 = vector.broadcast %333 : bf16 to vector<16x256xbf16>
    %337 = arith.select %335, %332, %336 : vector<16x256xi1>, vector<16x256xbf16>
    %c32_258 = arith.constant 32 : index
    %c0_259 = arith.constant 0 : index
    %338 = vector.load %arg28[%c32_258, %c0_259] : memref<288x256xbf16, #tpu.memory_space<vmem>>, vector<16x256xbf16>
    tpu.vector_store %arg28[%c32_258, %c0_259], %337 {strides = array<i32>} : memref<288x256xbf16, #tpu.memory_space<vmem>>, vector<16x256xbf16>,
    %c0_260 = arith.constant 0 : index
    %c16_261 = arith.constant 16 : index
    %339 = vector.load %arg27[%c0_260, %c16_261] : memref<32x290xbf16, #tpu.memory_space<vmem>>, vector<16x256xbf16>
    %c0_i32_262 = arith.constant 0 : i32
    %340 = arith.sitofp %c0_i32_262 : i32 to bf16
    %341 = vector.shape_cast %21 : vector<1x256xi1> to vector<1x256xi1>
    %342 = vector.broadcast %341 : vector<1x256xi1> to vector<16x256xi1>
    %343 = vector.broadcast %340 : bf16 to vector<16x256xbf16>
    %344 = arith.select %342, %339, %343 : vector<16x256xi1>, vector<16x256xbf16>
    %c48_263 = arith.constant 48 : index
    %c0_264 = arith.constant 0 : index
    %345 = vector.load %arg28[%c48_263, %c0_264] : memref<288x256xbf16, #tpu.memory_space<vmem>>, vector<16x256xbf16>
    tpu.vector_store %arg28[%c48_263, %c0_264], %344 {strides = array<i32>} : memref<288x256xbf16, #tpu.memory_space<vmem>>, vector<16x256xbf16>,
    %c0_265 = arith.constant 0 : index
    %c17_266 = arith.constant 17 : index
    %346 = vector.load %arg27[%c0_265, %c17_266] : memref<32x290xbf16, #tpu.memory_space<vmem>>, vector<16x256xbf16>
    %c64_267 = arith.constant 64 : index
    %c0_268 = arith.constant 0 : index
    %347 = vector.load %arg28[%c64_267, %c0_268] : memref<288x256xbf16, #tpu.memory_space<vmem>>, vector<16x256xbf16>
    tpu.vector_store %arg28[%c64_267, %c0_268], %346 {strides = array<i32>} : memref<288x256xbf16, #tpu.memory_space<vmem>>, vector<16x256xbf16>,
    %c0_269 = arith.constant 0 : index
    %c18_270 = arith.constant 18 : index
    %348 = vector.load %arg27[%c0_269, %c18_270] : memref<32x290xbf16, #tpu.memory_space<vmem>>, vector<16x256xbf16>
    %c0_i32_271 = arith.constant 0 : i32
    %349 = arith.sitofp %c0_i32_271 : i32 to bf16
    %350 = vector.shape_cast %23 : vector<1x256xi1> to vector<1x256xi1>
    %351 = vector.broadcast %350 : vector<1x256xi1> to vector<16x256xi1>
    %352 = vector.broadcast %349 : bf16 to vector<16x256xbf16>
    %353 = arith.select %351, %348, %352 : vector<16x256xi1>, vector<16x256xbf16>
    %c80_272 = arith.constant 80 : index
    %c0_273 = arith.constant 0 : index
    %354 = vector.load %arg28[%c80_272, %c0_273] : memref<288x256xbf16, #tpu.memory_space<vmem>>, vector<16x256xbf16>
    tpu.vector_store %arg28[%c80_272, %c0_273], %353 {strides = array<i32>} : memref<288x256xbf16, #tpu.memory_space<vmem>>, vector<16x256xbf16>,
    %c0_274 = arith.constant 0 : index
    %c32_275 = arith.constant 32 : index
    %355 = vector.load %arg27[%c0_274, %c32_275] : memref<32x290xbf16, #tpu.memory_space<vmem>>, vector<16x256xbf16>
    %c0_i32_276 = arith.constant 0 : i32
    %356 = arith.sitofp %c0_i32_276 : i32 to bf16
    %357 = vector.shape_cast %21 : vector<1x256xi1> to vector<1x256xi1>
    %358 = vector.broadcast %357 : vector<1x256xi1> to vector<16x256xi1>
    %359 = vector.broadcast %356 : bf16 to vector<16x256xbf16>
    %360 = arith.select %358, %355, %359 : vector<16x256xi1>, vector<16x256xbf16>
    %c96_277 = arith.constant 96 : index
    %c0_278 = arith.constant 0 : index
    %361 = vector.load %arg28[%c96_277, %c0_278] : memref<288x256xbf16, #tpu.memory_space<vmem>>, vector<16x256xbf16>
    tpu.vector_store %arg28[%c96_277, %c0_278], %360 {strides = array<i32>} : memref<288x256xbf16, #tpu.memory_space<vmem>>, vector<16x256xbf16>,
    %c0_279 = arith.constant 0 : index
    %c33_280 = arith.constant 33 : index
    %362 = vector.load %arg27[%c0_279, %c33_280] : memref<32x290xbf16, #tpu.memory_space<vmem>>, vector<16x256xbf16>
    %c112_281 = arith.constant 112 : index
    %c0_282 = arith.constant 0 : index
    %363 = vector.load %arg28[%c112_281, %c0_282] : memref<288x256xbf16, #tpu.memory_space<vmem>>, vector<16x256xbf16>
    tpu.vector_store %arg28[%c112_281, %c0_282], %362 {strides = array<i32>} : memref<288x256xbf16, #tpu.memory_space<vmem>>, vector<16x256xbf16>,
    %c0_283 = arith.constant 0 : index
    %c34_284 = arith.constant 34 : index
    %364 = vector.load %arg27[%c0_283, %c34_284] : memref<32x290xbf16, #tpu.memory_space<vmem>>, vector<16x256xbf16>
    %c0_i32_285 = arith.constant 0 : i32
    %365 = arith.sitofp %c0_i32_285 : i32 to bf16
    %366 = vector.shape_cast %23 : vector<1x256xi1> to vector<1x256xi1>
    %367 = vector.broadcast %366 : vector<1x256xi1> to vector<16x256xi1>
    %368 = vector.broadcast %365 : bf16 to vector<16x256xbf16>
    %369 = arith.select %367, %364, %368 : vector<16x256xi1>, vector<16x256xbf16>
    %c128_286 = arith.constant 128 : index
    %c0_287 = arith.constant 0 : index
    %370 = vector.load %arg28[%c128_286, %c0_287] : memref<288x256xbf16, #tpu.memory_space<vmem>>, vector<16x256xbf16>
    tpu.vector_store %arg28[%c128_286, %c0_287], %369 {strides = array<i32>} : memref<288x256xbf16, #tpu.memory_space<vmem>>, vector<16x256xbf16>,
    %c0_288 = arith.constant 0 : index
    %c0_289 = arith.constant 0 : index
    %371 = vector.load %arg12[%c0_288, %c0_289] : memref<16x144xbf16, #tpu.memory_space<vmem>>, vector<16x144xbf16>
    %c0_290 = arith.constant 0 : index
    %c0_291 = arith.constant 0 : index
    %372 = vector.load %arg28[%c0_290, %c0_291] : memref<288x256xbf16, #tpu.memory_space<vmem>>, vector<144x256xbf16>
    %cst_292 = arith.constant dense<0.000000e+00> : vector<16x256xf32>
    %373 = tpu.matmul %371, %372, %cst_292 {dimension_numbers = #tpu.dot_dimension_numbers<[1], [0], [0], [1], [0, 0, 1, 1], [], []>} : vector<16x144xbf16>, vector<144x256xbf16>, vector<16x256xf32> -> vector<16x256xf32>
    %c0_293 = arith.constant 0 : index
    %c0_294 = arith.constant 0 : index
    %374 = vector.load %arg13[%c0_293, %c0_294] : memref<16x1xf32, #tpu.memory_space<vmem>>, vector<16x1xf32>
    %375 = vector.broadcast %374 : vector<16x1xf32> to vector<16x256xf32>
    %376 = arith.addf %373, %375 : vector<16x256xf32>
    %377 = arith.addf %376, %262 : vector<16x256xf32>
    %cst_295 = arith.constant 0.000000e+00 : f32
    %378 = vector.broadcast %cst_295 : f32 to vector<16x256xf32>
    %379 = arith.maximumf %377, %378 : vector<16x256xf32>
    %380 = arith.truncf %379 : vector<16x256xf32> to vector<16x256xbf16>
    %c0_296 = arith.constant 0 : index
    %c17_297 = arith.constant 17 : index
    %381 = vector.load %arg27[%c0_296, %c17_297] : memref<32x290xbf16, #tpu.memory_space<vmem>>, vector<16x256xbf16>
    tpu.vector_store %arg27[%c0_296, %c17_297], %380 {strides = array<i32>} : memref<32x290xbf16, #tpu.memory_space<vmem>>, vector<16x256xbf16>,
    %382 = arith.truncf %29 : vector<16x256xf32> to vector<16x256xbf16>
    %c16_298 = arith.constant 16 : index
    %c17_299 = arith.constant 17 : index
    %383 = vector.load %arg27[%c16_298, %c17_299] : memref<32x290xbf16, #tpu.memory_space<vmem>>, vector<16x256xbf16>
    tpu.vector_store %arg27[%c16_298, %c17_299], %382 {strides = array<i32>} : memref<32x290xbf16, #tpu.memory_space<vmem>>, vector<16x256xbf16>,
    %c0_300 = arith.constant 0 : index
    %c0_301 = arith.constant 0 : index
    %384 = vector.load %arg27[%c0_300, %c0_301] : memref<32x290xbf16, #tpu.memory_space<vmem>>, vector<16x256xbf16>
    %c0_i32_302 = arith.constant 0 : i32
    %385 = arith.sitofp %c0_i32_302 : i32 to bf16
    %386 = vector.shape_cast %21 : vector<1x256xi1> to vector<1x256xi1>
    %387 = vector.broadcast %386 : vector<1x256xi1> to vector<16x256xi1>
    %388 = vector.broadcast %385 : bf16 to vector<16x256xbf16>
    %389 = arith.select %387, %384, %388 : vector<16x256xi1>, vector<16x256xbf16>
    %c0_303 = arith.constant 0 : index
    %c0_304 = arith.constant 0 : index
    %390 = vector.load %arg28[%c0_303, %c0_304] : memref<288x256xbf16, #tpu.memory_space<vmem>>, vector<16x256xbf16>
    tpu.vector_store %arg28[%c0_303, %c0_304], %389 {strides = array<i32>} : memref<288x256xbf16, #tpu.memory_space<vmem>>, vector<16x256xbf16>,
    %c0_305 = arith.constant 0 : index
    %c1_306 = arith.constant 1 : index
    %391 = vector.load %arg27[%c0_305, %c1_306] : memref<32x290xbf16, #tpu.memory_space<vmem>>, vector<16x256xbf16>
    %c16_307 = arith.constant 16 : index
    %c0_308 = arith.constant 0 : index
    %392 = vector.load %arg28[%c16_307, %c0_308] : memref<288x256xbf16, #tpu.memory_space<vmem>>, vector<16x256xbf16>
    tpu.vector_store %arg28[%c16_307, %c0_308], %391 {strides = array<i32>} : memref<288x256xbf16, #tpu.memory_space<vmem>>, vector<16x256xbf16>,
    %c0_309 = arith.constant 0 : index
    %c2_310 = arith.constant 2 : index
    %393 = vector.load %arg27[%c0_309, %c2_310] : memref<32x290xbf16, #tpu.memory_space<vmem>>, vector<16x256xbf16>
    %c0_i32_311 = arith.constant 0 : i32
    %394 = arith.sitofp %c0_i32_311 : i32 to bf16
    %395 = vector.shape_cast %23 : vector<1x256xi1> to vector<1x256xi1>
    %396 = vector.broadcast %395 : vector<1x256xi1> to vector<16x256xi1>
    %397 = vector.broadcast %394 : bf16 to vector<16x256xbf16>
    %398 = arith.select %396, %393, %397 : vector<16x256xi1>, vector<16x256xbf16>
    %c32_312 = arith.constant 32 : index
    %c0_313 = arith.constant 0 : index
    %399 = vector.load %arg28[%c32_312, %c0_313] : memref<288x256xbf16, #tpu.memory_space<vmem>>, vector<16x256xbf16>
    tpu.vector_store %arg28[%c32_312, %c0_313], %398 {strides = array<i32>} : memref<288x256xbf16, #tpu.memory_space<vmem>>, vector<16x256xbf16>,
    %c0_314 = arith.constant 0 : index
    %c16_315 = arith.constant 16 : index
    %400 = vector.load %arg27[%c0_314, %c16_315] : memref<32x290xbf16, #tpu.memory_space<vmem>>, vector<16x256xbf16>
    %c0_i32_316 = arith.constant 0 : i32
    %401 = arith.sitofp %c0_i32_316 : i32 to bf16
    %402 = vector.shape_cast %21 : vector<1x256xi1> to vector<1x256xi1>
    %403 = vector.broadcast %402 : vector<1x256xi1> to vector<16x256xi1>
    %404 = vector.broadcast %401 : bf16 to vector<16x256xbf16>
    %405 = arith.select %403, %400, %404 : vector<16x256xi1>, vector<16x256xbf16>
    %c48_317 = arith.constant 48 : index
    %c0_318 = arith.constant 0 : index
    %406 = vector.load %arg28[%c48_317, %c0_318] : memref<288x256xbf16, #tpu.memory_space<vmem>>, vector<16x256xbf16>
    tpu.vector_store %arg28[%c48_317, %c0_318], %405 {strides = array<i32>} : memref<288x256xbf16, #tpu.memory_space<vmem>>, vector<16x256xbf16>,
    %c0_319 = arith.constant 0 : index
    %c17_320 = arith.constant 17 : index
    %407 = vector.load %arg27[%c0_319, %c17_320] : memref<32x290xbf16, #tpu.memory_space<vmem>>, vector<16x256xbf16>
    %c64_321 = arith.constant 64 : index
    %c0_322 = arith.constant 0 : index
    %408 = vector.load %arg28[%c64_321, %c0_322] : memref<288x256xbf16, #tpu.memory_space<vmem>>, vector<16x256xbf16>
    tpu.vector_store %arg28[%c64_321, %c0_322], %407 {strides = array<i32>} : memref<288x256xbf16, #tpu.memory_space<vmem>>, vector<16x256xbf16>,
    %c0_323 = arith.constant 0 : index
    %c18_324 = arith.constant 18 : index
    %409 = vector.load %arg27[%c0_323, %c18_324] : memref<32x290xbf16, #tpu.memory_space<vmem>>, vector<16x256xbf16>
    %c0_i32_325 = arith.constant 0 : i32
    %410 = arith.sitofp %c0_i32_325 : i32 to bf16
    %411 = vector.shape_cast %23 : vector<1x256xi1> to vector<1x256xi1>
    %412 = vector.broadcast %411 : vector<1x256xi1> to vector<16x256xi1>
    %413 = vector.broadcast %410 : bf16 to vector<16x256xbf16>
    %414 = arith.select %412, %409, %413 : vector<16x256xi1>, vector<16x256xbf16>
    %c80_326 = arith.constant 80 : index
    %c0_327 = arith.constant 0 : index
    %415 = vector.load %arg28[%c80_326, %c0_327] : memref<288x256xbf16, #tpu.memory_space<vmem>>, vector<16x256xbf16>
    tpu.vector_store %arg28[%c80_326, %c0_327], %414 {strides = array<i32>} : memref<288x256xbf16, #tpu.memory_space<vmem>>, vector<16x256xbf16>,
    %c0_328 = arith.constant 0 : index
    %c32_329 = arith.constant 32 : index
    %416 = vector.load %arg27[%c0_328, %c32_329] : memref<32x290xbf16, #tpu.memory_space<vmem>>, vector<16x256xbf16>
    %c0_i32_330 = arith.constant 0 : i32
    %417 = arith.sitofp %c0_i32_330 : i32 to bf16
    %418 = vector.shape_cast %21 : vector<1x256xi1> to vector<1x256xi1>
    %419 = vector.broadcast %418 : vector<1x256xi1> to vector<16x256xi1>
    %420 = vector.broadcast %417 : bf16 to vector<16x256xbf16>
    %421 = arith.select %419, %416, %420 : vector<16x256xi1>, vector<16x256xbf16>
    %c96_331 = arith.constant 96 : index
    %c0_332 = arith.constant 0 : index
    %422 = vector.load %arg28[%c96_331, %c0_332] : memref<288x256xbf16, #tpu.memory_space<vmem>>, vector<16x256xbf16>
    tpu.vector_store %arg28[%c96_331, %c0_332], %421 {strides = array<i32>} : memref<288x256xbf16, #tpu.memory_space<vmem>>, vector<16x256xbf16>,
    %c0_333 = arith.constant 0 : index
    %c33_334 = arith.constant 33 : index
    %423 = vector.load %arg27[%c0_333, %c33_334] : memref<32x290xbf16, #tpu.memory_space<vmem>>, vector<16x256xbf16>
    %c112_335 = arith.constant 112 : index
    %c0_336 = arith.constant 0 : index
    %424 = vector.load %arg28[%c112_335, %c0_336] : memref<288x256xbf16, #tpu.memory_space<vmem>>, vector<16x256xbf16>
    tpu.vector_store %arg28[%c112_335, %c0_336], %423 {strides = array<i32>} : memref<288x256xbf16, #tpu.memory_space<vmem>>, vector<16x256xbf16>,
    %c0_337 = arith.constant 0 : index
    %c34_338 = arith.constant 34 : index
    %425 = vector.load %arg27[%c0_337, %c34_338] : memref<32x290xbf16, #tpu.memory_space<vmem>>, vector<16x256xbf16>
    %c0_i32_339 = arith.constant 0 : i32
    %426 = arith.sitofp %c0_i32_339 : i32 to bf16
    %427 = vector.shape_cast %23 : vector<1x256xi1> to vector<1x256xi1>
    %428 = vector.broadcast %427 : vector<1x256xi1> to vector<16x256xi1>
    %429 = vector.broadcast %426 : bf16 to vector<16x256xbf16>
    %430 = arith.select %428, %425, %429 : vector<16x256xi1>, vector<16x256xbf16>
    %c128_340 = arith.constant 128 : index
    %c0_341 = arith.constant 0 : index
    %431 = vector.load %arg28[%c128_340, %c0_341] : memref<288x256xbf16, #tpu.memory_space<vmem>>, vector<16x256xbf16>
    tpu.vector_store %arg28[%c128_340, %c0_341], %430 {strides = array<i32>} : memref<288x256xbf16, #tpu.memory_space<vmem>>, vector<16x256xbf16>,
    %c16_342 = arith.constant 16 : index
    %c0_343 = arith.constant 0 : index
    %432 = vector.load %arg27[%c16_342, %c0_343] : memref<32x290xbf16, #tpu.memory_space<vmem>>, vector<16x256xbf16>
    %c0_i32_344 = arith.constant 0 : i32
    %433 = arith.sitofp %c0_i32_344 : i32 to bf16
    %434 = vector.shape_cast %21 : vector<1x256xi1> to vector<1x256xi1>
    %435 = vector.broadcast %434 : vector<1x256xi1> to vector<16x256xi1>
    %436 = vector.broadcast %433 : bf16 to vector<16x256xbf16>
    %437 = arith.select %435, %432, %436 : vector<16x256xi1>, vector<16x256xbf16>
    %c144_345 = arith.constant 144 : index
    %c0_346 = arith.constant 0 : index
    %438 = vector.load %arg28[%c144_345, %c0_346] : memref<288x256xbf16, #tpu.memory_space<vmem>>, vector<16x256xbf16>
    tpu.vector_store %arg28[%c144_345, %c0_346], %437 {strides = array<i32>} : memref<288x256xbf16, #tpu.memory_space<vmem>>, vector<16x256xbf16>,
    %c16_347 = arith.constant 16 : index
    %c1_348 = arith.constant 1 : index
    %439 = vector.load %arg27[%c16_347, %c1_348] : memref<32x290xbf16, #tpu.memory_space<vmem>>, vector<16x256xbf16>
    %c160_349 = arith.constant 160 : index
    %c0_350 = arith.constant 0 : index
    %440 = vector.load %arg28[%c160_349, %c0_350] : memref<288x256xbf16, #tpu.memory_space<vmem>>, vector<16x256xbf16>
    tpu.vector_store %arg28[%c160_349, %c0_350], %439 {strides = array<i32>} : memref<288x256xbf16, #tpu.memory_space<vmem>>, vector<16x256xbf16>,
    %c16_351 = arith.constant 16 : index
    %c2_352 = arith.constant 2 : index
    %441 = vector.load %arg27[%c16_351, %c2_352] : memref<32x290xbf16, #tpu.memory_space<vmem>>, vector<16x256xbf16>
    %c0_i32_353 = arith.constant 0 : i32
    %442 = arith.sitofp %c0_i32_353 : i32 to bf16
    %443 = vector.shape_cast %23 : vector<1x256xi1> to vector<1x256xi1>
    %444 = vector.broadcast %443 : vector<1x256xi1> to vector<16x256xi1>
    %445 = vector.broadcast %442 : bf16 to vector<16x256xbf16>
    %446 = arith.select %444, %441, %445 : vector<16x256xi1>, vector<16x256xbf16>
    %c176_354 = arith.constant 176 : index
    %c0_355 = arith.constant 0 : index
    %447 = vector.load %arg28[%c176_354, %c0_355] : memref<288x256xbf16, #tpu.memory_space<vmem>>, vector<16x256xbf16>
    tpu.vector_store %arg28[%c176_354, %c0_355], %446 {strides = array<i32>} : memref<288x256xbf16, #tpu.memory_space<vmem>>, vector<16x256xbf16>,
    %c16_356 = arith.constant 16 : index
    %c16_357 = arith.constant 16 : index
    %448 = vector.load %arg27[%c16_356, %c16_357] : memref<32x290xbf16, #tpu.memory_space<vmem>>, vector<16x256xbf16>
    %c0_i32_358 = arith.constant 0 : i32
    %449 = arith.sitofp %c0_i32_358 : i32 to bf16
    %450 = vector.shape_cast %21 : vector<1x256xi1> to vector<1x256xi1>
    %451 = vector.broadcast %450 : vector<1x256xi1> to vector<16x256xi1>
    %452 = vector.broadcast %449 : bf16 to vector<16x256xbf16>
    %453 = arith.select %451, %448, %452 : vector<16x256xi1>, vector<16x256xbf16>
    %c192_359 = arith.constant 192 : index
    %c0_360 = arith.constant 0 : index
    %454 = vector.load %arg28[%c192_359, %c0_360] : memref<288x256xbf16, #tpu.memory_space<vmem>>, vector<16x256xbf16>
    tpu.vector_store %arg28[%c192_359, %c0_360], %453 {strides = array<i32>} : memref<288x256xbf16, #tpu.memory_space<vmem>>, vector<16x256xbf16>,
    %c16_361 = arith.constant 16 : index
    %c17_362 = arith.constant 17 : index
    %455 = vector.load %arg27[%c16_361, %c17_362] : memref<32x290xbf16, #tpu.memory_space<vmem>>, vector<16x256xbf16>
    %c208_363 = arith.constant 208 : index
    %c0_364 = arith.constant 0 : index
    %456 = vector.load %arg28[%c208_363, %c0_364] : memref<288x256xbf16, #tpu.memory_space<vmem>>, vector<16x256xbf16>
    tpu.vector_store %arg28[%c208_363, %c0_364], %455 {strides = array<i32>} : memref<288x256xbf16, #tpu.memory_space<vmem>>, vector<16x256xbf16>,
    %c16_365 = arith.constant 16 : index
    %c18_366 = arith.constant 18 : index
    %457 = vector.load %arg27[%c16_365, %c18_366] : memref<32x290xbf16, #tpu.memory_space<vmem>>, vector<16x256xbf16>
    %c0_i32_367 = arith.constant 0 : i32
    %458 = arith.sitofp %c0_i32_367 : i32 to bf16
    %459 = vector.shape_cast %23 : vector<1x256xi1> to vector<1x256xi1>
    %460 = vector.broadcast %459 : vector<1x256xi1> to vector<16x256xi1>
    %461 = vector.broadcast %458 : bf16 to vector<16x256xbf16>
    %462 = arith.select %460, %457, %461 : vector<16x256xi1>, vector<16x256xbf16>
    %c224_368 = arith.constant 224 : index
    %c0_369 = arith.constant 0 : index
    %463 = vector.load %arg28[%c224_368, %c0_369] : memref<288x256xbf16, #tpu.memory_space<vmem>>, vector<16x256xbf16>
    tpu.vector_store %arg28[%c224_368, %c0_369], %462 {strides = array<i32>} : memref<288x256xbf16, #tpu.memory_space<vmem>>, vector<16x256xbf16>,
    %c16_370 = arith.constant 16 : index
    %c32_371 = arith.constant 32 : index
    %464 = vector.load %arg27[%c16_370, %c32_371] : memref<32x290xbf16, #tpu.memory_space<vmem>>, vector<16x256xbf16>
    %c0_i32_372 = arith.constant 0 : i32
    %465 = arith.sitofp %c0_i32_372 : i32 to bf16
    %466 = vector.shape_cast %21 : vector<1x256xi1> to vector<1x256xi1>
    %467 = vector.broadcast %466 : vector<1x256xi1> to vector<16x256xi1>
    %468 = vector.broadcast %465 : bf16 to vector<16x256xbf16>
    %469 = arith.select %467, %464, %468 : vector<16x256xi1>, vector<16x256xbf16>
    %c240_373 = arith.constant 240 : index
    %c0_374 = arith.constant 0 : index
    %470 = vector.load %arg28[%c240_373, %c0_374] : memref<288x256xbf16, #tpu.memory_space<vmem>>, vector<16x256xbf16>
    tpu.vector_store %arg28[%c240_373, %c0_374], %469 {strides = array<i32>} : memref<288x256xbf16, #tpu.memory_space<vmem>>, vector<16x256xbf16>,
    %c16_375 = arith.constant 16 : index
    %c33_376 = arith.constant 33 : index
    %471 = vector.load %arg27[%c16_375, %c33_376] : memref<32x290xbf16, #tpu.memory_space<vmem>>, vector<16x256xbf16>
    %c256_377 = arith.constant 256 : index
    %c0_378 = arith.constant 0 : index
    %472 = vector.load %arg28[%c256_377, %c0_378] : memref<288x256xbf16, #tpu.memory_space<vmem>>, vector<16x256xbf16>
    tpu.vector_store %arg28[%c256_377, %c0_378], %471 {strides = array<i32>} : memref<288x256xbf16, #tpu.memory_space<vmem>>, vector<16x256xbf16>,
    %c16_379 = arith.constant 16 : index
    %c34_380 = arith.constant 34 : index
    %473 = vector.load %arg27[%c16_379, %c34_380] : memref<32x290xbf16, #tpu.memory_space<vmem>>, vector<16x256xbf16>
    %c0_i32_381 = arith.constant 0 : i32
    %474 = arith.sitofp %c0_i32_381 : i32 to bf16
    %475 = vector.shape_cast %23 : vector<1x256xi1> to vector<1x256xi1>
    %476 = vector.broadcast %475 : vector<1x256xi1> to vector<16x256xi1>
    %477 = vector.broadcast %474 : bf16 to vector<16x256xbf16>
    %478 = arith.select %476, %473, %477 : vector<16x256xi1>, vector<16x256xbf16>
    %c272_382 = arith.constant 272 : index
    %c0_383 = arith.constant 0 : index
    %479 = vector.load %arg28[%c272_382, %c0_383] : memref<288x256xbf16, #tpu.memory_space<vmem>>, vector<16x256xbf16>
    tpu.vector_store %arg28[%c272_382, %c0_383], %478 {strides = array<i32>} : memref<288x256xbf16, #tpu.memory_space<vmem>>, vector<16x256xbf16>,
    %c0_384 = arith.constant 0 : index
    %c0_385 = arith.constant 0 : index
    %480 = vector.load %arg14[%c0_384, %c0_385] : memref<32x288xbf16, #tpu.memory_space<vmem>>, vector<32x288xbf16>
    %c0_386 = arith.constant 0 : index
    %c0_387 = arith.constant 0 : index
    %481 = vector.load %arg28[%c0_386, %c0_387] : memref<288x256xbf16, #tpu.memory_space<vmem>>, vector<288x256xbf16>
    %cst_388 = arith.constant dense<0.000000e+00> : vector<32x256xf32>
    %482 = tpu.matmul %480, %481, %cst_388 {dimension_numbers = #tpu.dot_dimension_numbers<[1], [0], [0], [1], [0, 0, 1, 1], [], []>} : vector<32x288xbf16>, vector<288x256xbf16>, vector<32x256xf32> -> vector<32x256xf32>
    %c0_389 = arith.constant 0 : index
    %c0_390 = arith.constant 0 : index
    %483 = vector.load %arg15[%c0_389, %c0_390] : memref<32x1xf32, #tpu.memory_space<vmem>>, vector<32x1xf32>
    %484 = vector.broadcast %483 : vector<32x1xf32> to vector<32x256xf32>
    %485 = arith.addf %482, %484 : vector<32x256xf32>
    %486 = arith.negf %485 : vector<32x256xf32>
    %487 = math.exp %486 : vector<32x256xf32>
    %cst_391 = arith.constant 1.000000e+00 : f32
    %488 = vector.broadcast %cst_391 : f32 to vector<32x256xf32>
    %489 = arith.addf %488, %487 : vector<32x256xf32>
    %490 = arith.divf %488, %489 : vector<32x256xf32>
    %491 = vector.extract_strided_slice %490 {offsets = [0, 0], sizes = [16, 256], strides = [1, 1]} : vector<32x256xf32> to vector<16x256xf32>
    %492 = vector.extract_strided_slice %490 {offsets = [16, 0], sizes = [16, 256], strides = [1, 1]} : vector<32x256xf32> to vector<16x256xf32>
    %493 = arith.mulf %492, %29 : vector<16x256xf32>
    %494 = arith.truncf %493 : vector<16x256xf32> to vector<16x256xbf16>
    %c16_392 = arith.constant 16 : index
    %c17_393 = arith.constant 17 : index
    %495 = vector.load %arg27[%c16_392, %c17_393] : memref<32x290xbf16, #tpu.memory_space<vmem>>, vector<16x256xbf16>
    tpu.vector_store %arg27[%c16_392, %c17_393], %494 {strides = array<i32>} : memref<32x290xbf16, #tpu.memory_space<vmem>>, vector<16x256xbf16>,
    %c16_394 = arith.constant 16 : index
    %c0_395 = arith.constant 0 : index
    %496 = vector.load %arg27[%c16_394, %c0_395] : memref<32x290xbf16, #tpu.memory_space<vmem>>, vector<16x256xbf16>
    %c0_i32_396 = arith.constant 0 : i32
    %497 = arith.sitofp %c0_i32_396 : i32 to bf16
    %498 = vector.shape_cast %21 : vector<1x256xi1> to vector<1x256xi1>
    %499 = vector.broadcast %498 : vector<1x256xi1> to vector<16x256xi1>
    %500 = vector.broadcast %497 : bf16 to vector<16x256xbf16>
    %501 = arith.select %499, %496, %500 : vector<16x256xi1>, vector<16x256xbf16>
    %c144_397 = arith.constant 144 : index
    %c0_398 = arith.constant 0 : index
    %502 = vector.load %arg28[%c144_397, %c0_398] : memref<288x256xbf16, #tpu.memory_space<vmem>>, vector<16x256xbf16>
    tpu.vector_store %arg28[%c144_397, %c0_398], %501 {strides = array<i32>} : memref<288x256xbf16, #tpu.memory_space<vmem>>, vector<16x256xbf16>,
    %c16_399 = arith.constant 16 : index
    %c1_400 = arith.constant 1 : index
    %503 = vector.load %arg27[%c16_399, %c1_400] : memref<32x290xbf16, #tpu.memory_space<vmem>>, vector<16x256xbf16>
    %c160_401 = arith.constant 160 : index
    %c0_402 = arith.constant 0 : index
    %504 = vector.load %arg28[%c160_401, %c0_402] : memref<288x256xbf16, #tpu.memory_space<vmem>>, vector<16x256xbf16>
    tpu.vector_store %arg28[%c160_401, %c0_402], %503 {strides = array<i32>} : memref<288x256xbf16, #tpu.memory_space<vmem>>, vector<16x256xbf16>,
    %c16_403 = arith.constant 16 : index
    %c2_404 = arith.constant 2 : index
    %505 = vector.load %arg27[%c16_403, %c2_404] : memref<32x290xbf16, #tpu.memory_space<vmem>>, vector<16x256xbf16>
    %c0_i32_405 = arith.constant 0 : i32
    %506 = arith.sitofp %c0_i32_405 : i32 to bf16
    %507 = vector.shape_cast %23 : vector<1x256xi1> to vector<1x256xi1>
    %508 = vector.broadcast %507 : vector<1x256xi1> to vector<16x256xi1>
    %509 = vector.broadcast %506 : bf16 to vector<16x256xbf16>
    %510 = arith.select %508, %505, %509 : vector<16x256xi1>, vector<16x256xbf16>
    %c176_406 = arith.constant 176 : index
    %c0_407 = arith.constant 0 : index
    %511 = vector.load %arg28[%c176_406, %c0_407] : memref<288x256xbf16, #tpu.memory_space<vmem>>, vector<16x256xbf16>
    tpu.vector_store %arg28[%c176_406, %c0_407], %510 {strides = array<i32>} : memref<288x256xbf16, #tpu.memory_space<vmem>>, vector<16x256xbf16>,
    %c16_408 = arith.constant 16 : index
    %c16_409 = arith.constant 16 : index
    %512 = vector.load %arg27[%c16_408, %c16_409] : memref<32x290xbf16, #tpu.memory_space<vmem>>, vector<16x256xbf16>
    %c0_i32_410 = arith.constant 0 : i32
    %513 = arith.sitofp %c0_i32_410 : i32 to bf16
    %514 = vector.shape_cast %21 : vector<1x256xi1> to vector<1x256xi1>
    %515 = vector.broadcast %514 : vector<1x256xi1> to vector<16x256xi1>
    %516 = vector.broadcast %513 : bf16 to vector<16x256xbf16>
    %517 = arith.select %515, %512, %516 : vector<16x256xi1>, vector<16x256xbf16>
    %c192_411 = arith.constant 192 : index
    %c0_412 = arith.constant 0 : index
    %518 = vector.load %arg28[%c192_411, %c0_412] : memref<288x256xbf16, #tpu.memory_space<vmem>>, vector<16x256xbf16>
    tpu.vector_store %arg28[%c192_411, %c0_412], %517 {strides = array<i32>} : memref<288x256xbf16, #tpu.memory_space<vmem>>, vector<16x256xbf16>,
    %c16_413 = arith.constant 16 : index
    %c17_414 = arith.constant 17 : index
    %519 = vector.load %arg27[%c16_413, %c17_414] : memref<32x290xbf16, #tpu.memory_space<vmem>>, vector<16x256xbf16>
    %c208_415 = arith.constant 208 : index
    %c0_416 = arith.constant 0 : index
    %520 = vector.load %arg28[%c208_415, %c0_416] : memref<288x256xbf16, #tpu.memory_space<vmem>>, vector<16x256xbf16>
    tpu.vector_store %arg28[%c208_415, %c0_416], %519 {strides = array<i32>} : memref<288x256xbf16, #tpu.memory_space<vmem>>, vector<16x256xbf16>,
    %c16_417 = arith.constant 16 : index
    %c18_418 = arith.constant 18 : index
    %521 = vector.load %arg27[%c16_417, %c18_418] : memref<32x290xbf16, #tpu.memory_space<vmem>>, vector<16x256xbf16>
    %c0_i32_419 = arith.constant 0 : i32
    %522 = arith.sitofp %c0_i32_419 : i32 to bf16
    %523 = vector.shape_cast %23 : vector<1x256xi1> to vector<1x256xi1>
    %524 = vector.broadcast %523 : vector<1x256xi1> to vector<16x256xi1>
    %525 = vector.broadcast %522 : bf16 to vector<16x256xbf16>
    %526 = arith.select %524, %521, %525 : vector<16x256xi1>, vector<16x256xbf16>
    %c224_420 = arith.constant 224 : index
    %c0_421 = arith.constant 0 : index
    %527 = vector.load %arg28[%c224_420, %c0_421] : memref<288x256xbf16, #tpu.memory_space<vmem>>, vector<16x256xbf16>
    tpu.vector_store %arg28[%c224_420, %c0_421], %526 {strides = array<i32>} : memref<288x256xbf16, #tpu.memory_space<vmem>>, vector<16x256xbf16>,
    %c16_422 = arith.constant 16 : index
    %c32_423 = arith.constant 32 : index
    %528 = vector.load %arg27[%c16_422, %c32_423] : memref<32x290xbf16, #tpu.memory_space<vmem>>, vector<16x256xbf16>
    %c0_i32_424 = arith.constant 0 : i32
    %529 = arith.sitofp %c0_i32_424 : i32 to bf16
    %530 = vector.shape_cast %21 : vector<1x256xi1> to vector<1x256xi1>
    %531 = vector.broadcast %530 : vector<1x256xi1> to vector<16x256xi1>
    %532 = vector.broadcast %529 : bf16 to vector<16x256xbf16>
    %533 = arith.select %531, %528, %532 : vector<16x256xi1>, vector<16x256xbf16>
    %c240_425 = arith.constant 240 : index
    %c0_426 = arith.constant 0 : index
    %534 = vector.load %arg28[%c240_425, %c0_426] : memref<288x256xbf16, #tpu.memory_space<vmem>>, vector<16x256xbf16>
    tpu.vector_store %arg28[%c240_425, %c0_426], %533 {strides = array<i32>} : memref<288x256xbf16, #tpu.memory_space<vmem>>, vector<16x256xbf16>,
    %c16_427 = arith.constant 16 : index
    %c33_428 = arith.constant 33 : index
    %535 = vector.load %arg27[%c16_427, %c33_428] : memref<32x290xbf16, #tpu.memory_space<vmem>>, vector<16x256xbf16>
    %c256_429 = arith.constant 256 : index
    %c0_430 = arith.constant 0 : index
    %536 = vector.load %arg28[%c256_429, %c0_430] : memref<288x256xbf16, #tpu.memory_space<vmem>>, vector<16x256xbf16>
    tpu.vector_store %arg28[%c256_429, %c0_430], %535 {strides = array<i32>} : memref<288x256xbf16, #tpu.memory_space<vmem>>, vector<16x256xbf16>,
    %c16_431 = arith.constant 16 : index
    %c34_432 = arith.constant 34 : index
    %537 = vector.load %arg27[%c16_431, %c34_432] : memref<32x290xbf16, #tpu.memory_space<vmem>>, vector<16x256xbf16>
    %c0_i32_433 = arith.constant 0 : i32
    %538 = arith.sitofp %c0_i32_433 : i32 to bf16
    %539 = vector.shape_cast %23 : vector<1x256xi1> to vector<1x256xi1>
    %540 = vector.broadcast %539 : vector<1x256xi1> to vector<16x256xi1>
    %541 = vector.broadcast %538 : bf16 to vector<16x256xbf16>
    %542 = arith.select %540, %537, %541 : vector<16x256xi1>, vector<16x256xbf16>
    %c272_434 = arith.constant 272 : index
    %c0_435 = arith.constant 0 : index
    %543 = vector.load %arg28[%c272_434, %c0_435] : memref<288x256xbf16, #tpu.memory_space<vmem>>, vector<16x256xbf16>
    tpu.vector_store %arg28[%c272_434, %c0_435], %542 {strides = array<i32>} : memref<288x256xbf16, #tpu.memory_space<vmem>>, vector<16x256xbf16>,
    %c0_436 = arith.constant 0 : index
    %c0_437 = arith.constant 0 : index
    %544 = vector.load %arg16[%c0_436, %c0_437] : memref<16x288xbf16, #tpu.memory_space<vmem>>, vector<16x288xbf16>
    %c0_438 = arith.constant 0 : index
    %c0_439 = arith.constant 0 : index
    %545 = vector.load %arg28[%c0_438, %c0_439] : memref<288x256xbf16, #tpu.memory_space<vmem>>, vector<288x256xbf16>
    %cst_440 = arith.constant dense<0.000000e+00> : vector<16x256xf32>
    %546 = tpu.matmul %544, %545, %cst_440 {dimension_numbers = #tpu.dot_dimension_numbers<[1], [0], [0], [1], [0, 0, 1, 1], [], []>} : vector<16x288xbf16>, vector<288x256xbf16>, vector<16x256xf32> -> vector<16x256xf32>
    %c0_441 = arith.constant 0 : index
    %c0_442 = arith.constant 0 : index
    %547 = vector.load %arg17[%c0_441, %c0_442] : memref<16x1xf32, #tpu.memory_space<vmem>>, vector<16x1xf32>
    %548 = vector.broadcast %547 : vector<16x1xf32> to vector<16x256xf32>
    %549 = arith.addf %546, %548 : vector<16x256xf32>
    %550 = math.tanh %549 : vector<16x256xf32>
    %cst_443 = arith.constant 1.000000e+00 : f32
    %551 = vector.broadcast %cst_443 : f32 to vector<16x256xf32>
    %552 = arith.subf %551, %491 : vector<16x256xf32>
    %553 = arith.mulf %29, %552 : vector<16x256xf32>
    %554 = arith.mulf %550, %491 : vector<16x256xf32>
    %555 = arith.addf %553, %554 : vector<16x256xf32>
    %556 = arith.truncf %555 : vector<16x256xf32> to vector<16x256xbf16>
    %c0_444 = arith.constant 0 : index
    %c17_445 = arith.constant 17 : index
    %557 = vector.load %arg27[%c0_444, %c17_445] : memref<32x290xbf16, #tpu.memory_space<vmem>>, vector<16x256xbf16>
    tpu.vector_store %arg27[%c0_444, %c17_445], %556 {strides = array<i32>} : memref<32x290xbf16, #tpu.memory_space<vmem>>, vector<16x256xbf16>,
    %c0_446 = arith.constant 0 : index
    %c0_447 = arith.constant 0 : index
    %558 = vector.load %arg27[%c0_446, %c0_447] : memref<32x290xbf16, #tpu.memory_space<vmem>>, vector<16x256xbf16>
    %c0_i32_448 = arith.constant 0 : i32
    %559 = arith.sitofp %c0_i32_448 : i32 to bf16
    %560 = vector.shape_cast %21 : vector<1x256xi1> to vector<1x256xi1>
    %561 = vector.broadcast %560 : vector<1x256xi1> to vector<16x256xi1>
    %562 = vector.broadcast %559 : bf16 to vector<16x256xbf16>
    %563 = arith.select %561, %558, %562 : vector<16x256xi1>, vector<16x256xbf16>
    %c0_449 = arith.constant 0 : index
    %c0_450 = arith.constant 0 : index
    %564 = vector.load %arg28[%c0_449, %c0_450] : memref<288x256xbf16, #tpu.memory_space<vmem>>, vector<16x256xbf16>
    tpu.vector_store %arg28[%c0_449, %c0_450], %563 {strides = array<i32>} : memref<288x256xbf16, #tpu.memory_space<vmem>>, vector<16x256xbf16>,
    %c0_451 = arith.constant 0 : index
    %c1_452 = arith.constant 1 : index
    %565 = vector.load %arg27[%c0_451, %c1_452] : memref<32x290xbf16, #tpu.memory_space<vmem>>, vector<16x256xbf16>
    %c16_453 = arith.constant 16 : index
    %c0_454 = arith.constant 0 : index
    %566 = vector.load %arg28[%c16_453, %c0_454] : memref<288x256xbf16, #tpu.memory_space<vmem>>, vector<16x256xbf16>
    tpu.vector_store %arg28[%c16_453, %c0_454], %565 {strides = array<i32>} : memref<288x256xbf16, #tpu.memory_space<vmem>>, vector<16x256xbf16>,
    %c0_455 = arith.constant 0 : index
    %c2_456 = arith.constant 2 : index
    %567 = vector.load %arg27[%c0_455, %c2_456] : memref<32x290xbf16, #tpu.memory_space<vmem>>, vector<16x256xbf16>
    %c0_i32_457 = arith.constant 0 : i32
    %568 = arith.sitofp %c0_i32_457 : i32 to bf16
    %569 = vector.shape_cast %23 : vector<1x256xi1> to vector<1x256xi1>
    %570 = vector.broadcast %569 : vector<1x256xi1> to vector<16x256xi1>
    %571 = vector.broadcast %568 : bf16 to vector<16x256xbf16>
    %572 = arith.select %570, %567, %571 : vector<16x256xi1>, vector<16x256xbf16>
    %c32_458 = arith.constant 32 : index
    %c0_459 = arith.constant 0 : index
    %573 = vector.load %arg28[%c32_458, %c0_459] : memref<288x256xbf16, #tpu.memory_space<vmem>>, vector<16x256xbf16>
    tpu.vector_store %arg28[%c32_458, %c0_459], %572 {strides = array<i32>} : memref<288x256xbf16, #tpu.memory_space<vmem>>, vector<16x256xbf16>,
    %c0_460 = arith.constant 0 : index
    %c16_461 = arith.constant 16 : index
    %574 = vector.load %arg27[%c0_460, %c16_461] : memref<32x290xbf16, #tpu.memory_space<vmem>>, vector<16x256xbf16>
    %c0_i32_462 = arith.constant 0 : i32
    %575 = arith.sitofp %c0_i32_462 : i32 to bf16
    %576 = vector.shape_cast %21 : vector<1x256xi1> to vector<1x256xi1>
    %577 = vector.broadcast %576 : vector<1x256xi1> to vector<16x256xi1>
    %578 = vector.broadcast %575 : bf16 to vector<16x256xbf16>
    %579 = arith.select %577, %574, %578 : vector<16x256xi1>, vector<16x256xbf16>
    %c48_463 = arith.constant 48 : index
    %c0_464 = arith.constant 0 : index
    %580 = vector.load %arg28[%c48_463, %c0_464] : memref<288x256xbf16, #tpu.memory_space<vmem>>, vector<16x256xbf16>
    tpu.vector_store %arg28[%c48_463, %c0_464], %579 {strides = array<i32>} : memref<288x256xbf16, #tpu.memory_space<vmem>>, vector<16x256xbf16>,
    %c0_465 = arith.constant 0 : index
    %c17_466 = arith.constant 17 : index
    %581 = vector.load %arg27[%c0_465, %c17_466] : memref<32x290xbf16, #tpu.memory_space<vmem>>, vector<16x256xbf16>
    %c64_467 = arith.constant 64 : index
    %c0_468 = arith.constant 0 : index
    %582 = vector.load %arg28[%c64_467, %c0_468] : memref<288x256xbf16, #tpu.memory_space<vmem>>, vector<16x256xbf16>
    tpu.vector_store %arg28[%c64_467, %c0_468], %581 {strides = array<i32>} : memref<288x256xbf16, #tpu.memory_space<vmem>>, vector<16x256xbf16>,
    %c0_469 = arith.constant 0 : index
    %c18_470 = arith.constant 18 : index
    %583 = vector.load %arg27[%c0_469, %c18_470] : memref<32x290xbf16, #tpu.memory_space<vmem>>, vector<16x256xbf16>
    %c0_i32_471 = arith.constant 0 : i32
    %584 = arith.sitofp %c0_i32_471 : i32 to bf16
    %585 = vector.shape_cast %23 : vector<1x256xi1> to vector<1x256xi1>
    %586 = vector.broadcast %585 : vector<1x256xi1> to vector<16x256xi1>
    %587 = vector.broadcast %584 : bf16 to vector<16x256xbf16>
    %588 = arith.select %586, %583, %587 : vector<16x256xi1>, vector<16x256xbf16>
    %c80_472 = arith.constant 80 : index
    %c0_473 = arith.constant 0 : index
    %589 = vector.load %arg28[%c80_472, %c0_473] : memref<288x256xbf16, #tpu.memory_space<vmem>>, vector<16x256xbf16>
    tpu.vector_store %arg28[%c80_472, %c0_473], %588 {strides = array<i32>} : memref<288x256xbf16, #tpu.memory_space<vmem>>, vector<16x256xbf16>,
    %c0_474 = arith.constant 0 : index
    %c32_475 = arith.constant 32 : index
    %590 = vector.load %arg27[%c0_474, %c32_475] : memref<32x290xbf16, #tpu.memory_space<vmem>>, vector<16x256xbf16>
    %c0_i32_476 = arith.constant 0 : i32
    %591 = arith.sitofp %c0_i32_476 : i32 to bf16
    %592 = vector.shape_cast %21 : vector<1x256xi1> to vector<1x256xi1>
    %593 = vector.broadcast %592 : vector<1x256xi1> to vector<16x256xi1>
    %594 = vector.broadcast %591 : bf16 to vector<16x256xbf16>
    %595 = arith.select %593, %590, %594 : vector<16x256xi1>, vector<16x256xbf16>
    %c96_477 = arith.constant 96 : index
    %c0_478 = arith.constant 0 : index
    %596 = vector.load %arg28[%c96_477, %c0_478] : memref<288x256xbf16, #tpu.memory_space<vmem>>, vector<16x256xbf16>
    tpu.vector_store %arg28[%c96_477, %c0_478], %595 {strides = array<i32>} : memref<288x256xbf16, #tpu.memory_space<vmem>>, vector<16x256xbf16>,
    %c0_479 = arith.constant 0 : index
    %c33_480 = arith.constant 33 : index
    %597 = vector.load %arg27[%c0_479, %c33_480] : memref<32x290xbf16, #tpu.memory_space<vmem>>, vector<16x256xbf16>
    %c112_481 = arith.constant 112 : index
    %c0_482 = arith.constant 0 : index
    %598 = vector.load %arg28[%c112_481, %c0_482] : memref<288x256xbf16, #tpu.memory_space<vmem>>, vector<16x256xbf16>
    tpu.vector_store %arg28[%c112_481, %c0_482], %597 {strides = array<i32>} : memref<288x256xbf16, #tpu.memory_space<vmem>>, vector<16x256xbf16>,
    %c0_483 = arith.constant 0 : index
    %c34_484 = arith.constant 34 : index
    %599 = vector.load %arg27[%c0_483, %c34_484] : memref<32x290xbf16, #tpu.memory_space<vmem>>, vector<16x256xbf16>
    %c0_i32_485 = arith.constant 0 : i32
    %600 = arith.sitofp %c0_i32_485 : i32 to bf16
    %601 = vector.shape_cast %23 : vector<1x256xi1> to vector<1x256xi1>
    %602 = vector.broadcast %601 : vector<1x256xi1> to vector<16x256xi1>
    %603 = vector.broadcast %600 : bf16 to vector<16x256xbf16>
    %604 = arith.select %602, %599, %603 : vector<16x256xi1>, vector<16x256xbf16>
    %c128_486 = arith.constant 128 : index
    %c0_487 = arith.constant 0 : index
    %605 = vector.load %arg28[%c128_486, %c0_487] : memref<288x256xbf16, #tpu.memory_space<vmem>>, vector<16x256xbf16>
    tpu.vector_store %arg28[%c128_486, %c0_487], %604 {strides = array<i32>} : memref<288x256xbf16, #tpu.memory_space<vmem>>, vector<16x256xbf16>,
    %c0_488 = arith.constant 0 : index
    %c0_489 = arith.constant 0 : index
    %606 = vector.load %arg18[%c0_488, %c0_489] : memref<16x144xbf16, #tpu.memory_space<vmem>>, vector<16x144xbf16>
    %c0_490 = arith.constant 0 : index
    %c0_491 = arith.constant 0 : index
    %607 = vector.load %arg28[%c0_490, %c0_491] : memref<288x256xbf16, #tpu.memory_space<vmem>>, vector<144x256xbf16>
    %cst_492 = arith.constant dense<0.000000e+00> : vector<16x256xf32>
    %608 = tpu.matmul %606, %607, %cst_492 {dimension_numbers = #tpu.dot_dimension_numbers<[1], [0], [0], [1], [0, 0, 1, 1], [], []>} : vector<16x144xbf16>, vector<144x256xbf16>, vector<16x256xf32> -> vector<16x256xf32>
    %c0_493 = arith.constant 0 : index
    %c0_494 = arith.constant 0 : index
    %609 = vector.load %arg19[%c0_493, %c0_494] : memref<16x1xf32, #tpu.memory_space<vmem>>, vector<16x1xf32>
    %610 = vector.broadcast %609 : vector<16x1xf32> to vector<16x256xf32>
    %611 = arith.addf %608, %610 : vector<16x256xf32>
    %cst_495 = arith.constant 0.000000e+00 : f32
    %612 = vector.broadcast %cst_495 : f32 to vector<16x256xf32>
    %613 = arith.maximumf %611, %612 : vector<16x256xf32>
    %614 = arith.truncf %613 : vector<16x256xf32> to vector<16x256xbf16>
    %c0_496 = arith.constant 0 : index
    %c17_497 = arith.constant 17 : index
    %615 = vector.load %arg27[%c0_496, %c17_497] : memref<32x290xbf16, #tpu.memory_space<vmem>>, vector<16x256xbf16>
    tpu.vector_store %arg27[%c0_496, %c17_497], %614 {strides = array<i32>} : memref<32x290xbf16, #tpu.memory_space<vmem>>, vector<16x256xbf16>,
    %c0_498 = arith.constant 0 : index
    %c0_499 = arith.constant 0 : index
    %616 = vector.load %arg27[%c0_498, %c0_499] : memref<32x290xbf16, #tpu.memory_space<vmem>>, vector<16x256xbf16>
    %c0_i32_500 = arith.constant 0 : i32
    %617 = arith.sitofp %c0_i32_500 : i32 to bf16
    %618 = vector.shape_cast %21 : vector<1x256xi1> to vector<1x256xi1>
    %619 = vector.broadcast %618 : vector<1x256xi1> to vector<16x256xi1>
    %620 = vector.broadcast %617 : bf16 to vector<16x256xbf16>
    %621 = arith.select %619, %616, %620 : vector<16x256xi1>, vector<16x256xbf16>
    %c0_501 = arith.constant 0 : index
    %c0_502 = arith.constant 0 : index
    %622 = vector.load %arg28[%c0_501, %c0_502] : memref<288x256xbf16, #tpu.memory_space<vmem>>, vector<16x256xbf16>
    tpu.vector_store %arg28[%c0_501, %c0_502], %621 {strides = array<i32>} : memref<288x256xbf16, #tpu.memory_space<vmem>>, vector<16x256xbf16>,
    %c0_503 = arith.constant 0 : index
    %c1_504 = arith.constant 1 : index
    %623 = vector.load %arg27[%c0_503, %c1_504] : memref<32x290xbf16, #tpu.memory_space<vmem>>, vector<16x256xbf16>
    %c16_505 = arith.constant 16 : index
    %c0_506 = arith.constant 0 : index
    %624 = vector.load %arg28[%c16_505, %c0_506] : memref<288x256xbf16, #tpu.memory_space<vmem>>, vector<16x256xbf16>
    tpu.vector_store %arg28[%c16_505, %c0_506], %623 {strides = array<i32>} : memref<288x256xbf16, #tpu.memory_space<vmem>>, vector<16x256xbf16>,
    %c0_507 = arith.constant 0 : index
    %c2_508 = arith.constant 2 : index
    %625 = vector.load %arg27[%c0_507, %c2_508] : memref<32x290xbf16, #tpu.memory_space<vmem>>, vector<16x256xbf16>
    %c0_i32_509 = arith.constant 0 : i32
    %626 = arith.sitofp %c0_i32_509 : i32 to bf16
    %627 = vector.shape_cast %23 : vector<1x256xi1> to vector<1x256xi1>
    %628 = vector.broadcast %627 : vector<1x256xi1> to vector<16x256xi1>
    %629 = vector.broadcast %626 : bf16 to vector<16x256xbf16>
    %630 = arith.select %628, %625, %629 : vector<16x256xi1>, vector<16x256xbf16>
    %c32_510 = arith.constant 32 : index
    %c0_511 = arith.constant 0 : index
    %631 = vector.load %arg28[%c32_510, %c0_511] : memref<288x256xbf16, #tpu.memory_space<vmem>>, vector<16x256xbf16>
    tpu.vector_store %arg28[%c32_510, %c0_511], %630 {strides = array<i32>} : memref<288x256xbf16, #tpu.memory_space<vmem>>, vector<16x256xbf16>,
    %c0_512 = arith.constant 0 : index
    %c16_513 = arith.constant 16 : index
    %632 = vector.load %arg27[%c0_512, %c16_513] : memref<32x290xbf16, #tpu.memory_space<vmem>>, vector<16x256xbf16>
    %c0_i32_514 = arith.constant 0 : i32
    %633 = arith.sitofp %c0_i32_514 : i32 to bf16
    %634 = vector.shape_cast %21 : vector<1x256xi1> to vector<1x256xi1>
    %635 = vector.broadcast %634 : vector<1x256xi1> to vector<16x256xi1>
    %636 = vector.broadcast %633 : bf16 to vector<16x256xbf16>
    %637 = arith.select %635, %632, %636 : vector<16x256xi1>, vector<16x256xbf16>
    %c48_515 = arith.constant 48 : index
    %c0_516 = arith.constant 0 : index
    %638 = vector.load %arg28[%c48_515, %c0_516] : memref<288x256xbf16, #tpu.memory_space<vmem>>, vector<16x256xbf16>
    tpu.vector_store %arg28[%c48_515, %c0_516], %637 {strides = array<i32>} : memref<288x256xbf16, #tpu.memory_space<vmem>>, vector<16x256xbf16>,
    %c0_517 = arith.constant 0 : index
    %c17_518 = arith.constant 17 : index
    %639 = vector.load %arg27[%c0_517, %c17_518] : memref<32x290xbf16, #tpu.memory_space<vmem>>, vector<16x256xbf16>
    %c64_519 = arith.constant 64 : index
    %c0_520 = arith.constant 0 : index
    %640 = vector.load %arg28[%c64_519, %c0_520] : memref<288x256xbf16, #tpu.memory_space<vmem>>, vector<16x256xbf16>
    tpu.vector_store %arg28[%c64_519, %c0_520], %639 {strides = array<i32>} : memref<288x256xbf16, #tpu.memory_space<vmem>>, vector<16x256xbf16>,
    %c0_521 = arith.constant 0 : index
    %c18_522 = arith.constant 18 : index
    %641 = vector.load %arg27[%c0_521, %c18_522] : memref<32x290xbf16, #tpu.memory_space<vmem>>, vector<16x256xbf16>
    %c0_i32_523 = arith.constant 0 : i32
    %642 = arith.sitofp %c0_i32_523 : i32 to bf16
    %643 = vector.shape_cast %23 : vector<1x256xi1> to vector<1x256xi1>
    %644 = vector.broadcast %643 : vector<1x256xi1> to vector<16x256xi1>
    %645 = vector.broadcast %642 : bf16 to vector<16x256xbf16>
    %646 = arith.select %644, %641, %645 : vector<16x256xi1>, vector<16x256xbf16>
    %c80_524 = arith.constant 80 : index
    %c0_525 = arith.constant 0 : index
    %647 = vector.load %arg28[%c80_524, %c0_525] : memref<288x256xbf16, #tpu.memory_space<vmem>>, vector<16x256xbf16>
    tpu.vector_store %arg28[%c80_524, %c0_525], %646 {strides = array<i32>} : memref<288x256xbf16, #tpu.memory_space<vmem>>, vector<16x256xbf16>,
    %c0_526 = arith.constant 0 : index
    %c32_527 = arith.constant 32 : index
    %648 = vector.load %arg27[%c0_526, %c32_527] : memref<32x290xbf16, #tpu.memory_space<vmem>>, vector<16x256xbf16>
    %c0_i32_528 = arith.constant 0 : i32
    %649 = arith.sitofp %c0_i32_528 : i32 to bf16
    %650 = vector.shape_cast %21 : vector<1x256xi1> to vector<1x256xi1>
    %651 = vector.broadcast %650 : vector<1x256xi1> to vector<16x256xi1>
    %652 = vector.broadcast %649 : bf16 to vector<16x256xbf16>
    %653 = arith.select %651, %648, %652 : vector<16x256xi1>, vector<16x256xbf16>
    %c96_529 = arith.constant 96 : index
    %c0_530 = arith.constant 0 : index
    %654 = vector.load %arg28[%c96_529, %c0_530] : memref<288x256xbf16, #tpu.memory_space<vmem>>, vector<16x256xbf16>
    tpu.vector_store %arg28[%c96_529, %c0_530], %653 {strides = array<i32>} : memref<288x256xbf16, #tpu.memory_space<vmem>>, vector<16x256xbf16>,
    %c0_531 = arith.constant 0 : index
    %c33_532 = arith.constant 33 : index
    %655 = vector.load %arg27[%c0_531, %c33_532] : memref<32x290xbf16, #tpu.memory_space<vmem>>, vector<16x256xbf16>
    %c112_533 = arith.constant 112 : index
    %c0_534 = arith.constant 0 : index
    %656 = vector.load %arg28[%c112_533, %c0_534] : memref<288x256xbf16, #tpu.memory_space<vmem>>, vector<16x256xbf16>
    tpu.vector_store %arg28[%c112_533, %c0_534], %655 {strides = array<i32>} : memref<288x256xbf16, #tpu.memory_space<vmem>>, vector<16x256xbf16>,
    %c0_535 = arith.constant 0 : index
    %c34_536 = arith.constant 34 : index
    %657 = vector.load %arg27[%c0_535, %c34_536] : memref<32x290xbf16, #tpu.memory_space<vmem>>, vector<16x256xbf16>
    %c0_i32_537 = arith.constant 0 : i32
    %658 = arith.sitofp %c0_i32_537 : i32 to bf16
    %659 = vector.shape_cast %23 : vector<1x256xi1> to vector<1x256xi1>
    %660 = vector.broadcast %659 : vector<1x256xi1> to vector<16x256xi1>
    %661 = vector.broadcast %658 : bf16 to vector<16x256xbf16>
    %662 = arith.select %660, %657, %661 : vector<16x256xi1>, vector<16x256xbf16>
    %c128_538 = arith.constant 128 : index
    %c0_539 = arith.constant 0 : index
    %663 = vector.load %arg28[%c128_538, %c0_539] : memref<288x256xbf16, #tpu.memory_space<vmem>>, vector<16x256xbf16>
    tpu.vector_store %arg28[%c128_538, %c0_539], %662 {strides = array<i32>} : memref<288x256xbf16, #tpu.memory_space<vmem>>, vector<16x256xbf16>,
    %c0_540 = arith.constant 0 : index
    %c0_541 = arith.constant 0 : index
    %664 = vector.load %arg20[%c0_540, %c0_541] : memref<16x144xbf16, #tpu.memory_space<vmem>>, vector<16x144xbf16>
    %c0_542 = arith.constant 0 : index
    %c0_543 = arith.constant 0 : index
    %665 = vector.load %arg28[%c0_542, %c0_543] : memref<288x256xbf16, #tpu.memory_space<vmem>>, vector<144x256xbf16>
    %cst_544 = arith.constant dense<0.000000e+00> : vector<16x256xf32>
    %666 = tpu.matmul %664, %665, %cst_544 {dimension_numbers = #tpu.dot_dimension_numbers<[1], [0], [0], [1], [0, 0, 1, 1], [], []>} : vector<16x144xbf16>, vector<144x256xbf16>, vector<16x256xf32> -> vector<16x256xf32>
    %c0_545 = arith.constant 0 : index
    %c0_546 = arith.constant 0 : index
    %667 = vector.load %arg21[%c0_545, %c0_546] : memref<16x1xf32, #tpu.memory_space<vmem>>, vector<16x1xf32>
    %668 = vector.broadcast %667 : vector<16x1xf32> to vector<16x256xf32>
    %669 = arith.addf %666, %668 : vector<16x256xf32>
    %670 = arith.addf %669, %555 : vector<16x256xf32>
    %cst_547 = arith.constant 0.000000e+00 : f32
    %671 = vector.broadcast %cst_547 : f32 to vector<16x256xf32>
    %672 = arith.maximumf %670, %671 : vector<16x256xf32>
    %c0_548 = arith.constant 0 : index
    %c0_549 = arith.constant 0 : index
    %673 = vector.load %arg22[%c0_548, %c0_549] : memref<16x1xf32, #tpu.memory_space<vmem>>, vector<16x1xf32>
    %674 = vector.broadcast %673 : vector<16x1xf32> to vector<16x256xf32>
    %675 = arith.mulf %672, %674 : vector<16x256xf32>
    %cst_550 = arith.constant dense<0.000000e+00> : vector<256xf32>
    %676 = vector.multi_reduction <add>, %675, %cst_550 [0] : vector<16x256xf32> to vector<256xf32>
    %677 = vector.shape_cast %676 : vector<256xf32> to vector<1x256xf32>
    %c0_551 = arith.constant 0 : index
    %c0_552 = arith.constant 0 : index
    %678 = vector.load %arg23[%c0_551, %c0_552] : memref<1x1xf32, #tpu.memory_space<vmem>>, vector<1x1xf32>
    %679 = vector.broadcast %678 : vector<1x1xf32> to vector<1x256xf32>
    %680 = arith.addf %677, %679 : vector<1x256xf32>
    %c0_553 = arith.constant 0 : index
    %c0_554 = arith.constant 0 : index
    %c0_555 = arith.constant 0 : index
    %681 = vector.load %arg24[%c0_553, %c0_554, %c0_555] : memref<1x1x256xf32, #tpu.memory_space<vmem>>, vector<1x1x256xf32>
    %682 = vector.shape_cast %681 : vector<1x1x256xf32> to vector<1x256xf32>
    %683 = vector.shape_cast %680 : vector<1x256xf32> to vector<1x1x256xf32>
    tpu.vector_store %arg24[%c0_553, %c0_554, %c0_555], %683 {strides = array<i32>} : memref<1x1x256xf32, #tpu.memory_space<vmem>>, vector<1x1x256xf32>,
    %c0_556 = arith.constant 0 : index
    %c0_557 = arith.constant 0 : index
    %c0_558 = arith.constant 0 : index
    %684 = vector.load %arg25[%c0_556, %c0_557, %c0_558] : memref<1x16x256xf32, #tpu.memory_space<vmem>>, vector<1x16x256xf32>
    %685 = vector.shape_cast %684 : vector<1x16x256xf32> to vector<16x256xf32>
    %686 = vector.shape_cast %262 : vector<16x256xf32> to vector<1x16x256xf32>
    tpu.vector_store %arg25[%c0_556, %c0_557, %c0_558], %686 {strides = array<i32>} : memref<1x16x256xf32, #tpu.memory_space<vmem>>, vector<1x16x256xf32>,
    %c0_559 = arith.constant 0 : index
    %c0_560 = arith.constant 0 : index
    %c0_561 = arith.constant 0 : index
    %687 = vector.load %arg26[%c0_559, %c0_560, %c0_561] : memref<1x16x256xf32, #tpu.memory_space<vmem>>, vector<1x16x256xf32>
    %688 = vector.shape_cast %687 : vector<1x16x256xf32> to vector<16x256xf32>
    %689 = vector.shape_cast %555 : vector<16x256xf32> to vector<1x16x256xf32>
    tpu.vector_store %arg26[%c0_559, %c0_560, %c0_561], %689 {strides = array<i32>} : memref<1x16x256xf32, #tpu.memory_space<vmem>>, vector<1x16x256xf32>,
    return
  }
  func.func @transform_0(%arg0: i32) -> (i32, i32, i32) {
    %c0_i32 = arith.constant 0 : i32
    %c0_i32_0 = arith.constant 0 : i32
    %c0_i32_1 = arith.constant 0 : i32
    return %arg0, %c0_i32, %c0_i32_0 : i32, i32, i32
  }
  func.func @transform_1(%arg0: i32) -> (i32, i32, i32) {
    %c0_i32 = arith.constant 0 : i32
    %c0_i32_0 = arith.constant 0 : i32
    %c0_i32_1 = arith.constant 0 : i32
    return %arg0, %c0_i32, %c0_i32_0 : i32, i32, i32
  }
  func.func @transform_2(%arg0: i32) -> (i32, i32, i32) {
    %c0_i32 = arith.constant 0 : i32
    %c0_i32_0 = arith.constant 0 : i32
    %c0_i32_1 = arith.constant 0 : i32
    return %arg0, %c0_i32, %c0_i32_0 : i32, i32, i32
  }
  func.func @transform_3(%arg0: i32) -> (i32, i32) {
    %c0_i32 = arith.constant 0 : i32
    %c0_i32_0 = arith.constant 0 : i32
    %c0_i32_1 = arith.constant 0 : i32
    return %c0_i32, %c0_i32_0 : i32, i32
  }
  func.func @transform_4(%arg0: i32) -> (i32, i32) {
    %c0_i32 = arith.constant 0 : i32
    %c0_i32_0 = arith.constant 0 : i32
    %c0_i32_1 = arith.constant 0 : i32
    return %c0_i32, %c0_i32_0 : i32, i32
  }
  func.func @transform_5(%arg0: i32) -> (i32, i32) {
    %c0_i32 = arith.constant 0 : i32
    %c0_i32_0 = arith.constant 0 : i32
    %c0_i32_1 = arith.constant 0 : i32
    return %c0_i32, %c0_i32_0 : i32, i32
  }
  func.func @transform_6(%arg0: i32) -> (i32, i32) {
    %c0_i32 = arith.constant 0 : i32
    %c0_i32_0 = arith.constant 0 : i32
    %c0_i32_1 = arith.constant 0 : i32
    return %c0_i32, %c0_i32_0 : i32, i32
  }
  func.func @transform_7(%arg0: i32) -> (i32, i32) {
    %c0_i32 = arith.constant 0 : i32
    %c0_i32_0 = arith.constant 0 : i32
    %c0_i32_1 = arith.constant 0 : i32
    return %c0_i32, %c0_i32_0 : i32, i32
  }
  func.func @transform_8(%arg0: i32) -> (i32, i32) {
    %c0_i32 = arith.constant 0 : i32
    %c0_i32_0 = arith.constant 0 : i32
    %c0_i32_1 = arith.constant 0 : i32
    return %c0_i32, %c0_i32_0 : i32, i32
  }
  func.func @transform_9(%arg0: i32) -> (i32, i32) {
    %c0_i32 = arith.constant 0 : i32
    %c0_i32_0 = arith.constant 0 : i32
    %c0_i32_1 = arith.constant 0 : i32
    return %c0_i32, %c0_i32_0 : i32, i32
  }
  func.func @transform_10(%arg0: i32) -> (i32, i32) {
    %c0_i32 = arith.constant 0 : i32
    %c0_i32_0 = arith.constant 0 : i32
    %c0_i32_1 = arith.constant 0 : i32
    return %c0_i32, %c0_i32_0 : i32, i32
  }
  func.func @transform_11(%arg0: i32) -> (i32, i32) {
    %c0_i32 = arith.constant 0 : i32
    %c0_i32_0 = arith.constant 0 : i32
    %c0_i32_1 = arith.constant 0 : i32
    return %c0_i32, %c0_i32_0 : i32, i32
  }
  func.func @transform_12(%arg0: i32) -> (i32, i32) {
    %c0_i32 = arith.constant 0 : i32
    %c0_i32_0 = arith.constant 0 : i32
    %c0_i32_1 = arith.constant 0 : i32
    return %c0_i32, %c0_i32_0 : i32, i32
  }
  func.func @transform_13(%arg0: i32) -> (i32, i32) {
    %c0_i32 = arith.constant 0 : i32
    %c0_i32_0 = arith.constant 0 : i32
    %c0_i32_1 = arith.constant 0 : i32
    return %c0_i32, %c0_i32_0 : i32, i32
  }
  func.func @transform_14(%arg0: i32) -> (i32, i32) {
    %c0_i32 = arith.constant 0 : i32
    %c0_i32_0 = arith.constant 0 : i32
    %c0_i32_1 = arith.constant 0 : i32
    return %c0_i32, %c0_i32_0 : i32, i32
  }
  func.func @transform_15(%arg0: i32) -> (i32, i32) {
    %c0_i32 = arith.constant 0 : i32
    %c0_i32_0 = arith.constant 0 : i32
    %c0_i32_1 = arith.constant 0 : i32
    return %c0_i32, %c0_i32_0 : i32, i32
  }
  func.func @transform_16(%arg0: i32) -> (i32, i32) {
    %c0_i32 = arith.constant 0 : i32
    %c0_i32_0 = arith.constant 0 : i32
    %c0_i32_1 = arith.constant 0 : i32
    return %c0_i32, %c0_i32_0 : i32, i32
  }
  func.func @transform_17(%arg0: i32) -> (i32, i32) {
    %c0_i32 = arith.constant 0 : i32
    %c0_i32_0 = arith.constant 0 : i32
    %c0_i32_1 = arith.constant 0 : i32
    return %c0_i32, %c0_i32_0 : i32, i32
  }
  func.func @transform_18(%arg0: i32) -> (i32, i32) {
    %c0_i32 = arith.constant 0 : i32
    %c0_i32_0 = arith.constant 0 : i32
    %c0_i32_1 = arith.constant 0 : i32
    return %c0_i32, %c0_i32_0 : i32, i32
  }
  func.func @transform_19(%arg0: i32) -> (i32, i32) {
    %c0_i32 = arith.constant 0 : i32
    %c0_i32_0 = arith.constant 0 : i32
    %c0_i32_1 = arith.constant 0 : i32
    return %c0_i32, %c0_i32_0 : i32, i32
  }
  func.func @transform_20(%arg0: i32) -> (i32, i32) {
    %c0_i32 = arith.constant 0 : i32
    %c0_i32_0 = arith.constant 0 : i32
    %c0_i32_1 = arith.constant 0 : i32
    return %c0_i32, %c0_i32_0 : i32, i32
  }
  func.func @transform_21(%arg0: i32) -> (i32, i32) {
    %c0_i32 = arith.constant 0 : i32
    %c0_i32_0 = arith.constant 0 : i32
    %c0_i32_1 = arith.constant 0 : i32
    return %c0_i32, %c0_i32_0 : i32, i32
  }
  func.func @transform_22(%arg0: i32) -> (i32, i32) {
    %c0_i32 = arith.constant 0 : i32
    %c0_i32_0 = arith.constant 0 : i32
    %c0_i32_1 = arith.constant 0 : i32
    return %c0_i32, %c0_i32_0 : i32, i32
  }
  func.func @transform_23(%arg0: i32) -> (i32, i32, i32) {
    %c0_i32 = arith.constant 0 : i32
    %c0_i32_0 = arith.constant 0 : i32
    %c0_i32_1 = arith.constant 0 : i32
    return %arg0, %c0_i32, %c0_i32_0 : i32, i32, i32
  }
  func.func @transform_24(%arg0: i32) -> (i32, i32, i32) {
    %c0_i32 = arith.constant 0 : i32
    %c0_i32_0 = arith.constant 0 : i32
    %c0_i32_1 = arith.constant 0 : i32
    return %arg0, %c0_i32, %c0_i32_0 : i32, i32, i32
  }
  func.func @transform_25(%arg0: i32) -> (i32, i32, i32) {
    %c0_i32 = arith.constant 0 : i32
    %c0_i32_0 = arith.constant 0 : i32
    %c0_i32_1 = arith.constant 0 : i32
    return %arg0, %c0_i32, %c0_i32_0 : i32, i32, i32
  }
}

</mosaic_0001>

<llo_original>
// kernel: firenet_forward.1
$region0: #{firenet_forward.1}
  #allocation0 [shape = 'u32[]', space=smem, size = 0x4, offset = 0x4, fixed_abs, tag = 'smem constant byte address 0x4 - core index']
  #allocation1 [shape = 'u32[72,128]{1,0:T(1,128)}', space=vmem, size = 0x9000, scoped, tag = 'internal scratch']
  #allocation2 [shape = 'bf16[32,290]{1,0:T(8,128)(2,1)}', space=vmem, size = 0x6000, scoped, tag = 'scratch operand']
  #allocation3 [shape = 'bf16[288,256]{1,0:T(8,128)(2,1)}', space=vmem, size = 0x24000, scoped, tag = 'scratch operand']
  #allocation4 [shape = 'f32[1,1]{1,0:T(1,128)S(1)}', space=vmem, size = 0x200, scoped, tag = 'scoped memory for firenet_forward.1']
  %s0 = inlined_call_operand.vmem [shape: bf16[2,16,256], index: 0, kind: input, shape index: {}]
  %s1 = inlined_call_operand.vmem [shape: f32[2,16,256], index: 1, kind: input, shape index: {}, may-alias: {1,2}]
  %s2 = inlined_call_operand.vmem [shape: f32[2,16,256], index: 2, kind: input, shape index: {}, may-alias: {1,2}]
  %s3 = inlined_call_operand.vmem [shape: bf16[16,144], index: 3, kind: input, shape index: {}]
  %s4 = inlined_call_operand.vmem [shape: f32[16,1], index: 4, kind: input, shape index: {}]
  %s5 = inlined_call_operand.vmem [shape: bf16[32,288], index: 5, kind: input, shape index: {}]
  %s6 = inlined_call_operand.vmem [shape: f32[32,1], index: 6, kind: input, shape index: {}]
  %s7 = inlined_call_operand.vmem [shape: bf16[16,288], index: 7, kind: input, shape index: {}]
  %s8 = inlined_call_operand.vmem [shape: f32[16,1], index: 8, kind: input, shape index: {}]
  %s9 = inlined_call_operand.vmem [shape: bf16[16,144], index: 9, kind: input, shape index: {}]
  %s10 = inlined_call_operand.vmem [shape: f32[16,1], index: 10, kind: input, shape index: {}]
  %s11 = inlined_call_operand.vmem [shape: bf16[16,144], index: 11, kind: input, shape index: {}]
  %s12 = inlined_call_operand.vmem [shape: f32[16,1], index: 12, kind: input, shape index: {}]
  %s13 = inlined_call_operand.vmem [shape: bf16[32,288], index: 13, kind: input, shape index: {}]
  %s14 = inlined_call_operand.vmem [shape: f32[32,1], index: 14, kind: input, shape index: {}]
  %s15 = inlined_call_operand.vmem [shape: bf16[16,288], index: 15, kind: input, shape index: {}]
  %s16 = inlined_call_operand.vmem [shape: f32[16,1], index: 16, kind: input, shape index: {}]
  %s17 = inlined_call_operand.vmem [shape: bf16[16,144], index: 17, kind: input, shape index: {}]
  %s18 = inlined_call_operand.vmem [shape: f32[16,1], index: 18, kind: input, shape index: {}]
  %s19 = inlined_call_operand.vmem [shape: bf16[16,144], index: 19, kind: input, shape index: {}]
  %s20 = inlined_call_operand.vmem [shape: f32[16,1], index: 20, kind: input, shape index: {}]
  %s21 = inlined_call_operand.vmem [shape: f32[16,1], index: 21, kind: input, shape index: {}]
  %s22 = inlined_call_operand.<no memory space> [shape: f32[1,1], index: 22, kind: input, shape index: {}]
  %s23 = inlined_call_operand.vmem [shape: f32[2,1,256], index: 23, kind: output, shape index: {0}]
  %s24 = inlined_call_operand.vmem [shape: f32[2,16,256], index: 24, kind: output, shape index: {1}]
  %s25 = inlined_call_operand.vmem [shape: f32[2,16,256], index: 25, kind: output, shape index: {2}]
  %26 = xla_tuple %s23, %s24, %s25
  %s27 = sld [smem:[#allocation0]]
  $region141: #{firenet_forward.1} parent=0
    _
  %s29 = ssub.s32 1, %s27
  %s30 = scalar_select 0, %s29, %s27
  %v31 = vstv %s22
  %32 = vst [vmem:[#allocation4] sm:$0x1] %v31
  loop: start=0, step=1, limit=4
  $region2: #{firenet_forward.1} parent=0 // loop_pre_header
    _
  $region3: #{firenet_forward.1} parent=0 // loop_header
    %s34 = sphi 0, %s38
    %p35 = scmp.ge.s32.totalorder %s34, 4
    %s44 = sphi 0, %s46
    %s47 = sphi 0, %s44
    %s48 = sphi 0, %s47
    %s64 = sphi 0, %s48
    %s70 = sphi 0, %s72
    %s73 = sphi 0, %s70
    %s74 = sphi 0, %s73
    %s90 = sphi 0, %s74
    %s96 = sphi 0, %s98
    %s99 = sphi 0, %s96
    %s100 = sphi 0, %s99
    %s116 = sphi 0, %s100
    %s120 = sphi 0, %s120
    %s122 = sphi 0, %s120
    %s123 = sphi 0, %s122
    %s137 = sphi 0, %s123
    %s141 = sphi 0, %s141
    %s143 = sphi 0, %s141
    %s144 = sphi 0, %s143
    %s158 = sphi 0, %s144
    %s162 = sphi 0, %s162
    %s164 = sphi 0, %s162
    %s165 = sphi 0, %s164
    %s179 = sphi 0, %s165
    %s183 = sphi 0, %s183
    %s185 = sphi 0, %s183
    %s186 = sphi 0, %s185
    %s200 = sphi 0, %s186
    %s204 = sphi 0, %s204
    %s206 = sphi 0, %s204
    %s207 = sphi 0, %s206
    %s221 = sphi 0, %s207
    %s225 = sphi 0, %s225
    %s227 = sphi 0, %s225
    %s228 = sphi 0, %s227
    %s242 = sphi 0, %s228
    %s246 = sphi 0, %s246
    %s248 = sphi 0, %s246
    %s249 = sphi 0, %s248
    %s263 = sphi 0, %s249
    %s267 = sphi 0, %s267
    %s269 = sphi 0, %s267
    %s270 = sphi 0, %s269
    %s284 = sphi 0, %s270
    %s288 = sphi 0, %s288
    %s290 = sphi 0, %s288
    %s291 = sphi 0, %s290
    %s305 = sphi 0, %s291
    %s309 = sphi 0, %s309
    %s311 = sphi 0, %s309
    %s312 = sphi 0, %s311
    %s326 = sphi 0, %s312
    %s330 = sphi 0, %s330
    %s332 = sphi 0, %s330
    %s333 = sphi 0, %s332
    %s347 = sphi 0, %s333
    %s351 = sphi 0, %s351
    %s353 = sphi 0, %s351
    %s354 = sphi 0, %s353
    %s368 = sphi 0, %s354
    %s372 = sphi 0, %s372
    %s374 = sphi 0, %s372
    %s375 = sphi 0, %s374
    %s389 = sphi 0, %s375
    %s393 = sphi 0, %s393
    %s395 = sphi 0, %s393
    %s396 = sphi 0, %s395
    %s410 = sphi 0, %s396
    %s414 = sphi 0, %s414
    %s416 = sphi 0, %s414
    %s417 = sphi 0, %s416
    %s431 = sphi 0, %s417
    %s435 = sphi 0, %s435
    %s437 = sphi 0, %s435
    %s438 = sphi 0, %s437
    %s452 = sphi 0, %s438
    %s456 = sphi 0, %s456
    %s458 = sphi 0, %s456
    %s459 = sphi 0, %s458
    %s473 = sphi 0, %s459
    %s477 = sphi 0, %s477
    %s479 = sphi 0, %s477
    %s480 = sphi 0, %s479
    %s494 = sphi 0, %s480
    %s498 = sphi 0, %s498
    %s500 = sphi 0, %s498
    %s501 = sphi 0, %s500
    %s515 = sphi 0, %s501
    %s519 = sphi 0, %s519
    %s521 = sphi 0, %s519
    %s522 = sphi 0, %s521
    %s536 = sphi 0, %s522
    %s542 = sphi 0, %s544
    %s545 = sphi 0, %s542
    %s546 = sphi 0, %s545
    %s562 = sphi 0, %s546
    %s568 = sphi 0, %s570
    %s571 = sphi 0, %s568
    %s572 = sphi 0, %s571
    %s588 = sphi 0, %s572
    %s594 = sphi 0, %s596
    %s597 = sphi 0, %s594
    %s598 = sphi 0, %s597
    %s614 = sphi 0, %s598
  $region4: #{firenet_forward.1} parent=0 // loop_header_branch
    %37 = sbr.rel (%p35) target = $region8
  $region5: #{firenet_forward.1} parent=0 // loop_body
    %s39 = ssub.s32 %s34, 1
    %s40 = ssub.s32 %s34, 2
    %s41 = sadd.s32 %s34, 1
    %s42 = ssub.s32 %s34, %s41
    %p43 = scmp.eq.s32.totalorder %s42, 0
    %s45 = sadd.s32 %s44, 1
    %s46 = scalar_select %p43, %s44, %s45
    %p49 = pneg %p43
    %p50 = scmp.eq.s32.totalorder %s34, 1
    %p51 = por %p49, %p50
    %p52 = scmp.ne.s32.totalorder %s44, %s47
    %p53 = scmp.eq.s32.totalorder %s34, 0
    %p54 = por %p52, %p53
    %p55 = scmp.ne.s32.totalorder %s44, %s47
    %p56 = scmp.eq.s32.totalorder %s39, 1
    %p57 = por %p55, %p56
    %p58 = scmp.ne.s32.totalorder %s47, %s48
    %p59 = scmp.eq.s32.totalorder %s39, 0
    %p60 = por %p58, %p59
    %p61 = scmp.ne.s32.totalorder %s47, %s48
    %p62 = scmp.eq.s32.totalorder %s40, 1
    %p63 = por %p61, %p62
    %p65 = scmp.ne.s32.totalorder %s48, %s64
    %p66 = scmp.eq.s32.totalorder %s40, 0
    %p67 = por %p65, %p66
    %s68 = ssub.s32 %s34, %s41
    %p69 = scmp.eq.s32.totalorder %s68, 0
    %s71 = sadd.s32 %s70, 1
    %s72 = scalar_select %p69, %s70, %s71
    %p75 = pneg %p69
    %p76 = scmp.eq.s32.totalorder %s34, 1
    %p77 = por %p75, %p76
    %p78 = scmp.ne.s32.totalorder %s70, %s73
    %p79 = scmp.eq.s32.totalorder %s34, 0
    %p80 = por %p78, %p79
    %p81 = scmp.ne.s32.totalorder %s70, %s73
    %p82 = scmp.eq.s32.totalorder %s39, 1
    %p83 = por %p81, %p82
    %p84 = scmp.ne.s32.totalorder %s73, %s74
    %p85 = scmp.eq.s32.totalorder %s39, 0
    %p86 = por %p84, %p85
    %p87 = scmp.ne.s32.totalorder %s73, %s74
    %p88 = scmp.eq.s32.totalorder %s40, 1
    %p89 = por %p87, %p88
    %p91 = scmp.ne.s32.totalorder %s74, %s90
    %p92 = scmp.eq.s32.totalorder %s40, 0
    %p93 = por %p91, %p92
    %s94 = ssub.s32 %s34, %s41
    %p95 = scmp.eq.s32.totalorder %s94, 0
    %s97 = sadd.s32 %s96, 1
    %s98 = scalar_select %p95, %s96, %s97
    %p101 = pneg %p95
    %p102 = scmp.eq.s32.totalorder %s34, 1
    %p103 = por %p101, %p102
    %p104 = scmp.ne.s32.totalorder %s96, %s99
    %p105 = scmp.eq.s32.totalorder %s34, 0
    %p106 = por %p104, %p105
    %p107 = scmp.ne.s32.totalorder %s96, %s99
    %p108 = scmp.eq.s32.totalorder %s39, 1
    %p109 = por %p107, %p108
    %p110 = scmp.ne.s32.totalorder %s99, %s100
    %p111 = scmp.eq.s32.totalorder %s39, 0
    %p112 = por %p110, %p111
    %p113 = scmp.ne.s32.totalorder %s99, %s100
    %p114 = scmp.eq.s32.totalorder %s40, 1
    %p115 = por %p113, %p114
    %p117 = scmp.ne.s32.totalorder %s100, %s116
    %p118 = scmp.eq.s32.totalorder %s40, 0
    %p119 = por %p117, %p118
    %s121 = sadd.s32 %s120, 1
    %p124 = scmp.eq.s32.totalorder %s34, 1
    %p125 = scmp.ne.s32.totalorder %s120, %s122
    %p126 = scmp.eq.s32.totalorder %s34, 0
    %p127 = por %p125, %p126
    %p128 = scmp.ne.s32.totalorder %s120, %s122
    %p129 = scmp.eq.s32.totalorder %s39, 1
    %p130 = por %p128, %p129
    %p131 = scmp.ne.s32.totalorder %s122, %s123
    %p132 = scmp.eq.s32.totalorder %s39, 0
    %p133 = por %p131, %p132
    %p134 = scmp.ne.s32.totalorder %s122, %s123
    %p135 = scmp.eq.s32.totalorder %s40, 1
    %p136 = por %p134, %p135
    %p138 = scmp.ne.s32.totalorder %s123, %s137
    %p139 = scmp.eq.s32.totalorder %s40, 0
    %p140 = por %p138, %p139
    %s142 = sadd.s32 %s141, 1
    %p145 = scmp.eq.s32.totalorder %s34, 1
    %p146 = scmp.ne.s32.totalorder %s141, %s143
    %p147 = scmp.eq.s32.totalorder %s34, 0
    %p148 = por %p146, %p147
    %p149 = scmp.ne.s32.totalorder %s141, %s143
    %p150 = scmp.eq.s32.totalorder %s39, 1
    %p151 = por %p149, %p150
    %p152 = scmp.ne.s32.totalorder %s143, %s144
    %p153 = scmp.eq.s32.totalorder %s39, 0
    %p154 = por %p152, %p153
    %p155 = scmp.ne.s32.totalorder %s143, %s144
    %p156 = scmp.eq.s32.totalorder %s40, 1
    %p157 = por %p155, %p156
    %p159 = scmp.ne.s32.totalorder %s144, %s158
    %p160 = scmp.eq.s32.totalorder %s40, 0
    %p161 = por %p159, %p160
    %s163 = sadd.s32 %s162, 1
    %p166 = scmp.eq.s32.totalorder %s34, 1
    %p167 = scmp.ne.s32.totalorder %s162, %s164
    %p168 = scmp.eq.s32.totalorder %s34, 0
    %p169 = por %p167, %p168
    %p170 = scmp.ne.s32.totalorder %s162, %s164
    %p171 = scmp.eq.s32.totalorder %s39, 1
    %p172 = por %p170, %p171
    %p173 = scmp.ne.s32.totalorder %s164, %s165
    %p174 = scmp.eq.s32.totalorder %s39, 0
    %p175 = por %p173, %p174
    %p176 = scmp.ne.s32.totalorder %s164, %s165
    %p177 = scmp.eq.s32.totalorder %s40, 1
    %p178 = por %p176, %p177
    %p180 = scmp.ne.s32.totalorder %s165, %s179
    %p181 = scmp.eq.s32.totalorder %s40, 0
    %p182 = por %p180, %p181
    %s184 = sadd.s32 %s183, 1
    %p187 = scmp.eq.s32.totalorder %s34, 1
    %p188 = scmp.ne.s32.totalorder %s183, %s185
    %p189 = scmp.eq.s32.totalorder %s34, 0
    %p190 = por %p188, %p189
    %p191 = scmp.ne.s32.totalorder %s183, %s185
    %p192 = scmp.eq.s32.totalorder %s39, 1
    %p193 = por %p191, %p192
    %p194 = scmp.ne.s32.totalorder %s185, %s186
    %p195 = scmp.eq.s32.totalorder %s39, 0
    %p196 = por %p194, %p195
    %p197 = scmp.ne.s32.totalorder %s185, %s186
    %p198 = scmp.eq.s32.totalorder %s40, 1
    %p199 = por %p197, %p198
    %p201 = scmp.ne.s32.totalorder %s186, %s200
    %p202 = scmp.eq.s32.totalorder %s40, 0
    %p203 = por %p201, %p202
    %s205 = sadd.s32 %s204, 1
    %p208 = scmp.eq.s32.totalorder %s34, 1
    %p209 = scmp.ne.s32.totalorder %s204, %s206
    %p210 = scmp.eq.s32.totalorder %s34, 0
    %p211 = por %p209, %p210
    %p212 = scmp.ne.s32.totalorder %s204, %s206
    %p213 = scmp.eq.s32.totalorder %s39, 1
    %p214 = por %p212, %p213
    %p215 = scmp.ne.s32.totalorder %s206, %s207
    %p216 = scmp.eq.s32.totalorder %s39, 0
    %p217 = por %p215, %p216
    %p218 = scmp.ne.s32.totalorder %s206, %s207
    %p219 = scmp.eq.s32.totalorder %s40, 1
    %p220 = por %p218, %p219
    %p222 = scmp.ne.s32.totalorder %s207, %s221
    %p223 = scmp.eq.s32.totalorder %s40, 0
    %p224 = por %p222, %p223
    %s226 = sadd.s32 %s225, 1
    %p229 = scmp.eq.s32.totalorder %s34, 1
    %p230 = scmp.ne.s32.totalorder %s225, %s227
    %p231 = scmp.eq.s32.totalorder %s34, 0
    %p232 = por %p230, %p231
    %p233 = scmp.ne.s32.totalorder %s225, %s227
    %p234 = scmp.eq.s32.totalorder %s39, 1
    %p235 = por %p233, %p234
    %p236 = scmp.ne.s32.totalorder %s227, %s228
    %p237 = scmp.eq.s32.totalorder %s39, 0
    %p238 = por %p236, %p237
    %p239 = scmp.ne.s32.totalorder %s227, %s228
    %p240 = scmp.eq.s32.totalorder %s40, 1
    %p241 = por %p239, %p240
    %p243 = scmp.ne.s32.totalorder %s228, %s242
    %p244 = scmp.eq.s32.totalorder %s40, 0
    %p245 = por %p243, %p244
    %s247 = sadd.s32 %s246, 1
    %p250 = scmp.eq.s32.totalorder %s34, 1
    %p251 = scmp.ne.s32.totalorder %s246, %s248
    %p252 = scmp.eq.s32.totalorder %s34, 0
    %p253 = por %p251, %p252
    %p254 = scmp.ne.s32.totalorder %s246, %s248
    %p255 = scmp.eq.s32.totalorder %s39, 1
    %p256 = por %p254, %p255
    %p257 = scmp.ne.s32.totalorder %s248, %s249
    %p258 = scmp.eq.s32.totalorder %s39, 0
    %p259 = por %p257, %p258
    %p260 = scmp.ne.s32.totalorder %s248, %s249
    %p261 = scmp.eq.s32.totalorder %s40, 1
    %p262 = por %p260, %p261
    %p264 = scmp.ne.s32.totalorder %s249, %s263
    %p265 = scmp.eq.s32.totalorder %s40, 0
    %p266 = por %p264, %p265
    %s268 = sadd.s32 %s267, 1
    %p271 = scmp.eq.s32.totalorder %s34, 1
    %p272 = scmp.ne.s32.totalorder %s267, %s269
    %p273 = scmp.eq.s32.totalorder %s34, 0
    %p274 = por %p272, %p273
    %p275 = scmp.ne.s32.totalorder %s267, %s269
    %p276 = scmp.eq.s32.totalorder %s39, 1
    %p277 = por %p275, %p276
    %p278 = scmp.ne.s32.totalorder %s269, %s270
    %p279 = scmp.eq.s32.totalorder %s39, 0
    %p280 = por %p278, %p279
    %p281 = scmp.ne.s32.totalorder %s269, %s270
    %p282 = scmp.eq.s32.totalorder %s40, 1
    %p283 = por %p281, %p282
    %p285 = scmp.ne.s32.totalorder %s270, %s284
    %p286 = scmp.eq.s32.totalorder %s40, 0
    %p287 = por %p285, %p286
    %s289 = sadd.s32 %s288, 1
    %p292 = scmp.eq.s32.totalorder %s34, 1
    %p293 = scmp.ne.s32.totalorder %s288, %s290
    %p294 = scmp.eq.s32.totalorder %s34, 0
    %p295 = por %p293, %p294
    %p296 = scmp.ne.s32.totalorder %s288, %s290
    %p297 = scmp.eq.s32.totalorder %s39, 1
    %p298 = por %p296, %p297
    %p299 = scmp.ne.s32.totalorder %s290, %s291
    %p300 = scmp.eq.s32.totalorder %s39, 0
    %p301 = por %p299, %p300
    %p302 = scmp.ne.s32.totalorder %s290, %s291
    %p303 = scmp.eq.s32.totalorder %s40, 1
    %p304 = por %p302, %p303
    %p306 = scmp.ne.s32.totalorder %s291, %s305
    %p307 = scmp.eq.s32.totalorder %s40, 0
    %p308 = por %p306, %p307
    %s310 = sadd.s32 %s309, 1
    %p313 = scmp.eq.s32.totalorder %s34, 1
    %p314 = scmp.ne.s32.totalorder %s309, %s311
    %p315 = scmp.eq.s32.totalorder %s34, 0
    %p316 = por %p314, %p315
    %p317 = scmp.ne.s32.totalorder %s309, %s311
    %p318 = scmp.eq.s32.totalorder %s39, 1
    %p319 = por %p317, %p318
    %p320 = scmp.ne.s32.totalorder %s311, %s312
    %p321 = scmp.eq.s32.totalorder %s39, 0
    %p322 = por %p320, %p321
    %p323 = scmp.ne.s32.totalorder %s311, %s312
    %p324 = scmp.eq.s32.totalorder %s40, 1
    %p325 = por %p323, %p324
    %p327 = scmp.ne.s32.totalorder %s312, %s326
    %p328 = scmp.eq.s32.totalorder %s40, 0
    %p329 = por %p327, %p328
    %s331 = sadd.s32 %s330, 1
    %p334 = scmp.eq.s32.totalorder %s34, 1
    %p335 = scmp.ne.s32.totalorder %s330, %s332
    %p336 = scmp.eq.s32.totalorder %s34, 0
    %p337 = por %p335, %p336
    %p338 = scmp.ne.s32.totalorder %s330, %s332
    %p339 = scmp.eq.s32.totalorder %s39, 1
    %p340 = por %p338, %p339
    %p341 = scmp.ne.s32.totalorder %s332, %s333
    %p342 = scmp.eq.s32.totalorder %s39, 0
    %p343 = por %p341, %p342
    %p344 = scmp.ne.s32.totalorder %s332, %s333
    %p345 = scmp.eq.s32.totalorder %s40, 1
    %p346 = por %p344, %p345
    %p348 = scmp.ne.s32.totalorder %s333, %s347
    %p349 = scmp.eq.s32.totalorder %s40, 0
    %p350 = por %p348, %p349
    %s352 = sadd.s32 %s351, 1
    %p355 = scmp.eq.s32.totalorder %s34, 1
    %p356 = scmp.ne.s32.totalorder %s351, %s353
    %p357 = scmp.eq.s32.totalorder %s34, 0
    %p358 = por %p356, %p357
    %p359 = scmp.ne.s32.totalorder %s351, %s353
    %p360 = scmp.eq.s32.totalorder %s39, 1
    %p361 = por %p359, %p360
    %p362 = scmp.ne.s32.totalorder %s353, %s354
    %p363 = scmp.eq.s32.totalorder %s39, 0
    %p364 = por %p362, %p363
    %p365 = scmp.ne.s32.totalorder %s353, %s354
    %p366 = scmp.eq.s32.totalorder %s40, 1
    %p367 = por %p365, %p366
    %p369 = scmp.ne.s32.totalorder %s354, %s368
    %p370 = scmp.eq.s32.totalorder %s40, 0
    %p371 = por %p369, %p370
    %s373 = sadd.s32 %s372, 1
    %p376 = scmp.eq.s32.totalorder %s34, 1
    %p377 = scmp.ne.s32.totalorder %s372, %s374
    %p378 = scmp.eq.s32.totalorder %s34, 0
    %p379 = por %p377, %p378
    %p380 = scmp.ne.s32.totalorder %s372, %s374
    %p381 = scmp.eq.s32.totalorder %s39, 1
    %p382 = por %p380, %p381
    %p383 = scmp.ne.s32.totalorder %s374, %s375
    %p384 = scmp.eq.s32.totalorder %s39, 0
    %p385 = por %p383, %p384
    %p386 = scmp.ne.s32.totalorder %s374, %s375
    %p387 = scmp.eq.s32.totalorder %s40, 1
    %p388 = por %p386, %p387
    %p390 = scmp.ne.s32.totalorder %s375, %s389
    %p391 = scmp.eq.s32.totalorder %s40, 0
    %p392 = por %p390, %p391
    %s394 = sadd.s32 %s393, 1
    %p397 = scmp.eq.s32.totalorder %s34, 1
    %p398 = scmp.ne.s32.totalorder %s393, %s395
    %p399 = scmp.eq.s32.totalorder %s34, 0
    %p400 = por %p398, %p399
    %p401 = scmp.ne.s32.totalorder %s393, %s395
    %p402 = scmp.eq.s32.totalorder %s39, 1
    %p403 = por %p401, %p402
    %p404 = scmp.ne.s32.totalorder %s395, %s396
    %p405 = scmp.eq.s32.totalorder %s39, 0
    %p406 = por %p404, %p405
    %p407 = scmp.ne.s32.totalorder %s395, %s396
    %p408 = scmp.eq.s32.totalorder %s40, 1
    %p409 = por %p407, %p408
    %p411 = scmp.ne.s32.totalorder %s396, %s410
    %p412 = scmp.eq.s32.totalorder %s40, 0
    %p413 = por %p411, %p412
    %s415 = sadd.s32 %s414, 1
    %p418 = scmp.eq.s32.totalorder %s34, 1
    %p419 = scmp.ne.s32.totalorder %s414, %s416
    %p420 = scmp.eq.s32.totalorder %s34, 0
    %p421 = por %p419, %p420
    %p422 = scmp.ne.s32.totalorder %s414, %s416
    %p423 = scmp.eq.s32.totalorder %s39, 1
    %p424 = por %p422, %p423
    %p425 = scmp.ne.s32.totalorder %s416, %s417
    %p426 = scmp.eq.s32.totalorder %s39, 0
    %p427 = por %p425, %p426
    %p428 = scmp.ne.s32.totalorder %s416, %s417
    %p429 = scmp.eq.s32.totalorder %s40, 1
    %p430 = por %p428, %p429
    %p432 = scmp.ne.s32.totalorder %s417, %s431
    %p433 = scmp.eq.s32.totalorder %s40, 0
    %p434 = por %p432, %p433
    %s436 = sadd.s32 %s435, 1
    %p439 = scmp.eq.s32.totalorder %s34, 1
    %p440 = scmp.ne.s32.totalorder %s435, %s437
    %p441 = scmp.eq.s32.totalorder %s34, 0
    %p442 = por %p440, %p441
    %p443 = scmp.ne.s32.totalorder %s435, %s437
    %p444 = scmp.eq.s32.totalorder %s39, 1
    %p445 = por %p443, %p444
    %p446 = scmp.ne.s32.totalorder %s437, %s438
    %p447 = scmp.eq.s32.totalorder %s39, 0
    %p448 = por %p446, %p447
    %p449 = scmp.ne.s32.totalorder %s437, %s438
    %p450 = scmp.eq.s32.totalorder %s40, 1
    %p451 = por %p449, %p450
    %p453 = scmp.ne.s32.totalorder %s438, %s452
    %p454 = scmp.eq.s32.totalorder %s40, 0
    %p455 = por %p453, %p454
    %s457 = sadd.s32 %s456, 1
    %p460 = scmp.eq.s32.totalorder %s34, 1
    %p461 = scmp.ne.s32.totalorder %s456, %s458
    %p462 = scmp.eq.s32.totalorder %s34, 0
    %p463 = por %p461, %p462
    %p464 = scmp.ne.s32.totalorder %s456, %s458
    %p465 = scmp.eq.s32.totalorder %s39, 1
    %p466 = por %p464, %p465
    %p467 = scmp.ne.s32.totalorder %s458, %s459
    %p468 = scmp.eq.s32.totalorder %s39, 0
    %p469 = por %p467, %p468
    %p470 = scmp.ne.s32.totalorder %s458, %s459
    %p471 = scmp.eq.s32.totalorder %s40, 1
    %p472 = por %p470, %p471
    %p474 = scmp.ne.s32.totalorder %s459, %s473
    %p475 = scmp.eq.s32.totalorder %s40, 0
    %p476 = por %p474, %p475
    %s478 = sadd.s32 %s477, 1
    %p481 = scmp.eq.s32.totalorder %s34, 1
    %p482 = scmp.ne.s32.totalorder %s477, %s479
    %p483 = scmp.eq.s32.totalorder %s34, 0
    %p484 = por %p482, %p483
    %p485 = scmp.ne.s32.totalorder %s477, %s479
    %p486 = scmp.eq.s32.totalorder %s39, 1
    %p487 = por %p485, %p486
    %p488 = scmp.ne.s32.totalorder %s479, %s480
    %p489 = scmp.eq.s32.totalorder %s39, 0
    %p490 = por %p488, %p489
    %p491 = scmp.ne.s32.totalorder %s479, %s480
    %p492 = scmp.eq.s32.totalorder %s40, 1
    %p493 = por %p491, %p492
    %p495 = scmp.ne.s32.totalorder %s480, %s494
    %p496 = scmp.eq.s32.totalorder %s40, 0
    %p497 = por %p495, %p496
    %s499 = sadd.s32 %s498, 1
    %p502 = scmp.eq.s32.totalorder %s34, 1
    %p503 = scmp.ne.s32.totalorder %s498, %s500
    %p504 = scmp.eq.s32.totalorder %s34, 0
    %p505 = por %p503, %p504
    %p506 = scmp.ne.s32.totalorder %s498, %s500
    %p507 = scmp.eq.s32.totalorder %s39, 1
    %p508 = por %p506, %p507
    %p509 = scmp.ne.s32.totalorder %s500, %s501
    %p510 = scmp.eq.s32.totalorder %s39, 0
    %p511 = por %p509, %p510
    %p512 = scmp.ne.s32.totalorder %s500, %s501
    %p513 = scmp.eq.s32.totalorder %s40, 1
    %p514 = por %p512, %p513
    %p516 = scmp.ne.s32.totalorder %s501, %s515
    %p517 = scmp.eq.s32.totalorder %s40, 0
    %p518 = por %p516, %p517
    %s520 = sadd.s32 %s519, 1
    %p523 = scmp.eq.s32.totalorder %s34, 1
    %p524 = scmp.ne.s32.totalorder %s519, %s521
    %p525 = scmp.eq.s32.totalorder %s34, 0
    %p526 = por %p524, %p525
    %p527 = scmp.ne.s32.totalorder %s519, %s521
    %p528 = scmp.eq.s32.totalorder %s39, 1
    %p529 = por %p527, %p528
    %p530 = scmp.ne.s32.totalorder %s521, %s522
    %p531 = scmp.eq.s32.totalorder %s39, 0
    %p532 = por %p530, %p531
    %p533 = scmp.ne.s32.totalorder %s521, %s522
    %p534 = scmp.eq.s32.totalorder %s40, 1
    %p535 = por %p533, %p534
    %p537 = scmp.ne.s32.totalorder %s522, %s536
    %p538 = scmp.eq.s32.totalorder %s40, 0
    %p539 = por %p537, %p538
    %s540 = ssub.s32 %s34, %s41
    %p541 = scmp.eq.s32.totalorder %s540, 0
    %s543 = sadd.s32 %s542, 1
    %s544 = scalar_select %p541, %s542, %s543
    %p547 = pneg %p541
    %p548 = scmp.eq.s32.totalorder %s34, 1
    %p549 = por %p547, %p548
    %p550 = scmp.ne.s32.totalorder %s542, %s545
    %p551 = scmp.eq.s32.totalorder %s34, 0
    %p552 = por %p550, %p551
    %p553 = scmp.ne.s32.totalorder %s542, %s545
    %p554 = scmp.eq.s32.totalorder %s39, 1
    %p555 = por %p553, %p554
    %p556 = scmp.ne.s32.totalorder %s545, %s546
    %p557 = scmp.eq.s32.totalorder %s39, 0
    %p558 = por %p556, %p557
    %p559 = scmp.ne.s32.totalorder %s545, %s546
    %p560 = scmp.eq.s32.totalorder %s40, 1
    %p561 = por %p559, %p560
    %p563 = scmp.ne.s32.totalorder %s546, %s562
    %p564 = scmp.eq.s32.totalorder %s40, 0
    %p565 = por %p563, %p564
    %s566 = ssub.s32 %s34, %s41
    %p567 = scmp.eq.s32.totalorder %s566, 0
    %s569 = sadd.s32 %s568, 1
    %s570 = scalar_select %p567, %s568, %s569
    %p573 = pneg %p567
    %p574 = scmp.eq.s32.totalorder %s34, 1
    %p575 = por %p573, %p574
    %p576 = scmp.ne.s32.totalorder %s568, %s571
    %p577 = scmp.eq.s32.totalorder %s34, 0
    %p578 = por %p576, %p577
    %p579 = scmp.ne.s32.totalorder %s568, %s571
    %p580 = scmp.eq.s32.totalorder %s39, 1
    %p581 = por %p579, %p580
    %p582 = scmp.ne.s32.totalorder %s571, %s572
    %p583 = scmp.eq.s32.totalorder %s39, 0
    %p584 = por %p582, %p583
    %p585 = scmp.ne.s32.totalorder %s571, %s572
    %p586 = scmp.eq.s32.totalorder %s40, 1
    %p587 = por %p585, %p586
    %p589 = scmp.ne.s32.totalorder %s572, %s588
    %p590 = scmp.eq.s32.totalorder %s40, 0
    %p591 = por %p589, %p590
    %s592 = ssub.s32 %s34, %s41
    %p593 = scmp.eq.s32.totalorder %s592, 0
    %s595 = sadd.s32 %s594, 1
    %s596 = scalar_select %p593, %s594, %s595
    %p599 = pneg %p593
    %p600 = scmp.eq.s32.totalorder %s34, 1
    %p601 = por %p599, %p600
    %p602 = scmp.ne.s32.totalorder %s594, %s597
    %p603 = scmp.eq.s32.totalorder %s34, 0
    %p604 = por %p602, %p603
    %p605 = scmp.ne.s32.totalorder %s594, %s597
    %p606 = scmp.eq.s32.totalorder %s39, 1
    %p607 = por %p605, %p606
    %p608 = scmp.ne.s32.totalorder %s597, %s598
    %p609 = scmp.eq.s32.totalorder %s39, 0
    %p610 = por %p608, %p609
    %p611 = scmp.ne.s32.totalorder %s597, %s598
    %p612 = scmp.eq.s32.totalorder %s40, 1
    %p613 = por %p611, %p612
    %p615 = scmp.ne.s32.totalorder %s598, %s614
    %p616 = scmp.eq.s32.totalorder %s40, 0
    %p617 = por %p615, %p616
    %p618 = scmp.le.s32.totalorder 1, %s34
    %p619 = scmp.lt.s32.totalorder %s34, 3
    %p620 = pnand %p618, %p619
    %p621 = pneg %p620
    // Predicated region
    $region9: #{firenet_forward.1} parent=5 // pred_check
      _
    $region10: #{firenet_forward.1} parent=5 // pred_check_branch
      %623 = sbr.rel (%p620) target = $region12
    $region11: #{firenet_forward.1} parent=5 // pred_region
      %s624 = ssub.s32 %s34, 1
      // Predicated region
      $region13: #{firenet_forward.1} parent=11 // pred_check
        %p625 = pneg %p133
      $region14: #{firenet_forward.1} parent=11 // pred_check_branch
        %627 = sbr.rel (%p625) target = $region16
      $region15: #{firenet_forward.1} parent=11 // pred_region
        _
      $region16: #{firenet_forward.1} parent=11 // pred_fallthru
        _
      // Predicated region
      $region17: #{firenet_forward.1} parent=11 // pred_check
        %p628 = pneg %p154
      $region18: #{firenet_forward.1} parent=11 // pred_check_branch
        %630 = sbr.rel (%p628) target = $region20
      $region19: #{firenet_forward.1} parent=11 // pred_region
        _
      $region20: #{firenet_forward.1} parent=11 // pred_fallthru
        _
      // Predicated region
      $region21: #{firenet_forward.1} parent=11 // pred_check
        %p631 = pneg %p175
      $region22: #{firenet_forward.1} parent=11 // pred_check_branch
        %633 = sbr.rel (%p631) target = $region24
      $region23: #{firenet_forward.1} parent=11 // pred_region
        _
      $region24: #{firenet_forward.1} parent=11 // pred_fallthru
        _
      // Predicated region
      $region25: #{firenet_forward.1} parent=11 // pred_check
        %p634 = pneg %p196
      $region26: #{firenet_forward.1} parent=11 // pred_check_branch
        %636 = sbr.rel (%p634) target = $region28
      $region27: #{firenet_forward.1} parent=11 // pred_region
        _
      $region28: #{firenet_forward.1} parent=11 // pred_fallthru
        _
      // Predicated region
      $region29: #{firenet_forward.1} parent=11 // pred_check
        %p637 = pneg %p217
      $region30: #{firenet_forward.1} parent=11 // pred_check_branch
        %639 = sbr.rel (%p637) target = $region32
      $region31: #{firenet_forward.1} parent=11 // pred_region
        _
      $region32: #{firenet_forward.1} parent=11 // pred_fallthru
        _
      // Predicated region
      $region33: #{firenet_forward.1} parent=11 // pred_check
        %p640 = pneg %p238
      $region34: #{firenet_forward.1} parent=11 // pred_check_branch
        %642 = sbr.rel (%p640) target = $region36
      $region35: #{firenet_forward.1} parent=11 // pred_region
        _
      $region36: #{firenet_forward.1} parent=11 // pred_fallthru
        _
      // Predicated region
      $region37: #{firenet_forward.1} parent=11 // pred_check
        %p643 = pneg %p259
      $region38: #{firenet_forward.1} parent=11 // pred_check_branch
        %645 = sbr.rel (%p643) target = $region40
      $region39: #{firenet_forward.1} parent=11 // pred_region
        _
      $region40: #{firenet_forward.1} parent=11 // pred_fallthru
        _
      // Predicated region
      $region41: #{firenet_forward.1} parent=11 // pred_check
        %p646 = pneg %p280
      $region42: #{firenet_forward.1} parent=11 // pred_check_branch
        %648 = sbr.rel (%p646) target = $region44
      $region43: #{firenet_forward.1} parent=11 // pred_region
        _
      $region44: #{firenet_forward.1} parent=11 // pred_fallthru
        _
      // Predicated region
      $region45: #{firenet_forward.1} parent=11 // pred_check
        %p649 = pneg %p301
      $region46: #{firenet_forward.1} parent=11 // pred_check_branch
        %651 = sbr.rel (%p649) target = $region48
      $region47: #{firenet_forward.1} parent=11 // pred_region
        _
      $region48: #{firenet_forward.1} parent=11 // pred_fallthru
        _
      // Predicated region
      $region49: #{firenet_forward.1} parent=11 // pred_check
        %p652 = pneg %p322
      $region50: #{firenet_forward.1} parent=11 // pred_check_branch
        %654 = sbr.rel (%p652) target = $region52
      $region51: #{firenet_forward.1} parent=11 // pred_region
        _
      $region52: #{firenet_forward.1} parent=11 // pred_fallthru
        _
      // Predicated region
      $region53: #{firenet_forward.1} parent=11 // pred_check
        %p655 = pneg %p343
      $region54: #{firenet_forward.1} parent=11 // pred_check_branch
        %657 = sbr.rel (%p655) target = $region56
      $region55: #{firenet_forward.1} parent=11 // pred_region
        _
      $region56: #{firenet_forward.1} parent=11 // pred_fallthru
        _
      // Predicated region
      $region57: #{firenet_forward.1} parent=11 // pred_check
        %p658 = pneg %p364
      $region58: #{firenet_forward.1} parent=11 // pred_check_branch
        %660 = sbr.rel (%p658) target = $region60
      $region59: #{firenet_forward.1} parent=11 // pred_region
        _
      $region60: #{firenet_forward.1} parent=11 // pred_fallthru
        _
      // Predicated region
      $region61: #{firenet_forward.1} parent=11 // pred_check
        %p661 = pneg %p385
      $region62: #{firenet_forward.1} parent=11 // pred_check_branch
        %663 = sbr.rel (%p661) target = $region64
      $region63: #{firenet_forward.1} parent=11 // pred_region
        _
      $region64: #{firenet_forward.1} parent=11 // pred_fallthru
        _
      // Predicated region
      $region65: #{firenet_forward.1} parent=11 // pred_check
        %p664 = pneg %p406
      $region66: #{firenet_forward.1} parent=11 // pred_check_branch
        %666 = sbr.rel (%p664) target = $region68
      $region67: #{firenet_forward.1} parent=11 // pred_region
        _
      $region68: #{firenet_forward.1} parent=11 // pred_fallthru
        _
      // Predicated region
      $region69: #{firenet_forward.1} parent=11 // pred_check
        %p667 = pneg %p427
      $region70: #{firenet_forward.1} parent=11 // pred_check_branch
        %669 = sbr.rel (%p667) target = $region72
      $region71: #{firenet_forward.1} parent=11 // pred_region
        _
      $region72: #{firenet_forward.1} parent=11 // pred_fallthru
        _
      // Predicated region
      $region73: #{firenet_forward.1} parent=11 // pred_check
        %p670 = pneg %p448
      $region74: #{firenet_forward.1} parent=11 // pred_check_branch
        %672 = sbr.rel (%p670) target = $region76
      $region75: #{firenet_forward.1} parent=11 // pred_region
        _
      $region76: #{firenet_forward.1} parent=11 // pred_fallthru
        _
      // Predicated region
      $region77: #{firenet_forward.1} parent=11 // pred_check
        %p673 = pneg %p469
      $region78: #{firenet_forward.1} parent=11 // pred_check_branch
        %675 = sbr.rel (%p673) target = $region80
      $region79: #{firenet_forward.1} parent=11 // pred_region
        _
      $region80: #{firenet_forward.1} parent=11 // pred_fallthru
        _
      // Predicated region
      $region81: #{firenet_forward.1} parent=11 // pred_check
        %p676 = pneg %p490
      $region82: #{firenet_forward.1} parent=11 // pred_check_branch
        %678 = sbr.rel (%p676) target = $region84
      $region83: #{firenet_forward.1} parent=11 // pred_region
        _
      $region84: #{firenet_forward.1} parent=11 // pred_fallthru
        _
      // Predicated region
      $region85: #{firenet_forward.1} parent=11 // pred_check
        %p679 = pneg %p511
      $region86: #{firenet_forward.1} parent=11 // pred_check_branch
        %681 = sbr.rel (%p679) target = $region88
      $region87: #{firenet_forward.1} parent=11 // pred_region
        _
      $region88: #{firenet_forward.1} parent=11 // pred_fallthru
        _
      // Predicated region
      $region89: #{firenet_forward.1} parent=11 // pred_check
        %p682 = pneg %p532
      $region90: #{firenet_forward.1} parent=11 // pred_check_branch
        %684 = sbr.rel (%p682) target = $region92
      $region91: #{firenet_forward.1} parent=11 // pred_region
        _
      $region92: #{firenet_forward.1} parent=11 // pred_fallthru
        _
    $region12: #{firenet_forward.1} parent=5 // pred_fallthru
      _
    %p685 = scmp.lt.s32.totalorder %s34, 2
    // Predicated region
    $region93: #{firenet_forward.1} parent=5 // pred_check
      %p686 = pneg %p685
    $region94: #{firenet_forward.1} parent=5 // pred_check_branch
      %688 = sbr.rel (%p686) target = $region96
    $region95: #{firenet_forward.1} parent=5 // pred_region
      // Predicated region
      $region97: #{firenet_forward.1} parent=95 // pred_check
        %p689 = pneg %p54
      $region98: #{firenet_forward.1} parent=95 // pred_check_branch
        %691 = sbr.rel (%p689) target = $region100
      $region99: #{firenet_forward.1} parent=95 // pred_region
        %p692 = scmp.lt.s32.totalorder %s34, 1
        %s693 = scalar_select %p692, %s34, 1
        %s694 = smul.addr %s693, 4
        %s695 = smul.addr %s694, 4
        %s696 = scalar_lea.vmem %s0, %s695
      $region100: #{firenet_forward.1} parent=95 // pred_fallthru
        _
      // Predicated region
      $region101: #{firenet_forward.1} parent=95 // pred_check
        %p697 = pneg %p80
      $region102: #{firenet_forward.1} parent=95 // pred_check_branch
        %699 = sbr.rel (%p697) target = $region104
      $region103: #{firenet_forward.1} parent=95 // pred_region
        %p700 = scmp.lt.s32.totalorder %s34, 1
        %s701 = scalar_select %p700, %s34, 1
        %s702 = smul.addr %s701, 4
        %s703 = smul.addr %s702, 8
        %s704 = scalar_lea.vmem %s1, %s703
      $region104: #{firenet_forward.1} parent=95 // pred_fallthru
        _
      // Predicated region
      $region105: #{firenet_forward.1} parent=95 // pred_check
        %p705 = pneg %p106
      $region106: #{firenet_forward.1} parent=95 // pred_check_branch
        %707 = sbr.rel (%p705) target = $region108
      $region107: #{firenet_forward.1} parent=95 // pred_region
        %p708 = scmp.lt.s32.totalorder %s34, 1
        %s709 = scalar_select %p708, %s34, 1
        %s710 = smul.addr %s709, 4
        %s711 = smul.addr %s710, 8
        %s712 = scalar_lea.vmem %s2, %s711
      $region108: #{firenet_forward.1} parent=95 // pred_fallthru
        _
    $region96: #{firenet_forward.1} parent=5 // pred_fallthru
      _
    %p713 = scmp.le.s32.totalorder 1, %s34
    %p714 = scmp.lt.s32.totalorder %s34, 3
    %p715 = pnand %p713, %p714
    %p716 = pneg %p715
    // Predicated region
    $region109: #{firenet_forward.1} parent=5 // pred_check
      _
    $region110: #{firenet_forward.1} parent=5 // pred_check_branch
      %718 = sbr.rel (%p715) target = $region112
    $region111: #{firenet_forward.1} parent=5 // pred_region
      %s719 = ssub.s32 %s34, 1
      %p720 = scmp.lt.s32.totalorder %s39, 1
      %s721 = scalar_select %p720, %s39, 1
      %s722 = smul.addr %s721, 4
      %s723 = smul.addr %s722, 4
      %s724 = scalar_lea.vmem %s0, %s723
      %p725 = pneg %p60
      %p726 = pneg %p57
      %p727 = scmp.lt.s32.totalorder %s39, 1
      %s728 = scalar_select %p727, %s39, 1
      %s729 = smul.addr %s728, 4
      %s730 = smul.addr %s729, 8
      %s731 = scalar_lea.vmem %s1, %s730
      %p732 = pneg %p86
      %p733 = pneg %p83
      %p734 = scmp.lt.s32.totalorder %s39, 1
      %s735 = scalar_select %p734, %s39, 1
      %s736 = smul.addr %s735, 4
      %s737 = smul.addr %s736, 8
      %s738 = scalar_lea.vmem %s2, %s737
      %p739 = pneg %p112
      %p740 = pneg %p109
      %p741 = pneg %p133
      %p742 = pneg %p130
      %p743 = pneg %p154
      %p744 = pneg %p151
      %p745 = pneg %p175
      %p746 = pneg %p172
      %p747 = pneg %p196
      %p748 = pneg %p193
      %p749 = pneg %p217
      %p750 = pneg %p214
      %p751 = pneg %p238
      %p752 = pneg %p235
      %p753 = pneg %p259
      %p754 = pneg %p256
      %p755 = pneg %p280
      %p756 = pneg %p277
      %p757 = pneg %p301
      %p758 = pneg %p298
      %p759 = pneg %p322
      %p760 = pneg %p319
      %p761 = pneg %p343
      %p762 = pneg %p340
      %p763 = pneg %p364
      %p764 = pneg %p361
      %p765 = pneg %p385
      %p766 = pneg %p382
      %p767 = pneg %p406
      %p768 = pneg %p403
      %p769 = pneg %p427
      %p770 = pneg %p424
      %p771 = pneg %p448
      %p772 = pneg %p445
      %p773 = pneg %p469
      %p774 = pneg %p466
      %p775 = pneg %p490
      %p776 = pneg %p487
      %p777 = pneg %p511
      %p778 = pneg %p508
      %p779 = pneg %p532
      %p780 = pneg %p529
      %p781 = pneg %p558
      %p782 = pneg %p555
      %p783 = scmp.lt.s32.totalorder %s39, 1
      %s784 = scalar_select %p783, %s39, 1
      %s785 = smul.addr %s784, 2
      %s786 = scalar_lea.vmem %s23, %s785
      %p787 = pneg %p584
      %p788 = pneg %p581
      %p789 = scmp.lt.s32.totalorder %s39, 1
      %s790 = scalar_select %p789, %s39, 1
      %s791 = smul.addr %s790, 4
      %s792 = smul.addr %s791, 8
      %s793 = scalar_lea.vmem %s24, %s792
      %p794 = pneg %p610
      %p795 = pneg %p607
      %p796 = scmp.lt.s32.totalorder %s39, 1
      %s797 = scalar_select %p796, %s39, 1
      %s798 = smul.addr %s797, 4
      %s799 = smul.addr %s798, 8
      %s800 = scalar_lea.vmem %s25, %s799
      %p801 = scmp.lt.s32.totalorder %s39, 1
      %s802 = scalar_select %p801, %s39, 1
      %s803 = smul.addr %s802, 4
      %s804 = smul.addr %s803, 4
      %s805 = scalar_lea.vmem %s0, %s804
      %p806 = scmp.lt.s32.totalorder %s39, 1
      %s807 = scalar_select %p806, %s39, 1
      %s808 = smul.addr %s807, 4
      %s809 = smul.addr %s808, 8
      %s810 = scalar_lea.vmem %s1, %s809
      %p811 = scmp.lt.s32.totalorder %s39, 1
      %s812 = scalar_select %p811, %s39, 1
      %s813 = smul.addr %s812, 4
      %s814 = smul.addr %s813, 8
      %s815 = scalar_lea.vmem %s2, %s814
      %p816 = scmp.lt.s32.totalorder %s39, 1
      %s817 = scalar_select %p816, %s39, 1
      %s818 = smul.addr %s817, 2
      %s819 = scalar_lea.vmem %s23, %s818
      %p820 = scmp.lt.s32.totalorder %s39, 1
      %s821 = scalar_select %p820, %s39, 1
      %s822 = smul.addr %s821, 4
      %s823 = smul.addr %s822, 8
      %s824 = scalar_lea.vmem %s24, %s823
      %p825 = scmp.lt.s32.totalorder %s39, 1
      %s826 = scalar_select %p825, %s39, 1
      %s827 = smul.addr %s826, 4
      %s828 = smul.addr %s827, 8
      %s829 = scalar_lea.vmem %s25, %s828
      %vm833 = vcmask 134144
      %834 = vst.msk [vmem:[#allocation2] sm:$0xf] %vm833, 0
      %835 = vst.msk [vmem:[#allocation2 + $0xc] sm:$0xf] %vm833, 0
      %836 = vst.msk [vmem:[#allocation2 + $0x18] sm:$0xf] %vm833, 0
      %837 = vst.msk [vmem:[#allocation2 + $0x24] sm:$0xf] %vm833, 0
      %vm838 = vcmask 273544
      %839 = vst.msk [vmem:[#allocation2 + $0x8] sm:$0xf] %vm838, 0
      %840 = vst.msk [vmem:[#allocation2 + $0x14] sm:$0xf] %vm838, 0
      %841 = vst.msk [vmem:[#allocation2 + $0x20] sm:$0xf] %vm838, 0
      %842 = vst.msk [vmem:[#allocation2 + $0x2c] sm:$0xf] %vm838, 0
      %v843 = vlaneseq
      %v844 = vand.u32 %v843, 127
      %v845 = vadd.s32 %v844, 128
      %vm846 = vcmp.lt.s32.totalorder %v844, 0
      %v847 = vsub.s32 0, %v844
      %v848 = vsel %vm846, %v847, %v844
      %v849 = vshrl.u32 %v848, 4
      %v850 = vand.u32 %v848, 15
      %v851 = vsub.s32 0, %v850
      %v852 = vsel %vm846, %v851, %v850
      %vm853 = vcmp.lt.s32.totalorder %v845, 0
      %v854 = vsub.s32 0, %v845
      %v855 = vsel %vm853, %v854, %v845
      %v856 = vshrl.u32 %v855, 4
      %v857 = vand.u32 %v855, 15
      %v858 = vsub.s32 0, %v857
      %v859 = vsel %vm853, %v858, %v857
      %vm860 = vcmp.ne.s32.totalorder %v852, 0
      %vm861 = vcmp.ne.s32.totalorder %v859, 0
      %vm862 = vcmp.lt.s32.totalorder %v852, 0
      %vm863 = vcmp.lt.s32.totalorder %v859, 0
      %vm864 = vmand %vm862, %vm860
      %vm865 = vmand %vm863, %vm861
      %v866 = vadd.s32 %v852, 16
      %v867 = vadd.s32 %v859, 16
      %v868 = vsel %vm864, %v866, %v852
      %v869 = vsel %vm865, %v867, %v859
      %vm870 = vcmp.ge.s32.totalorder %v868, 1
      %vm871 = vcmp.ge.s32.totalorder %v869, 1
      %vm872 = vcmp.le.s32.totalorder %v868, 14
      %vm873 = vcmp.le.s32.totalorder %v869, 14
      %v874 = vld [vmem:[%s805] sm:$0xff]
      %v875 = vld [vmem:[%s805 + $0x8] sm:$0xff]
      %v876 = vld [vmem:[%s810] sm:$0xff]
      %v877 = vld [vmem:[%s810 + $0x8] sm:$0xff]
      %v878 = vld [vmem:[%s810 + $0x10] sm:$0xff]
      %v879 = vld [vmem:[%s810 + $0x18] sm:$0xff]
      %v880 = vld [vmem:[%s815] sm:$0xff]
      %v881 = vld [vmem:[%s815 + $0x8] sm:$0xff]
      %v882 = vld [vmem:[%s815 + $0x10] sm:$0xff]
      %v883 = vld [vmem:[%s815 + $0x18] sm:$0xff]
      %886 = vrot.lane.b32.xlu0 %v874, 17
      %v887 = vpop.permute.xlu0 %886
      %888 = vrot.lane.b32.xlu0 %v875, 17
      %v889 = vpop.permute.xlu0 %888
      %v890 = vrot.slane %v887, 4
      %v891 = vrot.slane %v889, 4
      %vm892 = vcmask 138240
      %v893 = vsel %vm892, %v890, %v887
      %v894 = vsel %vm892, %v891, %v889
      %vm899 = vcmask 1043592
      %vm900 = vcmask 1047556
      %vm901 = vmor %vm900, %vm899
      %902 = vst.msk [vmem:[#allocation2] sm:$0xff] %vm901, %v893
      %903 = vst.msk [vmem:[#allocation2 + $0x8] sm:$0xf] %vm833, %v890
      %904 = vst.msk [vmem:[#allocation2 + $0xc] sm:$0xff] %vm901, %v894
      %905 = vst.msk [vmem:[#allocation2 + $0x14] sm:$0xf] %vm833, %v891
      %v906 = vld [vmem:[#allocation2] sm:$0xff]
      %v907 = vld [vmem:[#allocation2 + $0xc] sm:$0xff]
      %v908 = vsel %vm870, 1, 0
      %v909 = vsel %vm871, 1, 0
      %vm910 = vcmp.eq.s32.totalorder %v908, 1
      %vm911 = vcmp.eq.s32.totalorder %v909, 1
      %vm912 = vmpackc.low %vm911, %vm910
      %v913 = vsel %vm912, %v906, 0
      %v914 = vsel %vm912, %v907, 0
      %915 = vst [vmem:[#allocation3] sm:$0xff] %v913
      %916 = vst [vmem:[#allocation3 + $0x8] sm:$0xff] %v914
      %v917 = vld [vmem:[#allocation2] sm:$0xff]
      %v918 = vld [vmem:[#allocation2 + $0x8] sm:$0xf]
      %v919 = vld [vmem:[#allocation2 + $0xc] sm:$0xff]
      %v920 = vld [vmem:[#allocation2 + $0x14] sm:$0xf]
      %925 = vrot.lane.b32.xlu0 %v917, 127
      %v926 = vpop.permute.xlu0 %925
      %927 = vrot.lane.b32.xlu0 %v918, 127
      %v928 = vpop.permute.xlu0 %927
      %929 = vrot.lane.b32.xlu0 %v919, 127
      %v930 = vpop.permute.xlu0 %929
      %931 = vrot.lane.b32.xlu0 %v920, 127
      %v932 = vpop.permute.xlu0 %931
      %v933 = vrot.slane %v926, 4
      %v934 = vrot.slane %v928, 4
      %v935 = vrot.slane %v930, 4
      %v936 = vrot.slane %v932, 4
      %vm937 = vcmask 1043456
      %v938 = vsel %vm937, %v933, %v934
      %vm939 = vcmask 1039360
      %v940 = vsel %vm939, %v926, %v938
      %v941 = vsel %vm937, %v935, %v936
      %v942 = vsel %vm939, %v930, %v941
      %945 = vst [vmem:[#allocation3 + $0x10] sm:$0xff] %v940
      %946 = vst [vmem:[#allocation3 + $0x18] sm:$0xff] %v942
      %v947 = vld [vmem:[#allocation2] sm:$0xff]
      %v948 = vld [vmem:[#allocation2 + $0x8] sm:$0xf]
      %v949 = vld [vmem:[#allocation2 + $0xc] sm:$0xff]
      %v950 = vld [vmem:[#allocation2 + $0x14] sm:$0xf]
      %v951 = vsel %vm872, 1, 0
      %v952 = vsel %vm873, 1, 0
      %vm953 = vcmp.eq.s32.totalorder %v951, 1
      %vm954 = vcmp.eq.s32.totalorder %v952, 1
      %vm955 = vmpackc.low %vm954, %vm953
      %v956 = vsel %vm955, 65537, 0
      %957 = vrot.lane.b32.xlu0 %v956, 2
      %v958 = vpop.permute.xlu0 %957
      %v959 = vrot.slane %v958, 4
      %vm960 = vcmask 15360
      %v961 = vsel %vm960, %v959, %v958
      %v962 = vunpack.c.l.b16 %v961
      %v963 = vunpack.c.h.b16 %v961
      %v964 = vunpack.c.l.b16 0
      %v965 = vunpack.c.h.b16 0
      %vm966 = vcmp.ne.s32.totalorder %v962, %v964
      %vm967 = vcmp.ne.s32.totalorder %v963, %v965
      %vm968 = vmpackc.low %vm967, %vm966
      %v969 = vunpack.c.l.b16 %v959
      %v970 = vunpack.c.h.b16 %v959
      %v971 = vunpack.c.l.b16 0
      %v972 = vunpack.c.h.b16 0
      %vm973 = vcmp.ne.s32.totalorder %v969, %v971
      %vm974 = vcmp.ne.s32.totalorder %v970, %v972
      %vm975 = vmpackc.low %vm974, %vm973
      %v976 = vsel %vm968, %v947, 0
      %v977 = vsel %vm975, %v948, 0
      %v978 = vsel %vm968, %v949, 0
      %v979 = vsel %vm975, %v950, 0
      %984 = vrot.lane.b32.xlu0 %v976, 126
      %v985 = vpop.permute.xlu0 %984
      %986 = vrot.lane.b32.xlu0 %v977, 126
      %v987 = vpop.permute.xlu0 %986
      %988 = vrot.lane.b32.xlu0 %v978, 126
      %v989 = vpop.permute.xlu0 %988
      %990 = vrot.lane.b32.xlu0 %v979, 126
      %v991 = vpop.permute.xlu0 %990
      %v992 = vrot.slane %v985, 4
      %v993 = vrot.slane %v987, 4
      %v994 = vrot.slane %v989, 4
      %v995 = vrot.slane %v991, 4
      %v996 = vsel %vm937, %v992, %v993
      %vm997 = vcmask 1031168
      %v998 = vsel %vm997, %v985, %v996
      %v999 = vsel %vm937, %v994, %v995
      %v1000 = vsel %vm997, %v989, %v999
      %1003 = vst [vmem:[#allocation3 + $0x20] sm:$0xff] %v998
      %1004 = vst [vmem:[#allocation3 + $0x28] sm:$0xff] %v1000
      %v1005 = vld [vmem:[#allocation2] sm:$0xff]
      %v1006 = vld [vmem:[#allocation2 + $0x8] sm:$0xf]
      %v1007 = vld [vmem:[#allocation2 + $0xc] sm:$0xff]
      %v1008 = vld [vmem:[#allocation2 + $0x14] sm:$0xf]
      %v1009 = vsel %vm912, 65537, 0
      %1010 = vrot.lane.b32.xlu0 %v1009, 16
      %v1011 = vpop.permute.xlu0 %1010
      %v1012 = vrot.slane %v1011, 4
      %vm1013 = vcmask 130048
      %v1014 = vsel %vm1013, %v1012, %v1011
      %v1015 = vunpack.c.l.b16 %v1014
      %v1016 = vunpack.c.h.b16 %v1014
      %v1017 = vunpack.c.l.b16 0
      %v1018 = vunpack.c.h.b16 0
      %vm1019 = vcmp.ne.s32.totalorder %v1015, %v1017
      %vm1020 = vcmp.ne.s32.totalorder %v1016, %v1018
      %vm1021 = vmpackc.low %vm1020, %vm1019
      %v1022 = vunpack.c.l.b16 %v1012
      %v1023 = vunpack.c.h.b16 %v1012
      %v1024 = vunpack.c.l.b16 0
      %v1025 = vunpack.c.h.b16 0
      %vm1026 = vcmp.ne.s32.totalorder %v1022, %v1024
      %vm1027 = vcmp.ne.s32.totalorder %v1023, %v1025
      %vm1028 = vmpackc.low %vm1027, %vm1026
      %v1029 = vsel %vm1021, %v1005, 0
      %v1030 = vsel %vm1028, %v1006, 0
      %v1031 = vsel %vm1021, %v1007, 0
      %v1032 = vsel %vm1028, %v1008, 0
      %1037 = vrot.lane.b32.xlu0 %v1029, 112
      %v1038 = vpop.permute.xlu0 %1037
      %1039 = vrot.lane.b32.xlu0 %v1030, 112
      %v1040 = vpop.permute.xlu0 %1039
      %1041 = vrot.lane.b32.xlu0 %v1031, 112
      %v1042 = vpop.permute.xlu0 %1041
      %1043 = vrot.lane.b32.xlu0 %v1032, 112
      %v1044 = vpop.permute.xlu0 %1043
      %v1045 = vrot.slane %v1038, 4
      %v1046 = vrot.slane %v1040, 4
      %v1047 = vrot.slane %v1042, 4
      %v1048 = vrot.slane %v1044, 4
      %v1049 = vsel %vm937, %v1045, %v1046
      %vm1050 = vcmask 916480
      %v1051 = vsel %vm1050, %v1038, %v1049
      %v1052 = vsel %vm937, %v1047, %v1048
      %v1053 = vsel %vm1050, %v1042, %v1052
      %1056 = vst [vmem:[#allocation3 + $0x30] sm:$0xff] %v1051
      %1057 = vst [vmem:[#allocation3 + $0x38] sm:$0xff] %v1053
      %v1058 = vld [vmem:[#allocation2] sm:$0xff]
      %v1059 = vld [vmem:[#allocation2 + $0x8] sm:$0xf]
      %v1060 = vld [vmem:[#allocation2 + $0xc] sm:$0xff]
      %v1061 = vld [vmem:[#allocation2 + $0x14] sm:$0xf]
      %1066 = vrot.lane.b32.xlu0 %v1058, 111
      %v1067 = vpop.permute.xlu0 %1066
      %1068 = vrot.lane.b32.xlu0 %v1059, 111
      %v1069 = vpop.permute.xlu0 %1068
      %1070 = vrot.lane.b32.xlu0 %v1060, 111
      %v1071 = vpop.permute.xlu0 %1070
      %1072 = vrot.lane.b32.xlu0 %v1061, 111
      %v1073 = vpop.permute.xlu0 %1072
      %v1074 = vrot.slane %v1067, 4
      %v1075 = vrot.slane %v1069, 4
      %v1076 = vrot.slane %v1071, 4
      %v1077 = vrot.slane %v1073, 4
      %v1078 = vsel %vm937, %v1074, %v1075
      %vm1079 = vcmask 908288
      %v1080 = vsel %vm1079, %v1067, %v1078
      %v1081 = vsel %vm937, %v1076, %v1077
      %v1082 = vsel %vm1079, %v1071, %v1081
      %1085 = vst [vmem:[#allocation3 + $0x40] sm:$0xff] %v1080
      %1086 = vst [vmem:[#allocation3 + $0x48] sm:$0xff] %v1082
      %v1087 = vld [vmem:[#allocation2] sm:$0xff]
      %v1088 = vld [vmem:[#allocation2 + $0x8] sm:$0xf]
      %v1089 = vld [vmem:[#allocation2 + $0xc] sm:$0xff]
      %v1090 = vld [vmem:[#allocation2 + $0x14] sm:$0xf]
      %1091 = vrot.lane.b32.xlu0 %v956, 18
      %v1092 = vpop.permute.xlu0 %1091
      %v1093 = vrot.slane %v1092, 4
      %vm1094 = vcmask 146432
      %v1095 = vsel %vm1094, %v1093, %v1092
      %v1096 = vunpack.c.l.b16 %v1095
      %v1097 = vunpack.c.h.b16 %v1095
      %v1098 = vunpack.c.l.b16 0
      %v1099 = vunpack.c.h.b16 0
      %vm1100 = vcmp.ne.s32.totalorder %v1096, %v1098
      %vm1101 = vcmp.ne.s32.totalorder %v1097, %v1099
      %vm1102 = vmpackc.low %vm1101, %vm1100
      %v1103 = vunpack.c.l.b16 %v1093
      %v1104 = vunpack.c.h.b16 %v1093
      %v1105 = vunpack.c.l.b16 0
      %v1106 = vunpack.c.h.b16 0
      %vm1107 = vcmp.ne.s32.totalorder %v1103, %v1105
      %vm1108 = vcmp.ne.s32.totalorder %v1104, %v1106
      %vm1109 = vmpackc.low %vm1108, %vm1107
      %v1110 = vsel %vm1102, %v1087, 0
      %v1111 = vsel %vm1109, %v1088, 0
      %v1112 = vsel %vm1102, %v1089, 0
      %v1113 = vsel %vm1109, %v1090, 0
      %1118 = vrot.lane.b32.xlu0 %v1110, 110
      %v1119 = vpop.permute.xlu0 %1118
      %1120 = vrot.lane.b32.xlu0 %v1111, 110
      %v1121 = vpop.permute.xlu0 %1120
      %1122 = vrot.lane.b32.xlu0 %v1112, 110
      %v1123 = vpop.permute.xlu0 %1122
      %1124 = vrot.lane.b32.xlu0 %v1113, 110
      %v1125 = vpop.permute.xlu0 %1124
      %v1126 = vrot.slane %v1119, 4
      %v1127 = vrot.slane %v1121, 4
      %v1128 = vrot.slane %v1123, 4
      %v1129 = vrot.slane %v1125, 4
      %v1130 = vsel %vm937, %v1126, %v1127
      %vm1131 = vcmask 900096
      %v1132 = vsel %vm1131, %v1119, %v1130
      %v1133 = vsel %vm937, %v1128, %v1129
      %v1134 = vsel %vm1131, %v1123, %v1133
      %1137 = vst [vmem:[#allocation3 + $0x50] sm:$0xff] %v1132
      %1138 = vst [vmem:[#allocation3 + $0x58] sm:$0xff] %v1134
      %v1139 = vld [vmem:[#allocation2] sm:$0xff]
      %v1140 = vld [vmem:[#allocation2 + $0x8] sm:$0xf]
      %v1141 = vld [vmem:[#allocation2 + $0xc] sm:$0xff]
      %v1142 = vld [vmem:[#allocation2 + $0x14] sm:$0xf]
      %1143 = vrot.lane.b32.xlu0 %v1009, 32
      %v1144 = vpop.permute.xlu0 %1143
      %v1145 = vrot.slane %v1144, 4
      %vm1146 = vcmask 261120
      %v1147 = vsel %vm1146, %v1145, %v1144
      %v1148 = vunpack.c.l.b16 %v1147
      %v1149 = vunpack.c.h.b16 %v1147
      %v1150 = vunpack.c.l.b16 0
      %v1151 = vunpack.c.h.b16 0
      %vm1152 = vcmp.ne.s32.totalorder %v1148, %v1150
      %vm1153 = vcmp.ne.s32.totalorder %v1149, %v1151
      %vm1154 = vmpackc.low %vm1153, %vm1152
      %v1155 = vunpack.c.l.b16 %v1145
      %v1156 = vunpack.c.h.b16 %v1145
      %v1157 = vunpack.c.l.b16 0
      %v1158 = vunpack.c.h.b16 0
      %vm1159 = vcmp.ne.s32.totalorder %v1155, %v1157
      %vm1160 = vcmp.ne.s32.totalorder %v1156, %v1158
      %vm1161 = vmpackc.low %vm1160, %vm1159
      %v1162 = vsel %vm1154, %v1139, 0
      %v1163 = vsel %vm1161, %v1140, 0
      %v1164 = vsel %vm1154, %v1141, 0
      %v1165 = vsel %vm1161, %v1142, 0
      %1170 = vrot.lane.b32.xlu0 %v1162, 96
      %v1171 = vpop.permute.xlu0 %1170
      %1172 = vrot.lane.b32.xlu0 %v1163, 96
      %v1173 = vpop.permute.xlu0 %1172
      %1174 = vrot.lane.b32.xlu0 %v1164, 96
      %v1175 = vpop.permute.xlu0 %1174
      %1176 = vrot.lane.b32.xlu0 %v1165, 96
      %v1177 = vpop.permute.xlu0 %1176
      %v1178 = vrot.slane %v1171, 4
      %v1179 = vrot.slane %v1173, 4
      %v1180 = vrot.slane %v1175, 4
      %v1181 = vrot.slane %v1177, 4
      %v1182 = vsel %vm937, %v1178, %v1179
      %vm1183 = vcmask 785408
      %v1184 = vsel %vm1183, %v1171, %v1182
      %v1185 = vsel %vm937, %v1180, %v1181
      %v1186 = vsel %vm1183, %v1175, %v1185
      %1189 = vst [vmem:[#allocation3 + $0x60] sm:$0xff] %v1184
      %1190 = vst [vmem:[#allocation3 + $0x68] sm:$0xff] %v1186
      %v1191 = vld [vmem:[#allocation2] sm:$0xff]
      %v1192 = vld [vmem:[#allocation2 + $0x8] sm:$0xf]
      %v1193 = vld [vmem:[#allocation2 + $0xc] sm:$0xff]
      %v1194 = vld [vmem:[#allocation2 + $0x14] sm:$0xf]
      %1199 = vrot.lane.b32.xlu0 %v1191, 95
      %v1200 = vpop.permute.xlu0 %1199
      %1201 = vrot.lane.b32.xlu0 %v1192, 95
      %v1202 = vpop.permute.xlu0 %1201
      %1203 = vrot.lane.b32.xlu0 %v1193, 95
      %v1204 = vpop.permute.xlu0 %1203
      %1205 = vrot.lane.b32.xlu0 %v1194, 95
      %v1206 = vpop.permute.xlu0 %1205
      %v1207 = vrot.slane %v1200, 4
      %v1208 = vrot.slane %v1202, 4
      %v1209 = vrot.slane %v1204, 4
      %v1210 = vrot.slane %v1206, 4
      %v1211 = vsel %vm937, %v1207, %v1208
      %vm1212 = vcmask 777216
      %v1213 = vsel %vm1212, %v1200, %v1211
      %v1214 = vsel %vm937, %v1209, %v1210
      %v1215 = vsel %vm1212, %v1204, %v1214
      %1218 = vst [vmem:[#allocation3 + $0x70] sm:$0xff] %v1213
      %1219 = vst [vmem:[#allocation3 + $0x78] sm:$0xff] %v1215
      %v1220 = vld [vmem:[#allocation2] sm:$0xff]
      %v1221 = vld [vmem:[#allocation2 + $0x8] sm:$0xf]
      %v1222 = vld [vmem:[#allocation2 + $0xc] sm:$0xff]
      %v1223 = vld [vmem:[#allocation2 + $0x14] sm:$0xf]
      %1224 = vrot.lane.b32.xlu0 %v956, 34
      %v1225 = vpop.permute.xlu0 %1224
      %v1226 = vrot.slane %v1225, 4
      %vm1227 = vcmask 277504
      %v1228 = vsel %vm1227, %v1226, %v1225
      %v1229 = vunpack.c.l.b16 %v1228
      %v1230 = vunpack.c.h.b16 %v1228
      %v1231 = vunpack.c.l.b16 0
      %v1232 = vunpack.c.h.b16 0
      %vm1233 = vcmp.ne.s32.totalorder %v1229, %v1231
      %vm1234 = vcmp.ne.s32.totalorder %v1230, %v1232
      %vm1235 = vmpackc.low %vm1234, %vm1233
      %v1236 = vunpack.c.l.b16 %v1226
      %v1237 = vunpack.c.h.b16 %v1226
      %v1238 = vunpack.c.l.b16 0
      %v1239 = vunpack.c.h.b16 0
      %vm1240 = vcmp.ne.s32.totalorder %v1236, %v1238
      %vm1241 = vcmp.ne.s32.totalorder %v1237, %v1239
      %vm1242 = vmpackc.low %vm1241, %vm1240
      %v1243 = vsel %vm1235, %v1220, 0
      %v1244 = vsel %vm1242, %v1221, 0
      %v1245 = vsel %vm1235, %v1222, 0
      %v1246 = vsel %vm1242, %v1223, 0
      %1251 = vrot.lane.b32.xlu0 %v1243, 94
      %v1252 = vpop.permute.xlu0 %1251
      %1253 = vrot.lane.b32.xlu0 %v1244, 94
      %v1254 = vpop.permute.xlu0 %1253
      %1255 = vrot.lane.b32.xlu0 %v1245, 94
      %v1256 = vpop.permute.xlu0 %1255
      %1257 = vrot.lane.b32.xlu0 %v1246, 94
      %v1258 = vpop.permute.xlu0 %1257
      %v1259 = vrot.slane %v1252, 4
      %v1260 = vrot.slane %v1254, 4
      %v1261 = vrot.slane %v1256, 4
      %v1262 = vrot.slane %v1258, 4
      %v1263 = vsel %vm937, %v1259, %v1260
      %vm1264 = vcmask 769024
      %v1265 = vsel %vm1264, %v1252, %v1263
      %v1266 = vsel %vm937, %v1261, %v1262
      %v1267 = vsel %vm1264, %v1256, %v1266
      %1270 = vst [vmem:[#allocation3 + $0x80] sm:$0xff] %v1265
      %1271 = vst [vmem:[#allocation3 + $0x88] sm:$0xff] %v1267
      %v1272 = vld [vmem:[%s3] sm:$0xff]
      %v1273 = vld [vmem:[%s3 + $0x8] sm:$0xff]
      %v1274 = vld [vmem:[#allocation3] sm:$0xff]
      %v1275 = vld [vmem:[#allocation3 + $0x8] sm:$0xff]
      %v1276 = vld [vmem:[#allocation3 + $0x10] sm:$0xff]
      %v1277 = vld [vmem:[#allocation3 + $0x18] sm:$0xff]
      %v1278 = vld [vmem:[#allocation3 + $0x20] sm:$0xff]
      %v1279 = vld [vmem:[#allocation3 + $0x28] sm:$0xff]
      %v1280 = vld [vmem:[#allocation3 + $0x30] sm:$0xff]
      %v1281 = vld [vmem:[#allocation3 + $0x38] sm:$0xff]
      %v1282 = vld [vmem:[#allocation3 + $0x40] sm:$0xff]
      %v1283 = vld [vmem:[#allocation3 + $0x48] sm:$0xff]
      %v1284 = vld [vmem:[#allocation3 + $0x50] sm:$0xff]
      %v1285 = vld [vmem:[#allocation3 + $0x58] sm:$0xff]
      %v1286 = vld [vmem:[#allocation3 + $0x60] sm:$0xff]
      %v1287 = vld [vmem:[#allocation3 + $0x68] sm:$0xff]
      %v1288 = vld [vmem:[#allocation3 + $0x70] sm:$0xff]
      %v1289 = vld [vmem:[#allocation3 + $0x78] sm:$0xff]
      %v1290 = vld [vmem:[#allocation3 + $0x80] sm:$0xff]
      %v1291 = vld [vmem:[#allocation3 + $0x88] sm:$0xff]
      %v1292 = vld [vmem:[%s4] sm:$0xff]
      %v1293 = vld [vmem:[%s4 + $0x8] sm:$0xff]
      %1295 = vset.pattern.permute.xlu0 0
      %1296 = vperm.xlu0 %1295, %v1292
      %v1297 = vpop.permute.xlu0 %1296
      %1300 = vset.pattern.permute.xlu0 0
      %1301 = vperm.xlu0 %1300, %v1293
      %v1302 = vpop.permute.xlu0 %1301
      %v1306 = vunpack.c.l.b16 %v1272
      %v1307 = vunpack.c.h.b16 %v1272
      %v1308 = vunpack.c.l.b16 %v1273
      %v1309 = vunpack.c.h.b16 %v1273
      %v1310 = vpack.c.b16 %v1308, %v1306
      %v1311 = vpack.c.b16 %v1309, %v1307
      %v1331 = vunpack.c.l.b16 %v1274
      %v1332 = vunpack.c.h.b16 %v1274
      %v1333 = vunpack.c.l.b16 %v1275
      %v1334 = vunpack.c.h.b16 %v1275
      %v1335 = vunpack.c.l.b16 %v1276
      %v1336 = vunpack.c.h.b16 %v1276
      %v1337 = vunpack.c.l.b16 %v1277
      %v1338 = vunpack.c.h.b16 %v1277
      %v1339 = vunpack.c.l.b16 %v1278
      %v1340 = vunpack.c.h.b16 %v1278
      %v1341 = vunpack.c.l.b16 %v1279
      %v1342 = vunpack.c.h.b16 %v1279
      %v1343 = vunpack.c.l.b16 %v1280
      %v1344 = vunpack.c.h.b16 %v1280
      %v1345 = vunpack.c.l.b16 %v1281
      %v1346 = vunpack.c.h.b16 %v1281
      %v1347 = vunpack.c.l.b16 %v1282
      %v1348 = vunpack.c.h.b16 %v1282
      %v1349 = vunpack.c.l.b16 %v1283
      %v1350 = vunpack.c.h.b16 %v1283
      %v1351 = vunpack.c.l.b16 %v1284
      %v1352 = vunpack.c.h.b16 %v1284
      %v1353 = vunpack.c.l.b16 %v1285
      %v1354 = vunpack.c.h.b16 %v1285
      %v1355 = vunpack.c.l.b16 %v1286
      %v1356 = vunpack.c.h.b16 %v1286
      %v1357 = vunpack.c.l.b16 %v1287
      %v1358 = vunpack.c.h.b16 %v1287
      %v1359 = vunpack.c.l.b16 %v1288
      %v1360 = vunpack.c.h.b16 %v1288
      %v1361 = vunpack.c.l.b16 %v1289
      %v1362 = vunpack.c.h.b16 %v1289
      %v1363 = vunpack.c.l.b16 %v1290
      %v1364 = vunpack.c.h.b16 %v1290
      %v1365 = vunpack.c.l.b16 %v1291
      %v1366 = vunpack.c.h.b16 %v1291
      %v1367 = vpack.c.b16 %v1333, %v1331
      %v1368 = vpack.c.b16 %v1334, %v1332
      %v1369 = vpack.c.b16 %v1337, %v1335
      %v1370 = vpack.c.b16 %v1338, %v1336
      %v1371 = vpack.c.b16 %v1341, %v1339
      %v1372 = vpack.c.b16 %v1342, %v1340
      %v1373 = vpack.c.b16 %v1345, %v1343
      %v1374 = vpack.c.b16 %v1346, %v1344
      %v1375 = vpack.c.b16 %v1349, %v1347
      %v1376 = vpack.c.b16 %v1350, %v1348
      %v1377 = vpack.c.b16 %v1353, %v1351
      %v1378 = vpack.c.b16 %v1354, %v1352
      %v1379 = vpack.c.b16 %v1357, %v1355
      %v1380 = vpack.c.b16 %v1358, %v1356
      %v1381 = vpack.c.b16 %v1361, %v1359
      %v1382 = vpack.c.b16 %v1362, %v1360
      %v1383 = vpack.c.b16 %v1365, %v1363
      %v1384 = vpack.c.b16 %v1366, %v1364
      %vm1403 = vcmask 130048
      %v1405 = vsel %vm1403, %v1311, 0
      %1407 = vmatpush.bf16.msra.mxu0 %v1381
      %1408 = vmatpush.bf16.msra.mxu0 %v1379
      %1409 = vmatpush.bf16.msra.mxu0 %v1377
      %1410 = vmatpush.bf16.msra.mxu0 %v1375
      %1411 = vmatpush.bf16.msra.mxu0 %v1373
      %1412 = vmatpush.bf16.msra.mxu0 %v1371
      %1413 = vmatpush.bf16.msra.mxu0 %v1369
      %1414 = vmatpush.bf16.msra.mxu0 %v1367
      %1415 = vmatmul.bf16.gmra.mxu0 %v1310
      %v1416 = vpop.f32.mrf.mxu0
      %v1417 = vadd.f32 %v1297, %v1416
      %v1418 = vpop.f32.mrf.mxu0
      %v1419 = vadd.f32 %v1302, %v1418
      %1420 = vdwg.mxu0
      %1421 = vmatpush.bf16.msra.mxu0 0
      %1422 = vmatpush.bf16.msra.mxu0 0
      %1423 = vmatpush.bf16.msra.mxu0 0
      %1424 = vmatpush.bf16.msra.mxu0 0
      %1425 = vmatpush.bf16.msra.mxu0 0
      %1426 = vmatpush.bf16.msra.mxu0 0
      %1427 = vmatpush.bf16.msra.mxu0 0
      %1428 = vmatpush.bf16.msra.mxu0 %v1383
      %1429 = vmatmul.bf16.gmra.mxu0 %v1405
      %v1430 = vpop.f32.mrf.mxu0
      %v1431 = vadd.f32 %v1417, %v1430
      %v1432 = vpop.f32.mrf.mxu0
      %v1433 = vadd.f32 %v1419, %v1432
      %1434 = vdwg.mxu0
      %1435 = vmatpush.bf16.msra.mxu0 %v1382
      %1436 = vmatpush.bf16.msra.mxu0 %v1380
      %1437 = vmatpush.bf16.msra.mxu0 %v1378
      %1438 = vmatpush.bf16.msra.mxu0 %v1376
      %1439 = vmatpush.bf16.msra.mxu0 %v1374
      %1440 = vmatpush.bf16.msra.mxu0 %v1372
      %1441 = vmatpush.bf16.msra.mxu0 %v1370
      %1442 = vmatpush.bf16.msra.mxu0 %v1368
      %1443 = vmatmul.bf16.gmra.mxu0 %v1310
      %v1444 = vpop.f32.mrf.mxu0
      %v1445 = vadd.f32 %v1297, %v1444
      %v1446 = vpop.f32.mrf.mxu0
      %v1447 = vadd.f32 %v1302, %v1446
      %1448 = vdwg.mxu0
      %1449 = vmatpush.bf16.msra.mxu0 0
      %1450 = vmatpush.bf16.msra.mxu0 0
      %1451 = vmatpush.bf16.msra.mxu0 0
      %1452 = vmatpush.bf16.msra.mxu0 0
      %1453 = vmatpush.bf16.msra.mxu0 0
      %1454 = vmatpush.bf16.msra.mxu0 0
      %1455 = vmatpush.bf16.msra.mxu0 0
      %1456 = vmatpush.bf16.msra.mxu0 %v1384
      %1457 = vmatmul.bf16.gmra.mxu0 %v1405
      %v1458 = vpop.f32.mrf.mxu0
      %v1459 = vadd.f32 %v1445, %v1458
      %v1460 = vpop.f32.mrf.mxu0
      %v1461 = vadd.f32 %v1447, %v1460
      %1462 = vdwg.mxu0
      %v1463 = vmax.f32 %v1431, 0.0
      %v1464 = vmax.f32 %v1459, 0.0
      %v1465 = vmax.f32 %v1433, 0.0
      %v1466 = vmax.f32 %v1461, 0.0
      %v1467 = vpack.c.bf16 %v1464, %v1463
      %v1468 = vpack.c.bf16 %v1466, %v1465
      %1471 = vrot.lane.b32.xlu0 %v1467, 17
      %v1472 = vpop.permute.xlu0 %1471
      %1473 = vrot.lane.b32.xlu0 %v1468, 17
      %v1474 = vpop.permute.xlu0 %1473
      %v1475 = vrot.slane %v1472, 4
      %v1476 = vrot.slane %v1474, 4
      %v1477 = vsel %vm892, %v1475, %v1472
      %v1478 = vsel %vm892, %v1476, %v1474
      %1483 = vst.msk [vmem:[#allocation2] sm:$0xff] %vm901, %v1477
      %1484 = vst.msk [vmem:[#allocation2 + $0x8] sm:$0xf] %vm833, %v1475
      %1485 = vst.msk [vmem:[#allocation2 + $0xc] sm:$0xff] %vm901, %v1478
      %1486 = vst.msk [vmem:[#allocation2 + $0x14] sm:$0xf] %vm833, %v1476
      %v1487 = vpack.c.bf16 %v877, %v876
      %v1488 = vpack.c.bf16 %v879, %v878
      %1491 = vrot.lane.b32.xlu0 %v1487, 17
      %v1492 = vpop.permute.xlu0 %1491
      %1493 = vrot.lane.b32.xlu0 %v1488, 17
      %v1494 = vpop.permute.xlu0 %1493
      %v1495 = vrot.slane %v1492, 4
      %v1496 = vrot.slane %v1494, 4
      %v1497 = vsel %vm892, %v1495, %v1492
      %v1498 = vsel %vm892, %v1496, %v1494
      %1503 = vst.msk [vmem:[#allocation2 + $0x18] sm:$0xff] %vm901, %v1497
      %1504 = vst.msk [vmem:[#allocation2 + $0x20] sm:$0xf] %vm833, %v1495
      %1505 = vst.msk [vmem:[#allocation2 + $0x24] sm:$0xff] %vm901, %v1498
      %1506 = vst.msk [vmem:[#allocation2 + $0x2c] sm:$0xf] %vm833, %v1496
      %v1507 = vld [vmem:[#allocation2] sm:$0xff]
      %v1508 = vld [vmem:[#allocation2 + $0xc] sm:$0xff]
      %v1509 = vsel %vm912, %v1507, 0
      %v1510 = vsel %vm912, %v1508, 0
      %1511 = vst [vmem:[#allocation3] sm:$0xff] %v1509
      %1512 = vst [vmem:[#allocation3 + $0x8] sm:$0xff] %v1510
      %v1513 = vld [vmem:[#allocation2] sm:$0xff]
      %v1514 = vld [vmem:[#allocation2 + $0x8] sm:$0xf]
      %v1515 = vld [vmem:[#allocation2 + $0xc] sm:$0xff]
      %v1516 = vld [vmem:[#allocation2 + $0x14] sm:$0xf]
      %1521 = vrot.lane.b32.xlu0 %v1513, 127
      %v1522 = vpop.permute.xlu0 %1521
      %1523 = vrot.lane.b32.xlu0 %v1514, 127
      %v1524 = vpop.permute.xlu0 %1523
      %1525 = vrot.lane.b32.xlu0 %v1515, 127
      %v1526 = vpop.permute.xlu0 %1525
      %1527 = vrot.lane.b32.xlu0 %v1516, 127
      %v1528 = vpop.permute.xlu0 %1527
      %v1529 = vrot.slane %v1522, 4
      %v1530 = vrot.slane %v1524, 4
      %v1531 = vrot.slane %v1526, 4
      %v1532 = vrot.slane %v1528, 4
      %v1533 = vsel %vm937, %v1529, %v1530
      %v1534 = vsel %vm939, %v1522, %v1533
      %v1535 = vsel %vm937, %v1531, %v1532
      %v1536 = vsel %vm939, %v1526, %v1535
      %1539 = vst [vmem:[#allocation3 + $0x10] sm:$0xff] %v1534
      %1540 = vst [vmem:[#allocation3 + $0x18] sm:$0xff] %v1536
      %v1541 = vld [vmem:[#allocation2] sm:$0xff]
      %v1542 = vld [vmem:[#allocation2 + $0x8] sm:$0xf]
      %v1543 = vld [vmem:[#allocation2 + $0xc] sm:$0xff]
      %v1544 = vld [vmem:[#allocation2 + $0x14] sm:$0xf]
      %v1545 = vsel %vm968, %v1541, 0
      %v1546 = vsel %vm975, %v1542, 0
      %v1547 = vsel %vm968, %v1543, 0
      %v1548 = vsel %vm975, %v1544, 0
      %1553 = vrot.lane.b32.xlu0 %v1545, 126
      %v1554 = vpop.permute.xlu0 %1553
      %1555 = vrot.lane.b32.xlu0 %v1546, 126
      %v1556 = vpop.permute.xlu0 %1555
      %1557 = vrot.lane.b32.xlu0 %v1547, 126
      %v1558 = vpop.permute.xlu0 %1557
      %1559 = vrot.lane.b32.xlu0 %v1548, 126
      %v1560 = vpop.permute.xlu0 %1559
      %v1561 = vrot.slane %v1554, 4
      %v1562 = vrot.slane %v1556, 4
      %v1563 = vrot.slane %v1558, 4
      %v1564 = vrot.slane %v1560, 4
      %v1565 = vsel %vm937, %v1561, %v1562
      %v1566 = vsel %vm997, %v1554, %v1565
      %v1567 = vsel %vm937, %v1563, %v1564
      %v1568 = vsel %vm997, %v1558, %v1567
      %1571 = vst [vmem:[#allocation3 + $0x20] sm:$0xff] %v1566
      %1572 = vst [vmem:[#allocation3 + $0x28] sm:$0xff] %v1568
      %v1573 = vld [vmem:[#allocation2] sm:$0xff]
      %v1574 = vld [vmem:[#allocation2 + $0x8] sm:$0xf]
      %v1575 = vld [vmem:[#allocation2 + $0xc] sm:$0xff]
      %v1576 = vld [vmem:[#allocation2 + $0x14] sm:$0xf]
      %v1577 = vsel %vm1021, %v1573, 0
      %v1578 = vsel %vm1028, %v1574, 0
      %v1579 = vsel %vm1021, %v1575, 0
      %v1580 = vsel %vm1028, %v1576, 0
      %1585 = vrot.lane.b32.xlu0 %v1577, 112
      %v1586 = vpop.permute.xlu0 %1585
      %1587 = vrot.lane.b32.xlu0 %v1578, 112
      %v1588 = vpop.permute.xlu0 %1587
      %1589 = vrot.lane.b32.xlu0 %v1579, 112
      %v1590 = vpop.permute.xlu0 %1589
      %1591 = vrot.lane.b32.xlu0 %v1580, 112
      %v1592 = vpop.permute.xlu0 %1591
      %v1593 = vrot.slane %v1586, 4
      %v1594 = vrot.slane %v1588, 4
      %v1595 = vrot.slane %v1590, 4
      %v1596 = vrot.slane %v1592, 4
      %v1597 = vsel %vm937, %v1593, %v1594
      %v1598 = vsel %vm1050, %v1586, %v1597
      %v1599 = vsel %vm937, %v1595, %v1596
      %v1600 = vsel %vm1050, %v1590, %v1599
      %1603 = vst [vmem:[#allocation3 + $0x30] sm:$0xff] %v1598
      %1604 = vst [vmem:[#allocation3 + $0x38] sm:$0xff] %v1600
      %v1605 = vld [vmem:[#allocation2] sm:$0xff]
      %v1606 = vld [vmem:[#allocation2 + $0x8] sm:$0xf]
      %v1607 = vld [vmem:[#allocation2 + $0xc] sm:$0xff]
      %v1608 = vld [vmem:[#allocation2 + $0x14] sm:$0xf]
      %1613 = vrot.lane.b32.xlu0 %v1605, 111
      %v1614 = vpop.permute.xlu0 %1613
      %1615 = vrot.lane.b32.xlu0 %v1606, 111
      %v1616 = vpop.permute.xlu0 %1615
      %1617 = vrot.lane.b32.xlu0 %v1607, 111
      %v1618 = vpop.permute.xlu0 %1617
      %1619 = vrot.lane.b32.xlu0 %v1608, 111
      %v1620 = vpop.permute.xlu0 %1619
      %v1621 = vrot.slane %v1614, 4
      %v1622 = vrot.slane %v1616, 4
      %v1623 = vrot.slane %v1618, 4
      %v1624 = vrot.slane %v1620, 4
      %v1625 = vsel %vm937, %v1621, %v1622
      %v1626 = vsel %vm1079, %v1614, %v1625
      %v1627 = vsel %vm937, %v1623, %v1624
      %v1628 = vsel %vm1079, %v1618, %v1627
      %1631 = vst [vmem:[#allocation3 + $0x40] sm:$0xff] %v1626
      %1632 = vst [vmem:[#allocation3 + $0x48] sm:$0xff] %v1628
      %v1633 = vld [vmem:[#allocation2] sm:$0xff]
      %v1634 = vld [vmem:[#allocation2 + $0x8] sm:$0xf]
      %v1635 = vld [vmem:[#allocation2 + $0xc] sm:$0xff]
      %v1636 = vld [vmem:[#allocation2 + $0x14] sm:$0xf]
      %v1637 = vsel %vm1102, %v1633, 0
      %v1638 = vsel %vm1109, %v1634, 0
      %v1639 = vsel %vm1102, %v1635, 0
      %v1640 = vsel %vm1109, %v1636, 0
      %1645 = vrot.lane.b32.xlu0 %v1637, 110
      %v1646 = vpop.permute.xlu0 %1645
      %1647 = vrot.lane.b32.xlu0 %v1638, 110
      %v1648 = vpop.permute.xlu0 %1647
      %1649 = vrot.lane.b32.xlu0 %v1639, 110
      %v1650 = vpop.permute.xlu0 %1649
      %1651 = vrot.lane.b32.xlu0 %v1640, 110
      %v1652 = vpop.permute.xlu0 %1651
      %v1653 = vrot.slane %v1646, 4
      %v1654 = vrot.slane %v1648, 4
      %v1655 = vrot.slane %v1650, 4
      %v1656 = vrot.slane %v1652, 4
      %v1657 = vsel %vm937, %v1653, %v1654
      %v1658 = vsel %vm1131, %v1646, %v1657
      %v1659 = vsel %vm937, %v1655, %v1656
      %v1660 = vsel %vm1131, %v1650, %v1659
      %1663 = vst [vmem:[#allocation3 + $0x50] sm:$0xff] %v1658
      %1664 = vst [vmem:[#allocation3 + $0x58] sm:$0xff] %v1660
      %v1665 = vld [vmem:[#allocation2] sm:$0xff]
      %v1666 = vld [vmem:[#allocation2 + $0x8] sm:$0xf]
      %v1667 = vld [vmem:[#allocation2 + $0xc] sm:$0xff]
      %v1668 = vld [vmem:[#allocation2 + $0x14] sm:$0xf]
      %v1669 = vsel %vm1154, %v1665, 0
      %v1670 = vsel %vm1161, %v1666, 0
      %v1671 = vsel %vm1154, %v1667, 0
      %v1672 = vsel %vm1161, %v1668, 0
      %1677 = vrot.lane.b32.xlu0 %v1669, 96
      %v1678 = vpop.permute.xlu0 %1677
      %1679 = vrot.lane.b32.xlu0 %v1670, 96
      %v1680 = vpop.permute.xlu0 %1679
      %1681 = vrot.lane.b32.xlu0 %v1671, 96
      %v1682 = vpop.permute.xlu0 %1681
      %1683 = vrot.lane.b32.xlu0 %v1672, 96
      %v1684 = vpop.permute.xlu0 %1683
      %v1685 = vrot.slane %v1678, 4
      %v1686 = vrot.slane %v1680, 4
      %v1687 = vrot.slane %v1682, 4
      %v1688 = vrot.slane %v1684, 4
      %v1689 = vsel %vm937, %v1685, %v1686
      %v1690 = vsel %vm1183, %v1678, %v1689
      %v1691 = vsel %vm937, %v1687, %v1688
      %v1692 = vsel %vm1183, %v1682, %v1691
      %1695 = vst [vmem:[#allocation3 + $0x60] sm:$0xff] %v1690
      %1696 = vst [vmem:[#allocation3 + $0x68] sm:$0xff] %v1692
      %v1697 = vld [vmem:[#allocation2] sm:$0xff]
      %v1698 = vld [vmem:[#allocation2 + $0x8] sm:$0xf]
      %v1699 = vld [vmem:[#allocation2 + $0xc] sm:$0xff]
      %v1700 = vld [vmem:[#allocation2 + $0x14] sm:$0xf]
      %1705 = vrot.lane.b32.xlu0 %v1697, 95
      %v1706 = vpop.permute.xlu0 %1705
      %1707 = vrot.lane.b32.xlu0 %v1698, 95
      %v1708 = vpop.permute.xlu0 %1707
      %1709 = vrot.lane.b32.xlu0 %v1699, 95
      %v1710 = vpop.permute.xlu0 %1709
      %1711 = vrot.lane.b32.xlu0 %v1700, 95
      %v1712 = vpop.permute.xlu0 %1711
      %v1713 = vrot.slane %v1706, 4
      %v1714 = vrot.slane %v1708, 4
      %v1715 = vrot.slane %v1710, 4
      %v1716 = vrot.slane %v1712, 4
      %v1717 = vsel %vm937, %v1713, %v1714
      %v1718 = vsel %vm1212, %v1706, %v1717
      %v1719 = vsel %vm937, %v1715, %v1716
      %v1720 = vsel %vm1212, %v1710, %v1719
      %1723 = vst [vmem:[#allocation3 + $0x70] sm:$0xff] %v1718
      %1724 = vst [vmem:[#allocation3 + $0x78] sm:$0xff] %v1720
      %v1725 = vld [vmem:[#allocation2] sm:$0xff]
      %v1726 = vld [vmem:[#allocation2 + $0x8] sm:$0xf]
      %v1727 = vld [vmem:[#allocation2 + $0xc] sm:$0xff]
      %v1728 = vld [vmem:[#allocation2 + $0x14] sm:$0xf]
      %v1729 = vsel %vm1235, %v1725, 0
      %v1730 = vsel %vm1242, %v1726, 0
      %v1731 = vsel %vm1235, %v1727, 0
      %v1732 = vsel %vm1242, %v1728, 0
      %1737 = vrot.lane.b32.xlu0 %v1729, 94
      %v1738 = vpop.permute.xlu0 %1737
      %1739 = vrot.lane.b32.xlu0 %v1730, 94
      %v1740 = vpop.permute.xlu0 %1739
      %1741 = vrot.lane.b32.xlu0 %v1731, 94
      %v1742 = vpop.permute.xlu0 %1741
      %1743 = vrot.lane.b32.xlu0 %v1732, 94
      %v1744 = vpop.permute.xlu0 %1743
      %v1745 = vrot.slane %v1738, 4
      %v1746 = vrot.slane %v1740, 4
      %v1747 = vrot.slane %v1742, 4
      %v1748 = vrot.slane %v1744, 4
      %v1749 = vsel %vm937, %v1745, %v1746
      %v1750 = vsel %vm1264, %v1738, %v1749
      %v1751 = vsel %vm937, %v1747, %v1748
      %v1752 = vsel %vm1264, %v1742, %v1751
      %1755 = vst [vmem:[#allocation3 + $0x80] sm:$0xff] %v1750
      %1756 = vst [vmem:[#allocation3 + $0x88] sm:$0xff] %v1752
      %v1757 = vld [vmem:[#allocation2 + $0x18] sm:$0xff]
      %v1758 = vld [vmem:[#allocation2 + $0x24] sm:$0xff]
      %v1759 = vsel %vm912, %v1757, 0
      %v1760 = vsel %vm912, %v1758, 0
      %1761 = vst [vmem:[#allocation3 + $0x90] sm:$0xff] %v1759
      %1762 = vst [vmem:[#allocation3 + $0x98] sm:$0xff] %v1760
      %v1763 = vld [vmem:[#allocation2 + $0x18] sm:$0xff]
      %v1764 = vld [vmem:[#allocation2 + $0x20] sm:$0xf]
      %v1765 = vld [vmem:[#allocation2 + $0x24] sm:$0xff]
      %v1766 = vld [vmem:[#allocation2 + $0x2c] sm:$0xf]
      %1771 = vrot.lane.b32.xlu0 %v1763, 127
      %v1772 = vpop.permute.xlu0 %1771
      %1773 = vrot.lane.b32.xlu0 %v1764, 127
      %v1774 = vpop.permute.xlu0 %1773
      %1775 = vrot.lane.b32.xlu0 %v1765, 127
      %v1776 = vpop.permute.xlu0 %1775
      %1777 = vrot.lane.b32.xlu0 %v1766, 127
      %v1778 = vpop.permute.xlu0 %1777
      %v1779 = vrot.slane %v1772, 4
      %v1780 = vrot.slane %v1774, 4
      %v1781 = vrot.slane %v1776, 4
      %v1782 = vrot.slane %v1778, 4
      %v1783 = vsel %vm937, %v1779, %v1780
      %v1784 = vsel %vm939, %v1772, %v1783
      %v1785 = vsel %vm937, %v1781, %v1782
      %v1786 = vsel %vm939, %v1776, %v1785
      %1789 = vst [vmem:[#allocation3 + $0xa0] sm:$0xff] %v1784
      %1790 = vst [vmem:[#allocation3 + $0xa8] sm:$0xff] %v1786
      %v1791 = vld [vmem:[#allocation2 + $0x18] sm:$0xff]
      %v1792 = vld [vmem:[#allocation2 + $0x20] sm:$0xf]
      %v1793 = vld [vmem:[#allocation2 + $0x24] sm:$0xff]
      %v1794 = vld [vmem:[#allocation2 + $0x2c] sm:$0xf]
      %v1795 = vsel %vm968, %v1791, 0
      %v1796 = vsel %vm975, %v1792, 0
      %v1797 = vsel %vm968, %v1793, 0
      %v1798 = vsel %vm975, %v1794, 0
      %1803 = vrot.lane.b32.xlu0 %v1795, 126
      %v1804 = vpop.permute.xlu0 %1803
      %1805 = vrot.lane.b32.xlu0 %v1796, 126
      %v1806 = vpop.permute.xlu0 %1805
      %1807 = vrot.lane.b32.xlu0 %v1797, 126
      %v1808 = vpop.permute.xlu0 %1807
      %1809 = vrot.lane.b32.xlu0 %v1798, 126
      %v1810 = vpop.permute.xlu0 %1809
      %v1811 = vrot.slane %v1804, 4
      %v1812 = vrot.slane %v1806, 4
      %v1813 = vrot.slane %v1808, 4
      %v1814 = vrot.slane %v1810, 4
      %v1815 = vsel %vm937, %v1811, %v1812
      %v1816 = vsel %vm997, %v1804, %v1815
      %v1817 = vsel %vm937, %v1813, %v1814
      %v1818 = vsel %vm997, %v1808, %v1817
      %1821 = vst [vmem:[#allocation3 + $0xb0] sm:$0xff] %v1816
      %1822 = vst [vmem:[#allocation3 + $0xb8] sm:$0xff] %v1818
      %v1823 = vld [vmem:[#allocation2 + $0x18] sm:$0xff]
      %v1824 = vld [vmem:[#allocation2 + $0x20] sm:$0xf]
      %v1825 = vld [vmem:[#allocation2 + $0x24] sm:$0xff]
      %v1826 = vld [vmem:[#allocation2 + $0x2c] sm:$0xf]
      %v1827 = vsel %vm1021, %v1823, 0
      %v1828 = vsel %vm1028, %v1824, 0
      %v1829 = vsel %vm1021, %v1825, 0
      %v1830 = vsel %vm1028, %v1826, 0
      %1835 = vrot.lane.b32.xlu0 %v1827, 112
      %v1836 = vpop.permute.xlu0 %1835
      %1837 = vrot.lane.b32.xlu0 %v1828, 112
      %v1838 = vpop.permute.xlu0 %1837
      %1839 = vrot.lane.b32.xlu0 %v1829, 112
      %v1840 = vpop.permute.xlu0 %1839
      %1841 = vrot.lane.b32.xlu0 %v1830, 112
      %v1842 = vpop.permute.xlu0 %1841
      %v1843 = vrot.slane %v1836, 4
      %v1844 = vrot.slane %v1838, 4
      %v1845 = vrot.slane %v1840, 4
      %v1846 = vrot.slane %v1842, 4
      %v1847 = vsel %vm937, %v1843, %v1844
      %v1848 = vsel %vm1050, %v1836, %v1847
      %v1849 = vsel %vm937, %v1845, %v1846
      %v1850 = vsel %vm1050, %v1840, %v1849
      %1853 = vst [vmem:[#allocation3 + $0xc0] sm:$0xff] %v1848
      %1854 = vst [vmem:[#allocation3 + $0xc8] sm:$0xff] %v1850
      %v1855 = vld [vmem:[#allocation2 + $0x18] sm:$0xff]
      %v1856 = vld [vmem:[#allocation2 + $0x20] sm:$0xf]
      %v1857 = vld [vmem:[#allocation2 + $0x24] sm:$0xff]
      %v1858 = vld [vmem:[#allocation2 + $0x2c] sm:$0xf]
      %1863 = vrot.lane.b32.xlu0 %v1855, 111
      %v1864 = vpop.permute.xlu0 %1863
      %1865 = vrot.lane.b32.xlu0 %v1856, 111
      %v1866 = vpop.permute.xlu0 %1865
      %1867 = vrot.lane.b32.xlu0 %v1857, 111
      %v1868 = vpop.permute.xlu0 %1867
      %1869 = vrot.lane.b32.xlu0 %v1858, 111
      %v1870 = vpop.permute.xlu0 %1869
      %v1871 = vrot.slane %v1864, 4
      %v1872 = vrot.slane %v1866, 4
      %v1873 = vrot.slane %v1868, 4
      %v1874 = vrot.slane %v1870, 4
      %v1875 = vsel %vm937, %v1871, %v1872
      %v1876 = vsel %vm1079, %v1864, %v1875
      %v1877 = vsel %vm937, %v1873, %v1874
      %v1878 = vsel %vm1079, %v1868, %v1877
      %1881 = vst [vmem:[#allocation3 + $0xd0] sm:$0xff] %v1876
      %1882 = vst [vmem:[#allocation3 + $0xd8] sm:$0xff] %v1878
      %v1883 = vld [vmem:[#allocation2 + $0x18] sm:$0xff]
      %v1884 = vld [vmem:[#allocation2 + $0x20] sm:$0xf]
      %v1885 = vld [vmem:[#allocation2 + $0x24] sm:$0xff]
      %v1886 = vld [vmem:[#allocation2 + $0x2c] sm:$0xf]
      %v1887 = vsel %vm1102, %v1883, 0
      %v1888 = vsel %vm1109, %v1884, 0
      %v1889 = vsel %vm1102, %v1885, 0
      %v1890 = vsel %vm1109, %v1886, 0
      %1895 = vrot.lane.b32.xlu0 %v1887, 110
      %v1896 = vpop.permute.xlu0 %1895
      %1897 = vrot.lane.b32.xlu0 %v1888, 110
      %v1898 = vpop.permute.xlu0 %1897
      %1899 = vrot.lane.b32.xlu0 %v1889, 110
      %v1900 = vpop.permute.xlu0 %1899
      %1901 = vrot.lane.b32.xlu0 %v1890, 110
      %v1902 = vpop.permute.xlu0 %1901
      %v1903 = vrot.slane %v1896, 4
      %v1904 = vrot.slane %v1898, 4
      %v1905 = vrot.slane %v1900, 4
      %v1906 = vrot.slane %v1902, 4
      %v1907 = vsel %vm937, %v1903, %v1904
      %v1908 = vsel %vm1131, %v1896, %v1907
      %v1909 = vsel %vm937, %v1905, %v1906
      %v1910 = vsel %vm1131, %v1900, %v1909
      %1913 = vst [vmem:[#allocation3 + $0xe0] sm:$0xff] %v1908
      %1914 = vst [vmem:[#allocation3 + $0xe8] sm:$0xff] %v1910
      %v1915 = vld [vmem:[#allocation2 + $0x18] sm:$0xff]
      %v1916 = vld [vmem:[#allocation2 + $0x20] sm:$0xf]
      %v1917 = vld [vmem:[#allocation2 + $0x24] sm:$0xff]
      %v1918 = vld [vmem:[#allocation2 + $0x2c] sm:$0xf]
      %v1919 = vsel %vm1154, %v1915, 0
      %v1920 = vsel %vm1161, %v1916, 0
      %v1921 = vsel %vm1154, %v1917, 0
      %v1922 = vsel %vm1161, %v1918, 0
      %1927 = vrot.lane.b32.xlu0 %v1919, 96
      %v1928 = vpop.permute.xlu0 %1927
      %1929 = vrot.lane.b32.xlu0 %v1920, 96
      %v1930 = vpop.permute.xlu0 %1929
      %1931 = vrot.lane.b32.xlu0 %v1921, 96
      %v1932 = vpop.permute.xlu0 %1931
      %1933 = vrot.lane.b32.xlu0 %v1922, 96
      %v1934 = vpop.permute.xlu0 %1933
      %v1935 = vrot.slane %v1928, 4
      %v1936 = vrot.slane %v1930, 4
      %v1937 = vrot.slane %v1932, 4
      %v1938 = vrot.slane %v1934, 4
      %v1939 = vsel %vm937, %v1935, %v1936
      %v1940 = vsel %vm1183, %v1928, %v1939
      %v1941 = vsel %vm937, %v1937, %v1938
      %v1942 = vsel %vm1183, %v1932, %v1941
      %1945 = vst [vmem:[#allocation3 + $0xf0] sm:$0xff] %v1940
      %1946 = vst [vmem:[#allocation3 + $0xf8] sm:$0xff] %v1942
      %v1947 = vld [vmem:[#allocation2 + $0x18] sm:$0xff]
      %v1948 = vld [vmem:[#allocation2 + $0x20] sm:$0xf]
      %v1949 = vld [vmem:[#allocation2 + $0x24] sm:$0xff]
      %v1950 = vld [vmem:[#allocation2 + $0x2c] sm:$0xf]
      %1955 = vrot.lane.b32.xlu0 %v1947, 95
      %v1956 = vpop.permute.xlu0 %1955
      %1957 = vrot.lane.b32.xlu0 %v1948, 95
      %v1958 = vpop.permute.xlu0 %1957
      %1959 = vrot.lane.b32.xlu0 %v1949, 95
      %v1960 = vpop.permute.xlu0 %1959
      %1961 = vrot.lane.b32.xlu0 %v1950, 95
      %v1962 = vpop.permute.xlu0 %1961
      %v1963 = vrot.slane %v1956, 4
      %v1964 = vrot.slane %v1958, 4
      %v1965 = vrot.slane %v1960, 4
      %v1966 = vrot.slane %v1962, 4
      %v1967 = vsel %vm937, %v1963, %v1964
      %v1968 = vsel %vm1212, %v1956, %v1967
      %v1969 = vsel %vm937, %v1965, %v1966
      %v1970 = vsel %vm1212, %v1960, %v1969
      %1973 = vst [vmem:[#allocation3 + $0x100] sm:$0xff] %v1968
      %1974 = vst [vmem:[#allocation3 + $0x108] sm:$0xff] %v1970
      %v1975 = vld [vmem:[#allocation2 + $0x18] sm:$0xff]
      %v1976 = vld [vmem:[#allocation2 + $0x20] sm:$0xf]
      %v1977 = vld [vmem:[#allocation2 + $0x24] sm:$0xff]
      %v1978 = vld [vmem:[#allocation2 + $0x2c] sm:$0xf]
      %v1979 = vsel %vm1235, %v1975, 0
      %v1980 = vsel %vm1242, %v1976, 0
      %v1981 = vsel %vm1235, %v1977, 0
      %v1982 = vsel %vm1242, %v1978, 0
      %1987 = vrot.lane.b32.xlu0 %v1979, 94
      %v1988 = vpop.permute.xlu0 %1987
      %1989 = vrot.lane.b32.xlu0 %v1980, 94
      %v1990 = vpop.permute.xlu0 %1989
      %1991 = vrot.lane.b32.xlu0 %v1981, 94
      %v1992 = vpop.permute.xlu0 %1991
      %1993 = vrot.lane.b32.xlu0 %v1982, 94
      %v1994 = vpop.permute.xlu0 %1993
      %v1995 = vrot.slane %v1988, 4
      %v1996 = vrot.slane %v1990, 4
      %v1997 = vrot.slane %v1992, 4
      %v1998 = vrot.slane %v1994, 4
      %v1999 = vsel %vm937, %v1995, %v1996
      %v2000 = vsel %vm1264, %v1988, %v1999
      %v2001 = vsel %vm937, %v1997, %v1998
      %v2002 = vsel %vm1264, %v1992, %v2001
      %2005 = vst [vmem:[#allocation3 + $0x110] sm:$0xff] %v2000
      %2006 = vst [vmem:[#allocation3 + $0x118] sm:$0xff] %v2002
      %v2007 = vld [vmem:[%s5] sm:$0xff]
      %v2008 = vld [vmem:[%s5 + $0x8] sm:$0xf]
      %v2009 = vld [vmem:[%s5 + $0xc] sm:$0xff]
      %v2010 = vld [vmem:[%s5 + $0x14] sm:$0xf]
      %v2011 = vld [vmem:[%s5 + $0x18] sm:$0xff]
      %v2012 = vld [vmem:[%s5 + $0x20] sm:$0xf]
      %v2013 = vld [vmem:[%s5 + $0x24] sm:$0xff]
      %v2014 = vld [vmem:[%s5 + $0x2c] sm:$0xf]
      %v2015 = vld [vmem:[#allocation3] sm:$0xff]
      %v2016 = vld [vmem:[#allocation3 + $0x8] sm:$0xff]
      %v2017 = vld [vmem:[#allocation3 + $0x10] sm:$0xff]
      %v2018 = vld [vmem:[#allocation3 + $0x18] sm:$0xff]
      %v2019 = vld [vmem:[#allocation3 + $0x20] sm:$0xff]
      %v2020 = vld [vmem:[#allocation3 + $0x28] sm:$0xff]
      %v2021 = vld [vmem:[#allocation3 + $0x30] sm:$0xff]
      %v2022 = vld [vmem:[#allocation3 + $0x38] sm:$0xff]
      %v2023 = vld [vmem:[#allocation3 + $0x40] sm:$0xff]
      %v2024 = vld [vmem:[#allocation3 + $0x48] sm:$0xff]
      %v2025 = vld [vmem:[#allocation3 + $0x50] sm:$0xff]
      %v2026 = vld [vmem:[#allocation3 + $0x58] sm:$0xff]
      %v2027 = vld [vmem:[#allocation3 + $0x60] sm:$0xff]
      %v2028 = vld [vmem:[#allocation3 + $0x68] sm:$0xff]
      %v2029 = vld [vmem:[#allocation3 + $0x70] sm:$0xff]
      %v2030 = vld [vmem:[#allocation3 + $0x78] sm:$0xff]
      %v2031 = vld [vmem:[#allocation3 + $0x80] sm:$0xff]
      %v2032 = vld [vmem:[#allocation3 + $0x88] sm:$0xff]
      %v2033 = vld [vmem:[#allocation3 + $0x90] sm:$0xff]
      %v2034 = vld [vmem:[#allocation3 + $0x98] sm:$0xff]
      %v2035 = vld [vmem:[#allocation3 + $0xa0] sm:$0xff]
      %v2036 = vld [vmem:[#allocation3 + $0xa8] sm:$0xff]
      %v2037 = vld [vmem:[#allocation3 + $0xb0] sm:$0xff]
      %v2038 = vld [vmem:[#allocation3 + $0xb8] sm:$0xff]
      %v2039 = vld [vmem:[#allocation3 + $0xc0] sm:$0xff]
      %v2040 = vld [vmem:[#allocation3 + $0xc8] sm:$0xff]
      %v2041 = vld [vmem:[#allocation3 + $0xd0] sm:$0xff]
      %v2042 = vld [vmem:[#allocation3 + $0xd8] sm:$0xff]
      %v2043 = vld [vmem:[#allocation3 + $0xe0] sm:$0xff]
      %v2044 = vld [vmem:[#allocation3 + $0xe8] sm:$0xff]
      %v2045 = vld [vmem:[#allocation3 + $0xf0] sm:$0xff]
      %v2046 = vld [vmem:[#allocation3 + $0xf8] sm:$0xff]
      %v2047 = vld [vmem:[#allocation3 + $0x100] sm:$0xff]
      %v2048 = vld [vmem:[#allocation3 + $0x108] sm:$0xff]
      %v2049 = vld [vmem:[#allocation3 + $0x110] sm:$0xff]
      %v2050 = vld [vmem:[#allocation3 + $0x118] sm:$0xff]
      %v2051 = vld [vmem:[%s6] sm:$0xff]
      %v2052 = vld [vmem:[%s6 + $0x8] sm:$0xff]
      %v2053 = vld [vmem:[%s6 + $0x10] sm:$0xff]
      %v2054 = vld [vmem:[%s6 + $0x18] sm:$0xff]
      %2056 = vset.pattern.permute.xlu0 0
      %2057 = vperm.xlu0 %2056, %v2051
      %v2058 = vpop.permute.xlu0 %2057
      %2061 = vset.pattern.permute.xlu0 0
      %2062 = vperm.xlu0 %2061, %v2052
      %v2063 = vpop.permute.xlu0 %2062
      %2066 = vset.pattern.permute.xlu0 0
      %2067 = vperm.xlu0 %2066, %v2053
      %v2068 = vpop.permute.xlu0 %2067
      %2071 = vset.pattern.permute.xlu0 0
      %2072 = vperm.xlu0 %2071, %v2054
      %v2073 = vpop.permute.xlu0 %2072
      %v2083 = vunpack.c.l.b16 %v2007
      %v2084 = vunpack.c.h.b16 %v2007
      %v2085 = vunpack.c.l.b16 %v2008
      %v2086 = vunpack.c.l.b16 %v2009
      %v2087 = vunpack.c.h.b16 %v2009
      %v2088 = vunpack.c.l.b16 %v2010
      %v2089 = vunpack.c.l.b16 %v2011
      %v2090 = vunpack.c.h.b16 %v2011
      %v2091 = vunpack.c.l.b16 %v2012
      %v2092 = vunpack.c.l.b16 %v2013
      %v2093 = vunpack.c.h.b16 %v2013
      %v2094 = vunpack.c.l.b16 %v2014
      %v2095 = vpack.c.b16 %v2086, %v2083
      %v2096 = vpack.c.b16 %v2087, %v2084
      %v2097 = vpack.c.b16 %v2088, %v2085
      %v2098 = vpack.c.b16 %v2092, %v2089
      %v2099 = vpack.c.b16 %v2093, %v2090
      %v2100 = vpack.c.b16 %v2094, %v2091
      %v2141 = vunpack.c.l.b16 %v2015
      %v2142 = vunpack.c.h.b16 %v2015
      %v2143 = vunpack.c.l.b16 %v2016
      %v2144 = vunpack.c.h.b16 %v2016
      %v2145 = vunpack.c.l.b16 %v2017
      %v2146 = vunpack.c.h.b16 %v2017
      %v2147 = vunpack.c.l.b16 %v2018
      %v2148 = vunpack.c.h.b16 %v2018
      %v2149 = vunpack.c.l.b16 %v2019
      %v2150 = vunpack.c.h.b16 %v2019
      %v2151 = vunpack.c.l.b16 %v2020
      %v2152 = vunpack.c.h.b16 %v2020
      %v2153 = vunpack.c.l.b16 %v2021
      %v2154 = vunpack.c.h.b16 %v2021
      %v2155 = vunpack.c.l.b16 %v2022
      %v2156 = vunpack.c.h.b16 %v2022
      %v2157 = vunpack.c.l.b16 %v2023
      %v2158 = vunpack.c.h.b16 %v2023
      %v2159 = vunpack.c.l.b16 %v2024
      %v2160 = vunpack.c.h.b16 %v2024
      %v2161 = vunpack.c.l.b16 %v2025
      %v2162 = vunpack.c.h.b16 %v2025
      %v2163 = vunpack.c.l.b16 %v2026
      %v2164 = vunpack.c.h.b16 %v2026
      %v2165 = vunpack.c.l.b16 %v2027
      %v2166 = vunpack.c.h.b16 %v2027
      %v2167 = vunpack.c.l.b16 %v2028
      %v2168 = vunpack.c.h.b16 %v2028
      %v2169 = vunpack.c.l.b16 %v2029
      %v2170 = vunpack.c.h.b16 %v2029
      %v2171 = vunpack.c.l.b16 %v2030
      %v2172 = vunpack.c.h.b16 %v2030
      %v2173 = vunpack.c.l.b16 %v2031
      %v2174 = vunpack.c.h.b16 %v2031
      %v2175 = vunpack.c.l.b16 %v2032
      %v2176 = vunpack.c.h.b16 %v2032
      %v2177 = vunpack.c.l.b16 %v2033
      %v2178 = vunpack.c.h.b16 %v2033
      %v2179 = vunpack.c.l.b16 %v2034
      %v2180 = vunpack.c.h.b16 %v2034
      %v2181 = vunpack.c.l.b16 %v2035
      %v2182 = vunpack.c.h.b16 %v2035
      %v2183 = vunpack.c.l.b16 %v2036
      %v2184 = vunpack.c.h.b16 %v2036
      %v2185 = vunpack.c.l.b16 %v2037
      %v2186 = vunpack.c.h.b16 %v2037
      %v2187 = vunpack.c.l.b16 %v2038
      %v2188 = vunpack.c.h.b16 %v2038
      %v2189 = vunpack.c.l.b16 %v2039
      %v2190 = vunpack.c.h.b16 %v2039
      %v2191 = vunpack.c.l.b16 %v2040
      %v2192 = vunpack.c.h.b16 %v2040
      %v2193 = vunpack.c.l.b16 %v2041
      %v2194 = vunpack.c.h.b16 %v2041
      %v2195 = vunpack.c.l.b16 %v2042
      %v2196 = vunpack.c.h.b16 %v2042
      %v2197 = vunpack.c.l.b16 %v2043
      %v2198 = vunpack.c.h.b16 %v2043
      %v2199 = vunpack.c.l.b16 %v2044
      %v2200 = vunpack.c.h.b16 %v2044
      %v2201 = vunpack.c.l.b16 %v2045
      %v2202 = vunpack.c.h.b16 %v2045
      %v2203 = vunpack.c.l.b16 %v2046
      %v2204 = vunpack.c.h.b16 %v2046
      %v2205 = vunpack.c.l.b16 %v2047
      %v2206 = vunpack.c.h.b16 %v2047
      %v2207 = vunpack.c.l.b16 %v2048
      %v2208 = vunpack.c.h.b16 %v2048
      %v2209 = vunpack.c.l.b16 %v2049
      %v2210 = vunpack.c.h.b16 %v2049
      %v2211 = vunpack.c.l.b16 %v2050
      %v2212 = vunpack.c.h.b16 %v2050
      %v2213 = vpack.c.b16 %v2143, %v2141
      %v2214 = vpack.c.b16 %v2144, %v2142
      %v2215 = vpack.c.b16 %v2147, %v2145
      %v2216 = vpack.c.b16 %v2148, %v2146
      %v2217 = vpack.c.b16 %v2151, %v2149
      %v2218 = vpack.c.b16 %v2152, %v2150
      %v2219 = vpack.c.b16 %v2155, %v2153
      %v2220 = vpack.c.b16 %v2156, %v2154
      %v2221 = vpack.c.b16 %v2159, %v2157
      %v2222 = vpack.c.b16 %v2160, %v2158
      %v2223 = vpack.c.b16 %v2163, %v2161
      %v2224 = vpack.c.b16 %v2164, %v2162
      %v2225 = vpack.c.b16 %v2167, %v2165
      %v2226 = vpack.c.b16 %v2168, %v2166
      %v2227 = vpack.c.b16 %v2171, %v2169
      %v2228 = vpack.c.b16 %v2172, %v2170
      %v2229 = vpack.c.b16 %v2175, %v2173
      %v2230 = vpack.c.b16 %v2176, %v2174
      %v2231 = vpack.c.b16 %v2179, %v2177
      %v2232 = vpack.c.b16 %v2180, %v2178
      %v2233 = vpack.c.b16 %v2183, %v2181
      %v2234 = vpack.c.b16 %v2184, %v2182
      %v2235 = vpack.c.b16 %v2187, %v2185
      %v2236 = vpack.c.b16 %v2188, %v2186
      %v2237 = vpack.c.b16 %v2191, %v2189
      %v2238 = vpack.c.b16 %v2192, %v2190
      %v2239 = vpack.c.b16 %v2195, %v2193
      %v2240 = vpack.c.b16 %v2196, %v2194
      %v2241 = vpack.c.b16 %v2199, %v2197
      %v2242 = vpack.c.b16 %v2200, %v2198
      %v2243 = vpack.c.b16 %v2203, %v2201
      %v2244 = vpack.c.b16 %v2204, %v2202
      %v2245 = vpack.c.b16 %v2207, %v2205
      %v2246 = vpack.c.b16 %v2208, %v2206
      %v2247 = vpack.c.b16 %v2211, %v2209
      %v2248 = vpack.c.b16 %v2212, %v2210
      %vm2285 = vcmask 261120
      %v2287 = vsel %vm2285, %v2097, 0
      %v2290 = vsel %vm2285, %v2100, 0
      %2292 = vmatpush.bf16.msra.mxu0 %v2227
      %2293 = vmatpush.bf16.msra.mxu0 %v2225
      %2294 = vmatpush.bf16.msra.mxu0 %v2223
      %2295 = vmatpush.bf16.msra.mxu0 %v2221
      %2296 = vmatpush.bf16.msra.mxu0 %v2219
      %2297 = vmatpush.bf16.msra.mxu0 %v2217
      %2298 = vmatpush.bf16.msra.mxu0 %v2215
      %2299 = vmatpush.bf16.msra.mxu0 %v2213
      %2300 = vmatmul.bf16.gmra.mxu0 %v2095
      %v2301 = vpop.f32.mrf.mxu0
      %v2302 = vadd.f32 %v2058, %v2301
      %v2303 = vpop.f32.mrf.mxu0
      %v2304 = vadd.f32 %v2063, %v2303
      %2305 = vmatmul.bf16.gmra.mxu0 %v2098
      %v2306 = vpop.f32.mrf.mxu0
      %v2307 = vadd.f32 %v2068, %v2306
      %v2308 = vpop.f32.mrf.mxu0
      %v2309 = vadd.f32 %v2073, %v2308
      %2310 = vdwg.mxu0
      %2311 = vmatpush.bf16.msra.mxu0 %v2243
      %2312 = vmatpush.bf16.msra.mxu0 %v2241
      %2313 = vmatpush.bf16.msra.mxu0 %v2239
      %2314 = vmatpush.bf16.msra.mxu0 %v2237
      %2315 = vmatpush.bf16.msra.mxu0 %v2235
      %2316 = vmatpush.bf16.msra.mxu0 %v2233
      %2317 = vmatpush.bf16.msra.mxu0 %v2231
      %2318 = vmatpush.bf16.msra.mxu0 %v2229
      %2319 = vmatmul.bf16.gmra.mxu0 %v2096
      %v2320 = vpop.f32.mrf.mxu0
      %v2321 = vadd.f32 %v2302, %v2320
      %v2322 = vpop.f32.mrf.mxu0
      %v2323 = vadd.f32 %v2304, %v2322
      %2324 = vmatmul.bf16.gmra.mxu0 %v2099
      %v2325 = vpop.f32.mrf.mxu0
      %v2326 = vadd.f32 %v2307, %v2325
      %v2327 = vpop.f32.mrf.mxu0
      %v2328 = vadd.f32 %v2309, %v2327
      %2329 = vdwg.mxu0
      %2330 = vmatpush.bf16.msra.mxu0 0
      %2331 = vmatpush.bf16.msra.mxu0 0
      %2332 = vmatpush.bf16.msra.mxu0 0
      %2333 = vmatpush.bf16.msra.mxu0 0
      %2334 = vmatpush.bf16.msra.mxu0 0
      %2335 = vmatpush.bf16.msra.mxu0 0
      %2336 = vmatpush.bf16.msra.mxu0 %v2247
      %2337 = vmatpush.bf16.msra.mxu0 %v2245
      %2338 = vmatmul.bf16.gmra.mxu0 %v2287
      %v2339 = vpop.f32.mrf.mxu0
      %v2340 = vadd.f32 %v2321, %v2339
      %v2341 = vpop.f32.mrf.mxu0
      %v2342 = vadd.f32 %v2323, %v2341
      %2343 = vmatmul.bf16.gmra.mxu0 %v2290
      %v2344 = vpop.f32.mrf.mxu0
      %v2345 = vadd.f32 %v2326, %v2344
      %v2346 = vpop.f32.mrf.mxu0
      %v2347 = vadd.f32 %v2328, %v2346
      %2348 = vdwg.mxu0
      %2349 = vmatpush.bf16.msra.mxu0 %v2228
      %2350 = vmatpush.bf16.msra.mxu0 %v2226
      %2351 = vmatpush.bf16.msra.mxu0 %v2224
      %2352 = vmatpush.bf16.msra.mxu0 %v2222
      %2353 = vmatpush.bf16.msra.mxu0 %v2220
      %2354 = vmatpush.bf16.msra.mxu0 %v2218
      %2355 = vmatpush.bf16.msra.mxu0 %v2216
      %2356 = vmatpush.bf16.msra.mxu0 %v2214
      %2357 = vmatmul.bf16.gmra.mxu0 %v2095
      %v2358 = vpop.f32.mrf.mxu0
      %v2359 = vadd.f32 %v2058, %v2358
      %v2360 = vpop.f32.mrf.mxu0
      %v2361 = vadd.f32 %v2063, %v2360
      %2362 = vmatmul.bf16.gmra.mxu0 %v2098
      %v2363 = vpop.f32.mrf.mxu0
      %v2364 = vadd.f32 %v2068, %v2363
      %v2365 = vpop.f32.mrf.mxu0
      %v2366 = vadd.f32 %v2073, %v2365
      %2367 = vdwg.mxu0
      %2368 = vmatpush.bf16.msra.mxu0 %v2244
      %2369 = vmatpush.bf16.msra.mxu0 %v2242
      %2370 = vmatpush.bf16.msra.mxu0 %v2240
      %2371 = vmatpush.bf16.msra.mxu0 %v2238
      %2372 = vmatpush.bf16.msra.mxu0 %v2236
      %2373 = vmatpush.bf16.msra.mxu0 %v2234
      %2374 = vmatpush.bf16.msra.mxu0 %v2232
      %2375 = vmatpush.bf16.msra.mxu0 %v2230
      %2376 = vmatmul.bf16.gmra.mxu0 %v2096
      %v2377 = vpop.f32.mrf.mxu0
      %v2378 = vadd.f32 %v2359, %v2377
      %v2379 = vpop.f32.mrf.mxu0
      %v2380 = vadd.f32 %v2361, %v2379
      %2381 = vmatmul.bf16.gmra.mxu0 %v2099
      %v2382 = vpop.f32.mrf.mxu0
      %v2383 = vadd.f32 %v2364, %v2382
      %v2384 = vpop.f32.mrf.mxu0
      %v2385 = vadd.f32 %v2366, %v2384
      %2386 = vdwg.mxu0
      %2387 = vmatpush.bf16.msra.mxu0 0
      %2388 = vmatpush.bf16.msra.mxu0 0
      %2389 = vmatpush.bf16.msra.mxu0 0
      %2390 = vmatpush.bf16.msra.mxu0 0
      %2391 = vmatpush.bf16.msra.mxu0 0
      %2392 = vmatpush.bf16.msra.mxu0 0
      %2393 = vmatpush.bf16.msra.mxu0 %v2248
      %2394 = vmatpush.bf16.msra.mxu0 %v2246
      %2395 = vmatmul.bf16.gmra.mxu0 %v2287
      %v2396 = vpop.f32.mrf.mxu0
      %v2397 = vadd.f32 %v2378, %v2396
      %v2398 = vpop.f32.mrf.mxu0
      %v2399 = vadd.f32 %v2380, %v2398
      %2400 = vmatmul.bf16.gmra.mxu0 %v2290
      %v2401 = vpop.f32.mrf.mxu0
      %v2402 = vadd.f32 %v2383, %v2401
      %v2403 = vpop.f32.mrf.mxu0
      %v2404 = vadd.f32 %v2385, %v2403
      %2405 = vdwg.mxu0
      %v2406 = vxor.u32 %v2340, 2147483648
      %v2407 = vxor.u32 %v2397, 2147483648
      %v2408 = vxor.u32 %v2342, 2147483648
      %v2409 = vxor.u32 %v2399, 2147483648
      %v2410 = vxor.u32 %v2345, 2147483648
      %v2411 = vxor.u32 %v2402, 2147483648
      %v2412 = vxor.u32 %v2347, 2147483648
      %v2413 = vxor.u32 %v2404, 2147483648
      %v2414 = vmul.f32 %v2406, 1.442695
      %v2415 = vpow.pop %v2414
      %v2416 = vmul.f32 %v2407, 1.442695
      %v2417 = vpow.pop %v2416
      %v2418 = vmul.f32 %v2408, 1.442695
      %v2419 = vpow.pop %v2418
      %v2420 = vmul.f32 %v2409, 1.442695
      %v2421 = vpow.pop %v2420
      %v2422 = vmul.f32 %v2410, 1.442695
      %v2423 = vpow.pop %v2422
      %v2424 = vmul.f32 %v2411, 1.442695
      %v2425 = vpow.pop %v2424
      %v2426 = vmul.f32 %v2412, 1.442695
      %v2427 = vpow.pop %v2426
      %v2428 = vmul.f32 %v2413, 1.442695
      %v2429 = vpow.pop %v2428
      %v2430 = vadd.f32 %v2415, 1.0
      %v2431 = vadd.f32 %v2417, 1.0
      %v2432 = vadd.f32 %v2419, 1.0
      %v2433 = vadd.f32 %v2421, 1.0
      %v2434 = vadd.f32 %v2423, 1.0
      %v2435 = vadd.f32 %v2425, 1.0
      %v2436 = vadd.f32 %v2427, 1.0
      %v2437 = vadd.f32 %v2429, 1.0
      %v2438 = vrcp.pop %v2430
      %v2439 = vmul.f32 %v2430, %v2438
      %v2440 = vsub.f32 1.0, %v2439
      %v2441 = vmul.f32 %v2438, %v2440
      %v2442 = vadd.f32 %v2438, %v2441
      %vm2443 = vweird.f32 %v2430
      %vm2444 = vweird.f32 %v2438
      %vm2445 = vmor %vm2443, %vm2444
      %v2446 = vsel %vm2445, %v2438, %v2442
      %v2447 = vand.u32 2147483647, %v2430
      %vm2448 = vcmp.eq.f32.partialorder %v2447, 8.507059e+37
      %v2449 = vand.u32 %v2430, 2147483648
      %v2450 = vor.u32 1.1754944e-38, %v2449
      %v2451 = vsel %vm2448, %v2450, %v2446
      %v2452 = vmul.f32 1.0, %v2451
      %v2453 = vrcp.pop %v2431
      %v2454 = vmul.f32 %v2431, %v2453
      %v2455 = vsub.f32 1.0, %v2454
      %v2456 = vmul.f32 %v2453, %v2455
      %v2457 = vadd.f32 %v2453, %v2456
      %vm2458 = vweird.f32 %v2431
      %vm2459 = vweird.f32 %v2453
      %vm2460 = vmor %vm2458, %vm2459
      %v2461 = vsel %vm2460, %v2453, %v2457
      %v2462 = vand.u32 2147483647, %v2431
      %vm2463 = vcmp.eq.f32.partialorder %v2462, 8.507059e+37
      %v2464 = vand.u32 %v2431, 2147483648
      %v2465 = vor.u32 1.1754944e-38, %v2464
      %v2466 = vsel %vm2463, %v2465, %v2461
      %v2467 = vmul.f32 1.0, %v2466
      %v2468 = vrcp.pop %v2432
      %v2469 = vmul.f32 %v2432, %v2468
      %v2470 = vsub.f32 1.0, %v2469
      %v2471 = vmul.f32 %v2468, %v2470
      %v2472 = vadd.f32 %v2468, %v2471
      %vm2473 = vweird.f32 %v2432
      %vm2474 = vweird.f32 %v2468
      %vm2475 = vmor %vm2473, %vm2474
      %v2476 = vsel %vm2475, %v2468, %v2472
      %v2477 = vand.u32 2147483647, %v2432
      %vm2478 = vcmp.eq.f32.partialorder %v2477, 8.507059e+37
      %v2479 = vand.u32 %v2432, 2147483648
      %v2480 = vor.u32 1.1754944e-38, %v2479
      %v2481 = vsel %vm2478, %v2480, %v2476
      %v2482 = vmul.f32 1.0, %v2481
      %v2483 = vrcp.pop %v2433
      %v2484 = vmul.f32 %v2433, %v2483
      %v2485 = vsub.f32 1.0, %v2484
      %v2486 = vmul.f32 %v2483, %v2485
      %v2487 = vadd.f32 %v2483, %v2486
      %vm2488 = vweird.f32 %v2433
      %vm2489 = vweird.f32 %v2483
      %vm2490 = vmor %vm2488, %vm2489
      %v2491 = vsel %vm2490, %v2483, %v2487
      %v2492 = vand.u32 2147483647, %v2433
      %vm2493 = vcmp.eq.f32.partialorder %v2492, 8.507059e+37
      %v2494 = vand.u32 %v2433, 2147483648
      %v2495 = vor.u32 1.1754944e-38, %v2494
      %v2496 = vsel %vm2493, %v2495, %v2491
      %v2497 = vmul.f32 1.0, %v2496
      %v2498 = vrcp.pop %v2434
      %v2499 = vmul.f32 %v2434, %v2498
      %v2500 = vsub.f32 1.0, %v2499
      %v2501 = vmul.f32 %v2498, %v2500
      %v2502 = vadd.f32 %v2498, %v2501
      %vm2503 = vweird.f32 %v2434
      %vm2504 = vweird.f32 %v2498
      %vm2505 = vmor %vm2503, %vm2504
      %v2506 = vsel %vm2505, %v2498, %v2502
      %v2507 = vand.u32 2147483647, %v2434
      %vm2508 = vcmp.eq.f32.partialorder %v2507, 8.507059e+37
      %v2509 = vand.u32 %v2434, 2147483648
      %v2510 = vor.u32 1.1754944e-38, %v2509
      %v2511 = vsel %vm2508, %v2510, %v2506
      %v2512 = vmul.f32 1.0, %v2511
      %v2513 = vrcp.pop %v2435
      %v2514 = vmul.f32 %v2435, %v2513
      %v2515 = vsub.f32 1.0, %v2514
      %v2516 = vmul.f32 %v2513, %v2515
      %v2517 = vadd.f32 %v2513, %v2516
      %vm2518 = vweird.f32 %v2435
      %vm2519 = vweird.f32 %v2513
      %vm2520 = vmor %vm2518, %vm2519
      %v2521 = vsel %vm2520, %v2513, %v2517
      %v2522 = vand.u32 2147483647, %v2435
      %vm2523 = vcmp.eq.f32.partialorder %v2522, 8.507059e+37
      %v2524 = vand.u32 %v2435, 2147483648
      %v2525 = vor.u32 1.1754944e-38, %v2524
      %v2526 = vsel %vm2523, %v2525, %v2521
      %v2527 = vmul.f32 1.0, %v2526
      %v2528 = vrcp.pop %v2436
      %v2529 = vmul.f32 %v2436, %v2528
      %v2530 = vsub.f32 1.0, %v2529
      %v2531 = vmul.f32 %v2528, %v2530
      %v2532 = vadd.f32 %v2528, %v2531
      %vm2533 = vweird.f32 %v2436
      %vm2534 = vweird.f32 %v2528
      %vm2535 = vmor %vm2533, %vm2534
      %v2536 = vsel %vm2535, %v2528, %v2532
      %v2537 = vand.u32 2147483647, %v2436
      %vm2538 = vcmp.eq.f32.partialorder %v2537, 8.507059e+37
      %v2539 = vand.u32 %v2436, 2147483648
      %v2540 = vor.u32 1.1754944e-38, %v2539
      %v2541 = vsel %vm2538, %v2540, %v2536
      %v2542 = vmul.f32 1.0, %v2541
      %v2543 = vrcp.pop %v2437
      %v2544 = vmul.f32 %v2437, %v2543
      %v2545 = vsub.f32 1.0, %v2544
      %v2546 = vmul.f32 %v2543, %v2545
      %v2547 = vadd.f32 %v2543, %v2546
      %vm2548 = vweird.f32 %v2437
      %vm2549 = vweird.f32 %v2543
      %vm2550 = vmor %vm2548, %vm2549
      %v2551 = vsel %vm2550, %v2543, %v2547
      %v2552 = vand.u32 2147483647, %v2437
      %vm2553 = vcmp.eq.f32.partialorder %v2552, 8.507059e+37
      %v2554 = vand.u32 %v2437, 2147483648
      %v2555 = vor.u32 1.1754944e-38, %v2554
      %v2556 = vsel %vm2553, %v2555, %v2551
      %v2557 = vmul.f32 1.0, %v2556
      %v2558 = vmul.f32 %v2512, %v876
      %v2559 = vmul.f32 %v2527, %v877
      %v2560 = vmul.f32 %v2542, %v878
      %v2561 = vmul.f32 %v2557, %v879
      %v2562 = vpack.c.bf16 %v2559, %v2558
      %v2563 = vpack.c.bf16 %v2561, %v2560
      %2566 = vrot.lane.b32.xlu0 %v2562, 17
      %v2567 = vpop.permute.xlu0 %2566
      %2568 = vrot.lane.b32.xlu0 %v2563, 17
      %v2569 = vpop.permute.xlu0 %2568
      %v2570 = vrot.slane %v2567, 4
      %v2571 = vrot.slane %v2569, 4
      %v2572 = vsel %vm892, %v2570, %v2567
      %v2573 = vsel %vm892, %v2571, %v2569
      %2578 = vst.msk [vmem:[#allocation2 + $0x18] sm:$0xff] %vm901, %v2572
      %2579 = vst.msk [vmem:[#allocation2 + $0x20] sm:$0xf] %vm833, %v2570
      %2580 = vst.msk [vmem:[#allocation2 + $0x24] sm:$0xff] %vm901, %v2573
      %2581 = vst.msk [vmem:[#allocation2 + $0x2c] sm:$0xf] %vm833, %v2571
      %v2582 = vld [vmem:[#allocation2 + $0x18] sm:$0xff]
      %v2583 = vld [vmem:[#allocation2 + $0x24] sm:$0xff]
      %v2584 = vsel %vm912, %v2582, 0
      %v2585 = vsel %vm912, %v2583, 0
      %2586 = vst [vmem:[#allocation3 + $0x90] sm:$0xff] %v2584
      %2587 = vst [vmem:[#allocation3 + $0x98] sm:$0xff] %v2585
      %v2588 = vld [vmem:[#allocation2 + $0x18] sm:$0xff]
      %v2589 = vld [vmem:[#allocation2 + $0x20] sm:$0xf]
      %v2590 = vld [vmem:[#allocation2 + $0x24] sm:$0xff]
      %v2591 = vld [vmem:[#allocation2 + $0x2c] sm:$0xf]
      %2596 = vrot.lane.b32.xlu0 %v2588, 127
      %v2597 = vpop.permute.xlu0 %2596
      %2598 = vrot.lane.b32.xlu0 %v2589, 127
      %v2599 = vpop.permute.xlu0 %2598
      %2600 = vrot.lane.b32.xlu0 %v2590, 127
      %v2601 = vpop.permute.xlu0 %2600
      %2602 = vrot.lane.b32.xlu0 %v2591, 127
      %v2603 = vpop.permute.xlu0 %2602
      %v2604 = vrot.slane %v2597, 4
      %v2605 = vrot.slane %v2599, 4
      %v2606 = vrot.slane %v2601, 4
      %v2607 = vrot.slane %v2603, 4
      %v2608 = vsel %vm937, %v2604, %v2605
      %v2609 = vsel %vm939, %v2597, %v2608
      %v2610 = vsel %vm937, %v2606, %v2607
      %v2611 = vsel %vm939, %v2601, %v2610
      %2614 = vst [vmem:[#allocation3 + $0xa0] sm:$0xff] %v2609
      %2615 = vst [vmem:[#allocation3 + $0xa8] sm:$0xff] %v2611
      %v2616 = vld [vmem:[#allocation2 + $0x18] sm:$0xff]
      %v2617 = vld [vmem:[#allocation2 + $0x20] sm:$0xf]
      %v2618 = vld [vmem:[#allocation2 + $0x24] sm:$0xff]
      %v2619 = vld [vmem:[#allocation2 + $0x2c] sm:$0xf]
      %v2620 = vsel %vm968, %v2616, 0
      %v2621 = vsel %vm975, %v2617, 0
      %v2622 = vsel %vm968, %v2618, 0
      %v2623 = vsel %vm975, %v2619, 0
      %2628 = vrot.lane.b32.xlu0 %v2620, 126
      %v2629 = vpop.permute.xlu0 %2628
      %2630 = vrot.lane.b32.xlu0 %v2621, 126
      %v2631 = vpop.permute.xlu0 %2630
      %2632 = vrot.lane.b32.xlu0 %v2622, 126
      %v2633 = vpop.permute.xlu0 %2632
      %2634 = vrot.lane.b32.xlu0 %v2623, 126
      %v2635 = vpop.permute.xlu0 %2634
      %v2636 = vrot.slane %v2629, 4
      %v2637 = vrot.slane %v2631, 4
      %v2638 = vrot.slane %v2633, 4
      %v2639 = vrot.slane %v2635, 4
      %v2640 = vsel %vm937, %v2636, %v2637
      %v2641 = vsel %vm997, %v2629, %v2640
      %v2642 = vsel %vm937, %v2638, %v2639
      %v2643 = vsel %vm997, %v2633, %v2642
      %2646 = vst [vmem:[#allocation3 + $0xb0] sm:$0xff] %v2641
      %2647 = vst [vmem:[#allocation3 + $0xb8] sm:$0xff] %v2643
      %v2648 = vld [vmem:[#allocation2 + $0x18] sm:$0xff]
      %v2649 = vld [vmem:[#allocation2 + $0x20] sm:$0xf]
      %v2650 = vld [vmem:[#allocation2 + $0x24] sm:$0xff]
      %v2651 = vld [vmem:[#allocation2 + $0x2c] sm:$0xf]
      %v2652 = vsel %vm1021, %v2648, 0
      %v2653 = vsel %vm1028, %v2649, 0
      %v2654 = vsel %vm1021, %v2650, 0
      %v2655 = vsel %vm1028, %v2651, 0
      %2660 = vrot.lane.b32.xlu0 %v2652, 112
      %v2661 = vpop.permute.xlu0 %2660
      %2662 = vrot.lane.b32.xlu0 %v2653, 112
      %v2663 = vpop.permute.xlu0 %2662
      %2664 = vrot.lane.b32.xlu0 %v2654, 112
      %v2665 = vpop.permute.xlu0 %2664
      %2666 = vrot.lane.b32.xlu0 %v2655, 112
      %v2667 = vpop.permute.xlu0 %2666
      %v2668 = vrot.slane %v2661, 4
      %v2669 = vrot.slane %v2663, 4
      %v2670 = vrot.slane %v2665, 4
      %v2671 = vrot.slane %v2667, 4
      %v2672 = vsel %vm937, %v2668, %v2669
      %v2673 = vsel %vm1050, %v2661, %v2672
      %v2674 = vsel %vm937, %v2670, %v2671
      %v2675 = vsel %vm1050, %v2665, %v2674
      %2678 = vst [vmem:[#allocation3 + $0xc0] sm:$0xff] %v2673
      %2679 = vst [vmem:[#allocation3 + $0xc8] sm:$0xff] %v2675
      %v2680 = vld [vmem:[#allocation2 + $0x18] sm:$0xff]
      %v2681 = vld [vmem:[#allocation2 + $0x20] sm:$0xf]
      %v2682 = vld [vmem:[#allocation2 + $0x24] sm:$0xff]
      %v2683 = vld [vmem:[#allocation2 + $0x2c] sm:$0xf]
      %2688 = vrot.lane.b32.xlu0 %v2680, 111
      %v2689 = vpop.permute.xlu0 %2688
      %2690 = vrot.lane.b32.xlu0 %v2681, 111
      %v2691 = vpop.permute.xlu0 %2690
      %2692 = vrot.lane.b32.xlu0 %v2682, 111
      %v2693 = vpop.permute.xlu0 %2692
      %2694 = vrot.lane.b32.xlu0 %v2683, 111
      %v2695 = vpop.permute.xlu0 %2694
      %v2696 = vrot.slane %v2689, 4
      %v2697 = vrot.slane %v2691, 4
      %v2698 = vrot.slane %v2693, 4
      %v2699 = vrot.slane %v2695, 4
      %v2700 = vsel %vm937, %v2696, %v2697
      %v2701 = vsel %vm1079, %v2689, %v2700
      %v2702 = vsel %vm937, %v2698, %v2699
      %v2703 = vsel %vm1079, %v2693, %v2702
      %2706 = vst [vmem:[#allocation3 + $0xd0] sm:$0xff] %v2701
      %2707 = vst [vmem:[#allocation3 + $0xd8] sm:$0xff] %v2703
      %v2708 = vld [vmem:[#allocation2 + $0x18] sm:$0xff]
      %v2709 = vld [vmem:[#allocation2 + $0x20] sm:$0xf]
      %v2710 = vld [vmem:[#allocation2 + $0x24] sm:$0xff]
      %v2711 = vld [vmem:[#allocation2 + $0x2c] sm:$0xf]
      %v2712 = vsel %vm1102, %v2708, 0
      %v2713 = vsel %vm1109, %v2709, 0
      %v2714 = vsel %vm1102, %v2710, 0
      %v2715 = vsel %vm1109, %v2711, 0
      %2720 = vrot.lane.b32.xlu0 %v2712, 110
      %v2721 = vpop.permute.xlu0 %2720
      %2722 = vrot.lane.b32.xlu0 %v2713, 110
      %v2723 = vpop.permute.xlu0 %2722
      %2724 = vrot.lane.b32.xlu0 %v2714, 110
      %v2725 = vpop.permute.xlu0 %2724
      %2726 = vrot.lane.b32.xlu0 %v2715, 110
      %v2727 = vpop.permute.xlu0 %2726
      %v2728 = vrot.slane %v2721, 4
      %v2729 = vrot.slane %v2723, 4
      %v2730 = vrot.slane %v2725, 4
      %v2731 = vrot.slane %v2727, 4
      %v2732 = vsel %vm937, %v2728, %v2729
      %v2733 = vsel %vm1131, %v2721, %v2732
      %v2734 = vsel %vm937, %v2730, %v2731
      %v2735 = vsel %vm1131, %v2725, %v2734
      %2738 = vst [vmem:[#allocation3 + $0xe0] sm:$0xff] %v2733
      %2739 = vst [vmem:[#allocation3 + $0xe8] sm:$0xff] %v2735
      %v2740 = vld [vmem:[#allocation2 + $0x18] sm:$0xff]
      %v2741 = vld [vmem:[#allocation2 + $0x20] sm:$0xf]
      %v2742 = vld [vmem:[#allocation2 + $0x24] sm:$0xff]
      %v2743 = vld [vmem:[#allocation2 + $0x2c] sm:$0xf]
      %v2744 = vsel %vm1154, %v2740, 0
      %v2745 = vsel %vm1161, %v2741, 0
      %v2746 = vsel %vm1154, %v2742, 0
      %v2747 = vsel %vm1161, %v2743, 0
      %2752 = vrot.lane.b32.xlu0 %v2744, 96
      %v2753 = vpop.permute.xlu0 %2752
      %2754 = vrot.lane.b32.xlu0 %v2745, 96
      %v2755 = vpop.permute.xlu0 %2754
      %2756 = vrot.lane.b32.xlu0 %v2746, 96
      %v2757 = vpop.permute.xlu0 %2756
      %2758 = vrot.lane.b32.xlu0 %v2747, 96
      %v2759 = vpop.permute.xlu0 %2758
      %v2760 = vrot.slane %v2753, 4
      %v2761 = vrot.slane %v2755, 4
      %v2762 = vrot.slane %v2757, 4
      %v2763 = vrot.slane %v2759, 4
      %v2764 = vsel %vm937, %v2760, %v2761
      %v2765 = vsel %vm1183, %v2753, %v2764
      %v2766 = vsel %vm937, %v2762, %v2763
      %v2767 = vsel %vm1183, %v2757, %v2766
      %2770 = vst [vmem:[#allocation3 + $0xf0] sm:$0xff] %v2765
      %2771 = vst [vmem:[#allocation3 + $0xf8] sm:$0xff] %v2767
      %v2772 = vld [vmem:[#allocation2 + $0x18] sm:$0xff]
      %v2773 = vld [vmem:[#allocation2 + $0x20] sm:$0xf]
      %v2774 = vld [vmem:[#allocation2 + $0x24] sm:$0xff]
      %v2775 = vld [vmem:[#allocation2 + $0x2c] sm:$0xf]
      %2780 = vrot.lane.b32.xlu0 %v2772, 95
      %v2781 = vpop.permute.xlu0 %2780
      %2782 = vrot.lane.b32.xlu0 %v2773, 95
      %v2783 = vpop.permute.xlu0 %2782
      %2784 = vrot.lane.b32.xlu0 %v2774, 95
      %v2785 = vpop.permute.xlu0 %2784
      %2786 = vrot.lane.b32.xlu0 %v2775, 95
      %v2787 = vpop.permute.xlu0 %2786
      %v2788 = vrot.slane %v2781, 4
      %v2789 = vrot.slane %v2783, 4
      %v2790 = vrot.slane %v2785, 4
      %v2791 = vrot.slane %v2787, 4
      %v2792 = vsel %vm937, %v2788, %v2789
      %v2793 = vsel %vm1212, %v2781, %v2792
      %v2794 = vsel %vm937, %v2790, %v2791
      %v2795 = vsel %vm1212, %v2785, %v2794
      %2798 = vst [vmem:[#allocation3 + $0x100] sm:$0xff] %v2793
      %2799 = vst [vmem:[#allocation3 + $0x108] sm:$0xff] %v2795
      %v2800 = vld [vmem:[#allocation2 + $0x18] sm:$0xff]
      %v2801 = vld [vmem:[#allocation2 + $0x20] sm:$0xf]
      %v2802 = vld [vmem:[#allocation2 + $0x24] sm:$0xff]
      %v2803 = vld [vmem:[#allocation2 + $0x2c] sm:$0xf]
      %v2804 = vsel %vm1235, %v2800, 0
      %v2805 = vsel %vm1242, %v2801, 0
      %v2806 = vsel %vm1235, %v2802, 0
      %v2807 = vsel %vm1242, %v2803, 0
      %2812 = vrot.lane.b32.xlu0 %v2804, 94
      %v2813 = vpop.permute.xlu0 %2812
      %2814 = vrot.lane.b32.xlu0 %v2805, 94
      %v2815 = vpop.permute.xlu0 %2814
      %2816 = vrot.lane.b32.xlu0 %v2806, 94
      %v2817 = vpop.permute.xlu0 %2816
      %2818 = vrot.lane.b32.xlu0 %v2807, 94
      %v2819 = vpop.permute.xlu0 %2818
      %v2820 = vrot.slane %v2813, 4
      %v2821 = vrot.slane %v2815, 4
      %v2822 = vrot.slane %v2817, 4
      %v2823 = vrot.slane %v2819, 4
      %v2824 = vsel %vm937, %v2820, %v2821
      %v2825 = vsel %vm1264, %v2813, %v2824
      %v2826 = vsel %vm937, %v2822, %v2823
      %v2827 = vsel %vm1264, %v2817, %v2826
      %2830 = vst [vmem:[#allocation3 + $0x110] sm:$0xff] %v2825
      %2831 = vst [vmem:[#allocation3 + $0x118] sm:$0xff] %v2827
      %v2832 = vld [vmem:[%s7] sm:$0xff]
      %v2833 = vld [vmem:[%s7 + $0x8] sm:$0xf]
      %v2834 = vld [vmem:[%s7 + $0xc] sm:$0xff]
      %v2835 = vld [vmem:[%s7 + $0x14] sm:$0xf]
      %v2836 = vld [vmem:[#allocation3] sm:$0xff]
      %v2837 = vld [vmem:[#allocation3 + $0x8] sm:$0xff]
      %v2838 = vld [vmem:[#allocation3 + $0x10] sm:$0xff]
      %v2839 = vld [vmem:[#allocation3 + $0x18] sm:$0xff]
      %v2840 = vld [vmem:[#allocation3 + $0x20] sm:$0xff]
      %v2841 = vld [vmem:[#allocation3 + $0x28] sm:$0xff]
      %v2842 = vld [vmem:[#allocation3 + $0x30] sm:$0xff]
      %v2843 = vld [vmem:[#allocation3 + $0x38] sm:$0xff]
      %v2844 = vld [vmem:[#allocation3 + $0x40] sm:$0xff]
      %v2845 = vld [vmem:[#allocation3 + $0x48] sm:$0xff]
      %v2846 = vld [vmem:[#allocation3 + $0x50] sm:$0xff]
      %v2847 = vld [vmem:[#allocation3 + $0x58] sm:$0xff]
      %v2848 = vld [vmem:[#allocation3 + $0x60] sm:$0xff]
      %v2849 = vld [vmem:[#allocation3 + $0x68] sm:$0xff]
      %v2850 = vld [vmem:[#allocation3 + $0x70] sm:$0xff]
      %v2851 = vld [vmem:[#allocation3 + $0x78] sm:$0xff]
      %v2852 = vld [vmem:[#allocation3 + $0x80] sm:$0xff]
      %v2853 = vld [vmem:[#allocation3 + $0x88] sm:$0xff]
      %v2854 = vld [vmem:[#allocation3 + $0x90] sm:$0xff]
      %v2855 = vld [vmem:[#allocation3 + $0x98] sm:$0xff]
      %v2856 = vld [vmem:[#allocation3 + $0xa0] sm:$0xff]
      %v2857 = vld [vmem:[#allocation3 + $0xa8] sm:$0xff]
      %v2858 = vld [vmem:[#allocation3 + $0xb0] sm:$0xff]
      %v2859 = vld [vmem:[#allocation3 + $0xb8] sm:$0xff]
      %v2860 = vld [vmem:[#allocation3 + $0xc0] sm:$0xff]
      %v2861 = vld [vmem:[#allocation3 + $0xc8] sm:$0xff]
      %v2862 = vld [vmem:[#allocation3 + $0xd0] sm:$0xff]
      %v2863 = vld [vmem:[#allocation3 + $0xd8] sm:$0xff]
      %v2864 = vld [vmem:[#allocation3 + $0xe0] sm:$0xff]
      %v2865 = vld [vmem:[#allocation3 + $0xe8] sm:$0xff]
      %v2866 = vld [vmem:[#allocation3 + $0xf0] sm:$0xff]
      %v2867 = vld [vmem:[#allocation3 + $0xf8] sm:$0xff]
      %v2868 = vld [vmem:[#allocation3 + $0x100] sm:$0xff]
      %v2869 = vld [vmem:[#allocation3 + $0x108] sm:$0xff]
      %v2870 = vld [vmem:[#allocation3 + $0x110] sm:$0xff]
      %v2871 = vld [vmem:[#allocation3 + $0x118] sm:$0xff]
      %v2872 = vld [vmem:[%s8] sm:$0xff]
      %v2873 = vld [vmem:[%s8 + $0x8] sm:$0xff]
      %2875 = vset.pattern.permute.xlu0 0
      %2876 = vperm.xlu0 %2875, %v2872
      %v2877 = vpop.permute.xlu0 %2876
      %2880 = vset.pattern.permute.xlu0 0
      %2881 = vperm.xlu0 %2880, %v2873
      %v2882 = vpop.permute.xlu0 %2881
      %v2888 = vunpack.c.l.b16 %v2832
      %v2889 = vunpack.c.h.b16 %v2832
      %v2890 = vunpack.c.l.b16 %v2833
      %v2891 = vunpack.c.l.b16 %v2834
      %v2892 = vunpack.c.h.b16 %v2834
      %v2893 = vunpack.c.l.b16 %v2835
      %v2894 = vpack.c.b16 %v2891, %v2888
      %v2895 = vpack.c.b16 %v2892, %v2889
      %v2896 = vpack.c.b16 %v2893, %v2890
      %v2935 = vunpack.c.l.b16 %v2836
      %v2936 = vunpack.c.h.b16 %v2836
      %v2937 = vunpack.c.l.b16 %v2837
      %v2938 = vunpack.c.h.b16 %v2837
      %v2939 = vunpack.c.l.b16 %v2838
      %v2940 = vunpack.c.h.b16 %v2838
      %v2941 = vunpack.c.l.b16 %v2839
      %v2942 = vunpack.c.h.b16 %v2839
      %v2943 = vunpack.c.l.b16 %v2840
      %v2944 = vunpack.c.h.b16 %v2840
      %v2945 = vunpack.c.l.b16 %v2841
      %v2946 = vunpack.c.h.b16 %v2841
      %v2947 = vunpack.c.l.b16 %v2842
      %v2948 = vunpack.c.h.b16 %v2842
      %v2949 = vunpack.c.l.b16 %v2843
      %v2950 = vunpack.c.h.b16 %v2843
      %v2951 = vunpack.c.l.b16 %v2844
      %v2952 = vunpack.c.h.b16 %v2844
      %v2953 = vunpack.c.l.b16 %v2845
      %v2954 = vunpack.c.h.b16 %v2845
      %v2955 = vunpack.c.l.b16 %v2846
      %v2956 = vunpack.c.h.b16 %v2846
      %v2957 = vunpack.c.l.b16 %v2847
      %v2958 = vunpack.c.h.b16 %v2847
      %v2959 = vunpack.c.l.b16 %v2848
      %v2960 = vunpack.c.h.b16 %v2848
      %v2961 = vunpack.c.l.b16 %v2849
      %v2962 = vunpack.c.h.b16 %v2849
      %v2963 = vunpack.c.l.b16 %v2850
      %v2964 = vunpack.c.h.b16 %v2850
      %v2965 = vunpack.c.l.b16 %v2851
      %v2966 = vunpack.c.h.b16 %v2851
      %v2967 = vunpack.c.l.b16 %v2852
      %v2968 = vunpack.c.h.b16 %v2852
      %v2969 = vunpack.c.l.b16 %v2853
      %v2970 = vunpack.c.h.b16 %v2853
      %v2971 = vunpack.c.l.b16 %v2854
      %v2972 = vunpack.c.h.b16 %v2854
      %v2973 = vunpack.c.l.b16 %v2855
      %v2974 = vunpack.c.h.b16 %v2855
      %v2975 = vunpack.c.l.b16 %v2856
      %v2976 = vunpack.c.h.b16 %v2856
      %v2977 = vunpack.c.l.b16 %v2857
      %v2978 = vunpack.c.h.b16 %v2857
      %v2979 = vunpack.c.l.b16 %v2858
      %v2980 = vunpack.c.h.b16 %v2858
      %v2981 = vunpack.c.l.b16 %v2859
      %v2982 = vunpack.c.h.b16 %v2859
      %v2983 = vunpack.c.l.b16 %v2860
      %v2984 = vunpack.c.h.b16 %v2860
      %v2985 = vunpack.c.l.b16 %v2861
      %v2986 = vunpack.c.h.b16 %v2861
      %v2987 = vunpack.c.l.b16 %v2862
      %v2988 = vunpack.c.h.b16 %v2862
      %v2989 = vunpack.c.l.b16 %v2863
      %v2990 = vunpack.c.h.b16 %v2863
      %v2991 = vunpack.c.l.b16 %v2864
      %v2992 = vunpack.c.h.b16 %v2864
      %v2993 = vunpack.c.l.b16 %v2865
      %v2994 = vunpack.c.h.b16 %v2865
      %v2995 = vunpack.c.l.b16 %v2866
      %v2996 = vunpack.c.h.b16 %v2866
      %v2997 = vunpack.c.l.b16 %v2867
      %v2998 = vunpack.c.h.b16 %v2867
      %v2999 = vunpack.c.l.b16 %v2868
      %v3000 = vunpack.c.h.b16 %v2868
      %v3001 = vunpack.c.l.b16 %v2869
      %v3002 = vunpack.c.h.b16 %v2869
      %v3003 = vunpack.c.l.b16 %v2870
      %v3004 = vunpack.c.h.b16 %v2870
      %v3005 = vunpack.c.l.b16 %v2871
      %v3006 = vunpack.c.h.b16 %v2871
      %v3007 = vpack.c.b16 %v2937, %v2935
      %v3008 = vpack.c.b16 %v2938, %v2936
      %v3009 = vpack.c.b16 %v2941, %v2939
      %v3010 = vpack.c.b16 %v2942, %v2940
      %v3011 = vpack.c.b16 %v2945, %v2943
      %v3012 = vpack.c.b16 %v2946, %v2944
      %v3013 = vpack.c.b16 %v2949, %v2947
      %v3014 = vpack.c.b16 %v2950, %v2948
      %v3015 = vpack.c.b16 %v2953, %v2951
      %v3016 = vpack.c.b16 %v2954, %v2952
      %v3017 = vpack.c.b16 %v2957, %v2955
      %v3018 = vpack.c.b16 %v2958, %v2956
      %v3019 = vpack.c.b16 %v2961, %v2959
      %v3020 = vpack.c.b16 %v2962, %v2960
      %v3021 = vpack.c.b16 %v2965, %v2963
      %v3022 = vpack.c.b16 %v2966, %v2964
      %v3023 = vpack.c.b16 %v2969, %v2967
      %v3024 = vpack.c.b16 %v2970, %v2968
      %v3025 = vpack.c.b16 %v2973, %v2971
      %v3026 = vpack.c.b16 %v2974, %v2972
      %v3027 = vpack.c.b16 %v2977, %v2975
      %v3028 = vpack.c.b16 %v2978, %v2976
      %v3029 = vpack.c.b16 %v2981, %v2979
      %v3030 = vpack.c.b16 %v2982, %v2980
      %v3031 = vpack.c.b16 %v2985, %v2983
      %v3032 = vpack.c.b16 %v2986, %v2984
      %v3033 = vpack.c.b16 %v2989, %v2987
      %v3034 = vpack.c.b16 %v2990, %v2988
      %v3035 = vpack.c.b16 %v2993, %v2991
      %v3036 = vpack.c.b16 %v2994, %v2992
      %v3037 = vpack.c.b16 %v2997, %v2995
      %v3038 = vpack.c.b16 %v2998, %v2996
      %v3039 = vpack.c.b16 %v3001, %v2999
      %v3040 = vpack.c.b16 %v3002, %v3000
      %v3041 = vpack.c.b16 %v3005, %v3003
      %v3042 = vpack.c.b16 %v3006, %v3004
      %v3080 = vsel %vm2285, %v2896, 0
      %3082 = vmatpush.bf16.msra.mxu0 %v3021
      %3083 = vmatpush.bf16.msra.mxu0 %v3019
      %3084 = vmatpush.bf16.msra.mxu0 %v3017
      %3085 = vmatpush.bf16.msra.mxu0 %v3015
      %3086 = vmatpush.bf16.msra.mxu0 %v3013
      %3087 = vmatpush.bf16.msra.mxu0 %v3011
      %3088 = vmatpush.bf16.msra.mxu0 %v3009
      %3089 = vmatpush.bf16.msra.mxu0 %v3007
      %3090 = vmatmul.bf16.gmra.mxu0 %v2894
      %v3091 = vpop.f32.mrf.mxu0
      %v3092 = vadd.f32 %v2877, %v3091
      %v3093 = vpop.f32.mrf.mxu0
      %v3094 = vadd.f32 %v2882, %v3093
      %3095 = vdwg.mxu0
      %3096 = vmatpush.bf16.msra.mxu0 %v3037
      %3097 = vmatpush.bf16.msra.mxu0 %v3035
      %3098 = vmatpush.bf16.msra.mxu0 %v3033
      %3099 = vmatpush.bf16.msra.mxu0 %v3031
      %3100 = vmatpush.bf16.msra.mxu0 %v3029
      %3101 = vmatpush.bf16.msra.mxu0 %v3027
      %3102 = vmatpush.bf16.msra.mxu0 %v3025
      %3103 = vmatpush.bf16.msra.mxu0 %v3023
      %3104 = vmatmul.bf16.gmra.mxu0 %v2895
      %v3105 = vpop.f32.mrf.mxu0
      %v3106 = vadd.f32 %v3092, %v3105
      %v3107 = vpop.f32.mrf.mxu0
      %v3108 = vadd.f32 %v3094, %v3107
      %3109 = vdwg.mxu0
      %3110 = vmatpush.bf16.msra.mxu0 0
      %3111 = vmatpush.bf16.msra.mxu0 0
      %3112 = vmatpush.bf16.msra.mxu0 0
      %3113 = vmatpush.bf16.msra.mxu0 0
      %3114 = vmatpush.bf16.msra.mxu0 0
      %3115 = vmatpush.bf16.msra.mxu0 0
      %3116 = vmatpush.bf16.msra.mxu0 %v3041
      %3117 = vmatpush.bf16.msra.mxu0 %v3039
      %3118 = vmatmul.bf16.gmra.mxu0 %v3080
      %v3119 = vpop.f32.mrf.mxu0
      %v3120 = vadd.f32 %v3106, %v3119
      %v3121 = vpop.f32.mrf.mxu0
      %v3122 = vadd.f32 %v3108, %v3121
      %3123 = vdwg.mxu0
      %3124 = vmatpush.bf16.msra.mxu0 %v3022
      %3125 = vmatpush.bf16.msra.mxu0 %v3020
      %3126 = vmatpush.bf16.msra.mxu0 %v3018
      %3127 = vmatpush.bf16.msra.mxu0 %v3016
      %3128 = vmatpush.bf16.msra.mxu0 %v3014
      %3129 = vmatpush.bf16.msra.mxu0 %v3012
      %3130 = vmatpush.bf16.msra.mxu0 %v3010
      %3131 = vmatpush.bf16.msra.mxu0 %v3008
      %3132 = vmatmul.bf16.gmra.mxu0 %v2894
      %v3133 = vpop.f32.mrf.mxu0
      %v3134 = vadd.f32 %v2877, %v3133
      %v3135 = vpop.f32.mrf.mxu0
      %v3136 = vadd.f32 %v2882, %v3135
      %3137 = vdwg.mxu0
      %3138 = vmatpush.bf16.msra.mxu0 %v3038
      %3139 = vmatpush.bf16.msra.mxu0 %v3036
      %3140 = vmatpush.bf16.msra.mxu0 %v3034
      %3141 = vmatpush.bf16.msra.mxu0 %v3032
      %3142 = vmatpush.bf16.msra.mxu0 %v3030
      %3143 = vmatpush.bf16.msra.mxu0 %v3028
      %3144 = vmatpush.bf16.msra.mxu0 %v3026
      %3145 = vmatpush.bf16.msra.mxu0 %v3024
      %3146 = vmatmul.bf16.gmra.mxu0 %v2895
      %v3147 = vpop.f32.mrf.mxu0
      %v3148 = vadd.f32 %v3134, %v3147
      %v3149 = vpop.f32.mrf.mxu0
      %v3150 = vadd.f32 %v3136, %v3149
      %3151 = vdwg.mxu0
      %3152 = vmatpush.bf16.msra.mxu0 0
      %3153 = vmatpush.bf16.msra.mxu0 0
      %3154 = vmatpush.bf16.msra.mxu0 0
      %3155 = vmatpush.bf16.msra.mxu0 0
      %3156 = vmatpush.bf16.msra.mxu0 0
      %3157 = vmatpush.bf16.msra.mxu0 0
      %3158 = vmatpush.bf16.msra.mxu0 %v3042
      %3159 = vmatpush.bf16.msra.mxu0 %v3040
      %3160 = vmatmul.bf16.gmra.mxu0 %v3080
      %v3161 = vpop.f32.mrf.mxu0
      %v3162 = vadd.f32 %v3148, %v3161
      %v3163 = vpop.f32.mrf.mxu0
      %v3164 = vadd.f32 %v3150, %v3163
      %3165 = vdwg.mxu0
      %v3166 = vtanh.pop %v3120
      %v3167 = vtanh.pop %v3162
      %v3168 = vtanh.pop %v3122
      %v3169 = vtanh.pop %v3164
      %v3170 = vsub.f32 1.0, %v2452
      %v3171 = vsub.f32 1.0, %v2467
      %v3172 = vsub.f32 1.0, %v2482
      %v3173 = vsub.f32 1.0, %v2497
      %v3174 = vmul.f32 %v876, %v3170
      %v3175 = vmul.f32 %v877, %v3171
      %v3176 = vmul.f32 %v878, %v3172
      %v3177 = vmul.f32 %v879, %v3173
      %v3178 = vmul.f32 %v3166, %v2452
      %v3179 = vmul.f32 %v3167, %v2467
      %v3180 = vmul.f32 %v3168, %v2482
      %v3181 = vmul.f32 %v3169, %v2497
      %v3182 = vadd.f32 %v3174, %v3178
      %v3183 = vadd.f32 %v3175, %v3179
      %v3184 = vadd.f32 %v3176, %v3180
      %v3185 = vadd.f32 %v3177, %v3181
      %v3186 = vpack.c.bf16 %v3183, %v3182
      %v3187 = vpack.c.bf16 %v3185, %v3184
      %3190 = vrot.lane.b32.xlu0 %v3186, 17
      %v3191 = vpop.permute.xlu0 %3190
      %3192 = vrot.lane.b32.xlu0 %v3187, 17
      %v3193 = vpop.permute.xlu0 %3192
      %v3194 = vrot.slane %v3191, 4
      %v3195 = vrot.slane %v3193, 4
      %v3196 = vsel %vm892, %v3194, %v3191
      %v3197 = vsel %vm892, %v3195, %v3193
      %3202 = vst.msk [vmem:[#allocation2] sm:$0xff] %vm901, %v3196
      %3203 = vst.msk [vmem:[#allocation2 + $0x8] sm:$0xf] %vm833, %v3194
      %3204 = vst.msk [vmem:[#allocation2 + $0xc] sm:$0xff] %vm901, %v3197
      %3205 = vst.msk [vmem:[#allocation2 + $0x14] sm:$0xf] %vm833, %v3195
      %v3206 = vld [vmem:[#allocation2] sm:$0xff]
      %v3207 = vld [vmem:[#allocation2 + $0xc] sm:$0xff]
      %v3208 = vsel %vm912, %v3206, 0
      %v3209 = vsel %vm912, %v3207, 0
      %3210 = vst [vmem:[#allocation3] sm:$0xff] %v3208
      %3211 = vst [vmem:[#allocation3 + $0x8] sm:$0xff] %v3209
      %v3212 = vld [vmem:[#allocation2] sm:$0xff]
      %v3213 = vld [vmem:[#allocation2 + $0x8] sm:$0xf]
      %v3214 = vld [vmem:[#allocation2 + $0xc] sm:$0xff]
      %v3215 = vld [vmem:[#allocation2 + $0x14] sm:$0xf]
      %3220 = vrot.lane.b32.xlu0 %v3212, 127
      %v3221 = vpop.permute.xlu0 %3220
      %3222 = vrot.lane.b32.xlu0 %v3213, 127
      %v3223 = vpop.permute.xlu0 %3222
      %3224 = vrot.lane.b32.xlu0 %v3214, 127
      %v3225 = vpop.permute.xlu0 %3224
      %3226 = vrot.lane.b32.xlu0 %v3215, 127
      %v3227 = vpop.permute.xlu0 %3226
      %v3228 = vrot.slane %v3221, 4
      %v3229 = vrot.slane %v3223, 4
      %v3230 = vrot.slane %v3225, 4
      %v3231 = vrot.slane %v3227, 4
      %v3232 = vsel %vm937, %v3228, %v3229
      %v3233 = vsel %vm939, %v3221, %v3232
      %v3234 = vsel %vm937, %v3230, %v3231
      %v3235 = vsel %vm939, %v3225, %v3234
      %3238 = vst [vmem:[#allocation3 + $0x10] sm:$0xff] %v3233
      %3239 = vst [vmem:[#allocation3 + $0x18] sm:$0xff] %v3235
      %v3240 = vld [vmem:[#allocation2] sm:$0xff]
      %v3241 = vld [vmem:[#allocation2 + $0x8] sm:$0xf]
      %v3242 = vld [vmem:[#allocation2 + $0xc] sm:$0xff]
      %v3243 = vld [vmem:[#allocation2 + $0x14] sm:$0xf]
      %v3244 = vsel %vm968, %v3240, 0
      %v3245 = vsel %vm975, %v3241, 0
      %v3246 = vsel %vm968, %v3242, 0
      %v3247 = vsel %vm975, %v3243, 0
      %3252 = vrot.lane.b32.xlu0 %v3244, 126
      %v3253 = vpop.permute.xlu0 %3252
      %3254 = vrot.lane.b32.xlu0 %v3245, 126
      %v3255 = vpop.permute.xlu0 %3254
      %3256 = vrot.lane.b32.xlu0 %v3246, 126
      %v3257 = vpop.permute.xlu0 %3256
      %3258 = vrot.lane.b32.xlu0 %v3247, 126
      %v3259 = vpop.permute.xlu0 %3258
      %v3260 = vrot.slane %v3253, 4
      %v3261 = vrot.slane %v3255, 4
      %v3262 = vrot.slane %v3257, 4
      %v3263 = vrot.slane %v3259, 4
      %v3264 = vsel %vm937, %v3260, %v3261
      %v3265 = vsel %vm997, %v3253, %v3264
      %v3266 = vsel %vm937, %v3262, %v3263
      %v3267 = vsel %vm997, %v3257, %v3266
      %3270 = vst [vmem:[#allocation3 + $0x20] sm:$0xff] %v3265
      %3271 = vst [vmem:[#allocation3 + $0x28] sm:$0xff] %v3267
      %v3272 = vld [vmem:[#allocation2] sm:$0xff]
      %v3273 = vld [vmem:[#allocation2 + $0x8] sm:$0xf]
      %v3274 = vld [vmem:[#allocation2 + $0xc] sm:$0xff]
      %v3275 = vld [vmem:[#allocation2 + $0x14] sm:$0xf]
      %v3276 = vsel %vm1021, %v3272, 0
      %v3277 = vsel %vm1028, %v3273, 0
      %v3278 = vsel %vm1021, %v3274, 0
      %v3279 = vsel %vm1028, %v3275, 0
      %3284 = vrot.lane.b32.xlu0 %v3276, 112
      %v3285 = vpop.permute.xlu0 %3284
      %3286 = vrot.lane.b32.xlu0 %v3277, 112
      %v3287 = vpop.permute.xlu0 %3286
      %3288 = vrot.lane.b32.xlu0 %v3278, 112
      %v3289 = vpop.permute.xlu0 %3288
      %3290 = vrot.lane.b32.xlu0 %v3279, 112
      %v3291 = vpop.permute.xlu0 %3290
      %v3292 = vrot.slane %v3285, 4
      %v3293 = vrot.slane %v3287, 4
      %v3294 = vrot.slane %v3289, 4
      %v3295 = vrot.slane %v3291, 4
      %v3296 = vsel %vm937, %v3292, %v3293
      %v3297 = vsel %vm1050, %v3285, %v3296
      %v3298 = vsel %vm937, %v3294, %v3295
      %v3299 = vsel %vm1050, %v3289, %v3298
      %3302 = vst [vmem:[#allocation3 + $0x30] sm:$0xff] %v3297
      %3303 = vst [vmem:[#allocation3 + $0x38] sm:$0xff] %v3299
      %v3304 = vld [vmem:[#allocation2] sm:$0xff]
      %v3305 = vld [vmem:[#allocation2 + $0x8] sm:$0xf]
      %v3306 = vld [vmem:[#allocation2 + $0xc] sm:$0xff]
      %v3307 = vld [vmem:[#allocation2 + $0x14] sm:$0xf]
      %3312 = vrot.lane.b32.xlu0 %v3304, 111
      %v3313 = vpop.permute.xlu0 %3312
      %3314 = vrot.lane.b32.xlu0 %v3305, 111
      %v3315 = vpop.permute.xlu0 %3314
      %3316 = vrot.lane.b32.xlu0 %v3306, 111
      %v3317 = vpop.permute.xlu0 %3316
      %3318 = vrot.lane.b32.xlu0 %v3307, 111
      %v3319 = vpop.permute.xlu0 %3318
      %v3320 = vrot.slane %v3313, 4
      %v3321 = vrot.slane %v3315, 4
      %v3322 = vrot.slane %v3317, 4
      %v3323 = vrot.slane %v3319, 4
      %v3324 = vsel %vm937, %v3320, %v3321
      %v3325 = vsel %vm1079, %v3313, %v3324
      %v3326 = vsel %vm937, %v3322, %v3323
      %v3327 = vsel %vm1079, %v3317, %v3326
      %3330 = vst [vmem:[#allocation3 + $0x40] sm:$0xff] %v3325
      %3331 = vst [vmem:[#allocation3 + $0x48] sm:$0xff] %v3327
      %v3332 = vld [vmem:[#allocation2] sm:$0xff]
      %v3333 = vld [vmem:[#allocation2 + $0x8] sm:$0xf]
      %v3334 = vld [vmem:[#allocation2 + $0xc] sm:$0xff]
      %v3335 = vld [vmem:[#allocation2 + $0x14] sm:$0xf]
      %v3336 = vsel %vm1102, %v3332, 0
      %v3337 = vsel %vm1109, %v3333, 0
      %v3338 = vsel %vm1102, %v3334, 0
      %v3339 = vsel %vm1109, %v3335, 0
      %3344 = vrot.lane.b32.xlu0 %v3336, 110
      %v3345 = vpop.permute.xlu0 %3344
      %3346 = vrot.lane.b32.xlu0 %v3337, 110
      %v3347 = vpop.permute.xlu0 %3346
      %3348 = vrot.lane.b32.xlu0 %v3338, 110
      %v3349 = vpop.permute.xlu0 %3348
      %3350 = vrot.lane.b32.xlu0 %v3339, 110
      %v3351 = vpop.permute.xlu0 %3350
      %v3352 = vrot.slane %v3345, 4
      %v3353 = vrot.slane %v3347, 4
      %v3354 = vrot.slane %v3349, 4
      %v3355 = vrot.slane %v3351, 4
      %v3356 = vsel %vm937, %v3352, %v3353
      %v3357 = vsel %vm1131, %v3345, %v3356
      %v3358 = vsel %vm937, %v3354, %v3355
      %v3359 = vsel %vm1131, %v3349, %v3358
      %3362 = vst [vmem:[#allocation3 + $0x50] sm:$0xff] %v3357
      %3363 = vst [vmem:[#allocation3 + $0x58] sm:$0xff] %v3359
      %v3364 = vld [vmem:[#allocation2] sm:$0xff]
      %v3365 = vld [vmem:[#allocation2 + $0x8] sm:$0xf]
      %v3366 = vld [vmem:[#allocation2 + $0xc] sm:$0xff]
      %v3367 = vld [vmem:[#allocation2 + $0x14] sm:$0xf]
      %v3368 = vsel %vm1154, %v3364, 0
      %v3369 = vsel %vm1161, %v3365, 0
      %v3370 = vsel %vm1154, %v3366, 0
      %v3371 = vsel %vm1161, %v3367, 0
      %3376 = vrot.lane.b32.xlu0 %v3368, 96
      %v3377 = vpop.permute.xlu0 %3376
      %3378 = vrot.lane.b32.xlu0 %v3369, 96
      %v3379 = vpop.permute.xlu0 %3378
      %3380 = vrot.lane.b32.xlu0 %v3370, 96
      %v3381 = vpop.permute.xlu0 %3380
      %3382 = vrot.lane.b32.xlu0 %v3371, 96
      %v3383 = vpop.permute.xlu0 %3382
      %v3384 = vrot.slane %v3377, 4
      %v3385 = vrot.slane %v3379, 4
      %v3386 = vrot.slane %v3381, 4
      %v3387 = vrot.slane %v3383, 4
      %v3388 = vsel %vm937, %v3384, %v3385
      %v3389 = vsel %vm1183, %v3377, %v3388
      %v3390 = vsel %vm937, %v3386, %v3387
      %v3391 = vsel %vm1183, %v3381, %v3390
      %3394 = vst [vmem:[#allocation3 + $0x60] sm:$0xff] %v3389
      %3395 = vst [vmem:[#allocation3 + $0x68] sm:$0xff] %v3391
      %v3396 = vld [vmem:[#allocation2] sm:$0xff]
      %v3397 = vld [vmem:[#allocation2 + $0x8] sm:$0xf]
      %v3398 = vld [vmem:[#allocation2 + $0xc] sm:$0xff]
      %v3399 = vld [vmem:[#allocation2 + $0x14] sm:$0xf]
      %3404 = vrot.lane.b32.xlu0 %v3396, 95
      %v3405 = vpop.permute.xlu0 %3404
      %3406 = vrot.lane.b32.xlu0 %v3397, 95
      %v3407 = vpop.permute.xlu0 %3406
      %3408 = vrot.lane.b32.xlu0 %v3398, 95
      %v3409 = vpop.permute.xlu0 %3408
      %3410 = vrot.lane.b32.xlu0 %v3399, 95
      %v3411 = vpop.permute.xlu0 %3410
      %v3412 = vrot.slane %v3405, 4
      %v3413 = vrot.slane %v3407, 4
      %v3414 = vrot.slane %v3409, 4
      %v3415 = vrot.slane %v3411, 4
      %v3416 = vsel %vm937, %v3412, %v3413
      %v3417 = vsel %vm1212, %v3405, %v3416
      %v3418 = vsel %vm937, %v3414, %v3415
      %v3419 = vsel %vm1212, %v3409, %v3418
      %3422 = vst [vmem:[#allocation3 + $0x70] sm:$0xff] %v3417
      %3423 = vst [vmem:[#allocation3 + $0x78] sm:$0xff] %v3419
      %v3424 = vld [vmem:[#allocation2] sm:$0xff]
      %v3425 = vld [vmem:[#allocation2 + $0x8] sm:$0xf]
      %v3426 = vld [vmem:[#allocation2 + $0xc] sm:$0xff]
      %v3427 = vld [vmem:[#allocation2 + $0x14] sm:$0xf]
      %v3428 = vsel %vm1235, %v3424, 0
      %v3429 = vsel %vm1242, %v3425, 0
      %v3430 = vsel %vm1235, %v3426, 0
      %v3431 = vsel %vm1242, %v3427, 0
      %3436 = vrot.lane.b32.xlu0 %v3428, 94
      %v3437 = vpop.permute.xlu0 %3436
      %3438 = vrot.lane.b32.xlu0 %v3429, 94
      %v3439 = vpop.permute.xlu0 %3438
      %3440 = vrot.lane.b32.xlu0 %v3430, 94
      %v3441 = vpop.permute.xlu0 %3440
      %3442 = vrot.lane.b32.xlu0 %v3431, 94
      %v3443 = vpop.permute.xlu0 %3442
      %v3444 = vrot.slane %v3437, 4
      %v3445 = vrot.slane %v3439, 4
      %v3446 = vrot.slane %v3441, 4
      %v3447 = vrot.slane %v3443, 4
      %v3448 = vsel %vm937, %v3444, %v3445
      %v3449 = vsel %vm1264, %v3437, %v3448
      %v3450 = vsel %vm937, %v3446, %v3447
      %v3451 = vsel %vm1264, %v3441, %v3450
      %3454 = vst [vmem:[#allocation3 + $0x80] sm:$0xff] %v3449
      %3455 = vst [vmem:[#allocation3 + $0x88] sm:$0xff] %v3451
      %v3456 = vld [vmem:[%s9] sm:$0xff]
      %v3457 = vld [vmem:[%s9 + $0x8] sm:$0xff]
      %v3458 = vld [vmem:[#allocation3] sm:$0xff]
      %v3459 = vld [vmem:[#allocation3 + $0x8] sm:$0xff]
      %v3460 = vld [vmem:[#allocation3 + $0x10] sm:$0xff]
      %v3461 = vld [vmem:[#allocation3 + $0x18] sm:$0xff]
      %v3462 = vld [vmem:[#allocation3 + $0x20] sm:$0xff]
      %v3463 = vld [vmem:[#allocation3 + $0x28] sm:$0xff]
      %v3464 = vld [vmem:[#allocation3 + $0x30] sm:$0xff]
      %v3465 = vld [vmem:[#allocation3 + $0x38] sm:$0xff]
      %v3466 = vld [vmem:[#allocation3 + $0x40] sm:$0xff]
      %v3467 = vld [vmem:[#allocation3 + $0x48] sm:$0xff]
      %v3468 = vld [vmem:[#allocation3 + $0x50] sm:$0xff]
      %v3469 = vld [vmem:[#allocation3 + $0x58] sm:$0xff]
      %v3470 = vld [vmem:[#allocation3 + $0x60] sm:$0xff]
      %v3471 = vld [vmem:[#allocation3 + $0x68] sm:$0xff]
      %v3472 = vld [vmem:[#allocation3 + $0x70] sm:$0xff]
      %v3473 = vld [vmem:[#allocation3 + $0x78] sm:$0xff]
      %v3474 = vld [vmem:[#allocation3 + $0x80] sm:$0xff]
      %v3475 = vld [vmem:[#allocation3 + $0x88] sm:$0xff]
      %v3476 = vld [vmem:[%s10] sm:$0xff]
      %v3477 = vld [vmem:[%s10 + $0x8] sm:$0xff]
      %3479 = vset.pattern.permute.xlu0 0
      %3480 = vperm.xlu0 %3479, %v3476
      %v3481 = vpop.permute.xlu0 %3480
      %3484 = vset.pattern.permute.xlu0 0
      %3485 = vperm.xlu0 %3484, %v3477
      %v3486 = vpop.permute.xlu0 %3485
      %v3490 = vunpack.c.l.b16 %v3456
      %v3491 = vunpack.c.h.b16 %v3456
      %v3492 = vunpack.c.l.b16 %v3457
      %v3493 = vunpack.c.h.b16 %v3457
      %v3494 = vpack.c.b16 %v3492, %v3490
      %v3495 = vpack.c.b16 %v3493, %v3491
      %v3515 = vunpack.c.l.b16 %v3458
      %v3516 = vunpack.c.h.b16 %v3458
      %v3517 = vunpack.c.l.b16 %v3459
      %v3518 = vunpack.c.h.b16 %v3459
      %v3519 = vunpack.c.l.b16 %v3460
      %v3520 = vunpack.c.h.b16 %v3460
      %v3521 = vunpack.c.l.b16 %v3461
      %v3522 = vunpack.c.h.b16 %v3461
      %v3523 = vunpack.c.l.b16 %v3462
      %v3524 = vunpack.c.h.b16 %v3462
      %v3525 = vunpack.c.l.b16 %v3463
      %v3526 = vunpack.c.h.b16 %v3463
      %v3527 = vunpack.c.l.b16 %v3464
      %v3528 = vunpack.c.h.b16 %v3464
      %v3529 = vunpack.c.l.b16 %v3465
      %v3530 = vunpack.c.h.b16 %v3465
      %v3531 = vunpack.c.l.b16 %v3466
      %v3532 = vunpack.c.h.b16 %v3466
      %v3533 = vunpack.c.l.b16 %v3467
      %v3534 = vunpack.c.h.b16 %v3467
      %v3535 = vunpack.c.l.b16 %v3468
      %v3536 = vunpack.c.h.b16 %v3468
      %v3537 = vunpack.c.l.b16 %v3469
      %v3538 = vunpack.c.h.b16 %v3469
      %v3539 = vunpack.c.l.b16 %v3470
      %v3540 = vunpack.c.h.b16 %v3470
      %v3541 = vunpack.c.l.b16 %v3471
      %v3542 = vunpack.c.h.b16 %v3471
      %v3543 = vunpack.c.l.b16 %v3472
      %v3544 = vunpack.c.h.b16 %v3472
      %v3545 = vunpack.c.l.b16 %v3473
      %v3546 = vunpack.c.h.b16 %v3473
      %v3547 = vunpack.c.l.b16 %v3474
      %v3548 = vunpack.c.h.b16 %v3474
      %v3549 = vunpack.c.l.b16 %v3475
      %v3550 = vunpack.c.h.b16 %v3475
      %v3551 = vpack.c.b16 %v3517, %v3515
      %v3552 = vpack.c.b16 %v3518, %v3516
      %v3553 = vpack.c.b16 %v3521, %v3519
      %v3554 = vpack.c.b16 %v3522, %v3520
      %v3555 = vpack.c.b16 %v3525, %v3523
      %v3556 = vpack.c.b16 %v3526, %v3524
      %v3557 = vpack.c.b16 %v3529, %v3527
      %v3558 = vpack.c.b16 %v3530, %v3528
      %v3559 = vpack.c.b16 %v3533, %v3531
      %v3560 = vpack.c.b16 %v3534, %v3532
      %v3561 = vpack.c.b16 %v3537, %v3535
      %v3562 = vpack.c.b16 %v3538, %v3536
      %v3563 = vpack.c.b16 %v3541, %v3539
      %v3564 = vpack.c.b16 %v3542, %v3540
      %v3565 = vpack.c.b16 %v3545, %v3543
      %v3566 = vpack.c.b16 %v3546, %v3544
      %v3567 = vpack.c.b16 %v3549, %v3547
      %v3568 = vpack.c.b16 %v3550, %v3548
      %v3588 = vsel %vm1403, %v3495, 0
      %3590 = vmatpush.bf16.msra.mxu0 %v3565
      %3591 = vmatpush.bf16.msra.mxu0 %v3563
      %3592 = vmatpush.bf16.msra.mxu0 %v3561
      %3593 = vmatpush.bf16.msra.mxu0 %v3559
      %3594 = vmatpush.bf16.msra.mxu0 %v3557
      %3595 = vmatpush.bf16.msra.mxu0 %v3555
      %3596 = vmatpush.bf16.msra.mxu0 %v3553
      %3597 = vmatpush.bf16.msra.mxu0 %v3551
      %3598 = vmatmul.bf16.gmra.mxu0 %v3494
      %v3599 = vpop.f32.mrf.mxu0
      %v3600 = vadd.f32 %v3481, %v3599
      %v3601 = vpop.f32.mrf.mxu0
      %v3602 = vadd.f32 %v3486, %v3601
      %3603 = vdwg.mxu0
      %3604 = vmatpush.bf16.msra.mxu0 0
      %3605 = vmatpush.bf16.msra.mxu0 0
      %3606 = vmatpush.bf16.msra.mxu0 0
      %3607 = vmatpush.bf16.msra.mxu0 0
      %3608 = vmatpush.bf16.msra.mxu0 0
      %3609 = vmatpush.bf16.msra.mxu0 0
      %3610 = vmatpush.bf16.msra.mxu0 0
      %3611 = vmatpush.bf16.msra.mxu0 %v3567
      %3612 = vmatmul.bf16.gmra.mxu0 %v3588
      %v3613 = vpop.f32.mrf.mxu0
      %v3614 = vadd.f32 %v3600, %v3613
      %v3615 = vpop.f32.mrf.mxu0
      %v3616 = vadd.f32 %v3602, %v3615
      %3617 = vdwg.mxu0
      %3618 = vmatpush.bf16.msra.mxu0 %v3566
      %3619 = vmatpush.bf16.msra.mxu0 %v3564
      %3620 = vmatpush.bf16.msra.mxu0 %v3562
      %3621 = vmatpush.bf16.msra.mxu0 %v3560
      %3622 = vmatpush.bf16.msra.mxu0 %v3558
      %3623 = vmatpush.bf16.msra.mxu0 %v3556
      %3624 = vmatpush.bf16.msra.mxu0 %v3554
      %3625 = vmatpush.bf16.msra.mxu0 %v3552
      %3626 = vmatmul.bf16.gmra.mxu0 %v3494
      %v3627 = vpop.f32.mrf.mxu0
      %v3628 = vadd.f32 %v3481, %v3627
      %v3629 = vpop.f32.mrf.mxu0
      %v3630 = vadd.f32 %v3486, %v3629
      %3631 = vdwg.mxu0
      %3632 = vmatpush.bf16.msra.mxu0 0
      %3633 = vmatpush.bf16.msra.mxu0 0
      %3634 = vmatpush.bf16.msra.mxu0 0
      %3635 = vmatpush.bf16.msra.mxu0 0
      %3636 = vmatpush.bf16.msra.mxu0 0
      %3637 = vmatpush.bf16.msra.mxu0 0
      %3638 = vmatpush.bf16.msra.mxu0 0
      %3639 = vmatpush.bf16.msra.mxu0 %v3568
      %3640 = vmatmul.bf16.gmra.mxu0 %v3588
      %v3641 = vpop.f32.mrf.mxu0
      %v3642 = vadd.f32 %v3628, %v3641
      %v3643 = vpop.f32.mrf.mxu0
      %v3644 = vadd.f32 %v3630, %v3643
      %3645 = vdwg.mxu0
      %v3646 = vmax.f32 %v3614, 0.0
      %v3647 = vmax.f32 %v3642, 0.0
      %v3648 = vmax.f32 %v3616, 0.0
      %v3649 = vmax.f32 %v3644, 0.0
      %v3650 = vpack.c.bf16 %v3647, %v3646
      %v3651 = vpack.c.bf16 %v3649, %v3648
      %3654 = vrot.lane.b32.xlu0 %v3650, 17
      %v3655 = vpop.permute.xlu0 %3654
      %3656 = vrot.lane.b32.xlu0 %v3651, 17
      %v3657 = vpop.permute.xlu0 %3656
      %v3658 = vrot.slane %v3655, 4
      %v3659 = vrot.slane %v3657, 4
      %v3660 = vsel %vm892, %v3658, %v3655
      %v3661 = vsel %vm892, %v3659, %v3657
      %3666 = vst.msk [vmem:[#allocation2] sm:$0xff] %vm901, %v3660
      %3667 = vst.msk [vmem:[#allocation2 + $0x8] sm:$0xf] %vm833, %v3658
      %3668 = vst.msk [vmem:[#allocation2 + $0xc] sm:$0xff] %vm901, %v3661
      %3669 = vst.msk [vmem:[#allocation2 + $0x14] sm:$0xf] %vm833, %v3659
      %v3670 = vld [vmem:[#allocation2] sm:$0xff]
      %v3671 = vld [vmem:[#allocation2 + $0xc] sm:$0xff]
      %v3672 = vsel %vm912, %v3670, 0
      %v3673 = vsel %vm912, %v3671, 0
      %3674 = vst [vmem:[#allocation3] sm:$0xff] %v3672
      %3675 = vst [vmem:[#allocation3 + $0x8] sm:$0xff] %v3673
      %v3676 = vld [vmem:[#allocation2] sm:$0xff]
      %v3677 = vld [vmem:[#allocation2 + $0x8] sm:$0xf]
      %v3678 = vld [vmem:[#allocation2 + $0xc] sm:$0xff]
      %v3679 = vld [vmem:[#allocation2 + $0x14] sm:$0xf]
      %3684 = vrot.lane.b32.xlu0 %v3676, 127
      %v3685 = vpop.permute.xlu0 %3684
      %3686 = vrot.lane.b32.xlu0 %v3677, 127
      %v3687 = vpop.permute.xlu0 %3686
      %3688 = vrot.lane.b32.xlu0 %v3678, 127
      %v3689 = vpop.permute.xlu0 %3688
      %3690 = vrot.lane.b32.xlu0 %v3679, 127
      %v3691 = vpop.permute.xlu0 %3690
      %v3692 = vrot.slane %v3685, 4
      %v3693 = vrot.slane %v3687, 4
      %v3694 = vrot.slane %v3689, 4
      %v3695 = vrot.slane %v3691, 4
      %v3696 = vsel %vm937, %v3692, %v3693
      %v3697 = vsel %vm939, %v3685, %v3696
      %v3698 = vsel %vm937, %v3694, %v3695
      %v3699 = vsel %vm939, %v3689, %v3698
      %3702 = vst [vmem:[#allocation3 + $0x10] sm:$0xff] %v3697
      %3703 = vst [vmem:[#allocation3 + $0x18] sm:$0xff] %v3699
      %v3704 = vld [vmem:[#allocation2] sm:$0xff]
      %v3705 = vld [vmem:[#allocation2 + $0x8] sm:$0xf]
      %v3706 = vld [vmem:[#allocation2 + $0xc] sm:$0xff]
      %v3707 = vld [vmem:[#allocation2 + $0x14] sm:$0xf]
      %v3708 = vsel %vm968, %v3704, 0
      %v3709 = vsel %vm975, %v3705, 0
      %v3710 = vsel %vm968, %v3706, 0
      %v3711 = vsel %vm975, %v3707, 0
      %3716 = vrot.lane.b32.xlu0 %v3708, 126
      %v3717 = vpop.permute.xlu0 %3716
      %3718 = vrot.lane.b32.xlu0 %v3709, 126
      %v3719 = vpop.permute.xlu0 %3718
      %3720 = vrot.lane.b32.xlu0 %v3710, 126
      %v3721 = vpop.permute.xlu0 %3720
      %3722 = vrot.lane.b32.xlu0 %v3711, 126
      %v3723 = vpop.permute.xlu0 %3722
      %v3724 = vrot.slane %v3717, 4
      %v3725 = vrot.slane %v3719, 4
      %v3726 = vrot.slane %v3721, 4
      %v3727 = vrot.slane %v3723, 4
      %v3728 = vsel %vm937, %v3724, %v3725
      %v3729 = vsel %vm997, %v3717, %v3728
      %v3730 = vsel %vm937, %v3726, %v3727
      %v3731 = vsel %vm997, %v3721, %v3730
      %3734 = vst [vmem:[#allocation3 + $0x20] sm:$0xff] %v3729
      %3735 = vst [vmem:[#allocation3 + $0x28] sm:$0xff] %v3731
      %v3736 = vld [vmem:[#allocation2] sm:$0xff]
      %v3737 = vld [vmem:[#allocation2 + $0x8] sm:$0xf]
      %v3738 = vld [vmem:[#allocation2 + $0xc] sm:$0xff]
      %v3739 = vld [vmem:[#allocation2 + $0x14] sm:$0xf]
      %v3740 = vsel %vm1021, %v3736, 0
      %v3741 = vsel %vm1028, %v3737, 0
      %v3742 = vsel %vm1021, %v3738, 0
      %v3743 = vsel %vm1028, %v3739, 0
      %3748 = vrot.lane.b32.xlu0 %v3740, 112
      %v3749 = vpop.permute.xlu0 %3748
      %3750 = vrot.lane.b32.xlu0 %v3741, 112
      %v3751 = vpop.permute.xlu0 %3750
      %3752 = vrot.lane.b32.xlu0 %v3742, 112
      %v3753 = vpop.permute.xlu0 %3752
      %3754 = vrot.lane.b32.xlu0 %v3743, 112
      %v3755 = vpop.permute.xlu0 %3754
      %v3756 = vrot.slane %v3749, 4
      %v3757 = vrot.slane %v3751, 4
      %v3758 = vrot.slane %v3753, 4
      %v3759 = vrot.slane %v3755, 4
      %v3760 = vsel %vm937, %v3756, %v3757
      %v3761 = vsel %vm1050, %v3749, %v3760
      %v3762 = vsel %vm937, %v3758, %v3759
      %v3763 = vsel %vm1050, %v3753, %v3762
      %3766 = vst [vmem:[#allocation3 + $0x30] sm:$0xff] %v3761
      %3767 = vst [vmem:[#allocation3 + $0x38] sm:$0xff] %v3763
      %v3768 = vld [vmem:[#allocation2] sm:$0xff]
      %v3769 = vld [vmem:[#allocation2 + $0x8] sm:$0xf]
      %v3770 = vld [vmem:[#allocation2 + $0xc] sm:$0xff]
      %v3771 = vld [vmem:[#allocation2 + $0x14] sm:$0xf]
      %3776 = vrot.lane.b32.xlu0 %v3768, 111
      %v3777 = vpop.permute.xlu0 %3776
      %3778 = vrot.lane.b32.xlu0 %v3769, 111
      %v3779 = vpop.permute.xlu0 %3778
      %3780 = vrot.lane.b32.xlu0 %v3770, 111
      %v3781 = vpop.permute.xlu0 %3780
      %3782 = vrot.lane.b32.xlu0 %v3771, 111
      %v3783 = vpop.permute.xlu0 %3782
      %v3784 = vrot.slane %v3777, 4
      %v3785 = vrot.slane %v3779, 4
      %v3786 = vrot.slane %v3781, 4
      %v3787 = vrot.slane %v3783, 4
      %v3788 = vsel %vm937, %v3784, %v3785
      %v3789 = vsel %vm1079, %v3777, %v3788
      %v3790 = vsel %vm937, %v3786, %v3787
      %v3791 = vsel %vm1079, %v3781, %v3790
      %3794 = vst [vmem:[#allocation3 + $0x40] sm:$0xff] %v3789
      %3795 = vst [vmem:[#allocation3 + $0x48] sm:$0xff] %v3791
      %v3796 = vld [vmem:[#allocation2] sm:$0xff]
      %v3797 = vld [vmem:[#allocation2 + $0x8] sm:$0xf]
      %v3798 = vld [vmem:[#allocation2 + $0xc] sm:$0xff]
      %v3799 = vld [vmem:[#allocation2 + $0x14] sm:$0xf]
      %v3800 = vsel %vm1102, %v3796, 0
      %v3801 = vsel %vm1109, %v3797, 0
      %v3802 = vsel %vm1102, %v3798, 0
      %v3803 = vsel %vm1109, %v3799, 0
      %3808 = vrot.lane.b32.xlu0 %v3800, 110
      %v3809 = vpop.permute.xlu0 %3808
      %3810 = vrot.lane.b32.xlu0 %v3801, 110
      %v3811 = vpop.permute.xlu0 %3810
      %3812 = vrot.lane.b32.xlu0 %v3802, 110
      %v3813 = vpop.permute.xlu0 %3812
      %3814 = vrot.lane.b32.xlu0 %v3803, 110
      %v3815 = vpop.permute.xlu0 %3814
      %v3816 = vrot.slane %v3809, 4
      %v3817 = vrot.slane %v3811, 4
      %v3818 = vrot.slane %v3813, 4
      %v3819 = vrot.slane %v3815, 4
      %v3820 = vsel %vm937, %v3816, %v3817
      %v3821 = vsel %vm1131, %v3809, %v3820
      %v3822 = vsel %vm937, %v3818, %v3819
      %v3823 = vsel %vm1131, %v3813, %v3822
      %3826 = vst [vmem:[#allocation3 + $0x50] sm:$0xff] %v3821
      %3827 = vst [vmem:[#allocation3 + $0x58] sm:$0xff] %v3823
      %v3828 = vld [vmem:[#allocation2] sm:$0xff]
      %v3829 = vld [vmem:[#allocation2 + $0x8] sm:$0xf]
      %v3830 = vld [vmem:[#allocation2 + $0xc] sm:$0xff]
      %v3831 = vld [vmem:[#allocation2 + $0x14] sm:$0xf]
      %v3832 = vsel %vm1154, %v3828, 0
      %v3833 = vsel %vm1161, %v3829, 0
      %v3834 = vsel %vm1154, %v3830, 0
      %v3835 = vsel %vm1161, %v3831, 0
      %3840 = vrot.lane.b32.xlu0 %v3832, 96
      %v3841 = vpop.permute.xlu0 %3840
      %3842 = vrot.lane.b32.xlu0 %v3833, 96
      %v3843 = vpop.permute.xlu0 %3842
      %3844 = vrot.lane.b32.xlu0 %v3834, 96
      %v3845 = vpop.permute.xlu0 %3844
      %3846 = vrot.lane.b32.xlu0 %v3835, 96
      %v3847 = vpop.permute.xlu0 %3846
      %v3848 = vrot.slane %v3841, 4
      %v3849 = vrot.slane %v3843, 4
      %v3850 = vrot.slane %v3845, 4
      %v3851 = vrot.slane %v3847, 4
      %v3852 = vsel %vm937, %v3848, %v3849
      %v3853 = vsel %vm1183, %v3841, %v3852
      %v3854 = vsel %vm937, %v3850, %v3851
      %v3855 = vsel %vm1183, %v3845, %v3854
      %3858 = vst [vmem:[#allocation3 + $0x60] sm:$0xff] %v3853
      %3859 = vst [vmem:[#allocation3 + $0x68] sm:$0xff] %v3855
      %v3860 = vld [vmem:[#allocation2] sm:$0xff]
      %v3861 = vld [vmem:[#allocation2 + $0x8] sm:$0xf]
      %v3862 = vld [vmem:[#allocation2 + $0xc] sm:$0xff]
      %v3863 = vld [vmem:[#allocation2 + $0x14] sm:$0xf]
      %3868 = vrot.lane.b32.xlu0 %v3860, 95
      %v3869 = vpop.permute.xlu0 %3868
      %3870 = vrot.lane.b32.xlu0 %v3861, 95
      %v3871 = vpop.permute.xlu0 %3870
      %3872 = vrot.lane.b32.xlu0 %v3862, 95
      %v3873 = vpop.permute.xlu0 %3872
      %3874 = vrot.lane.b32.xlu0 %v3863, 95
      %v3875 = vpop.permute.xlu0 %3874
      %v3876 = vrot.slane %v3869, 4
      %v3877 = vrot.slane %v3871, 4
      %v3878 = vrot.slane %v3873, 4
      %v3879 = vrot.slane %v3875, 4
      %v3880 = vsel %vm937, %v3876, %v3877
      %v3881 = vsel %vm1212, %v3869, %v3880
      %v3882 = vsel %vm937, %v3878, %v3879
      %v3883 = vsel %vm1212, %v3873, %v3882
      %3886 = vst [vmem:[#allocation3 + $0x70] sm:$0xff] %v3881
      %3887 = vst [vmem:[#allocation3 + $0x78] sm:$0xff] %v3883
      %v3888 = vld [vmem:[#allocation2] sm:$0xff]
      %v3889 = vld [vmem:[#allocation2 + $0x8] sm:$0xf]
      %v3890 = vld [vmem:[#allocation2 + $0xc] sm:$0xff]
      %v3891 = vld [vmem:[#allocation2 + $0x14] sm:$0xf]
      %v3892 = vsel %vm1235, %v3888, 0
      %v3893 = vsel %vm1242, %v3889, 0
      %v3894 = vsel %vm1235, %v3890, 0
      %v3895 = vsel %vm1242, %v3891, 0
      %3900 = vrot.lane.b32.xlu0 %v3892, 94
      %v3901 = vpop.permute.xlu0 %3900
      %3902 = vrot.lane.b32.xlu0 %v3893, 94
      %v3903 = vpop.permute.xlu0 %3902
      %3904 = vrot.lane.b32.xlu0 %v3894, 94
      %v3905 = vpop.permute.xlu0 %3904
      %3906 = vrot.lane.b32.xlu0 %v3895, 94
      %v3907 = vpop.permute.xlu0 %3906
      %v3908 = vrot.slane %v3901, 4
      %v3909 = vrot.slane %v3903, 4
      %v3910 = vrot.slane %v3905, 4
      %v3911 = vrot.slane %v3907, 4
      %v3912 = vsel %vm937, %v3908, %v3909
      %v3913 = vsel %vm1264, %v3901, %v3912
      %v3914 = vsel %vm937, %v3910, %v3911
      %v3915 = vsel %vm1264, %v3905, %v3914
      %3918 = vst [vmem:[#allocation3 + $0x80] sm:$0xff] %v3913
      %3919 = vst [vmem:[#allocation3 + $0x88] sm:$0xff] %v3915
      %v3920 = vld [vmem:[%s11] sm:$0xff]
      %v3921 = vld [vmem:[%s11 + $0x8] sm:$0xff]
      %v3922 = vld [vmem:[#allocation3] sm:$0xff]
      %v3923 = vld [vmem:[#allocation3 + $0x8] sm:$0xff]
      %v3924 = vld [vmem:[#allocation3 + $0x10] sm:$0xff]
      %v3925 = vld [vmem:[#allocation3 + $0x18] sm:$0xff]
      %v3926 = vld [vmem:[#allocation3 + $0x20] sm:$0xff]
      %v3927 = vld [vmem:[#allocation3 + $0x28] sm:$0xff]
      %v3928 = vld [vmem:[#allocation3 + $0x30] sm:$0xff]
      %v3929 = vld [vmem:[#allocation3 + $0x38] sm:$0xff]
      %v3930 = vld [vmem:[#allocation3 + $0x40] sm:$0xff]
      %v3931 = vld [vmem:[#allocation3 + $0x48] sm:$0xff]
      %v3932 = vld [vmem:[#allocation3 + $0x50] sm:$0xff]
      %v3933 = vld [vmem:[#allocation3 + $0x58] sm:$0xff]
      %v3934 = vld [vmem:[#allocation3 + $0x60] sm:$0xff]
      %v3935 = vld [vmem:[#allocation3 + $0x68] sm:$0xff]
      %v3936 = vld [vmem:[#allocation3 + $0x70] sm:$0xff]
      %v3937 = vld [vmem:[#allocation3 + $0x78] sm:$0xff]
      %v3938 = vld [vmem:[#allocation3 + $0x80] sm:$0xff]
      %v3939 = vld [vmem:[#allocation3 + $0x88] sm:$0xff]
      %v3940 = vld [vmem:[%s12] sm:$0xff]
      %v3941 = vld [vmem:[%s12 + $0x8] sm:$0xff]
      %3943 = vset.pattern.permute.xlu0 0
      %3944 = vperm.xlu0 %3943, %v3940
      %v3945 = vpop.permute.xlu0 %3944
      %3948 = vset.pattern.permute.xlu0 0
      %3949 = vperm.xlu0 %3948, %v3941
      %v3950 = vpop.permute.xlu0 %3949
      %v3954 = vunpack.c.l.b16 %v3920
      %v3955 = vunpack.c.h.b16 %v3920
      %v3956 = vunpack.c.l.b16 %v3921
      %v3957 = vunpack.c.h.b16 %v3921
      %v3958 = vpack.c.b16 %v3956, %v3954
      %v3959 = vpack.c.b16 %v3957, %v3955
      %v3979 = vunpack.c.l.b16 %v3922
      %v3980 = vunpack.c.h.b16 %v3922
      %v3981 = vunpack.c.l.b16 %v3923
      %v3982 = vunpack.c.h.b16 %v3923
      %v3983 = vunpack.c.l.b16 %v3924
      %v3984 = vunpack.c.h.b16 %v3924
      %v3985 = vunpack.c.l.b16 %v3925
      %v3986 = vunpack.c.h.b16 %v3925
      %v3987 = vunpack.c.l.b16 %v3926
      %v3988 = vunpack.c.h.b16 %v3926
      %v3989 = vunpack.c.l.b16 %v3927
      %v3990 = vunpack.c.h.b16 %v3927
      %v3991 = vunpack.c.l.b16 %v3928
      %v3992 = vunpack.c.h.b16 %v3928
      %v3993 = vunpack.c.l.b16 %v3929
      %v3994 = vunpack.c.h.b16 %v3929
      %v3995 = vunpack.c.l.b16 %v3930
      %v3996 = vunpack.c.h.b16 %v3930
      %v3997 = vunpack.c.l.b16 %v3931
      %v3998 = vunpack.c.h.b16 %v3931
      %v3999 = vunpack.c.l.b16 %v3932
      %v4000 = vunpack.c.h.b16 %v3932
      %v4001 = vunpack.c.l.b16 %v3933
      %v4002 = vunpack.c.h.b16 %v3933
      %v4003 = vunpack.c.l.b16 %v3934
      %v4004 = vunpack.c.h.b16 %v3934
      %v4005 = vunpack.c.l.b16 %v3935
      %v4006 = vunpack.c.h.b16 %v3935
      %v4007 = vunpack.c.l.b16 %v3936
      %v4008 = vunpack.c.h.b16 %v3936
      %v4009 = vunpack.c.l.b16 %v3937
      %v4010 = vunpack.c.h.b16 %v3937
      %v4011 = vunpack.c.l.b16 %v3938
      %v4012 = vunpack.c.h.b16 %v3938
      %v4013 = vunpack.c.l.b16 %v3939
      %v4014 = vunpack.c.h.b16 %v3939
      %v4015 = vpack.c.b16 %v3981, %v3979
      %v4016 = vpack.c.b16 %v3982, %v3980
      %v4017 = vpack.c.b16 %v3985, %v3983
      %v4018 = vpack.c.b16 %v3986, %v3984
      %v4019 = vpack.c.b16 %v3989, %v3987
      %v4020 = vpack.c.b16 %v3990, %v3988
      %v4021 = vpack.c.b16 %v3993, %v3991
      %v4022 = vpack.c.b16 %v3994, %v3992
      %v4023 = vpack.c.b16 %v3997, %v3995
      %v4024 = vpack.c.b16 %v3998, %v3996
      %v4025 = vpack.c.b16 %v4001, %v3999
      %v4026 = vpack.c.b16 %v4002, %v4000
      %v4027 = vpack.c.b16 %v4005, %v4003
      %v4028 = vpack.c.b16 %v4006, %v4004
      %v4029 = vpack.c.b16 %v4009, %v4007
      %v4030 = vpack.c.b16 %v4010, %v4008
      %v4031 = vpack.c.b16 %v4013, %v4011
      %v4032 = vpack.c.b16 %v4014, %v4012
      %v4052 = vsel %vm1403, %v3959, 0
      %4054 = vmatpush.bf16.msra.mxu0 %v4029
      %4055 = vmatpush.bf16.msra.mxu0 %v4027
      %4056 = vmatpush.bf16.msra.mxu0 %v4025
      %4057 = vmatpush.bf16.msra.mxu0 %v4023
      %4058 = vmatpush.bf16.msra.mxu0 %v4021
      %4059 = vmatpush.bf16.msra.mxu0 %v4019
      %4060 = vmatpush.bf16.msra.mxu0 %v4017
      %4061 = vmatpush.bf16.msra.mxu0 %v4015
      %4062 = vmatmul.bf16.gmra.mxu0 %v3958
      %v4063 = vpop.f32.mrf.mxu0
      %v4064 = vadd.f32 %v3945, %v4063
      %v4065 = vpop.f32.mrf.mxu0
      %v4066 = vadd.f32 %v3950, %v4065
      %4067 = vdwg.mxu0
      %4068 = vmatpush.bf16.msra.mxu0 0
      %4069 = vmatpush.bf16.msra.mxu0 0
      %4070 = vmatpush.bf16.msra.mxu0 0
      %4071 = vmatpush.bf16.msra.mxu0 0
      %4072 = vmatpush.bf16.msra.mxu0 0
      %4073 = vmatpush.bf16.msra.mxu0 0
      %4074 = vmatpush.bf16.msra.mxu0 0
      %4075 = vmatpush.bf16.msra.mxu0 %v4031
      %4076 = vmatmul.bf16.gmra.mxu0 %v4052
      %v4077 = vpop.f32.mrf.mxu0
      %v4078 = vadd.f32 %v4064, %v4077
      %v4079 = vpop.f32.mrf.mxu0
      %v4080 = vadd.f32 %v4066, %v4079
      %4081 = vdwg.mxu0
      %4082 = vmatpush.bf16.msra.mxu0 %v4030
      %4083 = vmatpush.bf16.msra.mxu0 %v4028
      %4084 = vmatpush.bf16.msra.mxu0 %v4026
      %4085 = vmatpush.bf16.msra.mxu0 %v4024
      %4086 = vmatpush.bf16.msra.mxu0 %v4022
      %4087 = vmatpush.bf16.msra.mxu0 %v4020
      %4088 = vmatpush.bf16.msra.mxu0 %v4018
      %4089 = vmatpush.bf16.msra.mxu0 %v4016
      %4090 = vmatmul.bf16.gmra.mxu0 %v3958
      %v4091 = vpop.f32.mrf.mxu0
      %v4092 = vadd.f32 %v3945, %v4091
      %v4093 = vpop.f32.mrf.mxu0
      %v4094 = vadd.f32 %v3950, %v4093
      %4095 = vdwg.mxu0
      %4096 = vmatpush.bf16.msra.mxu0 0
      %4097 = vmatpush.bf16.msra.mxu0 0
      %4098 = vmatpush.bf16.msra.mxu0 0
      %4099 = vmatpush.bf16.msra.mxu0 0
      %4100 = vmatpush.bf16.msra.mxu0 0
      %4101 = vmatpush.bf16.msra.mxu0 0
      %4102 = vmatpush.bf16.msra.mxu0 0
      %4103 = vmatpush.bf16.msra.mxu0 %v4032
      %4104 = vmatmul.bf16.gmra.mxu0 %v4052
      %v4105 = vpop.f32.mrf.mxu0
      %v4106 = vadd.f32 %v4092, %v4105
      %v4107 = vpop.f32.mrf.mxu0
      %v4108 = vadd.f32 %v4094, %v4107
      %4109 = vdwg.mxu0
      %v4110 = vadd.f32 %v4078, %v3182
      %v4111 = vadd.f32 %v4106, %v3183
      %v4112 = vadd.f32 %v4080, %v3184
      %v4113 = vadd.f32 %v4108, %v3185
      %v4114 = vmax.f32 %v4110, 0.0
      %v4115 = vmax.f32 %v4111, 0.0
      %v4116 = vmax.f32 %v4112, 0.0
      %v4117 = vmax.f32 %v4113, 0.0
      %v4118 = vpack.c.bf16 %v4115, %v4114
      %v4119 = vpack.c.bf16 %v4117, %v4116
      %4122 = vrot.lane.b32.xlu0 %v4118, 17
      %v4123 = vpop.permute.xlu0 %4122
      %4124 = vrot.lane.b32.xlu0 %v4119, 17
      %v4125 = vpop.permute.xlu0 %4124
      %v4126 = vrot.slane %v4123, 4
      %v4127 = vrot.slane %v4125, 4
      %v4128 = vsel %vm892, %v4126, %v4123
      %v4129 = vsel %vm892, %v4127, %v4125
      %4134 = vst.msk [vmem:[#allocation2] sm:$0xff] %vm901, %v4128
      %4135 = vst.msk [vmem:[#allocation2 + $0x8] sm:$0xf] %vm833, %v4126
      %4136 = vst.msk [vmem:[#allocation2 + $0xc] sm:$0xff] %vm901, %v4129
      %4137 = vst.msk [vmem:[#allocation2 + $0x14] sm:$0xf] %vm833, %v4127
      %v4138 = vpack.c.bf16 %v881, %v880
      %v4139 = vpack.c.bf16 %v883, %v882
      %4142 = vrot.lane.b32.xlu0 %v4138, 17
      %v4143 = vpop.permute.xlu0 %4142
      %4144 = vrot.lane.b32.xlu0 %v4139, 17
      %v4145 = vpop.permute.xlu0 %4144
      %v4146 = vrot.slane %v4143, 4
      %v4147 = vrot.slane %v4145, 4
      %v4148 = vsel %vm892, %v4146, %v4143
      %v4149 = vsel %vm892, %v4147, %v4145
      %4154 = vst.msk [vmem:[#allocation2 + $0x18] sm:$0xff] %vm901, %v4148
      %4155 = vst.msk [vmem:[#allocation2 + $0x20] sm:$0xf] %vm833, %v4146
      %4156 = vst.msk [vmem:[#allocation2 + $0x24] sm:$0xff] %vm901, %v4149
      %4157 = vst.msk [vmem:[#allocation2 + $0x2c] sm:$0xf] %vm833, %v4147
      %v4158 = vld [vmem:[#allocation2] sm:$0xff]
      %v4159 = vld [vmem:[#allocation2 + $0xc] sm:$0xff]
      %v4160 = vsel %vm912, %v4158, 0
      %v4161 = vsel %vm912, %v4159, 0
      %4162 = vst [vmem:[#allocation3] sm:$0xff] %v4160
      %4163 = vst [vmem:[#allocation3 + $0x8] sm:$0xff] %v4161
      %v4164 = vld [vmem:[#allocation2] sm:$0xff]
      %v4165 = vld [vmem:[#allocation2 + $0x8] sm:$0xf]
      %v4166 = vld [vmem:[#allocation2 + $0xc] sm:$0xff]
      %v4167 = vld [vmem:[#allocation2 + $0x14] sm:$0xf]
      %4172 = vrot.lane.b32.xlu0 %v4164, 127
      %v4173 = vpop.permute.xlu0 %4172
      %4174 = vrot.lane.b32.xlu0 %v4165, 127
      %v4175 = vpop.permute.xlu0 %4174
      %4176 = vrot.lane.b32.xlu0 %v4166, 127
      %v4177 = vpop.permute.xlu0 %4176
      %4178 = vrot.lane.b32.xlu0 %v4167, 127
      %v4179 = vpop.permute.xlu0 %4178
      %v4180 = vrot.slane %v4173, 4
      %v4181 = vrot.slane %v4175, 4
      %v4182 = vrot.slane %v4177, 4
      %v4183 = vrot.slane %v4179, 4
      %v4184 = vsel %vm937, %v4180, %v4181
      %v4185 = vsel %vm939, %v4173, %v4184
      %v4186 = vsel %vm937, %v4182, %v4183
      %v4187 = vsel %vm939, %v4177, %v4186
      %4190 = vst [vmem:[#allocation3 + $0x10] sm:$0xff] %v4185
      %4191 = vst [vmem:[#allocation3 + $0x18] sm:$0xff] %v4187
      %v4192 = vld [vmem:[#allocation2] sm:$0xff]
      %v4193 = vld [vmem:[#allocation2 + $0x8] sm:$0xf]
      %v4194 = vld [vmem:[#allocation2 + $0xc] sm:$0xff]
      %v4195 = vld [vmem:[#allocation2 + $0x14] sm:$0xf]
      %v4196 = vsel %vm968, %v4192, 0
      %v4197 = vsel %vm975, %v4193, 0
      %v4198 = vsel %vm968, %v4194, 0
      %v4199 = vsel %vm975, %v4195, 0
      %4204 = vrot.lane.b32.xlu0 %v4196, 126
      %v4205 = vpop.permute.xlu0 %4204
      %4206 = vrot.lane.b32.xlu0 %v4197, 126
      %v4207 = vpop.permute.xlu0 %4206
      %4208 = vrot.lane.b32.xlu0 %v4198, 126
      %v4209 = vpop.permute.xlu0 %4208
      %4210 = vrot.lane.b32.xlu0 %v4199, 126
      %v4211 = vpop.permute.xlu0 %4210
      %v4212 = vrot.slane %v4205, 4
      %v4213 = vrot.slane %v4207, 4
      %v4214 = vrot.slane %v4209, 4
      %v4215 = vrot.slane %v4211, 4
      %v4216 = vsel %vm937, %v4212, %v4213
      %v4217 = vsel %vm997, %v4205, %v4216
      %v4218 = vsel %vm937, %v4214, %v4215
      %v4219 = vsel %vm997, %v4209, %v4218
      %4222 = vst [vmem:[#allocation3 + $0x20] sm:$0xff] %v4217
      %4223 = vst [vmem:[#allocation3 + $0x28] sm:$0xff] %v4219
      %v4224 = vld [vmem:[#allocation2] sm:$0xff]
      %v4225 = vld [vmem:[#allocation2 + $0x8] sm:$0xf]
      %v4226 = vld [vmem:[#allocation2 + $0xc] sm:$0xff]
      %v4227 = vld [vmem:[#allocation2 + $0x14] sm:$0xf]
      %v4228 = vsel %vm1021, %v4224, 0
      %v4229 = vsel %vm1028, %v4225, 0
      %v4230 = vsel %vm1021, %v4226, 0
      %v4231 = vsel %vm1028, %v4227, 0
      %4236 = vrot.lane.b32.xlu0 %v4228, 112
      %v4237 = vpop.permute.xlu0 %4236
      %4238 = vrot.lane.b32.xlu0 %v4229, 112
      %v4239 = vpop.permute.xlu0 %4238
      %4240 = vrot.lane.b32.xlu0 %v4230, 112
      %v4241 = vpop.permute.xlu0 %4240
      %4242 = vrot.lane.b32.xlu0 %v4231, 112
      %v4243 = vpop.permute.xlu0 %4242
      %v4244 = vrot.slane %v4237, 4
      %v4245 = vrot.slane %v4239, 4
      %v4246 = vrot.slane %v4241, 4
      %v4247 = vrot.slane %v4243, 4
      %v4248 = vsel %vm937, %v4244, %v4245
      %v4249 = vsel %vm1050, %v4237, %v4248
      %v4250 = vsel %vm937, %v4246, %v4247
      %v4251 = vsel %vm1050, %v4241, %v4250
      %4254 = vst [vmem:[#allocation3 + $0x30] sm:$0xff] %v4249
      %4255 = vst [vmem:[#allocation3 + $0x38] sm:$0xff] %v4251
      %v4256 = vld [vmem:[#allocation2] sm:$0xff]
      %v4257 = vld [vmem:[#allocation2 + $0x8] sm:$0xf]
      %v4258 = vld [vmem:[#allocation2 + $0xc] sm:$0xff]
      %v4259 = vld [vmem:[#allocation2 + $0x14] sm:$0xf]
      %4264 = vrot.lane.b32.xlu0 %v4256, 111
      %v4265 = vpop.permute.xlu0 %4264
      %4266 = vrot.lane.b32.xlu0 %v4257, 111
      %v4267 = vpop.permute.xlu0 %4266
      %4268 = vrot.lane.b32.xlu0 %v4258, 111
      %v4269 = vpop.permute.xlu0 %4268
      %4270 = vrot.lane.b32.xlu0 %v4259, 111
      %v4271 = vpop.permute.xlu0 %4270
      %v4272 = vrot.slane %v4265, 4
      %v4273 = vrot.slane %v4267, 4
      %v4274 = vrot.slane %v4269, 4
      %v4275 = vrot.slane %v4271, 4
      %v4276 = vsel %vm937, %v4272, %v4273
      %v4277 = vsel %vm1079, %v4265, %v4276
      %v4278 = vsel %vm937, %v4274, %v4275
      %v4279 = vsel %vm1079, %v4269, %v4278
      %4282 = vst [vmem:[#allocation3 + $0x40] sm:$0xff] %v4277
      %4283 = vst [vmem:[#allocation3 + $0x48] sm:$0xff] %v4279
      %v4284 = vld [vmem:[#allocation2] sm:$0xff]
      %v4285 = vld [vmem:[#allocation2 + $0x8] sm:$0xf]
      %v4286 = vld [vmem:[#allocation2 + $0xc] sm:$0xff]
      %v4287 = vld [vmem:[#allocation2 + $0x14] sm:$0xf]
      %v4288 = vsel %vm1102, %v4284, 0
      %v4289 = vsel %vm1109, %v4285, 0
      %v4290 = vsel %vm1102, %v4286, 0
      %v4291 = vsel %vm1109, %v4287, 0
      %4296 = vrot.lane.b32.xlu0 %v4288, 110
      %v4297 = vpop.permute.xlu0 %4296
      %4298 = vrot.lane.b32.xlu0 %v4289, 110
      %v4299 = vpop.permute.xlu0 %4298
      %4300 = vrot.lane.b32.xlu0 %v4290, 110
      %v4301 = vpop.permute.xlu0 %4300
      %4302 = vrot.lane.b32.xlu0 %v4291, 110
      %v4303 = vpop.permute.xlu0 %4302
      %v4304 = vrot.slane %v4297, 4
      %v4305 = vrot.slane %v4299, 4
      %v4306 = vrot.slane %v4301, 4
      %v4307 = vrot.slane %v4303, 4
      %v4308 = vsel %vm937, %v4304, %v4305
      %v4309 = vsel %vm1131, %v4297, %v4308
      %v4310 = vsel %vm937, %v4306, %v4307
      %v4311 = vsel %vm1131, %v4301, %v4310
      %4314 = vst [vmem:[#allocation3 + $0x50] sm:$0xff] %v4309
      %4315 = vst [vmem:[#allocation3 + $0x58] sm:$0xff] %v4311
      %v4316 = vld [vmem:[#allocation2] sm:$0xff]
      %v4317 = vld [vmem:[#allocation2 + $0x8] sm:$0xf]
      %v4318 = vld [vmem:[#allocation2 + $0xc] sm:$0xff]
      %v4319 = vld [vmem:[#allocation2 + $0x14] sm:$0xf]
      %v4320 = vsel %vm1154, %v4316, 0
      %v4321 = vsel %vm1161, %v4317, 0
      %v4322 = vsel %vm1154, %v4318, 0
      %v4323 = vsel %vm1161, %v4319, 0
      %4328 = vrot.lane.b32.xlu0 %v4320, 96
      %v4329 = vpop.permute.xlu0 %4328
      %4330 = vrot.lane.b32.xlu0 %v4321, 96
      %v4331 = vpop.permute.xlu0 %4330
      %4332 = vrot.lane.b32.xlu0 %v4322, 96
      %v4333 = vpop.permute.xlu0 %4332
      %4334 = vrot.lane.b32.xlu0 %v4323, 96
      %v4335 = vpop.permute.xlu0 %4334
      %v4336 = vrot.slane %v4329, 4
      %v4337 = vrot.slane %v4331, 4
      %v4338 = vrot.slane %v4333, 4
      %v4339 = vrot.slane %v4335, 4
      %v4340 = vsel %vm937, %v4336, %v4337
      %v4341 = vsel %vm1183, %v4329, %v4340
      %v4342 = vsel %vm937, %v4338, %v4339
      %v4343 = vsel %vm1183, %v4333, %v4342
      %4346 = vst [vmem:[#allocation3 + $0x60] sm:$0xff] %v4341
      %4347 = vst [vmem:[#allocation3 + $0x68] sm:$0xff] %v4343
      %v4348 = vld [vmem:[#allocation2] sm:$0xff]
      %v4349 = vld [vmem:[#allocation2 + $0x8] sm:$0xf]
      %v4350 = vld [vmem:[#allocation2 + $0xc] sm:$0xff]
      %v4351 = vld [vmem:[#allocation2 + $0x14] sm:$0xf]
      %4356 = vrot.lane.b32.xlu0 %v4348, 95
      %v4357 = vpop.permute.xlu0 %4356
      %4358 = vrot.lane.b32.xlu0 %v4349, 95
      %v4359 = vpop.permute.xlu0 %4358
      %4360 = vrot.lane.b32.xlu0 %v4350, 95
      %v4361 = vpop.permute.xlu0 %4360
      %4362 = vrot.lane.b32.xlu0 %v4351, 95
      %v4363 = vpop.permute.xlu0 %4362
      %v4364 = vrot.slane %v4357, 4
      %v4365 = vrot.slane %v4359, 4
      %v4366 = vrot.slane %v4361, 4
      %v4367 = vrot.slane %v4363, 4
      %v4368 = vsel %vm937, %v4364, %v4365
      %v4369 = vsel %vm1212, %v4357, %v4368
      %v4370 = vsel %vm937, %v4366, %v4367
      %v4371 = vsel %vm1212, %v4361, %v4370
      %4374 = vst [vmem:[#allocation3 + $0x70] sm:$0xff] %v4369
      %4375 = vst [vmem:[#allocation3 + $0x78] sm:$0xff] %v4371
      %v4376 = vld [vmem:[#allocation2] sm:$0xff]
      %v4377 = vld [vmem:[#allocation2 + $0x8] sm:$0xf]
      %v4378 = vld [vmem:[#allocation2 + $0xc] sm:$0xff]
      %v4379 = vld [vmem:[#allocation2 + $0x14] sm:$0xf]
      %v4380 = vsel %vm1235, %v4376, 0
      %v4381 = vsel %vm1242, %v4377, 0
      %v4382 = vsel %vm1235, %v4378, 0
      %v4383 = vsel %vm1242, %v4379, 0
      %4388 = vrot.lane.b32.xlu0 %v4380, 94
      %v4389 = vpop.permute.xlu0 %4388
      %4390 = vrot.lane.b32.xlu0 %v4381, 94
      %v4391 = vpop.permute.xlu0 %4390
      %4392 = vrot.lane.b32.xlu0 %v4382, 94
      %v4393 = vpop.permute.xlu0 %4392
      %4394 = vrot.lane.b32.xlu0 %v4383, 94
      %v4395 = vpop.permute.xlu0 %4394
      %v4396 = vrot.slane %v4389, 4
      %v4397 = vrot.slane %v4391, 4
      %v4398 = vrot.slane %v4393, 4
      %v4399 = vrot.slane %v4395, 4
      %v4400 = vsel %vm937, %v4396, %v4397
      %v4401 = vsel %vm1264, %v4389, %v4400
      %v4402 = vsel %vm937, %v4398, %v4399
      %v4403 = vsel %vm1264, %v4393, %v4402
      %4406 = vst [vmem:[#allocation3 + $0x80] sm:$0xff] %v4401
      %4407 = vst [vmem:[#allocation3 + $0x88] sm:$0xff] %v4403
      %v4408 = vld [vmem:[#allocation2 + $0x18] sm:$0xff]
      %v4409 = vld [vmem:[#allocation2 + $0x24] sm:$0xff]
      %v4410 = vsel %vm912, %v4408, 0
      %v4411 = vsel %vm912, %v4409, 0
      %4412 = vst [vmem:[#allocation3 + $0x90] sm:$0xff] %v4410
      %4413 = vst [vmem:[#allocation3 + $0x98] sm:$0xff] %v4411
      %v4414 = vld [vmem:[#allocation2 + $0x18] sm:$0xff]
      %v4415 = vld [vmem:[#allocation2 + $0x20] sm:$0xf]
      %v4416 = vld [vmem:[#allocation2 + $0x24] sm:$0xff]
      %v4417 = vld [vmem:[#allocation2 + $0x2c] sm:$0xf]
      %4422 = vrot.lane.b32.xlu0 %v4414, 127
      %v4423 = vpop.permute.xlu0 %4422
      %4424 = vrot.lane.b32.xlu0 %v4415, 127
      %v4425 = vpop.permute.xlu0 %4424
      %4426 = vrot.lane.b32.xlu0 %v4416, 127
      %v4427 = vpop.permute.xlu0 %4426
      %4428 = vrot.lane.b32.xlu0 %v4417, 127
      %v4429 = vpop.permute.xlu0 %4428
      %v4430 = vrot.slane %v4423, 4
      %v4431 = vrot.slane %v4425, 4
      %v4432 = vrot.slane %v4427, 4
      %v4433 = vrot.slane %v4429, 4
      %v4434 = vsel %vm937, %v4430, %v4431
      %v4435 = vsel %vm939, %v4423, %v4434
      %v4436 = vsel %vm937, %v4432, %v4433
      %v4437 = vsel %vm939, %v4427, %v4436
      %4440 = vst [vmem:[#allocation3 + $0xa0] sm:$0xff] %v4435
      %4441 = vst [vmem:[#allocation3 + $0xa8] sm:$0xff] %v4437
      %v4442 = vld [vmem:[#allocation2 + $0x18] sm:$0xff]
      %v4443 = vld [vmem:[#allocation2 + $0x20] sm:$0xf]
      %v4444 = vld [vmem:[#allocation2 + $0x24] sm:$0xff]
      %v4445 = vld [vmem:[#allocation2 + $0x2c] sm:$0xf]
      %v4446 = vsel %vm968, %v4442, 0
      %v4447 = vsel %vm975, %v4443, 0
      %v4448 = vsel %vm968, %v4444, 0
      %v4449 = vsel %vm975, %v4445, 0
      %4454 = vrot.lane.b32.xlu0 %v4446, 126
      %v4455 = vpop.permute.xlu0 %4454
      %4456 = vrot.lane.b32.xlu0 %v4447, 126
      %v4457 = vpop.permute.xlu0 %4456
      %4458 = vrot.lane.b32.xlu0 %v4448, 126
      %v4459 = vpop.permute.xlu0 %4458
      %4460 = vrot.lane.b32.xlu0 %v4449, 126
      %v4461 = vpop.permute.xlu0 %4460
      %v4462 = vrot.slane %v4455, 4
      %v4463 = vrot.slane %v4457, 4
      %v4464 = vrot.slane %v4459, 4
      %v4465 = vrot.slane %v4461, 4
      %v4466 = vsel %vm937, %v4462, %v4463
      %v4467 = vsel %vm997, %v4455, %v4466
      %v4468 = vsel %vm937, %v4464, %v4465
      %v4469 = vsel %vm997, %v4459, %v4468
      %4472 = vst [vmem:[#allocation3 + $0xb0] sm:$0xff] %v4467
      %4473 = vst [vmem:[#allocation3 + $0xb8] sm:$0xff] %v4469
      %v4474 = vld [vmem:[#allocation2 + $0x18] sm:$0xff]
      %v4475 = vld [vmem:[#allocation2 + $0x20] sm:$0xf]
      %v4476 = vld [vmem:[#allocation2 + $0x24] sm:$0xff]
      %v4477 = vld [vmem:[#allocation2 + $0x2c] sm:$0xf]
      %v4478 = vsel %vm1021, %v4474, 0
      %v4479 = vsel %vm1028, %v4475, 0
      %v4480 = vsel %vm1021, %v4476, 0
      %v4481 = vsel %vm1028, %v4477, 0
      %4486 = vrot.lane.b32.xlu0 %v4478, 112
      %v4487 = vpop.permute.xlu0 %4486
      %4488 = vrot.lane.b32.xlu0 %v4479, 112
      %v4489 = vpop.permute.xlu0 %4488
      %4490 = vrot.lane.b32.xlu0 %v4480, 112
      %v4491 = vpop.permute.xlu0 %4490
      %4492 = vrot.lane.b32.xlu0 %v4481, 112
      %v4493 = vpop.permute.xlu0 %4492
      %v4494 = vrot.slane %v4487, 4
      %v4495 = vrot.slane %v4489, 4
      %v4496 = vrot.slane %v4491, 4
      %v4497 = vrot.slane %v4493, 4
      %v4498 = vsel %vm937, %v4494, %v4495
      %v4499 = vsel %vm1050, %v4487, %v4498
      %v4500 = vsel %vm937, %v4496, %v4497
      %v4501 = vsel %vm1050, %v4491, %v4500
      %4504 = vst [vmem:[#allocation3 + $0xc0] sm:$0xff] %v4499
      %4505 = vst [vmem:[#allocation3 + $0xc8] sm:$0xff] %v4501
      %v4506 = vld [vmem:[#allocation2 + $0x18] sm:$0xff]
      %v4507 = vld [vmem:[#allocation2 + $0x20] sm:$0xf]
      %v4508 = vld [vmem:[#allocation2 + $0x24] sm:$0xff]
      %v4509 = vld [vmem:[#allocation2 + $0x2c] sm:$0xf]
      %4514 = vrot.lane.b32.xlu0 %v4506, 111
      %v4515 = vpop.permute.xlu0 %4514
      %4516 = vrot.lane.b32.xlu0 %v4507, 111
      %v4517 = vpop.permute.xlu0 %4516
      %4518 = vrot.lane.b32.xlu0 %v4508, 111
      %v4519 = vpop.permute.xlu0 %4518
      %4520 = vrot.lane.b32.xlu0 %v4509, 111
      %v4521 = vpop.permute.xlu0 %4520
      %v4522 = vrot.slane %v4515, 4
      %v4523 = vrot.slane %v4517, 4
      %v4524 = vrot.slane %v4519, 4
      %v4525 = vrot.slane %v4521, 4
      %v4526 = vsel %vm937, %v4522, %v4523
      %v4527 = vsel %vm1079, %v4515, %v4526
      %v4528 = vsel %vm937, %v4524, %v4525
      %v4529 = vsel %vm1079, %v4519, %v4528
      %4532 = vst [vmem:[#allocation3 + $0xd0] sm:$0xff] %v4527
      %4533 = vst [vmem:[#allocation3 + $0xd8] sm:$0xff] %v4529
      %v4534 = vld [vmem:[#allocation2 + $0x18] sm:$0xff]
      %v4535 = vld [vmem:[#allocation2 + $0x20] sm:$0xf]
      %v4536 = vld [vmem:[#allocation2 + $0x24] sm:$0xff]
      %v4537 = vld [vmem:[#allocation2 + $0x2c] sm:$0xf]
      %v4538 = vsel %vm1102, %v4534, 0
      %v4539 = vsel %vm1109, %v4535, 0
      %v4540 = vsel %vm1102, %v4536, 0
      %v4541 = vsel %vm1109, %v4537, 0
      %4546 = vrot.lane.b32.xlu0 %v4538, 110
      %v4547 = vpop.permute.xlu0 %4546
      %4548 = vrot.lane.b32.xlu0 %v4539, 110
      %v4549 = vpop.permute.xlu0 %4548
      %4550 = vrot.lane.b32.xlu0 %v4540, 110
      %v4551 = vpop.permute.xlu0 %4550
      %4552 = vrot.lane.b32.xlu0 %v4541, 110
      %v4553 = vpop.permute.xlu0 %4552
      %v4554 = vrot.slane %v4547, 4
      %v4555 = vrot.slane %v4549, 4
      %v4556 = vrot.slane %v4551, 4
      %v4557 = vrot.slane %v4553, 4
      %v4558 = vsel %vm937, %v4554, %v4555
      %v4559 = vsel %vm1131, %v4547, %v4558
      %v4560 = vsel %vm937, %v4556, %v4557
      %v4561 = vsel %vm1131, %v4551, %v4560
      %4564 = vst [vmem:[#allocation3 + $0xe0] sm:$0xff] %v4559
      %4565 = vst [vmem:[#allocation3 + $0xe8] sm:$0xff] %v4561
      %v4566 = vld [vmem:[#allocation2 + $0x18] sm:$0xff]
      %v4567 = vld [vmem:[#allocation2 + $0x20] sm:$0xf]
      %v4568 = vld [vmem:[#allocation2 + $0x24] sm:$0xff]
      %v4569 = vld [vmem:[#allocation2 + $0x2c] sm:$0xf]
      %v4570 = vsel %vm1154, %v4566, 0
      %v4571 = vsel %vm1161, %v4567, 0
      %v4572 = vsel %vm1154, %v4568, 0
      %v4573 = vsel %vm1161, %v4569, 0
      %4578 = vrot.lane.b32.xlu0 %v4570, 96
      %v4579 = vpop.permute.xlu0 %4578
      %4580 = vrot.lane.b32.xlu0 %v4571, 96
      %v4581 = vpop.permute.xlu0 %4580
      %4582 = vrot.lane.b32.xlu0 %v4572, 96
      %v4583 = vpop.permute.xlu0 %4582
      %4584 = vrot.lane.b32.xlu0 %v4573, 96
      %v4585 = vpop.permute.xlu0 %4584
      %v4586 = vrot.slane %v4579, 4
      %v4587 = vrot.slane %v4581, 4
      %v4588 = vrot.slane %v4583, 4
      %v4589 = vrot.slane %v4585, 4
      %v4590 = vsel %vm937, %v4586, %v4587
      %v4591 = vsel %vm1183, %v4579, %v4590
      %v4592 = vsel %vm937, %v4588, %v4589
      %v4593 = vsel %vm1183, %v4583, %v4592
      %4596 = vst [vmem:[#allocation3 + $0xf0] sm:$0xff] %v4591
      %4597 = vst [vmem:[#allocation3 + $0xf8] sm:$0xff] %v4593
      %v4598 = vld [vmem:[#allocation2 + $0x18] sm:$0xff]
      %v4599 = vld [vmem:[#allocation2 + $0x20] sm:$0xf]
      %v4600 = vld [vmem:[#allocation2 + $0x24] sm:$0xff]
      %v4601 = vld [vmem:[#allocation2 + $0x2c] sm:$0xf]
      %4606 = vrot.lane.b32.xlu0 %v4598, 95
      %v4607 = vpop.permute.xlu0 %4606
      %4608 = vrot.lane.b32.xlu0 %v4599, 95
      %v4609 = vpop.permute.xlu0 %4608
      %4610 = vrot.lane.b32.xlu0 %v4600, 95
      %v4611 = vpop.permute.xlu0 %4610
      %4612 = vrot.lane.b32.xlu0 %v4601, 95
      %v4613 = vpop.permute.xlu0 %4612
      %v4614 = vrot.slane %v4607, 4
      %v4615 = vrot.slane %v4609, 4
      %v4616 = vrot.slane %v4611, 4
      %v4617 = vrot.slane %v4613, 4
      %v4618 = vsel %vm937, %v4614, %v4615
      %v4619 = vsel %vm1212, %v4607, %v4618
      %v4620 = vsel %vm937, %v4616, %v4617
      %v4621 = vsel %vm1212, %v4611, %v4620
      %4624 = vst [vmem:[#allocation3 + $0x100] sm:$0xff] %v4619
      %4625 = vst [vmem:[#allocation3 + $0x108] sm:$0xff] %v4621
      %v4626 = vld [vmem:[#allocation2 + $0x18] sm:$0xff]
      %v4627 = vld [vmem:[#allocation2 + $0x20] sm:$0xf]
      %v4628 = vld [vmem:[#allocation2 + $0x24] sm:$0xff]
      %v4629 = vld [vmem:[#allocation2 + $0x2c] sm:$0xf]
      %v4630 = vsel %vm1235, %v4626, 0
      %v4631 = vsel %vm1242, %v4627, 0
      %v4632 = vsel %vm1235, %v4628, 0
      %v4633 = vsel %vm1242, %v4629, 0
      %4638 = vrot.lane.b32.xlu0 %v4630, 94
      %v4639 = vpop.permute.xlu0 %4638
      %4640 = vrot.lane.b32.xlu0 %v4631, 94
      %v4641 = vpop.permute.xlu0 %4640
      %4642 = vrot.lane.b32.xlu0 %v4632, 94
      %v4643 = vpop.permute.xlu0 %4642
      %4644 = vrot.lane.b32.xlu0 %v4633, 94
      %v4645 = vpop.permute.xlu0 %4644
      %v4646 = vrot.slane %v4639, 4
      %v4647 = vrot.slane %v4641, 4
      %v4648 = vrot.slane %v4643, 4
      %v4649 = vrot.slane %v4645, 4
      %v4650 = vsel %vm937, %v4646, %v4647
      %v4651 = vsel %vm1264, %v4639, %v4650
      %v4652 = vsel %vm937, %v4648, %v4649
      %v4653 = vsel %vm1264, %v4643, %v4652
      %4656 = vst [vmem:[#allocation3 + $0x110] sm:$0xff] %v4651
      %4657 = vst [vmem:[#allocation3 + $0x118] sm:$0xff] %v4653
      %v4658 = vld [vmem:[%s13] sm:$0xff]
      %v4659 = vld [vmem:[%s13 + $0x8] sm:$0xf]
      %v4660 = vld [vmem:[%s13 + $0xc] sm:$0xff]
      %v4661 = vld [vmem:[%s13 + $0x14] sm:$0xf]
      %v4662 = vld [vmem:[%s13 + $0x18] sm:$0xff]
      %v4663 = vld [vmem:[%s13 + $0x20] sm:$0xf]
      %v4664 = vld [vmem:[%s13 + $0x24] sm:$0xff]
      %v4665 = vld [vmem:[%s13 + $0x2c] sm:$0xf]
      %v4666 = vld [vmem:[#allocation3] sm:$0xff]
      %v4667 = vld [vmem:[#allocation3 + $0x8] sm:$0xff]
      %v4668 = vld [vmem:[#allocation3 + $0x10] sm:$0xff]
      %v4669 = vld [vmem:[#allocation3 + $0x18] sm:$0xff]
      %v4670 = vld [vmem:[#allocation3 + $0x20] sm:$0xff]
      %v4671 = vld [vmem:[#allocation3 + $0x28] sm:$0xff]
      %v4672 = vld [vmem:[#allocation3 + $0x30] sm:$0xff]
      %v4673 = vld [vmem:[#allocation3 + $0x38] sm:$0xff]
      %v4674 = vld [vmem:[#allocation3 + $0x40] sm:$0xff]
      %v4675 = vld [vmem:[#allocation3 + $0x48] sm:$0xff]
      %v4676 = vld [vmem:[#allocation3 + $0x50] sm:$0xff]
      %v4677 = vld [vmem:[#allocation3 + $0x58] sm:$0xff]
      %v4678 = vld [vmem:[#allocation3 + $0x60] sm:$0xff]
      %v4679 = vld [vmem:[#allocation3 + $0x68] sm:$0xff]
      %v4680 = vld [vmem:[#allocation3 + $0x70] sm:$0xff]
      %v4681 = vld [vmem:[#allocation3 + $0x78] sm:$0xff]
      %v4682 = vld [vmem:[#allocation3 + $0x80] sm:$0xff]
      %v4683 = vld [vmem:[#allocation3 + $0x88] sm:$0xff]
      %v4684 = vld [vmem:[#allocation3 + $0x90] sm:$0xff]
      %v4685 = vld [vmem:[#allocation3 + $0x98] sm:$0xff]
      %v4686 = vld [vmem:[#allocation3 + $0xa0] sm:$0xff]
      %v4687 = vld [vmem:[#allocation3 + $0xa8] sm:$0xff]
      %v4688 = vld [vmem:[#allocation3 + $0xb0] sm:$0xff]
      %v4689 = vld [vmem:[#allocation3 + $0xb8] sm:$0xff]
      %v4690 = vld [vmem:[#allocation3 + $0xc0] sm:$0xff]
      %v4691 = vld [vmem:[#allocation3 + $0xc8] sm:$0xff]
      %v4692 = vld [vmem:[#allocation3 + $0xd0] sm:$0xff]
      %v4693 = vld [vmem:[#allocation3 + $0xd8] sm:$0xff]
      %v4694 = vld [vmem:[#allocation3 + $0xe0] sm:$0xff]
      %v4695 = vld [vmem:[#allocation3 + $0xe8] sm:$0xff]
      %v4696 = vld [vmem:[#allocation3 + $0xf0] sm:$0xff]
      %v4697 = vld [vmem:[#allocation3 + $0xf8] sm:$0xff]
      %v4698 = vld [vmem:[#allocation3 + $0x100] sm:$0xff]
      %v4699 = vld [vmem:[#allocation3 + $0x108] sm:$0xff]
      %v4700 = vld [vmem:[#allocation3 + $0x110] sm:$0xff]
      %v4701 = vld [vmem:[#allocation3 + $0x118] sm:$0xff]
      %v4702 = vld [vmem:[%s14] sm:$0xff]
      %v4703 = vld [vmem:[%s14 + $0x8] sm:$0xff]
      %v4704 = vld [vmem:[%s14 + $0x10] sm:$0xff]
      %v4705 = vld [vmem:[%s14 + $0x18] sm:$0xff]
      %4707 = vset.pattern.permute.xlu0 0
      %4708 = vperm.xlu0 %4707, %v4702
      %v4709 = vpop.permute.xlu0 %4708
      %4712 = vset.pattern.permute.xlu0 0
      %4713 = vperm.xlu0 %4712, %v4703
      %v4714 = vpop.permute.xlu0 %4713
      %4717 = vset.pattern.permute.xlu0 0
      %4718 = vperm.xlu0 %4717, %v4704
      %v4719 = vpop.permute.xlu0 %4718
      %4722 = vset.pattern.permute.xlu0 0
      %4723 = vperm.xlu0 %4722, %v4705
      %v4724 = vpop.permute.xlu0 %4723
      %v4734 = vunpack.c.l.b16 %v4658
      %v4735 = vunpack.c.h.b16 %v4658
      %v4736 = vunpack.c.l.b16 %v4659
      %v4737 = vunpack.c.l.b16 %v4660
      %v4738 = vunpack.c.h.b16 %v4660
      %v4739 = vunpack.c.l.b16 %v4661
      %v4740 = vunpack.c.l.b16 %v4662
      %v4741 = vunpack.c.h.b16 %v4662
      %v4742 = vunpack.c.l.b16 %v4663
      %v4743 = vunpack.c.l.b16 %v4664
      %v4744 = vunpack.c.h.b16 %v4664
      %v4745 = vunpack.c.l.b16 %v4665
      %v4746 = vpack.c.b16 %v4737, %v4734
      %v4747 = vpack.c.b16 %v4738, %v4735
      %v4748 = vpack.c.b16 %v4739, %v4736
      %v4749 = vpack.c.b16 %v4743, %v4740
      %v4750 = vpack.c.b16 %v4744, %v4741
      %v4751 = vpack.c.b16 %v4745, %v4742
      %v4792 = vunpack.c.l.b16 %v4666
      %v4793 = vunpack.c.h.b16 %v4666
      %v4794 = vunpack.c.l.b16 %v4667
      %v4795 = vunpack.c.h.b16 %v4667
      %v4796 = vunpack.c.l.b16 %v4668
      %v4797 = vunpack.c.h.b16 %v4668
      %v4798 = vunpack.c.l.b16 %v4669
      %v4799 = vunpack.c.h.b16 %v4669
      %v4800 = vunpack.c.l.b16 %v4670
      %v4801 = vunpack.c.h.b16 %v4670
      %v4802 = vunpack.c.l.b16 %v4671
      %v4803 = vunpack.c.h.b16 %v4671
      %v4804 = vunpack.c.l.b16 %v4672
      %v4805 = vunpack.c.h.b16 %v4672
      %v4806 = vunpack.c.l.b16 %v4673
      %v4807 = vunpack.c.h.b16 %v4673
      %v4808 = vunpack.c.l.b16 %v4674
      %v4809 = vunpack.c.h.b16 %v4674
      %v4810 = vunpack.c.l.b16 %v4675
      %v4811 = vunpack.c.h.b16 %v4675
      %v4812 = vunpack.c.l.b16 %v4676
      %v4813 = vunpack.c.h.b16 %v4676
      %v4814 = vunpack.c.l.b16 %v4677
      %v4815 = vunpack.c.h.b16 %v4677
      %v4816 = vunpack.c.l.b16 %v4678
      %v4817 = vunpack.c.h.b16 %v4678
      %v4818 = vunpack.c.l.b16 %v4679
      %v4819 = vunpack.c.h.b16 %v4679
      %v4820 = vunpack.c.l.b16 %v4680
      %v4821 = vunpack.c.h.b16 %v4680
      %v4822 = vunpack.c.l.b16 %v4681
      %v4823 = vunpack.c.h.b16 %v4681
      %v4824 = vunpack.c.l.b16 %v4682
      %v4825 = vunpack.c.h.b16 %v4682
      %v4826 = vunpack.c.l.b16 %v4683
      %v4827 = vunpack.c.h.b16 %v4683
      %v4828 = vunpack.c.l.b16 %v4684
      %v4829 = vunpack.c.h.b16 %v4684
      %v4830 = vunpack.c.l.b16 %v4685
      %v4831 = vunpack.c.h.b16 %v4685
      %v4832 = vunpack.c.l.b16 %v4686
      %v4833 = vunpack.c.h.b16 %v4686
      %v4834 = vunpack.c.l.b16 %v4687
      %v4835 = vunpack.c.h.b16 %v4687
      %v4836 = vunpack.c.l.b16 %v4688
      %v4837 = vunpack.c.h.b16 %v4688
      %v4838 = vunpack.c.l.b16 %v4689
      %v4839 = vunpack.c.h.b16 %v4689
      %v4840 = vunpack.c.l.b16 %v4690
      %v4841 = vunpack.c.h.b16 %v4690
      %v4842 = vunpack.c.l.b16 %v4691
      %v4843 = vunpack.c.h.b16 %v4691
      %v4844 = vunpack.c.l.b16 %v4692
      %v4845 = vunpack.c.h.b16 %v4692
      %v4846 = vunpack.c.l.b16 %v4693
      %v4847 = vunpack.c.h.b16 %v4693
      %v4848 = vunpack.c.l.b16 %v4694
      %v4849 = vunpack.c.h.b16 %v4694
      %v4850 = vunpack.c.l.b16 %v4695
      %v4851 = vunpack.c.h.b16 %v4695
      %v4852 = vunpack.c.l.b16 %v4696
      %v4853 = vunpack.c.h.b16 %v4696
      %v4854 = vunpack.c.l.b16 %v4697
      %v4855 = vunpack.c.h.b16 %v4697
      %v4856 = vunpack.c.l.b16 %v4698
      %v4857 = vunpack.c.h.b16 %v4698
      %v4858 = vunpack.c.l.b16 %v4699
      %v4859 = vunpack.c.h.b16 %v4699
      %v4860 = vunpack.c.l.b16 %v4700
      %v4861 = vunpack.c.h.b16 %v4700
      %v4862 = vunpack.c.l.b16 %v4701
      %v4863 = vunpack.c.h.b16 %v4701
      %v4864 = vpack.c.b16 %v4794, %v4792
      %v4865 = vpack.c.b16 %v4795, %v4793
      %v4866 = vpack.c.b16 %v4798, %v4796
      %v4867 = vpack.c.b16 %v4799, %v4797
      %v4868 = vpack.c.b16 %v4802, %v4800
      %v4869 = vpack.c.b16 %v4803, %v4801
      %v4870 = vpack.c.b16 %v4806, %v4804
      %v4871 = vpack.c.b16 %v4807, %v4805
      %v4872 = vpack.c.b16 %v4810, %v4808
      %v4873 = vpack.c.b16 %v4811, %v4809
      %v4874 = vpack.c.b16 %v4814, %v4812
      %v4875 = vpack.c.b16 %v4815, %v4813
      %v4876 = vpack.c.b16 %v4818, %v4816
      %v4877 = vpack.c.b16 %v4819, %v4817
      %v4878 = vpack.c.b16 %v4822, %v4820
      %v4879 = vpack.c.b16 %v4823, %v4821
      %v4880 = vpack.c.b16 %v4826, %v4824
      %v4881 = vpack.c.b16 %v4827, %v4825
      %v4882 = vpack.c.b16 %v4830, %v4828
      %v4883 = vpack.c.b16 %v4831, %v4829
      %v4884 = vpack.c.b16 %v4834, %v4832
      %v4885 = vpack.c.b16 %v4835, %v4833
      %v4886 = vpack.c.b16 %v4838, %v4836
      %v4887 = vpack.c.b16 %v4839, %v4837
      %v4888 = vpack.c.b16 %v4842, %v4840
      %v4889 = vpack.c.b16 %v4843, %v4841
      %v4890 = vpack.c.b16 %v4846, %v4844
      %v4891 = vpack.c.b16 %v4847, %v4845
      %v4892 = vpack.c.b16 %v4850, %v4848
      %v4893 = vpack.c.b16 %v4851, %v4849
      %v4894 = vpack.c.b16 %v4854, %v4852
      %v4895 = vpack.c.b16 %v4855, %v4853
      %v4896 = vpack.c.b16 %v4858, %v4856
      %v4897 = vpack.c.b16 %v4859, %v4857
      %v4898 = vpack.c.b16 %v4862, %v4860
      %v4899 = vpack.c.b16 %v4863, %v4861
      %v4937 = vsel %vm2285, %v4748, 0
      %v4940 = vsel %vm2285, %v4751, 0
      %4942 = vmatpush.bf16.msra.mxu0 %v4878
      %4943 = vmatpush.bf16.msra.mxu0 %v4876
      %4944 = vmatpush.bf16.msra.mxu0 %v4874
      %4945 = vmatpush.bf16.msra.mxu0 %v4872
      %4946 = vmatpush.bf16.msra.mxu0 %v4870
      %4947 = vmatpush.bf16.msra.mxu0 %v4868
      %4948 = vmatpush.bf16.msra.mxu0 %v4866
      %4949 = vmatpush.bf16.msra.mxu0 %v4864
      %4950 = vmatmul.bf16.gmra.mxu0 %v4746
      %v4951 = vpop.f32.mrf.mxu0
      %v4952 = vadd.f32 %v4709, %v4951
      %v4953 = vpop.f32.mrf.mxu0
      %v4954 = vadd.f32 %v4714, %v4953
      %4955 = vmatmul.bf16.gmra.mxu0 %v4749
      %v4956 = vpop.f32.mrf.mxu0
      %v4957 = vadd.f32 %v4719, %v4956
      %v4958 = vpop.f32.mrf.mxu0
      %v4959 = vadd.f32 %v4724, %v4958
      %4960 = vdwg.mxu0
      %4961 = vmatpush.bf16.msra.mxu0 %v4894
      %4962 = vmatpush.bf16.msra.mxu0 %v4892
      %4963 = vmatpush.bf16.msra.mxu0 %v4890
      %4964 = vmatpush.bf16.msra.mxu0 %v4888
      %4965 = vmatpush.bf16.msra.mxu0 %v4886
      %4966 = vmatpush.bf16.msra.mxu0 %v4884
      %4967 = vmatpush.bf16.msra.mxu0 %v4882
      %4968 = vmatpush.bf16.msra.mxu0 %v4880
      %4969 = vmatmul.bf16.gmra.mxu0 %v4747
      %v4970 = vpop.f32.mrf.mxu0
      %v4971 = vadd.f32 %v4952, %v4970
      %v4972 = vpop.f32.mrf.mxu0
      %v4973 = vadd.f32 %v4954, %v4972
      %4974 = vmatmul.bf16.gmra.mxu0 %v4750
      %v4975 = vpop.f32.mrf.mxu0
      %v4976 = vadd.f32 %v4957, %v4975
      %v4977 = vpop.f32.mrf.mxu0
      %v4978 = vadd.f32 %v4959, %v4977
      %4979 = vdwg.mxu0
      %4980 = vmatpush.bf16.msra.mxu0 0
      %4981 = vmatpush.bf16.msra.mxu0 0
      %4982 = vmatpush.bf16.msra.mxu0 0
      %4983 = vmatpush.bf16.msra.mxu0 0
      %4984 = vmatpush.bf16.msra.mxu0 0
      %4985 = vmatpush.bf16.msra.mxu0 0
      %4986 = vmatpush.bf16.msra.mxu0 %v4898
      %4987 = vmatpush.bf16.msra.mxu0 %v4896
      %4988 = vmatmul.bf16.gmra.mxu0 %v4937
      %v4989 = vpop.f32.mrf.mxu0
      %v4990 = vadd.f32 %v4971, %v4989
      %v4991 = vpop.f32.mrf.mxu0
      %v4992 = vadd.f32 %v4973, %v4991
      %4993 = vmatmul.bf16.gmra.mxu0 %v4940
      %v4994 = vpop.f32.mrf.mxu0
      %v4995 = vadd.f32 %v4976, %v4994
      %v4996 = vpop.f32.mrf.mxu0
      %v4997 = vadd.f32 %v4978, %v4996
      %4998 = vdwg.mxu0
      %4999 = vmatpush.bf16.msra.mxu0 %v4879
      %5000 = vmatpush.bf16.msra.mxu0 %v4877
      %5001 = vmatpush.bf16.msra.mxu0 %v4875
      %5002 = vmatpush.bf16.msra.mxu0 %v4873
      %5003 = vmatpush.bf16.msra.mxu0 %v4871
      %5004 = vmatpush.bf16.msra.mxu0 %v4869
      %5005 = vmatpush.bf16.msra.mxu0 %v4867
      %5006 = vmatpush.bf16.msra.mxu0 %v4865
      %5007 = vmatmul.bf16.gmra.mxu0 %v4746
      %v5008 = vpop.f32.mrf.mxu0
      %v5009 = vadd.f32 %v4709, %v5008
      %v5010 = vpop.f32.mrf.mxu0
      %v5011 = vadd.f32 %v4714, %v5010
      %5012 = vmatmul.bf16.gmra.mxu0 %v4749
      %v5013 = vpop.f32.mrf.mxu0
      %v5014 = vadd.f32 %v4719, %v5013
      %v5015 = vpop.f32.mrf.mxu0
      %v5016 = vadd.f32 %v4724, %v5015
      %5017 = vdwg.mxu0
      %5018 = vmatpush.bf16.msra.mxu0 %v4895
      %5019 = vmatpush.bf16.msra.mxu0 %v4893
      %5020 = vmatpush.bf16.msra.mxu0 %v4891
      %5021 = vmatpush.bf16.msra.mxu0 %v4889
      %5022 = vmatpush.bf16.msra.mxu0 %v4887
      %5023 = vmatpush.bf16.msra.mxu0 %v4885
      %5024 = vmatpush.bf16.msra.mxu0 %v4883
      %5025 = vmatpush.bf16.msra.mxu0 %v4881
      %5026 = vmatmul.bf16.gmra.mxu0 %v4747
      %v5027 = vpop.f32.mrf.mxu0
      %v5028 = vadd.f32 %v5009, %v5027
      %v5029 = vpop.f32.mrf.mxu0
      %v5030 = vadd.f32 %v5011, %v5029
      %5031 = vmatmul.bf16.gmra.mxu0 %v4750
      %v5032 = vpop.f32.mrf.mxu0
      %v5033 = vadd.f32 %v5014, %v5032
      %v5034 = vpop.f32.mrf.mxu0
      %v5035 = vadd.f32 %v5016, %v5034
      %5036 = vdwg.mxu0
      %5037 = vmatpush.bf16.msra.mxu0 0
      %5038 = vmatpush.bf16.msra.mxu0 0
      %5039 = vmatpush.bf16.msra.mxu0 0
      %5040 = vmatpush.bf16.msra.mxu0 0
      %5041 = vmatpush.bf16.msra.mxu0 0
      %5042 = vmatpush.bf16.msra.mxu0 0
      %5043 = vmatpush.bf16.msra.mxu0 %v4899
      %5044 = vmatpush.bf16.msra.mxu0 %v4897
      %5045 = vmatmul.bf16.gmra.mxu0 %v4937
      %v5046 = vpop.f32.mrf.mxu0
      %v5047 = vadd.f32 %v5028, %v5046
      %v5048 = vpop.f32.mrf.mxu0
      %v5049 = vadd.f32 %v5030, %v5048
      %5050 = vmatmul.bf16.gmra.mxu0 %v4940
      %v5051 = vpop.f32.mrf.mxu0
      %v5052 = vadd.f32 %v5033, %v5051
      %v5053 = vpop.f32.mrf.mxu0
      %v5054 = vadd.f32 %v5035, %v5053
      %5055 = vdwg.mxu0
      %v5056 = vxor.u32 %v4990, 2147483648
      %v5057 = vxor.u32 %v5047, 2147483648
      %v5058 = vxor.u32 %v4992, 2147483648
      %v5059 = vxor.u32 %v5049, 2147483648
      %v5060 = vxor.u32 %v4995, 2147483648
      %v5061 = vxor.u32 %v5052, 2147483648
      %v5062 = vxor.u32 %v4997, 2147483648
      %v5063 = vxor.u32 %v5054, 2147483648
      %v5064 = vmul.f32 %v5056, 1.442695
      %v5065 = vpow.pop %v5064
      %v5066 = vmul.f32 %v5057, 1.442695
      %v5067 = vpow.pop %v5066
      %v5068 = vmul.f32 %v5058, 1.442695
      %v5069 = vpow.pop %v5068
      %v5070 = vmul.f32 %v5059, 1.442695
      %v5071 = vpow.pop %v5070
      %v5072 = vmul.f32 %v5060, 1.442695
      %v5073 = vpow.pop %v5072
      %v5074 = vmul.f32 %v5061, 1.442695
      %v5075 = vpow.pop %v5074
      %v5076 = vmul.f32 %v5062, 1.442695
      %v5077 = vpow.pop %v5076
      %v5078 = vmul.f32 %v5063, 1.442695
      %v5079 = vpow.pop %v5078
      %v5080 = vadd.f32 %v5065, 1.0
      %v5081 = vadd.f32 %v5067, 1.0
      %v5082 = vadd.f32 %v5069, 1.0
      %v5083 = vadd.f32 %v5071, 1.0
      %v5084 = vadd.f32 %v5073, 1.0
      %v5085 = vadd.f32 %v5075, 1.0
      %v5086 = vadd.f32 %v5077, 1.0
      %v5087 = vadd.f32 %v5079, 1.0
      %v5088 = vrcp.pop %v5080
      %v5089 = vmul.f32 %v5080, %v5088
      %v5090 = vsub.f32 1.0, %v5089
      %v5091 = vmul.f32 %v5088, %v5090
      %v5092 = vadd.f32 %v5088, %v5091
      %vm5093 = vweird.f32 %v5080
      %vm5094 = vweird.f32 %v5088
      %vm5095 = vmor %vm5093, %vm5094
      %v5096 = vsel %vm5095, %v5088, %v5092
      %v5097 = vand.u32 2147483647, %v5080
      %vm5098 = vcmp.eq.f32.partialorder %v5097, 8.507059e+37
      %v5099 = vand.u32 %v5080, 2147483648
      %v5100 = vor.u32 1.1754944e-38, %v5099
      %v5101 = vsel %vm5098, %v5100, %v5096
      %v5102 = vmul.f32 1.0, %v5101
      %v5103 = vrcp.pop %v5081
      %v5104 = vmul.f32 %v5081, %v5103
      %v5105 = vsub.f32 1.0, %v5104
      %v5106 = vmul.f32 %v5103, %v5105
      %v5107 = vadd.f32 %v5103, %v5106
      %vm5108 = vweird.f32 %v5081
      %vm5109 = vweird.f32 %v5103
      %vm5110 = vmor %vm5108, %vm5109
      %v5111 = vsel %vm5110, %v5103, %v5107
      %v5112 = vand.u32 2147483647, %v5081
      %vm5113 = vcmp.eq.f32.partialorder %v5112, 8.507059e+37
      %v5114 = vand.u32 %v5081, 2147483648
      %v5115 = vor.u32 1.1754944e-38, %v5114
      %v5116 = vsel %vm5113, %v5115, %v5111
      %v5117 = vmul.f32 1.0, %v5116
      %v5118 = vrcp.pop %v5082
      %v5119 = vmul.f32 %v5082, %v5118
      %v5120 = vsub.f32 1.0, %v5119
      %v5121 = vmul.f32 %v5118, %v5120
      %v5122 = vadd.f32 %v5118, %v5121
      %vm5123 = vweird.f32 %v5082
      %vm5124 = vweird.f32 %v5118
      %vm5125 = vmor %vm5123, %vm5124
      %v5126 = vsel %vm5125, %v5118, %v5122
      %v5127 = vand.u32 2147483647, %v5082
      %vm5128 = vcmp.eq.f32.partialorder %v5127, 8.507059e+37
      %v5129 = vand.u32 %v5082, 2147483648
      %v5130 = vor.u32 1.1754944e-38, %v5129
      %v5131 = vsel %vm5128, %v5130, %v5126
      %v5132 = vmul.f32 1.0, %v5131
      %v5133 = vrcp.pop %v5083
      %v5134 = vmul.f32 %v5083, %v5133
      %v5135 = vsub.f32 1.0, %v5134
      %v5136 = vmul.f32 %v5133, %v5135
      %v5137 = vadd.f32 %v5133, %v5136
      %vm5138 = vweird.f32 %v5083
      %vm5139 = vweird.f32 %v5133
      %vm5140 = vmor %vm5138, %vm5139
      %v5141 = vsel %vm5140, %v5133, %v5137
      %v5142 = vand.u32 2147483647, %v5083
      %vm5143 = vcmp.eq.f32.partialorder %v5142, 8.507059e+37
      %v5144 = vand.u32 %v5083, 2147483648
      %v5145 = vor.u32 1.1754944e-38, %v5144
      %v5146 = vsel %vm5143, %v5145, %v5141
      %v5147 = vmul.f32 1.0, %v5146
      %v5148 = vrcp.pop %v5084
      %v5149 = vmul.f32 %v5084, %v5148
      %v5150 = vsub.f32 1.0, %v5149
      %v5151 = vmul.f32 %v5148, %v5150
      %v5152 = vadd.f32 %v5148, %v5151
      %vm5153 = vweird.f32 %v5084
      %vm5154 = vweird.f32 %v5148
      %vm5155 = vmor %vm5153, %vm5154
      %v5156 = vsel %vm5155, %v5148, %v5152
      %v5157 = vand.u32 2147483647, %v5084
      %vm5158 = vcmp.eq.f32.partialorder %v5157, 8.507059e+37
      %v5159 = vand.u32 %v5084, 2147483648
      %v5160 = vor.u32 1.1754944e-38, %v5159
      %v5161 = vsel %vm5158, %v5160, %v5156
      %v5162 = vmul.f32 1.0, %v5161
      %v5163 = vrcp.pop %v5085
      %v5164 = vmul.f32 %v5085, %v5163
      %v5165 = vsub.f32 1.0, %v5164
      %v5166 = vmul.f32 %v5163, %v5165
      %v5167 = vadd.f32 %v5163, %v5166
      %vm5168 = vweird.f32 %v5085
      %vm5169 = vweird.f32 %v5163
      %vm5170 = vmor %vm5168, %vm5169
      %v5171 = vsel %vm5170, %v5163, %v5167
      %v5172 = vand.u32 2147483647, %v5085
      %vm5173 = vcmp.eq.f32.partialorder %v5172, 8.507059e+37
      %v5174 = vand.u32 %v5085, 2147483648
      %v5175 = vor.u32 1.1754944e-38, %v5174
      %v5176 = vsel %vm5173, %v5175, %v5171
      %v5177 = vmul.f32 1.0, %v5176
      %v5178 = vrcp.pop %v5086
      %v5179 = vmul.f32 %v5086, %v5178
      %v5180 = vsub.f32 1.0, %v5179
      %v5181 = vmul.f32 %v5178, %v5180
      %v5182 = vadd.f32 %v5178, %v5181
      %vm5183 = vweird.f32 %v5086
      %vm5184 = vweird.f32 %v5178
      %vm5185 = vmor %vm5183, %vm5184
      %v5186 = vsel %vm5185, %v5178, %v5182
      %v5187 = vand.u32 2147483647, %v5086
      %vm5188 = vcmp.eq.f32.partialorder %v5187, 8.507059e+37
      %v5189 = vand.u32 %v5086, 2147483648
      %v5190 = vor.u32 1.1754944e-38, %v5189
      %v5191 = vsel %vm5188, %v5190, %v5186
      %v5192 = vmul.f32 1.0, %v5191
      %v5193 = vrcp.pop %v5087
      %v5194 = vmul.f32 %v5087, %v5193
      %v5195 = vsub.f32 1.0, %v5194
      %v5196 = vmul.f32 %v5193, %v5195
      %v5197 = vadd.f32 %v5193, %v5196
      %vm5198 = vweird.f32 %v5087
      %vm5199 = vweird.f32 %v5193
      %vm5200 = vmor %vm5198, %vm5199
      %v5201 = vsel %vm5200, %v5193, %v5197
      %v5202 = vand.u32 2147483647, %v5087
      %vm5203 = vcmp.eq.f32.partialorder %v5202, 8.507059e+37
      %v5204 = vand.u32 %v5087, 2147483648
      %v5205 = vor.u32 1.1754944e-38, %v5204
      %v5206 = vsel %vm5203, %v5205, %v5201
      %v5207 = vmul.f32 1.0, %v5206
      %v5208 = vmul.f32 %v5162, %v880
      %v5209 = vmul.f32 %v5177, %v881
      %v5210 = vmul.f32 %v5192, %v882
      %v5211 = vmul.f32 %v5207, %v883
      %v5212 = vpack.c.bf16 %v5209, %v5208
      %v5213 = vpack.c.bf16 %v5211, %v5210
      %5216 = vrot.lane.b32.xlu0 %v5212, 17
      %v5217 = vpop.permute.xlu0 %5216
      %5218 = vrot.lane.b32.xlu0 %v5213, 17
      %v5219 = vpop.permute.xlu0 %5218
      %v5220 = vrot.slane %v5217, 4
      %v5221 = vrot.slane %v5219, 4
      %v5222 = vsel %vm892, %v5220, %v5217
      %v5223 = vsel %vm892, %v5221, %v5219
      %5228 = vst.msk [vmem:[#allocation2 + $0x18] sm:$0xff] %vm901, %v5222
      %5229 = vst.msk [vmem:[#allocation2 + $0x20] sm:$0xf] %vm833, %v5220
      %5230 = vst.msk [vmem:[#allocation2 + $0x24] sm:$0xff] %vm901, %v5223
      %5231 = vst.msk [vmem:[#allocation2 + $0x2c] sm:$0xf] %vm833, %v5221
      %v5232 = vld [vmem:[#allocation2 + $0x18] sm:$0xff]
      %v5233 = vld [vmem:[#allocation2 + $0x24] sm:$0xff]
      %v5234 = vsel %vm912, %v5232, 0
      %v5235 = vsel %vm912, %v5233, 0
      %5236 = vst [vmem:[#allocation3 + $0x90] sm:$0xff] %v5234
      %5237 = vst [vmem:[#allocation3 + $0x98] sm:$0xff] %v5235
      %v5238 = vld [vmem:[#allocation2 + $0x18] sm:$0xff]
      %v5239 = vld [vmem:[#allocation2 + $0x20] sm:$0xf]
      %v5240 = vld [vmem:[#allocation2 + $0x24] sm:$0xff]
      %v5241 = vld [vmem:[#allocation2 + $0x2c] sm:$0xf]
      %5246 = vrot.lane.b32.xlu0 %v5238, 127
      %v5247 = vpop.permute.xlu0 %5246
      %5248 = vrot.lane.b32.xlu0 %v5239, 127
      %v5249 = vpop.permute.xlu0 %5248
      %5250 = vrot.lane.b32.xlu0 %v5240, 127
      %v5251 = vpop.permute.xlu0 %5250
      %5252 = vrot.lane.b32.xlu0 %v5241, 127
      %v5253 = vpop.permute.xlu0 %5252
      %v5254 = vrot.slane %v5247, 4
      %v5255 = vrot.slane %v5249, 4
      %v5256 = vrot.slane %v5251, 4
      %v5257 = vrot.slane %v5253, 4
      %v5258 = vsel %vm937, %v5254, %v5255
      %v5259 = vsel %vm939, %v5247, %v5258
      %v5260 = vsel %vm937, %v5256, %v5257
      %v5261 = vsel %vm939, %v5251, %v5260
      %5264 = vst [vmem:[#allocation3 + $0xa0] sm:$0xff] %v5259
      %5265 = vst [vmem:[#allocation3 + $0xa8] sm:$0xff] %v5261
      %v5266 = vld [vmem:[#allocation2 + $0x18] sm:$0xff]
      %v5267 = vld [vmem:[#allocation2 + $0x20] sm:$0xf]
      %v5268 = vld [vmem:[#allocation2 + $0x24] sm:$0xff]
      %v5269 = vld [vmem:[#allocation2 + $0x2c] sm:$0xf]
      %v5270 = vsel %vm968, %v5266, 0
      %v5271 = vsel %vm975, %v5267, 0
      %v5272 = vsel %vm968, %v5268, 0
      %v5273 = vsel %vm975, %v5269, 0
      %5278 = vrot.lane.b32.xlu0 %v5270, 126
      %v5279 = vpop.permute.xlu0 %5278
      %5280 = vrot.lane.b32.xlu0 %v5271, 126
      %v5281 = vpop.permute.xlu0 %5280
      %5282 = vrot.lane.b32.xlu0 %v5272, 126
      %v5283 = vpop.permute.xlu0 %5282
      %5284 = vrot.lane.b32.xlu0 %v5273, 126
      %v5285 = vpop.permute.xlu0 %5284
      %v5286 = vrot.slane %v5279, 4
      %v5287 = vrot.slane %v5281, 4
      %v5288 = vrot.slane %v5283, 4
      %v5289 = vrot.slane %v5285, 4
      %v5290 = vsel %vm937, %v5286, %v5287
      %v5291 = vsel %vm997, %v5279, %v5290
      %v5292 = vsel %vm937, %v5288, %v5289
      %v5293 = vsel %vm997, %v5283, %v5292
      %5296 = vst [vmem:[#allocation3 + $0xb0] sm:$0xff] %v5291
      %5297 = vst [vmem:[#allocation3 + $0xb8] sm:$0xff] %v5293
      %v5298 = vld [vmem:[#allocation2 + $0x18] sm:$0xff]
      %v5299 = vld [vmem:[#allocation2 + $0x20] sm:$0xf]
      %v5300 = vld [vmem:[#allocation2 + $0x24] sm:$0xff]
      %v5301 = vld [vmem:[#allocation2 + $0x2c] sm:$0xf]
      %v5302 = vsel %vm1021, %v5298, 0
      %v5303 = vsel %vm1028, %v5299, 0
      %v5304 = vsel %vm1021, %v5300, 0
      %v5305 = vsel %vm1028, %v5301, 0
      %5310 = vrot.lane.b32.xlu0 %v5302, 112
      %v5311 = vpop.permute.xlu0 %5310
      %5312 = vrot.lane.b32.xlu0 %v5303, 112
      %v5313 = vpop.permute.xlu0 %5312
      %5314 = vrot.lane.b32.xlu0 %v5304, 112
      %v5315 = vpop.permute.xlu0 %5314
      %5316 = vrot.lane.b32.xlu0 %v5305, 112
      %v5317 = vpop.permute.xlu0 %5316
      %v5318 = vrot.slane %v5311, 4
      %v5319 = vrot.slane %v5313, 4
      %v5320 = vrot.slane %v5315, 4
      %v5321 = vrot.slane %v5317, 4
      %v5322 = vsel %vm937, %v5318, %v5319
      %v5323 = vsel %vm1050, %v5311, %v5322
      %v5324 = vsel %vm937, %v5320, %v5321
      %v5325 = vsel %vm1050, %v5315, %v5324
      %5328 = vst [vmem:[#allocation3 + $0xc0] sm:$0xff] %v5323
      %5329 = vst [vmem:[#allocation3 + $0xc8] sm:$0xff] %v5325
      %v5330 = vld [vmem:[#allocation2 + $0x18] sm:$0xff]
      %v5331 = vld [vmem:[#allocation2 + $0x20] sm:$0xf]
      %v5332 = vld [vmem:[#allocation2 + $0x24] sm:$0xff]
      %v5333 = vld [vmem:[#allocation2 + $0x2c] sm:$0xf]
      %5338 = vrot.lane.b32.xlu0 %v5330, 111
      %v5339 = vpop.permute.xlu0 %5338
      %5340 = vrot.lane.b32.xlu0 %v5331, 111
      %v5341 = vpop.permute.xlu0 %5340
      %5342 = vrot.lane.b32.xlu0 %v5332, 111
      %v5343 = vpop.permute.xlu0 %5342
      %5344 = vrot.lane.b32.xlu0 %v5333, 111
      %v5345 = vpop.permute.xlu0 %5344
      %v5346 = vrot.slane %v5339, 4
      %v5347 = vrot.slane %v5341, 4
      %v5348 = vrot.slane %v5343, 4
      %v5349 = vrot.slane %v5345, 4
      %v5350 = vsel %vm937, %v5346, %v5347
      %v5351 = vsel %vm1079, %v5339, %v5350
      %v5352 = vsel %vm937, %v5348, %v5349
      %v5353 = vsel %vm1079, %v5343, %v5352
      %5356 = vst [vmem:[#allocation3 + $0xd0] sm:$0xff] %v5351
      %5357 = vst [vmem:[#allocation3 + $0xd8] sm:$0xff] %v5353
      %v5358 = vld [vmem:[#allocation2 + $0x18] sm:$0xff]
      %v5359 = vld [vmem:[#allocation2 + $0x20] sm:$0xf]
      %v5360 = vld [vmem:[#allocation2 + $0x24] sm:$0xff]
      %v5361 = vld [vmem:[#allocation2 + $0x2c] sm:$0xf]
      %v5362 = vsel %vm1102, %v5358, 0
      %v5363 = vsel %vm1109, %v5359, 0
      %v5364 = vsel %vm1102, %v5360, 0
      %v5365 = vsel %vm1109, %v5361, 0
      %5370 = vrot.lane.b32.xlu0 %v5362, 110
      %v5371 = vpop.permute.xlu0 %5370
      %5372 = vrot.lane.b32.xlu0 %v5363, 110
      %v5373 = vpop.permute.xlu0 %5372
      %5374 = vrot.lane.b32.xlu0 %v5364, 110
      %v5375 = vpop.permute.xlu0 %5374
      %5376 = vrot.lane.b32.xlu0 %v5365, 110
      %v5377 = vpop.permute.xlu0 %5376
      %v5378 = vrot.slane %v5371, 4
      %v5379 = vrot.slane %v5373, 4
      %v5380 = vrot.slane %v5375, 4
      %v5381 = vrot.slane %v5377, 4
      %v5382 = vsel %vm937, %v5378, %v5379
      %v5383 = vsel %vm1131, %v5371, %v5382
      %v5384 = vsel %vm937, %v5380, %v5381
      %v5385 = vsel %vm1131, %v5375, %v5384
      %5388 = vst [vmem:[#allocation3 + $0xe0] sm:$0xff] %v5383
      %5389 = vst [vmem:[#allocation3 + $0xe8] sm:$0xff] %v5385
      %v5390 = vld [vmem:[#allocation2 + $0x18] sm:$0xff]
      %v5391 = vld [vmem:[#allocation2 + $0x20] sm:$0xf]
      %v5392 = vld [vmem:[#allocation2 + $0x24] sm:$0xff]
      %v5393 = vld [vmem:[#allocation2 + $0x2c] sm:$0xf]
      %v5394 = vsel %vm1154, %v5390, 0
      %v5395 = vsel %vm1161, %v5391, 0
      %v5396 = vsel %vm1154, %v5392, 0
      %v5397 = vsel %vm1161, %v5393, 0
      %5402 = vrot.lane.b32.xlu0 %v5394, 96
      %v5403 = vpop.permute.xlu0 %5402
      %5404 = vrot.lane.b32.xlu0 %v5395, 96
      %v5405 = vpop.permute.xlu0 %5404
      %5406 = vrot.lane.b32.xlu0 %v5396, 96
      %v5407 = vpop.permute.xlu0 %5406
      %5408 = vrot.lane.b32.xlu0 %v5397, 96
      %v5409 = vpop.permute.xlu0 %5408
      %v5410 = vrot.slane %v5403, 4
      %v5411 = vrot.slane %v5405, 4
      %v5412 = vrot.slane %v5407, 4
      %v5413 = vrot.slane %v5409, 4
      %v5414 = vsel %vm937, %v5410, %v5411
      %v5415 = vsel %vm1183, %v5403, %v5414
      %v5416 = vsel %vm937, %v5412, %v5413
      %v5417 = vsel %vm1183, %v5407, %v5416
      %5420 = vst [vmem:[#allocation3 + $0xf0] sm:$0xff] %v5415
      %5421 = vst [vmem:[#allocation3 + $0xf8] sm:$0xff] %v5417
      %v5422 = vld [vmem:[#allocation2 + $0x18] sm:$0xff]
      %v5423 = vld [vmem:[#allocation2 + $0x20] sm:$0xf]
      %v5424 = vld [vmem:[#allocation2 + $0x24] sm:$0xff]
      %v5425 = vld [vmem:[#allocation2 + $0x2c] sm:$0xf]
      %5430 = vrot.lane.b32.xlu0 %v5422, 95
      %v5431 = vpop.permute.xlu0 %5430
      %5432 = vrot.lane.b32.xlu0 %v5423, 95
      %v5433 = vpop.permute.xlu0 %5432
      %5434 = vrot.lane.b32.xlu0 %v5424, 95
      %v5435 = vpop.permute.xlu0 %5434
      %5436 = vrot.lane.b32.xlu0 %v5425, 95
      %v5437 = vpop.permute.xlu0 %5436
      %v5438 = vrot.slane %v5431, 4
      %v5439 = vrot.slane %v5433, 4
      %v5440 = vrot.slane %v5435, 4
      %v5441 = vrot.slane %v5437, 4
      %v5442 = vsel %vm937, %v5438, %v5439
      %v5443 = vsel %vm1212, %v5431, %v5442
      %v5444 = vsel %vm937, %v5440, %v5441
      %v5445 = vsel %vm1212, %v5435, %v5444
      %5448 = vst [vmem:[#allocation3 + $0x100] sm:$0xff] %v5443
      %5449 = vst [vmem:[#allocation3 + $0x108] sm:$0xff] %v5445
      %v5450 = vld [vmem:[#allocation2 + $0x18] sm:$0xff]
      %v5451 = vld [vmem:[#allocation2 + $0x20] sm:$0xf]
      %v5452 = vld [vmem:[#allocation2 + $0x24] sm:$0xff]
      %v5453 = vld [vmem:[#allocation2 + $0x2c] sm:$0xf]
      %v5454 = vsel %vm1235, %v5450, 0
      %v5455 = vsel %vm1242, %v5451, 0
      %v5456 = vsel %vm1235, %v5452, 0
      %v5457 = vsel %vm1242, %v5453, 0
      %5462 = vrot.lane.b32.xlu0 %v5454, 94
      %v5463 = vpop.permute.xlu0 %5462
      %5464 = vrot.lane.b32.xlu0 %v5455, 94
      %v5465 = vpop.permute.xlu0 %5464
      %5466 = vrot.lane.b32.xlu0 %v5456, 94
      %v5467 = vpop.permute.xlu0 %5466
      %5468 = vrot.lane.b32.xlu0 %v5457, 94
      %v5469 = vpop.permute.xlu0 %5468
      %v5470 = vrot.slane %v5463, 4
      %v5471 = vrot.slane %v5465, 4
      %v5472 = vrot.slane %v5467, 4
      %v5473 = vrot.slane %v5469, 4
      %v5474 = vsel %vm937, %v5470, %v5471
      %v5475 = vsel %vm1264, %v5463, %v5474
      %v5476 = vsel %vm937, %v5472, %v5473
      %v5477 = vsel %vm1264, %v5467, %v5476
      %5480 = vst [vmem:[#allocation3 + $0x110] sm:$0xff] %v5475
      %5481 = vst [vmem:[#allocation3 + $0x118] sm:$0xff] %v5477
      %v5482 = vld [vmem:[%s15] sm:$0xff]
      %v5483 = vld [vmem:[%s15 + $0x8] sm:$0xf]
      %v5484 = vld [vmem:[%s15 + $0xc] sm:$0xff]
      %v5485 = vld [vmem:[%s15 + $0x14] sm:$0xf]
      %v5486 = vld [vmem:[#allocation3] sm:$0xff]
      %v5487 = vld [vmem:[#allocation3 + $0x8] sm:$0xff]
      %v5488 = vld [vmem:[#allocation3 + $0x10] sm:$0xff]
      %v5489 = vld [vmem:[#allocation3 + $0x18] sm:$0xff]
      %v5490 = vld [vmem:[#allocation3 + $0x20] sm:$0xff]
      %v5491 = vld [vmem:[#allocation3 + $0x28] sm:$0xff]
      %v5492 = vld [vmem:[#allocation3 + $0x30] sm:$0xff]
      %v5493 = vld [vmem:[#allocation3 + $0x38] sm:$0xff]
      %v5494 = vld [vmem:[#allocation3 + $0x40] sm:$0xff]
      %v5495 = vld [vmem:[#allocation3 + $0x48] sm:$0xff]
      %v5496 = vld [vmem:[#allocation3 + $0x50] sm:$0xff]
      %v5497 = vld [vmem:[#allocation3 + $0x58] sm:$0xff]
      %v5498 = vld [vmem:[#allocation3 + $0x60] sm:$0xff]
      %v5499 = vld [vmem:[#allocation3 + $0x68] sm:$0xff]
      %v5500 = vld [vmem:[#allocation3 + $0x70] sm:$0xff]
      %v5501 = vld [vmem:[#allocation3 + $0x78] sm:$0xff]
      %v5502 = vld [vmem:[#allocation3 + $0x80] sm:$0xff]
      %v5503 = vld [vmem:[#allocation3 + $0x88] sm:$0xff]
      %v5504 = vld [vmem:[#allocation3 + $0x90] sm:$0xff]
      %v5505 = vld [vmem:[#allocation3 + $0x98] sm:$0xff]
      %v5506 = vld [vmem:[#allocation3 + $0xa0] sm:$0xff]
      %v5507 = vld [vmem:[#allocation3 + $0xa8] sm:$0xff]
      %v5508 = vld [vmem:[#allocation3 + $0xb0] sm:$0xff]
      %v5509 = vld [vmem:[#allocation3 + $0xb8] sm:$0xff]
      %v5510 = vld [vmem:[#allocation3 + $0xc0] sm:$0xff]
      %v5511 = vld [vmem:[#allocation3 + $0xc8] sm:$0xff]
      %v5512 = vld [vmem:[#allocation3 + $0xd0] sm:$0xff]
      %v5513 = vld [vmem:[#allocation3 + $0xd8] sm:$0xff]
      %v5514 = vld [vmem:[#allocation3 + $0xe0] sm:$0xff]
      %v5515 = vld [vmem:[#allocation3 + $0xe8] sm:$0xff]
      %v5516 = vld [vmem:[#allocation3 + $0xf0] sm:$0xff]
      %v5517 = vld [vmem:[#allocation3 + $0xf8] sm:$0xff]
      %v5518 = vld [vmem:[#allocation3 + $0x100] sm:$0xff]
      %v5519 = vld [vmem:[#allocation3 + $0x108] sm:$0xff]
      %v5520 = vld [vmem:[#allocation3 + $0x110] sm:$0xff]
      %v5521 = vld [vmem:[#allocation3 + $0x118] sm:$0xff]
      %v5522 = vld [vmem:[%s16] sm:$0xff]
      %v5523 = vld [vmem:[%s16 + $0x8] sm:$0xff]
      %5525 = vset.pattern.permute.xlu0 0
      %5526 = vperm.xlu0 %5525, %v5522
      %v5527 = vpop.permute.xlu0 %5526
      %5530 = vset.pattern.permute.xlu0 0
      %5531 = vperm.xlu0 %5530, %v5523
      %v5532 = vpop.permute.xlu0 %5531
      %v5538 = vunpack.c.l.b16 %v5482
      %v5539 = vunpack.c.h.b16 %v5482
      %v5540 = vunpack.c.l.b16 %v5483
      %v5541 = vunpack.c.l.b16 %v5484
      %v5542 = vunpack.c.h.b16 %v5484
      %v5543 = vunpack.c.l.b16 %v5485
      %v5544 = vpack.c.b16 %v5541, %v5538
      %v5545 = vpack.c.b16 %v5542, %v5539
      %v5546 = vpack.c.b16 %v5543, %v5540
      %v5585 = vunpack.c.l.b16 %v5486
      %v5586 = vunpack.c.h.b16 %v5486
      %v5587 = vunpack.c.l.b16 %v5487
      %v5588 = vunpack.c.h.b16 %v5487
      %v5589 = vunpack.c.l.b16 %v5488
      %v5590 = vunpack.c.h.b16 %v5488
      %v5591 = vunpack.c.l.b16 %v5489
      %v5592 = vunpack.c.h.b16 %v5489
      %v5593 = vunpack.c.l.b16 %v5490
      %v5594 = vunpack.c.h.b16 %v5490
      %v5595 = vunpack.c.l.b16 %v5491
      %v5596 = vunpack.c.h.b16 %v5491
      %v5597 = vunpack.c.l.b16 %v5492
      %v5598 = vunpack.c.h.b16 %v5492
      %v5599 = vunpack.c.l.b16 %v5493
      %v5600 = vunpack.c.h.b16 %v5493
      %v5601 = vunpack.c.l.b16 %v5494
      %v5602 = vunpack.c.h.b16 %v5494
      %v5603 = vunpack.c.l.b16 %v5495
      %v5604 = vunpack.c.h.b16 %v5495
      %v5605 = vunpack.c.l.b16 %v5496
      %v5606 = vunpack.c.h.b16 %v5496
      %v5607 = vunpack.c.l.b16 %v5497
      %v5608 = vunpack.c.h.b16 %v5497
      %v5609 = vunpack.c.l.b16 %v5498
      %v5610 = vunpack.c.h.b16 %v5498
      %v5611 = vunpack.c.l.b16 %v5499
      %v5612 = vunpack.c.h.b16 %v5499
      %v5613 = vunpack.c.l.b16 %v5500
      %v5614 = vunpack.c.h.b16 %v5500
      %v5615 = vunpack.c.l.b16 %v5501
      %v5616 = vunpack.c.h.b16 %v5501
      %v5617 = vunpack.c.l.b16 %v5502
      %v5618 = vunpack.c.h.b16 %v5502
      %v5619 = vunpack.c.l.b16 %v5503
      %v5620 = vunpack.c.h.b16 %v5503
      %v5621 = vunpack.c.l.b16 %v5504
      %v5622 = vunpack.c.h.b16 %v5504
      %v5623 = vunpack.c.l.b16 %v5505
      %v5624 = vunpack.c.h.b16 %v5505
      %v5625 = vunpack.c.l.b16 %v5506
      %v5626 = vunpack.c.h.b16 %v5506
      %v5627 = vunpack.c.l.b16 %v5507
      %v5628 = vunpack.c.h.b16 %v5507
      %v5629 = vunpack.c.l.b16 %v5508
      %v5630 = vunpack.c.h.b16 %v5508
      %v5631 = vunpack.c.l.b16 %v5509
      %v5632 = vunpack.c.h.b16 %v5509
      %v5633 = vunpack.c.l.b16 %v5510
      %v5634 = vunpack.c.h.b16 %v5510
      %v5635 = vunpack.c.l.b16 %v5511
      %v5636 = vunpack.c.h.b16 %v5511
      %v5637 = vunpack.c.l.b16 %v5512
      %v5638 = vunpack.c.h.b16 %v5512
      %v5639 = vunpack.c.l.b16 %v5513
      %v5640 = vunpack.c.h.b16 %v5513
      %v5641 = vunpack.c.l.b16 %v5514
      %v5642 = vunpack.c.h.b16 %v5514
      %v5643 = vunpack.c.l.b16 %v5515
      %v5644 = vunpack.c.h.b16 %v5515
      %v5645 = vunpack.c.l.b16 %v5516
      %v5646 = vunpack.c.h.b16 %v5516
      %v5647 = vunpack.c.l.b16 %v5517
      %v5648 = vunpack.c.h.b16 %v5517
      %v5649 = vunpack.c.l.b16 %v5518
      %v5650 = vunpack.c.h.b16 %v5518
      %v5651 = vunpack.c.l.b16 %v5519
      %v5652 = vunpack.c.h.b16 %v5519
      %v5653 = vunpack.c.l.b16 %v5520
      %v5654 = vunpack.c.h.b16 %v5520
      %v5655 = vunpack.c.l.b16 %v5521
      %v5656 = vunpack.c.h.b16 %v5521
      %v5657 = vpack.c.b16 %v5587, %v5585
      %v5658 = vpack.c.b16 %v5588, %v5586
      %v5659 = vpack.c.b16 %v5591, %v5589
      %v5660 = vpack.c.b16 %v5592, %v5590
      %v5661 = vpack.c.b16 %v5595, %v5593
      %v5662 = vpack.c.b16 %v5596, %v5594
      %v5663 = vpack.c.b16 %v5599, %v5597
      %v5664 = vpack.c.b16 %v5600, %v5598
      %v5665 = vpack.c.b16 %v5603, %v5601
      %v5666 = vpack.c.b16 %v5604, %v5602
      %v5667 = vpack.c.b16 %v5607, %v5605
      %v5668 = vpack.c.b16 %v5608, %v5606
      %v5669 = vpack.c.b16 %v5611, %v5609
      %v5670 = vpack.c.b16 %v5612, %v5610
      %v5671 = vpack.c.b16 %v5615, %v5613
      %v5672 = vpack.c.b16 %v5616, %v5614
      %v5673 = vpack.c.b16 %v5619, %v5617
      %v5674 = vpack.c.b16 %v5620, %v5618
      %v5675 = vpack.c.b16 %v5623, %v5621
      %v5676 = vpack.c.b16 %v5624, %v5622
      %v5677 = vpack.c.b16 %v5627, %v5625
      %v5678 = vpack.c.b16 %v5628, %v5626
      %v5679 = vpack.c.b16 %v5631, %v5629
      %v5680 = vpack.c.b16 %v5632, %v5630
      %v5681 = vpack.c.b16 %v5635, %v5633
      %v5682 = vpack.c.b16 %v5636, %v5634
      %v5683 = vpack.c.b16 %v5639, %v5637
      %v5684 = vpack.c.b16 %v5640, %v5638
      %v5685 = vpack.c.b16 %v5643, %v5641
      %v5686 = vpack.c.b16 %v5644, %v5642
      %v5687 = vpack.c.b16 %v5647, %v5645
      %v5688 = vpack.c.b16 %v5648, %v5646
      %v5689 = vpack.c.b16 %v5651, %v5649
      %v5690 = vpack.c.b16 %v5652, %v5650
      %v5691 = vpack.c.b16 %v5655, %v5653
      %v5692 = vpack.c.b16 %v5656, %v5654
      %v5730 = vsel %vm2285, %v5546, 0
      %5732 = vmatpush.bf16.msra.mxu0 %v5671
      %5733 = vmatpush.bf16.msra.mxu0 %v5669
      %5734 = vmatpush.bf16.msra.mxu0 %v5667
      %5735 = vmatpush.bf16.msra.mxu0 %v5665
      %5736 = vmatpush.bf16.msra.mxu0 %v5663
      %5737 = vmatpush.bf16.msra.mxu0 %v5661
      %5738 = vmatpush.bf16.msra.mxu0 %v5659
      %5739 = vmatpush.bf16.msra.mxu0 %v5657
      %5740 = vmatmul.bf16.gmra.mxu0 %v5544
      %v5741 = vpop.f32.mrf.mxu0
      %v5742 = vadd.f32 %v5527, %v5741
      %v5743 = vpop.f32.mrf.mxu0
      %v5744 = vadd.f32 %v5532, %v5743
      %5745 = vdwg.mxu0
      %5746 = vmatpush.bf16.msra.mxu0 %v5687
      %5747 = vmatpush.bf16.msra.mxu0 %v5685
      %5748 = vmatpush.bf16.msra.mxu0 %v5683
      %5749 = vmatpush.bf16.msra.mxu0 %v5681
      %5750 = vmatpush.bf16.msra.mxu0 %v5679
      %5751 = vmatpush.bf16.msra.mxu0 %v5677
      %5752 = vmatpush.bf16.msra.mxu0 %v5675
      %5753 = vmatpush.bf16.msra.mxu0 %v5673
      %5754 = vmatmul.bf16.gmra.mxu0 %v5545
      %v5755 = vpop.f32.mrf.mxu0
      %v5756 = vadd.f32 %v5742, %v5755
      %v5757 = vpop.f32.mrf.mxu0
      %v5758 = vadd.f32 %v5744, %v5757
      %5759 = vdwg.mxu0
      %5760 = vmatpush.bf16.msra.mxu0 0
      %5761 = vmatpush.bf16.msra.mxu0 0
      %5762 = vmatpush.bf16.msra.mxu0 0
      %5763 = vmatpush.bf16.msra.mxu0 0
      %5764 = vmatpush.bf16.msra.mxu0 0
      %5765 = vmatpush.bf16.msra.mxu0 0
      %5766 = vmatpush.bf16.msra.mxu0 %v5691
      %5767 = vmatpush.bf16.msra.mxu0 %v5689
      %5768 = vmatmul.bf16.gmra.mxu0 %v5730
      %v5769 = vpop.f32.mrf.mxu0
      %v5770 = vadd.f32 %v5756, %v5769
      %v5771 = vpop.f32.mrf.mxu0
      %v5772 = vadd.f32 %v5758, %v5771
      %5773 = vdwg.mxu0
      %5774 = vmatpush.bf16.msra.mxu0 %v5672
      %5775 = vmatpush.bf16.msra.mxu0 %v5670
      %5776 = vmatpush.bf16.msra.mxu0 %v5668
      %5777 = vmatpush.bf16.msra.mxu0 %v5666
      %5778 = vmatpush.bf16.msra.mxu0 %v5664
      %5779 = vmatpush.bf16.msra.mxu0 %v5662
      %5780 = vmatpush.bf16.msra.mxu0 %v5660
      %5781 = vmatpush.bf16.msra.mxu0 %v5658
      %5782 = vmatmul.bf16.gmra.mxu0 %v5544
      %v5783 = vpop.f32.mrf.mxu0
      %v5784 = vadd.f32 %v5527, %v5783
      %v5785 = vpop.f32.mrf.mxu0
      %v5786 = vadd.f32 %v5532, %v5785
      %5787 = vdwg.mxu0
      %5788 = vmatpush.bf16.msra.mxu0 %v5688
      %5789 = vmatpush.bf16.msra.mxu0 %v5686
      %5790 = vmatpush.bf16.msra.mxu0 %v5684
      %5791 = vmatpush.bf16.msra.mxu0 %v5682
      %5792 = vmatpush.bf16.msra.mxu0 %v5680
      %5793 = vmatpush.bf16.msra.mxu0 %v5678
      %5794 = vmatpush.bf16.msra.mxu0 %v5676
      %5795 = vmatpush.bf16.msra.mxu0 %v5674
      %5796 = vmatmul.bf16.gmra.mxu0 %v5545
      %v5797 = vpop.f32.mrf.mxu0
      %v5798 = vadd.f32 %v5784, %v5797
      %v5799 = vpop.f32.mrf.mxu0
      %v5800 = vadd.f32 %v5786, %v5799
      %5801 = vdwg.mxu0
      %5802 = vmatpush.bf16.msra.mxu0 0
      %5803 = vmatpush.bf16.msra.mxu0 0
      %5804 = vmatpush.bf16.msra.mxu0 0
      %5805 = vmatpush.bf16.msra.mxu0 0
      %5806 = vmatpush.bf16.msra.mxu0 0
      %5807 = vmatpush.bf16.msra.mxu0 0
      %5808 = vmatpush.bf16.msra.mxu0 %v5692
      %5809 = vmatpush.bf16.msra.mxu0 %v5690
      %5810 = vmatmul.bf16.gmra.mxu0 %v5730
      %v5811 = vpop.f32.mrf.mxu0
      %v5812 = vadd.f32 %v5798, %v5811
      %v5813 = vpop.f32.mrf.mxu0
      %v5814 = vadd.f32 %v5800, %v5813
      %5815 = vdwg.mxu0
      %v5816 = vtanh.pop %v5770
      %v5817 = vtanh.pop %v5812
      %v5818 = vtanh.pop %v5772
      %v5819 = vtanh.pop %v5814
      %v5820 = vsub.f32 1.0, %v5102
      %v5821 = vsub.f32 1.0, %v5117
      %v5822 = vsub.f32 1.0, %v5132
      %v5823 = vsub.f32 1.0, %v5147
      %v5824 = vmul.f32 %v880, %v5820
      %v5825 = vmul.f32 %v881, %v5821
      %v5826 = vmul.f32 %v882, %v5822
      %v5827 = vmul.f32 %v883, %v5823
      %v5828 = vmul.f32 %v5816, %v5102
      %v5829 = vmul.f32 %v5817, %v5117
      %v5830 = vmul.f32 %v5818, %v5132
      %v5831 = vmul.f32 %v5819, %v5147
      %v5832 = vadd.f32 %v5824, %v5828
      %v5833 = vadd.f32 %v5825, %v5829
      %v5834 = vadd.f32 %v5826, %v5830
      %v5835 = vadd.f32 %v5827, %v5831
      %v5836 = vpack.c.bf16 %v5833, %v5832
      %v5837 = vpack.c.bf16 %v5835, %v5834
      %5840 = vrot.lane.b32.xlu0 %v5836, 17
      %v5841 = vpop.permute.xlu0 %5840
      %5842 = vrot.lane.b32.xlu0 %v5837, 17
      %v5843 = vpop.permute.xlu0 %5842
      %v5844 = vrot.slane %v5841, 4
      %v5845 = vrot.slane %v5843, 4
      %v5846 = vsel %vm892, %v5844, %v5841
      %v5847 = vsel %vm892, %v5845, %v5843
      %5852 = vst.msk [vmem:[#allocation2] sm:$0xff] %vm901, %v5846
      %5853 = vst.msk [vmem:[#allocation2 + $0x8] sm:$0xf] %vm833, %v5844
      %5854 = vst.msk [vmem:[#allocation2 + $0xc] sm:$0xff] %vm901, %v5847
      %5855 = vst.msk [vmem:[#allocation2 + $0x14] sm:$0xf] %vm833, %v5845
      %v5856 = vld [vmem:[#allocation2] sm:$0xff]
      %v5857 = vld [vmem:[#allocation2 + $0xc] sm:$0xff]
      %v5858 = vsel %vm912, %v5856, 0
      %v5859 = vsel %vm912, %v5857, 0
      %5860 = vst [vmem:[#allocation3] sm:$0xff] %v5858
      %5861 = vst [vmem:[#allocation3 + $0x8] sm:$0xff] %v5859
      %v5862 = vld [vmem:[#allocation2] sm:$0xff]
      %v5863 = vld [vmem:[#allocation2 + $0x8] sm:$0xf]
      %v5864 = vld [vmem:[#allocation2 + $0xc] sm:$0xff]
      %v5865 = vld [vmem:[#allocation2 + $0x14] sm:$0xf]
      %5870 = vrot.lane.b32.xlu0 %v5862, 127
      %v5871 = vpop.permute.xlu0 %5870
      %5872 = vrot.lane.b32.xlu0 %v5863, 127
      %v5873 = vpop.permute.xlu0 %5872
      %5874 = vrot.lane.b32.xlu0 %v5864, 127
      %v5875 = vpop.permute.xlu0 %5874
      %5876 = vrot.lane.b32.xlu0 %v5865, 127
      %v5877 = vpop.permute.xlu0 %5876
      %v5878 = vrot.slane %v5871, 4
      %v5879 = vrot.slane %v5873, 4
      %v5880 = vrot.slane %v5875, 4
      %v5881 = vrot.slane %v5877, 4
      %v5882 = vsel %vm937, %v5878, %v5879
      %v5883 = vsel %vm939, %v5871, %v5882
      %v5884 = vsel %vm937, %v5880, %v5881
      %v5885 = vsel %vm939, %v5875, %v5884
      %5888 = vst [vmem:[#allocation3 + $0x10] sm:$0xff] %v5883
      %5889 = vst [vmem:[#allocation3 + $0x18] sm:$0xff] %v5885
      %v5890 = vld [vmem:[#allocation2] sm:$0xff]
      %v5891 = vld [vmem:[#allocation2 + $0x8] sm:$0xf]
      %v5892 = vld [vmem:[#allocation2 + $0xc] sm:$0xff]
      %v5893 = vld [vmem:[#allocation2 + $0x14] sm:$0xf]
      %v5894 = vsel %vm968, %v5890, 0
      %v5895 = vsel %vm975, %v5891, 0
      %v5896 = vsel %vm968, %v5892, 0
      %v5897 = vsel %vm975, %v5893, 0
      %5902 = vrot.lane.b32.xlu0 %v5894, 126
      %v5903 = vpop.permute.xlu0 %5902
      %5904 = vrot.lane.b32.xlu0 %v5895, 126
      %v5905 = vpop.permute.xlu0 %5904
      %5906 = vrot.lane.b32.xlu0 %v5896, 126
      %v5907 = vpop.permute.xlu0 %5906
      %5908 = vrot.lane.b32.xlu0 %v5897, 126
      %v5909 = vpop.permute.xlu0 %5908
      %v5910 = vrot.slane %v5903, 4
      %v5911 = vrot.slane %v5905, 4
      %v5912 = vrot.slane %v5907, 4
      %v5913 = vrot.slane %v5909, 4
      %v5914 = vsel %vm937, %v5910, %v5911
      %v5915 = vsel %vm997, %v5903, %v5914
      %v5916 = vsel %vm937, %v5912, %v5913
      %v5917 = vsel %vm997, %v5907, %v5916
      %5920 = vst [vmem:[#allocation3 + $0x20] sm:$0xff] %v5915
      %5921 = vst [vmem:[#allocation3 + $0x28] sm:$0xff] %v5917
      %v5922 = vld [vmem:[#allocation2] sm:$0xff]
      %v5923 = vld [vmem:[#allocation2 + $0x8] sm:$0xf]
      %v5924 = vld [vmem:[#allocation2 + $0xc] sm:$0xff]
      %v5925 = vld [vmem:[#allocation2 + $0x14] sm:$0xf]
      %v5926 = vsel %vm1021, %v5922, 0
      %v5927 = vsel %vm1028, %v5923, 0
      %v5928 = vsel %vm1021, %v5924, 0
      %v5929 = vsel %vm1028, %v5925, 0
      %5934 = vrot.lane.b32.xlu0 %v5926, 112
      %v5935 = vpop.permute.xlu0 %5934
      %5936 = vrot.lane.b32.xlu0 %v5927, 112
      %v5937 = vpop.permute.xlu0 %5936
      %5938 = vrot.lane.b32.xlu0 %v5928, 112
      %v5939 = vpop.permute.xlu0 %5938
      %5940 = vrot.lane.b32.xlu0 %v5929, 112
      %v5941 = vpop.permute.xlu0 %5940
      %v5942 = vrot.slane %v5935, 4
      %v5943 = vrot.slane %v5937, 4
      %v5944 = vrot.slane %v5939, 4
      %v5945 = vrot.slane %v5941, 4
      %v5946 = vsel %vm937, %v5942, %v5943
      %v5947 = vsel %vm1050, %v5935, %v5946
      %v5948 = vsel %vm937, %v5944, %v5945
      %v5949 = vsel %vm1050, %v5939, %v5948
      %5952 = vst [vmem:[#allocation3 + $0x30] sm:$0xff] %v5947
      %5953 = vst [vmem:[#allocation3 + $0x38] sm:$0xff] %v5949
      %v5954 = vld [vmem:[#allocation2] sm:$0xff]
      %v5955 = vld [vmem:[#allocation2 + $0x8] sm:$0xf]
      %v5956 = vld [vmem:[#allocation2 + $0xc] sm:$0xff]
      %v5957 = vld [vmem:[#allocation2 + $0x14] sm:$0xf]
      %5962 = vrot.lane.b32.xlu0 %v5954, 111
      %v5963 = vpop.permute.xlu0 %5962
      %5964 = vrot.lane.b32.xlu0 %v5955, 111
      %v5965 = vpop.permute.xlu0 %5964
      %5966 = vrot.lane.b32.xlu0 %v5956, 111
      %v5967 = vpop.permute.xlu0 %5966
      %5968 = vrot.lane.b32.xlu0 %v5957, 111
      %v5969 = vpop.permute.xlu0 %5968
      %v5970 = vrot.slane %v5963, 4
      %v5971 = vrot.slane %v5965, 4
      %v5972 = vrot.slane %v5967, 4
      %v5973 = vrot.slane %v5969, 4
      %v5974 = vsel %vm937, %v5970, %v5971
      %v5975 = vsel %vm1079, %v5963, %v5974
      %v5976 = vsel %vm937, %v5972, %v5973
      %v5977 = vsel %vm1079, %v5967, %v5976
      %5980 = vst [vmem:[#allocation3 + $0x40] sm:$0xff] %v5975
      %5981 = vst [vmem:[#allocation3 + $0x48] sm:$0xff] %v5977
      %v5982 = vld [vmem:[#allocation2] sm:$0xff]
      %v5983 = vld [vmem:[#allocation2 + $0x8] sm:$0xf]
      %v5984 = vld [vmem:[#allocation2 + $0xc] sm:$0xff]
      %v5985 = vld [vmem:[#allocation2 + $0x14] sm:$0xf]
      %v5986 = vsel %vm1102, %v5982, 0
      %v5987 = vsel %vm1109, %v5983, 0
      %v5988 = vsel %vm1102, %v5984, 0
      %v5989 = vsel %vm1109, %v5985, 0
      %5994 = vrot.lane.b32.xlu0 %v5986, 110
      %v5995 = vpop.permute.xlu0 %5994
      %5996 = vrot.lane.b32.xlu0 %v5987, 110
      %v5997 = vpop.permute.xlu0 %5996
      %5998 = vrot.lane.b32.xlu0 %v5988, 110
      %v5999 = vpop.permute.xlu0 %5998
      %6000 = vrot.lane.b32.xlu0 %v5989, 110
      %v6001 = vpop.permute.xlu0 %6000
      %v6002 = vrot.slane %v5995, 4
      %v6003 = vrot.slane %v5997, 4
      %v6004 = vrot.slane %v5999, 4
      %v6005 = vrot.slane %v6001, 4
      %v6006 = vsel %vm937, %v6002, %v6003
      %v6007 = vsel %vm1131, %v5995, %v6006
      %v6008 = vsel %vm937, %v6004, %v6005
      %v6009 = vsel %vm1131, %v5999, %v6008
      %6012 = vst [vmem:[#allocation3 + $0x50] sm:$0xff] %v6007
      %6013 = vst [vmem:[#allocation3 + $0x58] sm:$0xff] %v6009
      %v6014 = vld [vmem:[#allocation2] sm:$0xff]
      %v6015 = vld [vmem:[#allocation2 + $0x8] sm:$0xf]
      %v6016 = vld [vmem:[#allocation2 + $0xc] sm:$0xff]
      %v6017 = vld [vmem:[#allocation2 + $0x14] sm:$0xf]
      %v6018 = vsel %vm1154, %v6014, 0
      %v6019 = vsel %vm1161, %v6015, 0
      %v6020 = vsel %vm1154, %v6016, 0
      %v6021 = vsel %vm1161, %v6017, 0
      %6026 = vrot.lane.b32.xlu0 %v6018, 96
      %v6027 = vpop.permute.xlu0 %6026
      %6028 = vrot.lane.b32.xlu0 %v6019, 96
      %v6029 = vpop.permute.xlu0 %6028
      %6030 = vrot.lane.b32.xlu0 %v6020, 96
      %v6031 = vpop.permute.xlu0 %6030
      %6032 = vrot.lane.b32.xlu0 %v6021, 96
      %v6033 = vpop.permute.xlu0 %6032
      %v6034 = vrot.slane %v6027, 4
      %v6035 = vrot.slane %v6029, 4
      %v6036 = vrot.slane %v6031, 4
      %v6037 = vrot.slane %v6033, 4
      %v6038 = vsel %vm937, %v6034, %v6035
      %v6039 = vsel %vm1183, %v6027, %v6038
      %v6040 = vsel %vm937, %v6036, %v6037
      %v6041 = vsel %vm1183, %v6031, %v6040
      %6044 = vst [vmem:[#allocation3 + $0x60] sm:$0xff] %v6039
      %6045 = vst [vmem:[#allocation3 + $0x68] sm:$0xff] %v6041
      %v6046 = vld [vmem:[#allocation2] sm:$0xff]
      %v6047 = vld [vmem:[#allocation2 + $0x8] sm:$0xf]
      %v6048 = vld [vmem:[#allocation2 + $0xc] sm:$0xff]
      %v6049 = vld [vmem:[#allocation2 + $0x14] sm:$0xf]
      %6054 = vrot.lane.b32.xlu0 %v6046, 95
      %v6055 = vpop.permute.xlu0 %6054
      %6056 = vrot.lane.b32.xlu0 %v6047, 95
      %v6057 = vpop.permute.xlu0 %6056
      %6058 = vrot.lane.b32.xlu0 %v6048, 95
      %v6059 = vpop.permute.xlu0 %6058
      %6060 = vrot.lane.b32.xlu0 %v6049, 95
      %v6061 = vpop.permute.xlu0 %6060
      %v6062 = vrot.slane %v6055, 4
      %v6063 = vrot.slane %v6057, 4
      %v6064 = vrot.slane %v6059, 4
      %v6065 = vrot.slane %v6061, 4
      %v6066 = vsel %vm937, %v6062, %v6063
      %v6067 = vsel %vm1212, %v6055, %v6066
      %v6068 = vsel %vm937, %v6064, %v6065
      %v6069 = vsel %vm1212, %v6059, %v6068
      %6072 = vst [vmem:[#allocation3 + $0x70] sm:$0xff] %v6067
      %6073 = vst [vmem:[#allocation3 + $0x78] sm:$0xff] %v6069
      %v6074 = vld [vmem:[#allocation2] sm:$0xff]
      %v6075 = vld [vmem:[#allocation2 + $0x8] sm:$0xf]
      %v6076 = vld [vmem:[#allocation2 + $0xc] sm:$0xff]
      %v6077 = vld [vmem:[#allocation2 + $0x14] sm:$0xf]
      %v6078 = vsel %vm1235, %v6074, 0
      %v6079 = vsel %vm1242, %v6075, 0
      %v6080 = vsel %vm1235, %v6076, 0
      %v6081 = vsel %vm1242, %v6077, 0
      %6086 = vrot.lane.b32.xlu0 %v6078, 94
      %v6087 = vpop.permute.xlu0 %6086
      %6088 = vrot.lane.b32.xlu0 %v6079, 94
      %v6089 = vpop.permute.xlu0 %6088
      %6090 = vrot.lane.b32.xlu0 %v6080, 94
      %v6091 = vpop.permute.xlu0 %6090
      %6092 = vrot.lane.b32.xlu0 %v6081, 94
      %v6093 = vpop.permute.xlu0 %6092
      %v6094 = vrot.slane %v6087, 4
      %v6095 = vrot.slane %v6089, 4
      %v6096 = vrot.slane %v6091, 4
      %v6097 = vrot.slane %v6093, 4
      %v6098 = vsel %vm937, %v6094, %v6095
      %v6099 = vsel %vm1264, %v6087, %v6098
      %v6100 = vsel %vm937, %v6096, %v6097
      %v6101 = vsel %vm1264, %v6091, %v6100
      %6104 = vst [vmem:[#allocation3 + $0x80] sm:$0xff] %v6099
      %6105 = vst [vmem:[#allocation3 + $0x88] sm:$0xff] %v6101
      %v6106 = vld [vmem:[%s17] sm:$0xff]
      %v6107 = vld [vmem:[%s17 + $0x8] sm:$0xff]
      %v6108 = vld [vmem:[#allocation3] sm:$0xff]
      %v6109 = vld [vmem:[#allocation3 + $0x8] sm:$0xff]
      %v6110 = vld [vmem:[#allocation3 + $0x10] sm:$0xff]
      %v6111 = vld [vmem:[#allocation3 + $0x18] sm:$0xff]
      %v6112 = vld [vmem:[#allocation3 + $0x20] sm:$0xff]
      %v6113 = vld [vmem:[#allocation3 + $0x28] sm:$0xff]
      %v6114 = vld [vmem:[#allocation3 + $0x30] sm:$0xff]
      %v6115 = vld [vmem:[#allocation3 + $0x38] sm:$0xff]
      %v6116 = vld [vmem:[#allocation3 + $0x40] sm:$0xff]
      %v6117 = vld [vmem:[#allocation3 + $0x48] sm:$0xff]
      %v6118 = vld [vmem:[#allocation3 + $0x50] sm:$0xff]
      %v6119 = vld [vmem:[#allocation3 + $0x58] sm:$0xff]
      %v6120 = vld [vmem:[#allocation3 + $0x60] sm:$0xff]
      %v6121 = vld [vmem:[#allocation3 + $0x68] sm:$0xff]
      %v6122 = vld [vmem:[#allocation3 + $0x70] sm:$0xff]
      %v6123 = vld [vmem:[#allocation3 + $0x78] sm:$0xff]
      %v6124 = vld [vmem:[#allocation3 + $0x80] sm:$0xff]
      %v6125 = vld [vmem:[#allocation3 + $0x88] sm:$0xff]
      %v6126 = vld [vmem:[%s18] sm:$0xff]
      %v6127 = vld [vmem:[%s18 + $0x8] sm:$0xff]
      %6129 = vset.pattern.permute.xlu0 0
      %6130 = vperm.xlu0 %6129, %v6126
      %v6131 = vpop.permute.xlu0 %6130
      %6134 = vset.pattern.permute.xlu0 0
      %6135 = vperm.xlu0 %6134, %v6127
      %v6136 = vpop.permute.xlu0 %6135
      %v6140 = vunpack.c.l.b16 %v6106
      %v6141 = vunpack.c.h.b16 %v6106
      %v6142 = vunpack.c.l.b16 %v6107
      %v6143 = vunpack.c.h.b16 %v6107
      %v6144 = vpack.c.b16 %v6142, %v6140
      %v6145 = vpack.c.b16 %v6143, %v6141
      %v6165 = vunpack.c.l.b16 %v6108
      %v6166 = vunpack.c.h.b16 %v6108
      %v6167 = vunpack.c.l.b16 %v6109
      %v6168 = vunpack.c.h.b16 %v6109
      %v6169 = vunpack.c.l.b16 %v6110
      %v6170 = vunpack.c.h.b16 %v6110
      %v6171 = vunpack.c.l.b16 %v6111
      %v6172 = vunpack.c.h.b16 %v6111
      %v6173 = vunpack.c.l.b16 %v6112
      %v6174 = vunpack.c.h.b16 %v6112
      %v6175 = vunpack.c.l.b16 %v6113
      %v6176 = vunpack.c.h.b16 %v6113
      %v6177 = vunpack.c.l.b16 %v6114
      %v6178 = vunpack.c.h.b16 %v6114
      %v6179 = vunpack.c.l.b16 %v6115
      %v6180 = vunpack.c.h.b16 %v6115
      %v6181 = vunpack.c.l.b16 %v6116
      %v6182 = vunpack.c.h.b16 %v6116
      %v6183 = vunpack.c.l.b16 %v6117
      %v6184 = vunpack.c.h.b16 %v6117
      %v6185 = vunpack.c.l.b16 %v6118
      %v6186 = vunpack.c.h.b16 %v6118
      %v6187 = vunpack.c.l.b16 %v6119
      %v6188 = vunpack.c.h.b16 %v6119
      %v6189 = vunpack.c.l.b16 %v6120
      %v6190 = vunpack.c.h.b16 %v6120
      %v6191 = vunpack.c.l.b16 %v6121
      %v6192 = vunpack.c.h.b16 %v6121
      %v6193 = vunpack.c.l.b16 %v6122
      %v6194 = vunpack.c.h.b16 %v6122
      %v6195 = vunpack.c.l.b16 %v6123
      %v6196 = vunpack.c.h.b16 %v6123
      %v6197 = vunpack.c.l.b16 %v6124
      %v6198 = vunpack.c.h.b16 %v6124
      %v6199 = vunpack.c.l.b16 %v6125
      %v6200 = vunpack.c.h.b16 %v6125
      %v6201 = vpack.c.b16 %v6167, %v6165
      %v6202 = vpack.c.b16 %v6168, %v6166
      %v6203 = vpack.c.b16 %v6171, %v6169
      %v6204 = vpack.c.b16 %v6172, %v6170
      %v6205 = vpack.c.b16 %v6175, %v6173
      %v6206 = vpack.c.b16 %v6176, %v6174
      %v6207 = vpack.c.b16 %v6179, %v6177
      %v6208 = vpack.c.b16 %v6180, %v6178
      %v6209 = vpack.c.b16 %v6183, %v6181
      %v6210 = vpack.c.b16 %v6184, %v6182
      %v6211 = vpack.c.b16 %v6187, %v6185
      %v6212 = vpack.c.b16 %v6188, %v6186
      %v6213 = vpack.c.b16 %v6191, %v6189
      %v6214 = vpack.c.b16 %v6192, %v6190
      %v6215 = vpack.c.b16 %v6195, %v6193
      %v6216 = vpack.c.b16 %v6196, %v6194
      %v6217 = vpack.c.b16 %v6199, %v6197
      %v6218 = vpack.c.b16 %v6200, %v6198
      %v6238 = vsel %vm1403, %v6145, 0
      %6240 = vmatpush.bf16.msra.mxu0 %v6215
      %6241 = vmatpush.bf16.msra.mxu0 %v6213
      %6242 = vmatpush.bf16.msra.mxu0 %v6211
      %6243 = vmatpush.bf16.msra.mxu0 %v6209
      %6244 = vmatpush.bf16.msra.mxu0 %v6207
      %6245 = vmatpush.bf16.msra.mxu0 %v6205
      %6246 = vmatpush.bf16.msra.mxu0 %v6203
      %6247 = vmatpush.bf16.msra.mxu0 %v6201
      %6248 = vmatmul.bf16.gmra.mxu0 %v6144
      %v6249 = vpop.f32.mrf.mxu0
      %v6250 = vadd.f32 %v6131, %v6249
      %v6251 = vpop.f32.mrf.mxu0
      %v6252 = vadd.f32 %v6136, %v6251
      %6253 = vdwg.mxu0
      %6254 = vmatpush.bf16.msra.mxu0 0
      %6255 = vmatpush.bf16.msra.mxu0 0
      %6256 = vmatpush.bf16.msra.mxu0 0
      %6257 = vmatpush.bf16.msra.mxu0 0
      %6258 = vmatpush.bf16.msra.mxu0 0
      %6259 = vmatpush.bf16.msra.mxu0 0
      %6260 = vmatpush.bf16.msra.mxu0 0
      %6261 = vmatpush.bf16.msra.mxu0 %v6217
      %6262 = vmatmul.bf16.gmra.mxu0 %v6238
      %v6263 = vpop.f32.mrf.mxu0
      %v6264 = vadd.f32 %v6250, %v6263
      %v6265 = vpop.f32.mrf.mxu0
      %v6266 = vadd.f32 %v6252, %v6265
      %6267 = vdwg.mxu0
      %6268 = vmatpush.bf16.msra.mxu0 %v6216
      %6269 = vmatpush.bf16.msra.mxu0 %v6214
      %6270 = vmatpush.bf16.msra.mxu0 %v6212
      %6271 = vmatpush.bf16.msra.mxu0 %v6210
      %6272 = vmatpush.bf16.msra.mxu0 %v6208
      %6273 = vmatpush.bf16.msra.mxu0 %v6206
      %6274 = vmatpush.bf16.msra.mxu0 %v6204
      %6275 = vmatpush.bf16.msra.mxu0 %v6202
      %6276 = vmatmul.bf16.gmra.mxu0 %v6144
      %v6277 = vpop.f32.mrf.mxu0
      %v6278 = vadd.f32 %v6131, %v6277
      %v6279 = vpop.f32.mrf.mxu0
      %v6280 = vadd.f32 %v6136, %v6279
      %6281 = vdwg.mxu0
      %6282 = vmatpush.bf16.msra.mxu0 0
      %6283 = vmatpush.bf16.msra.mxu0 0
      %6284 = vmatpush.bf16.msra.mxu0 0
      %6285 = vmatpush.bf16.msra.mxu0 0
      %6286 = vmatpush.bf16.msra.mxu0 0
      %6287 = vmatpush.bf16.msra.mxu0 0
      %6288 = vmatpush.bf16.msra.mxu0 0
      %6289 = vmatpush.bf16.msra.mxu0 %v6218
      %6290 = vmatmul.bf16.gmra.mxu0 %v6238
      %v6291 = vpop.f32.mrf.mxu0
      %v6292 = vadd.f32 %v6278, %v6291
      %v6293 = vpop.f32.mrf.mxu0
      %v6294 = vadd.f32 %v6280, %v6293
      %6295 = vdwg.mxu0
      %v6296 = vmax.f32 %v6264, 0.0
      %v6297 = vmax.f32 %v6292, 0.0
      %v6298 = vmax.f32 %v6266, 0.0
      %v6299 = vmax.f32 %v6294, 0.0
      %v6300 = vpack.c.bf16 %v6297, %v6296
      %v6301 = vpack.c.bf16 %v6299, %v6298
      %6304 = vrot.lane.b32.xlu0 %v6300, 17
      %v6305 = vpop.permute.xlu0 %6304
      %6306 = vrot.lane.b32.xlu0 %v6301, 17
      %v6307 = vpop.permute.xlu0 %6306
      %v6308 = vrot.slane %v6305, 4
      %v6309 = vrot.slane %v6307, 4
      %v6310 = vsel %vm892, %v6308, %v6305
      %v6311 = vsel %vm892, %v6309, %v6307
      %6316 = vst.msk [vmem:[#allocation2] sm:$0xff] %vm901, %v6310
      %6317 = vst.msk [vmem:[#allocation2 + $0x8] sm:$0xf] %vm833, %v6308
      %6318 = vst.msk [vmem:[#allocation2 + $0xc] sm:$0xff] %vm901, %v6311
      %6319 = vst.msk [vmem:[#allocation2 + $0x14] sm:$0xf] %vm833, %v6309
      %v6320 = vld [vmem:[#allocation2] sm:$0xff]
      %v6321 = vld [vmem:[#allocation2 + $0xc] sm:$0xff]
      %v6322 = vsel %vm912, %v6320, 0
      %v6323 = vsel %vm912, %v6321, 0
      %6324 = vst [vmem:[#allocation3] sm:$0xff] %v6322
      %6325 = vst [vmem:[#allocation3 + $0x8] sm:$0xff] %v6323
      %v6326 = vld [vmem:[#allocation2] sm:$0xff]
      %v6327 = vld [vmem:[#allocation2 + $0x8] sm:$0xf]
      %v6328 = vld [vmem:[#allocation2 + $0xc] sm:$0xff]
      %v6329 = vld [vmem:[#allocation2 + $0x14] sm:$0xf]
      %6334 = vrot.lane.b32.xlu0 %v6326, 127
      %v6335 = vpop.permute.xlu0 %6334
      %6336 = vrot.lane.b32.xlu0 %v6327, 127
      %v6337 = vpop.permute.xlu0 %6336
      %6338 = vrot.lane.b32.xlu0 %v6328, 127
      %v6339 = vpop.permute.xlu0 %6338
      %6340 = vrot.lane.b32.xlu0 %v6329, 127
      %v6341 = vpop.permute.xlu0 %6340
      %v6342 = vrot.slane %v6335, 4
      %v6343 = vrot.slane %v6337, 4
      %v6344 = vrot.slane %v6339, 4
      %v6345 = vrot.slane %v6341, 4
      %v6346 = vsel %vm937, %v6342, %v6343
      %v6347 = vsel %vm939, %v6335, %v6346
      %v6348 = vsel %vm937, %v6344, %v6345
      %v6349 = vsel %vm939, %v6339, %v6348
      %6352 = vst [vmem:[#allocation3 + $0x10] sm:$0xff] %v6347
      %6353 = vst [vmem:[#allocation3 + $0x18] sm:$0xff] %v6349
      %v6354 = vld [vmem:[#allocation2] sm:$0xff]
      %v6355 = vld [vmem:[#allocation2 + $0x8] sm:$0xf]
      %v6356 = vld [vmem:[#allocation2 + $0xc] sm:$0xff]
      %v6357 = vld [vmem:[#allocation2 + $0x14] sm:$0xf]
      %v6358 = vsel %vm968, %v6354, 0
      %v6359 = vsel %vm975, %v6355, 0
      %v6360 = vsel %vm968, %v6356, 0
      %v6361 = vsel %vm975, %v6357, 0
      %6366 = vrot.lane.b32.xlu0 %v6358, 126
      %v6367 = vpop.permute.xlu0 %6366
      %6368 = vrot.lane.b32.xlu0 %v6359, 126
      %v6369 = vpop.permute.xlu0 %6368
      %6370 = vrot.lane.b32.xlu0 %v6360, 126
      %v6371 = vpop.permute.xlu0 %6370
      %6372 = vrot.lane.b32.xlu0 %v6361, 126
      %v6373 = vpop.permute.xlu0 %6372
      %v6374 = vrot.slane %v6367, 4
      %v6375 = vrot.slane %v6369, 4
      %v6376 = vrot.slane %v6371, 4
      %v6377 = vrot.slane %v6373, 4
      %v6378 = vsel %vm937, %v6374, %v6375
      %v6379 = vsel %vm997, %v6367, %v6378
      %v6380 = vsel %vm937, %v6376, %v6377
      %v6381 = vsel %vm997, %v6371, %v6380
      %6384 = vst [vmem:[#allocation3 + $0x20] sm:$0xff] %v6379
      %6385 = vst [vmem:[#allocation3 + $0x28] sm:$0xff] %v6381
      %v6386 = vld [vmem:[#allocation2] sm:$0xff]
      %v6387 = vld [vmem:[#allocation2 + $0x8] sm:$0xf]
      %v6388 = vld [vmem:[#allocation2 + $0xc] sm:$0xff]
      %v6389 = vld [vmem:[#allocation2 + $0x14] sm:$0xf]
      %v6390 = vsel %vm1021, %v6386, 0
      %v6391 = vsel %vm1028, %v6387, 0
      %v6392 = vsel %vm1021, %v6388, 0
      %v6393 = vsel %vm1028, %v6389, 0
      %6398 = vrot.lane.b32.xlu0 %v6390, 112
      %v6399 = vpop.permute.xlu0 %6398
      %6400 = vrot.lane.b32.xlu0 %v6391, 112
      %v6401 = vpop.permute.xlu0 %6400
      %6402 = vrot.lane.b32.xlu0 %v6392, 112
      %v6403 = vpop.permute.xlu0 %6402
      %6404 = vrot.lane.b32.xlu0 %v6393, 112
      %v6405 = vpop.permute.xlu0 %6404
      %v6406 = vrot.slane %v6399, 4
      %v6407 = vrot.slane %v6401, 4
      %v6408 = vrot.slane %v6403, 4
      %v6409 = vrot.slane %v6405, 4
      %v6410 = vsel %vm937, %v6406, %v6407
      %v6411 = vsel %vm1050, %v6399, %v6410
      %v6412 = vsel %vm937, %v6408, %v6409
      %v6413 = vsel %vm1050, %v6403, %v6412
      %6416 = vst [vmem:[#allocation3 + $0x30] sm:$0xff] %v6411
      %6417 = vst [vmem:[#allocation3 + $0x38] sm:$0xff] %v6413
      %v6418 = vld [vmem:[#allocation2] sm:$0xff]
      %v6419 = vld [vmem:[#allocation2 + $0x8] sm:$0xf]
      %v6420 = vld [vmem:[#allocation2 + $0xc] sm:$0xff]
      %v6421 = vld [vmem:[#allocation2 + $0x14] sm:$0xf]
      %6426 = vrot.lane.b32.xlu0 %v6418, 111
      %v6427 = vpop.permute.xlu0 %6426
      %6428 = vrot.lane.b32.xlu0 %v6419, 111
      %v6429 = vpop.permute.xlu0 %6428
      %6430 = vrot.lane.b32.xlu0 %v6420, 111
      %v6431 = vpop.permute.xlu0 %6430
      %6432 = vrot.lane.b32.xlu0 %v6421, 111
      %v6433 = vpop.permute.xlu0 %6432
      %v6434 = vrot.slane %v6427, 4
      %v6435 = vrot.slane %v6429, 4
      %v6436 = vrot.slane %v6431, 4
      %v6437 = vrot.slane %v6433, 4
      %v6438 = vsel %vm937, %v6434, %v6435
      %v6439 = vsel %vm1079, %v6427, %v6438
      %v6440 = vsel %vm937, %v6436, %v6437
      %v6441 = vsel %vm1079, %v6431, %v6440
      %6444 = vst [vmem:[#allocation3 + $0x40] sm:$0xff] %v6439
      %6445 = vst [vmem:[#allocation3 + $0x48] sm:$0xff] %v6441
      %v6446 = vld [vmem:[#allocation2] sm:$0xff]
      %v6447 = vld [vmem:[#allocation2 + $0x8] sm:$0xf]
      %v6448 = vld [vmem:[#allocation2 + $0xc] sm:$0xff]
      %v6449 = vld [vmem:[#allocation2 + $0x14] sm:$0xf]
      %v6450 = vsel %vm1102, %v6446, 0
      %v6451 = vsel %vm1109, %v6447, 0
      %v6452 = vsel %vm1102, %v6448, 0
      %v6453 = vsel %vm1109, %v6449, 0
      %6458 = vrot.lane.b32.xlu0 %v6450, 110
      %v6459 = vpop.permute.xlu0 %6458
      %6460 = vrot.lane.b32.xlu0 %v6451, 110
      %v6461 = vpop.permute.xlu0 %6460
      %6462 = vrot.lane.b32.xlu0 %v6452, 110
      %v6463 = vpop.permute.xlu0 %6462
      %6464 = vrot.lane.b32.xlu0 %v6453, 110
      %v6465 = vpop.permute.xlu0 %6464
      %v6466 = vrot.slane %v6459, 4
      %v6467 = vrot.slane %v6461, 4
      %v6468 = vrot.slane %v6463, 4
      %v6469 = vrot.slane %v6465, 4
      %v6470 = vsel %vm937, %v6466, %v6467
      %v6471 = vsel %vm1131, %v6459, %v6470
      %v6472 = vsel %vm937, %v6468, %v6469
      %v6473 = vsel %vm1131, %v6463, %v6472
      %6476 = vst [vmem:[#allocation3 + $0x50] sm:$0xff] %v6471
      %6477 = vst [vmem:[#allocation3 + $0x58] sm:$0xff] %v6473
      %v6478 = vld [vmem:[#allocation2] sm:$0xff]
      %v6479 = vld [vmem:[#allocation2 + $0x8] sm:$0xf]
      %v6480 = vld [vmem:[#allocation2 + $0xc] sm:$0xff]
      %v6481 = vld [vmem:[#allocation2 + $0x14] sm:$0xf]
      %v6482 = vsel %vm1154, %v6478, 0
      %v6483 = vsel %vm1161, %v6479, 0
      %v6484 = vsel %vm1154, %v6480, 0
      %v6485 = vsel %vm1161, %v6481, 0
      %6490 = vrot.lane.b32.xlu0 %v6482, 96
      %v6491 = vpop.permute.xlu0 %6490
      %6492 = vrot.lane.b32.xlu0 %v6483, 96
      %v6493 = vpop.permute.xlu0 %6492
      %6494 = vrot.lane.b32.xlu0 %v6484, 96
      %v6495 = vpop.permute.xlu0 %6494
      %6496 = vrot.lane.b32.xlu0 %v6485, 96
      %v6497 = vpop.permute.xlu0 %6496
      %v6498 = vrot.slane %v6491, 4
      %v6499 = vrot.slane %v6493, 4
      %v6500 = vrot.slane %v6495, 4
      %v6501 = vrot.slane %v6497, 4
      %v6502 = vsel %vm937, %v6498, %v6499
      %v6503 = vsel %vm1183, %v6491, %v6502
      %v6504 = vsel %vm937, %v6500, %v6501
      %v6505 = vsel %vm1183, %v6495, %v6504
      %6508 = vst [vmem:[#allocation3 + $0x60] sm:$0xff] %v6503
      %6509 = vst [vmem:[#allocation3 + $0x68] sm:$0xff] %v6505
      %v6510 = vld [vmem:[#allocation2] sm:$0xff]
      %v6511 = vld [vmem:[#allocation2 + $0x8] sm:$0xf]
      %v6512 = vld [vmem:[#allocation2 + $0xc] sm:$0xff]
      %v6513 = vld [vmem:[#allocation2 + $0x14] sm:$0xf]
      %6518 = vrot.lane.b32.xlu0 %v6510, 95
      %v6519 = vpop.permute.xlu0 %6518
      %6520 = vrot.lane.b32.xlu0 %v6511, 95
      %v6521 = vpop.permute.xlu0 %6520
      %6522 = vrot.lane.b32.xlu0 %v6512, 95
      %v6523 = vpop.permute.xlu0 %6522
      %6524 = vrot.lane.b32.xlu0 %v6513, 95
      %v6525 = vpop.permute.xlu0 %6524
      %v6526 = vrot.slane %v6519, 4
      %v6527 = vrot.slane %v6521, 4
      %v6528 = vrot.slane %v6523, 4
      %v6529 = vrot.slane %v6525, 4
      %v6530 = vsel %vm937, %v6526, %v6527
      %v6531 = vsel %vm1212, %v6519, %v6530
      %v6532 = vsel %vm937, %v6528, %v6529
      %v6533 = vsel %vm1212, %v6523, %v6532
      %6536 = vst [vmem:[#allocation3 + $0x70] sm:$0xff] %v6531
      %6537 = vst [vmem:[#allocation3 + $0x78] sm:$0xff] %v6533
      %v6538 = vld [vmem:[#allocation2] sm:$0xff]
      %v6539 = vld [vmem:[#allocation2 + $0x8] sm:$0xf]
      %v6540 = vld [vmem:[#allocation2 + $0xc] sm:$0xff]
      %v6541 = vld [vmem:[#allocation2 + $0x14] sm:$0xf]
      %v6542 = vsel %vm1235, %v6538, 0
      %v6543 = vsel %vm1242, %v6539, 0
      %v6544 = vsel %vm1235, %v6540, 0
      %v6545 = vsel %vm1242, %v6541, 0
      %6550 = vrot.lane.b32.xlu0 %v6542, 94
      %v6551 = vpop.permute.xlu0 %6550
      %6552 = vrot.lane.b32.xlu0 %v6543, 94
      %v6553 = vpop.permute.xlu0 %6552
      %6554 = vrot.lane.b32.xlu0 %v6544, 94
      %v6555 = vpop.permute.xlu0 %6554
      %6556 = vrot.lane.b32.xlu0 %v6545, 94
      %v6557 = vpop.permute.xlu0 %6556
      %v6558 = vrot.slane %v6551, 4
      %v6559 = vrot.slane %v6553, 4
      %v6560 = vrot.slane %v6555, 4
      %v6561 = vrot.slane %v6557, 4
      %v6562 = vsel %vm937, %v6558, %v6559
      %v6563 = vsel %vm1264, %v6551, %v6562
      %v6564 = vsel %vm937, %v6560, %v6561
      %v6565 = vsel %vm1264, %v6555, %v6564
      %6568 = vst [vmem:[#allocation3 + $0x80] sm:$0xff] %v6563
      %6569 = vst [vmem:[#allocation3 + $0x88] sm:$0xff] %v6565
      %v6570 = vld [vmem:[%s19] sm:$0xff]
      %v6571 = vld [vmem:[%s19 + $0x8] sm:$0xff]
      %v6572 = vld [vmem:[#allocation3] sm:$0xff]
      %v6573 = vld [vmem:[#allocation3 + $0x8] sm:$0xff]
      %v6574 = vld [vmem:[#allocation3 + $0x10] sm:$0xff]
      %v6575 = vld [vmem:[#allocation3 + $0x18] sm:$0xff]
      %v6576 = vld [vmem:[#allocation3 + $0x20] sm:$0xff]
      %v6577 = vld [vmem:[#allocation3 + $0x28] sm:$0xff]
      %v6578 = vld [vmem:[#allocation3 + $0x30] sm:$0xff]
      %v6579 = vld [vmem:[#allocation3 + $0x38] sm:$0xff]
      %v6580 = vld [vmem:[#allocation3 + $0x40] sm:$0xff]
      %v6581 = vld [vmem:[#allocation3 + $0x48] sm:$0xff]
      %v6582 = vld [vmem:[#allocation3 + $0x50] sm:$0xff]
      %v6583 = vld [vmem:[#allocation3 + $0x58] sm:$0xff]
      %v6584 = vld [vmem:[#allocation3 + $0x60] sm:$0xff]
      %v6585 = vld [vmem:[#allocation3 + $0x68] sm:$0xff]
      %v6586 = vld [vmem:[#allocation3 + $0x70] sm:$0xff]
      %v6587 = vld [vmem:[#allocation3 + $0x78] sm:$0xff]
      %v6588 = vld [vmem:[#allocation3 + $0x80] sm:$0xff]
      %v6589 = vld [vmem:[#allocation3 + $0x88] sm:$0xff]
      %v6590 = vld [vmem:[%s20] sm:$0xff]
      %v6591 = vld [vmem:[%s20 + $0x8] sm:$0xff]
      %6593 = vset.pattern.permute.xlu0 0
      %6594 = vperm.xlu0 %6593, %v6590
      %v6595 = vpop.permute.xlu0 %6594
      %6598 = vset.pattern.permute.xlu0 0
      %6599 = vperm.xlu0 %6598, %v6591
      %v6600 = vpop.permute.xlu0 %6599
      %v6604 = vunpack.c.l.b16 %v6570
      %v6605 = vunpack.c.h.b16 %v6570
      %v6606 = vunpack.c.l.b16 %v6571
      %v6607 = vunpack.c.h.b16 %v6571
      %v6608 = vpack.c.b16 %v6606, %v6604
      %v6609 = vpack.c.b16 %v6607, %v6605
      %v6629 = vunpack.c.l.b16 %v6572
      %v6630 = vunpack.c.h.b16 %v6572
      %v6631 = vunpack.c.l.b16 %v6573
      %v6632 = vunpack.c.h.b16 %v6573
      %v6633 = vunpack.c.l.b16 %v6574
      %v6634 = vunpack.c.h.b16 %v6574
      %v6635 = vunpack.c.l.b16 %v6575
      %v6636 = vunpack.c.h.b16 %v6575
      %v6637 = vunpack.c.l.b16 %v6576
      %v6638 = vunpack.c.h.b16 %v6576
      %v6639 = vunpack.c.l.b16 %v6577
      %v6640 = vunpack.c.h.b16 %v6577
      %v6641 = vunpack.c.l.b16 %v6578
      %v6642 = vunpack.c.h.b16 %v6578
      %v6643 = vunpack.c.l.b16 %v6579
      %v6644 = vunpack.c.h.b16 %v6579
      %v6645 = vunpack.c.l.b16 %v6580
      %v6646 = vunpack.c.h.b16 %v6580
      %v6647 = vunpack.c.l.b16 %v6581
      %v6648 = vunpack.c.h.b16 %v6581
      %v6649 = vunpack.c.l.b16 %v6582
      %v6650 = vunpack.c.h.b16 %v6582
      %v6651 = vunpack.c.l.b16 %v6583
      %v6652 = vunpack.c.h.b16 %v6583
      %v6653 = vunpack.c.l.b16 %v6584
      %v6654 = vunpack.c.h.b16 %v6584
      %v6655 = vunpack.c.l.b16 %v6585
      %v6656 = vunpack.c.h.b16 %v6585
      %v6657 = vunpack.c.l.b16 %v6586
      %v6658 = vunpack.c.h.b16 %v6586
      %v6659 = vunpack.c.l.b16 %v6587
      %v6660 = vunpack.c.h.b16 %v6587
      %v6661 = vunpack.c.l.b16 %v6588
      %v6662 = vunpack.c.h.b16 %v6588
      %v6663 = vunpack.c.l.b16 %v6589
      %v6664 = vunpack.c.h.b16 %v6589
      %v6665 = vpack.c.b16 %v6631, %v6629
      %v6666 = vpack.c.b16 %v6632, %v6630
      %v6667 = vpack.c.b16 %v6635, %v6633
      %v6668 = vpack.c.b16 %v6636, %v6634
      %v6669 = vpack.c.b16 %v6639, %v6637
      %v6670 = vpack.c.b16 %v6640, %v6638
      %v6671 = vpack.c.b16 %v6643, %v6641
      %v6672 = vpack.c.b16 %v6644, %v6642
      %v6673 = vpack.c.b16 %v6647, %v6645
      %v6674 = vpack.c.b16 %v6648, %v6646
      %v6675 = vpack.c.b16 %v6651, %v6649
      %v6676 = vpack.c.b16 %v6652, %v6650
      %v6677 = vpack.c.b16 %v6655, %v6653
      %v6678 = vpack.c.b16 %v6656, %v6654
      %v6679 = vpack.c.b16 %v6659, %v6657
      %v6680 = vpack.c.b16 %v6660, %v6658
      %v6681 = vpack.c.b16 %v6663, %v6661
      %v6682 = vpack.c.b16 %v6664, %v6662
      %v6702 = vsel %vm1403, %v6609, 0
      %6704 = vmatpush.bf16.msra.mxu0 %v6679
      %6705 = vmatpush.bf16.msra.mxu0 %v6677
      %6706 = vmatpush.bf16.msra.mxu0 %v6675
      %6707 = vmatpush.bf16.msra.mxu0 %v6673
      %6708 = vmatpush.bf16.msra.mxu0 %v6671
      %6709 = vmatpush.bf16.msra.mxu0 %v6669
      %6710 = vmatpush.bf16.msra.mxu0 %v6667
      %6711 = vmatpush.bf16.msra.mxu0 %v6665
      %6712 = vmatmul.bf16.gmra.mxu0 %v6608
      %v6713 = vpop.f32.mrf.mxu0
      %v6714 = vadd.f32 %v6595, %v6713
      %v6715 = vpop.f32.mrf.mxu0
      %v6716 = vadd.f32 %v6600, %v6715
      %6717 = vdwg.mxu0
      %6718 = vmatpush.bf16.msra.mxu0 0
      %6719 = vmatpush.bf16.msra.mxu0 0
      %6720 = vmatpush.bf16.msra.mxu0 0
      %6721 = vmatpush.bf16.msra.mxu0 0
      %6722 = vmatpush.bf16.msra.mxu0 0
      %6723 = vmatpush.bf16.msra.mxu0 0
      %6724 = vmatpush.bf16.msra.mxu0 0
      %6725 = vmatpush.bf16.msra.mxu0 %v6681
      %6726 = vmatmul.bf16.gmra.mxu0 %v6702
      %v6727 = vpop.f32.mrf.mxu0
      %v6728 = vadd.f32 %v6714, %v6727
      %v6729 = vpop.f32.mrf.mxu0
      %v6730 = vadd.f32 %v6716, %v6729
      %6731 = vdwg.mxu0
      %6732 = vmatpush.bf16.msra.mxu0 %v6680
      %6733 = vmatpush.bf16.msra.mxu0 %v6678
      %6734 = vmatpush.bf16.msra.mxu0 %v6676
      %6735 = vmatpush.bf16.msra.mxu0 %v6674
      %6736 = vmatpush.bf16.msra.mxu0 %v6672
      %6737 = vmatpush.bf16.msra.mxu0 %v6670
      %6738 = vmatpush.bf16.msra.mxu0 %v6668
      %6739 = vmatpush.bf16.msra.mxu0 %v6666
      %6740 = vmatmul.bf16.gmra.mxu0 %v6608
      %v6741 = vpop.f32.mrf.mxu0
      %v6742 = vadd.f32 %v6595, %v6741
      %v6743 = vpop.f32.mrf.mxu0
      %v6744 = vadd.f32 %v6600, %v6743
      %6745 = vdwg.mxu0
      %6746 = vmatpush.bf16.msra.mxu0 0
      %6747 = vmatpush.bf16.msra.mxu0 0
      %6748 = vmatpush.bf16.msra.mxu0 0
      %6749 = vmatpush.bf16.msra.mxu0 0
      %6750 = vmatpush.bf16.msra.mxu0 0
      %6751 = vmatpush.bf16.msra.mxu0 0
      %6752 = vmatpush.bf16.msra.mxu0 0
      %6753 = vmatpush.bf16.msra.mxu0 %v6682
      %6754 = vmatmul.bf16.gmra.mxu0 %v6702
      %v6755 = vpop.f32.mrf.mxu0
      %v6756 = vadd.f32 %v6742, %v6755
      %v6757 = vpop.f32.mrf.mxu0
      %v6758 = vadd.f32 %v6744, %v6757
      %6759 = vdwg.mxu0
      %v6760 = vadd.f32 %v6728, %v5832
      %v6761 = vadd.f32 %v6756, %v5833
      %v6762 = vadd.f32 %v6730, %v5834
      %v6763 = vadd.f32 %v6758, %v5835
      %v6764 = vmax.f32 %v6760, 0.0
      %v6765 = vmax.f32 %v6761, 0.0
      %v6766 = vmax.f32 %v6762, 0.0
      %v6767 = vmax.f32 %v6763, 0.0
      %v6768 = vld [vmem:[%s21] sm:$0xff]
      %v6769 = vld [vmem:[%s21 + $0x8] sm:$0xff]
      %6771 = vset.pattern.permute.xlu0 0
      %6772 = vperm.xlu0 %6771, %v6768
      %v6773 = vpop.permute.xlu0 %6772
      %6776 = vset.pattern.permute.xlu0 0
      %6777 = vperm.xlu0 %6776, %v6769
      %v6778 = vpop.permute.xlu0 %6777
      %v6780 = vmul.f32 %v6764, %v6773
      %v6781 = vmul.f32 %v6765, %v6773
      %v6782 = vmul.f32 %v6766, %v6778
      %v6783 = vmul.f32 %v6767, %v6778
      %v6784 = vadd.f32 %v6780, %v6782
      %v6785 = vrot.slane %v6784, 4
      %v6786 = vadd.f32 %v6784, %v6785
      %v6787 = vrot.slane %v6786, 2
      %v6788 = vadd.f32 %v6786, %v6787
      %v6789 = vrot.slane %v6788, 1
      %v6790 = vadd.f32 %v6788, %v6789
      %v6791 = vadd.f32 %v6781, %v6783
      %v6792 = vrot.slane %v6791, 4
      %v6793 = vadd.f32 %v6791, %v6792
      %v6794 = vrot.slane %v6793, 2
      %v6795 = vadd.f32 %v6793, %v6794
      %v6796 = vrot.slane %v6795, 1
      %v6797 = vadd.f32 %v6795, %v6796
      %v6798 = vld [vmem:[#allocation4] sm:$0x1]
      %6800 = vset.pattern.permute.xlu0 0
      %6801 = vperm.xlu0 %6800, %v6798
      %v6802 = vpop.permute.xlu0 %6801
      %v6804 = vperm.slane %v6802, 0
      %v6805 = vadd.f32 %v6790, %v6804
      %v6806 = vadd.f32 %v6797, %v6804
      %v6809 = vrot.slane %v6806, 7
      %vm6810 = vcmask 1040384
      %v6811 = vsel %vm6810, %v6805, %v6809
      %v6813 = vlaneseq
      %vm6814 = vcmp.ge.s32.totalorder %v6813, 0
      %vm6815 = vcmp.lt.s32.totalorder %v6813, 256
      %vm6816 = vmand %vm6814, %vm6815
      %6817 = vst.msk [vmem:[%s819] sm:$0x3] %vm6816, %v6811
      %6818 = vst [vmem:[%s824] sm:$0xff] %v3182
      %6819 = vst [vmem:[%s824 + $0x8] sm:$0xff] %v3183
      %6820 = vst [vmem:[%s824 + $0x10] sm:$0xff] %v3184
      %6821 = vst [vmem:[%s824 + $0x18] sm:$0xff] %v3185
      %6822 = vst [vmem:[%s829] sm:$0xff] %v5832
      %6823 = vst [vmem:[%s829 + $0x8] sm:$0xff] %v5833
      %6824 = vst [vmem:[%s829 + $0x10] sm:$0xff] %v5834
      %6825 = vst [vmem:[%s829 + $0x18] sm:$0xff] %v5835
      %p6826 = scmp.lt.s32.totalorder %s39, 1
      %s6827 = scalar_select %p6826, %s39, 1
      %s6828 = smul.addr %s6827, 2
      %s6829 = scalar_lea.vmem %s23, %s6828
      %p6830 = scmp.lt.s32.totalorder %s39, 1
      %s6831 = scalar_select %p6830, %s39, 1
      %s6832 = smul.addr %s6831, 4
      %s6833 = smul.addr %s6832, 8
      %s6834 = scalar_lea.vmem %s24, %s6833
      %p6835 = scmp.lt.s32.totalorder %s39, 1
      %s6836 = scalar_select %p6835, %s39, 1
      %s6837 = smul.addr %s6836, 4
      %s6838 = smul.addr %s6837, 8
      %s6839 = scalar_lea.vmem %s25, %s6838
      // Predicated region
      $region113: #{firenet_forward.1} parent=111 // pred_check
        %p6840 = pneg %p555
      $region114: #{firenet_forward.1} parent=111 // pred_check_branch
        %6842 = sbr.rel (%p6840) target = $region116
      $region115: #{firenet_forward.1} parent=111 // pred_region
        _
      $region116: #{firenet_forward.1} parent=111 // pred_fallthru
        _
      // Predicated region
      $region117: #{firenet_forward.1} parent=111 // pred_check
        %p6843 = pneg %p581
      $region118: #{firenet_forward.1} parent=111 // pred_check_branch
        %6845 = sbr.rel (%p6843) target = $region120
      $region119: #{firenet_forward.1} parent=111 // pred_region
        _
      $region120: #{firenet_forward.1} parent=111 // pred_fallthru
        _
      // Predicated region
      $region121: #{firenet_forward.1} parent=111 // pred_check
        %p6846 = pneg %p607
      $region122: #{firenet_forward.1} parent=111 // pred_check_branch
        %6848 = sbr.rel (%p6846) target = $region124
      $region123: #{firenet_forward.1} parent=111 // pred_region
        _
      $region124: #{firenet_forward.1} parent=111 // pred_fallthru
        _
    $region112: #{firenet_forward.1} parent=5 // pred_fallthru
      _
    %p6849 = scmp.le.s32.totalorder 2, %s34
    // Predicated region
    $region125: #{firenet_forward.1} parent=5 // pred_check
      %p6850 = pneg %p6849
    $region126: #{firenet_forward.1} parent=5 // pred_check_branch
      %6852 = sbr.rel (%p6850) target = $region128
    $region127: #{firenet_forward.1} parent=5 // pred_region
      %s6853 = ssub.s32 %s34, 2
      // Predicated region
      $region129: #{firenet_forward.1} parent=127 // pred_check
        %p6854 = pneg %p561
      $region130: #{firenet_forward.1} parent=127 // pred_check_branch
        %6856 = sbr.rel (%p6854) target = $region132
      $region131: #{firenet_forward.1} parent=127 // pred_region
        %p6857 = scmp.lt.s32.totalorder %s40, 1
        %s6858 = scalar_select %p6857, %s40, 1
        %s6859 = smul.addr %s6858, 2
        %s6860 = scalar_lea.vmem %s23, %s6859
      $region132: #{firenet_forward.1} parent=127 // pred_fallthru
        _
      // Predicated region
      $region133: #{firenet_forward.1} parent=127 // pred_check
        %p6861 = pneg %p587
      $region134: #{firenet_forward.1} parent=127 // pred_check_branch
        %6863 = sbr.rel (%p6861) target = $region136
      $region135: #{firenet_forward.1} parent=127 // pred_region
        %p6864 = scmp.lt.s32.totalorder %s40, 1
        %s6865 = scalar_select %p6864, %s40, 1
        %s6866 = smul.addr %s6865, 4
        %s6867 = smul.addr %s6866, 8
        %s6868 = scalar_lea.vmem %s24, %s6867
      $region136: #{firenet_forward.1} parent=127 // pred_fallthru
        _
      // Predicated region
      $region137: #{firenet_forward.1} parent=127 // pred_check
        %p6869 = pneg %p613
      $region138: #{firenet_forward.1} parent=127 // pred_check_branch
        %6871 = sbr.rel (%p6869) target = $region140
      $region139: #{firenet_forward.1} parent=127 // pred_region
        %p6872 = scmp.lt.s32.totalorder %s40, 1
        %s6873 = scalar_select %p6872, %s40, 1
        %s6874 = smul.addr %s6873, 4
        %s6875 = smul.addr %s6874, 8
        %s6876 = scalar_lea.vmem %s25, %s6875
      $region140: #{firenet_forward.1} parent=127 // pred_fallthru
        _
    $region128: #{firenet_forward.1} parent=5 // pred_fallthru
      _
  $region6: #{firenet_forward.1} parent=0 // loop_footer
    %s38 = sadd.s32 1, %s34
  $region7: #{firenet_forward.1} parent=0 // loop_footer_branch
    %33 = sbr.rel target = $region3
  $region8: #{firenet_forward.1} parent=0 // loop_exit
    _

</llo_original>
